<compile_context>
chip_gen: v7x
topology: tpu7x:2x2x1
jax: 0.10.0
libtpu: 0.0.40
codegen_flags: <defaults>
</compile_context>

<pallas_src>
import jax
import jax.numpy as jnp
from jax.experimental import pallas as pl
from jax.experimental.pallas import tpu as pltpu

BN_EPS = 1e-5
LRELU_SLOPE = 0.2


# ------------------------------ fused kernel ------------------------------- #

def _disc_fused_kernel(x_ref, w1_ref, w2_ref, w3_ref, w4_ref, w5_ref,
                       g2_ref, b2_ref, g3_ref, b3_ref, g4_ref, b4_ref,
                       out_ref, act1, act2, act3):
    B = x_ref.shape[0]

    def lrelu(z):
        return jnp.maximum(z, LRELU_SLOPE * z)

    def conv4x4_s2(src_ref, w_ref, oh, ow_comp):
        """4x4 stride-2 conv over the zero-padded NHWC activation as ONE matmul.

        The 16 taps are gathered with strided slices, concatenated along lanes
        into a (B*oh*ow_comp, 16*Cin) im2col matrix and pushed through the MXU
        in a single bf16 matmul with f32 accumulation (K = 16*Cin fills the
        systolic depth instead of 16 separate K=Cin pushes).
        """
        cin = src_ref.shape[-1]
        pieces = []
        for i in range(4):
            for j in range(4):
                pieces.append(src_ref[:, pl.ds(i, oh, 2), pl.ds(j, ow_comp, 2), :])
        a = jnp.concatenate(pieces, axis=-1)              # (B, oh, ow_comp, 16*cin) f32
        a = a.reshape(B * oh * ow_comp, 16 * cin).astype(jnp.bfloat16)
        return jnp.dot(a, w_ref[...], preferred_element_type=jnp.float32)

    def bn_lrelu(y, g_ref, b_ref, ow_comp, ow_valid):
        """Train-mode BatchNorm (+LeakyReLU) over the valid rows of y (M, C).

        Rows are ordered (b, oy, ox) with ox < ow_comp; only ox < ow_valid are
        real pixels (the two deepest layers compute at a padded width of 8 so
        every value reshape stays sublane-aligned).  Single-pass statistics in
        f32 with the variance clamped at zero.
        """
        m = y.shape[0]
        if ow_valid == ow_comp:                 # every row is a real pixel
            cnt = float(m)
            sum1 = jnp.sum(y, axis=0, keepdims=True)
            sum2 = jnp.sum(y * y, axis=0, keepdims=True)
        else:                                   # padded columns masked out of stats
            cnt = float(m * ow_valid // ow_comp)
            col = jax.lax.broadcasted_iota(jnp.int32, (m, 1), 0) % ow_comp
            mask = (col < ow_valid).astype(jnp.float32)
            ym = y * mask
            sum1 = jnp.sum(ym, axis=0, keepdims=True)
            sum2 = jnp.sum(ym * y, axis=0, keepdims=True)
        mean = sum1 * (1.0 / cnt)
        var = jnp.maximum(sum2 * (1.0 / cnt) - mean * mean, 0.0)
        scale = g_ref[...] * jax.lax.rsqrt(var + BN_EPS)
        shift = b_ref[...] - mean * scale
        return lrelu(y * scale + shift)

    def zero_pad_region(act, s):
        """Zero only the pad border and right zero-fill columns (interior is
        fully overwritten every call)."""
        b_, hp, wp, c = act.shape
        zrow = jnp.zeros((b_, 1, wp, c), act.dtype)
        act[:, 0:1, :, :] = zrow                                   # top pad row
        act[:, s + 1:s + 2, :, :] = zrow                           # bottom pad row
        act[:, :, 0:1, :] = jnp.zeros((b_, hp, 1, c), act.dtype)   # left pad col
        act[:, :, s + 1:wp, :] = jnp.zeros((b_, hp, wp - s - 1, c), act.dtype)

    s1 = act1.shape[1] - 2                    # 16
    s2 = act2.shape[1] - 2                    # 8
    s3 = act3.shape[1] - 2                    # 4
    s4 = s3 // 2                              # 2
    c1 = w1_ref.shape[-1]
    c2 = w2_ref.shape[-1]
    c3 = w3_ref.shape[-1]
    c4 = w4_ref.shape[-1]

    zero_pad_region(act1, s1)
    zero_pad_region(act2, s2)
    zero_pad_region(act3, s3)

    # layer 1: conv1 + leaky_relu -> act1 (padded NHWC)
    y1 = conv4x4_s2(x_ref, w1_ref, s1, s1)                         # (B*16*16, c1)
    act1[:, 1:1 + s1, 1:1 + s1, :] = lrelu(y1).reshape(B, s1, s1, c1)

    # layer 2: conv2 + BN2 + leaky_relu -> act2 (padded, extra right zero-fill)
    y2 = conv4x4_s2(act1, w2_ref, s2, s2)                          # (B*8*8, c2)
    act2[:, 1:1 + s2, 1:1 + s2, :] = (
        bn_lrelu(y2, g2_ref, b2_ref, s2, s2).reshape(B, s2, s2, c2))

    # layer 3: computed at padded width 8 (cols >= 4 masked out of BN, dropped)
    y3 = conv4x4_s2(act2, w3_ref, s3, 8)                           # (B*4*8, c3)
    z3 = bn_lrelu(y3, g3_ref, b3_ref, 8, s3).reshape(B, s3, 8, c3)
    act3[:, 1:1 + s3, 1:1 + s3, :] = z3[:, :, 0:s3, :]

    # layer 4: computed at padded width 8 (valid width 2); stays in (M, C) form.
    y4 = conv4x4_s2(act3, w4_ref, s4, 8)                           # (B*2*8, c4)
    z4 = bn_lrelu(y4, g4_ref, b4_ref, 8, s4)

    # layer 5: 2x2 / stride-1 / pad-0 conv (Cout=1) + sigmoid as one masked
    # dot-product: w5_ref is pre-tiled host-side to (B*2*8, c4) with zeros in
    # the padded columns, so the junk rows of z4 vanish from the reduction.
    prod = z4 * w5_ref[...]                                        # (B*16, c4)
    prod = prod.reshape(B, 2 * 8, c4)
    logit = jnp.sum(prod, axis=2, keepdims=True)                   # (B, 16, 1)
    logit = jnp.sum(logit, axis=1, keepdims=True)                  # (B, 1, 1)
    out_ref[...] = jax.nn.sigmoid(logit).reshape(B, 1, 1, 1)


# ------------------------------ host wrappers ------------------------------ #

def _prep_conv_weight(w):
    """(Cout, Cin, 4, 4) -> (16*Cin, Cout) bf16, rows in (kh, kw, cin) order
    matching the in-kernel im2col tap concatenation."""
    co, ci, kh, kw = w.shape
    return jnp.transpose(w, (2, 3, 1, 0)).reshape(kh * kw * ci, co).astype(jnp.bfloat16)


def _full_spec(shape):
    n = len(shape)
    return pl.BlockSpec(tuple(shape), lambda i, _n=n: (0,) * _n)


@jax.jit
def discriminator_forward(params, x_nchw):
    B, C, H, W = x_nchw.shape
    assert (H, W) == (32, 32), "fused kernel is specialized to 32x32 inputs"
    hs = params["conv1"].shape[0]
    c1, c2, c3, c4 = hs, hs * 2, hs * 4, hs * 8

    # One-time layout prep at the model boundary (NHWC + explicit zero pad).
    x = jnp.transpose(x_nchw, (0, 2, 3, 1))
    x = jnp.pad(x, ((0, 0), (1, 1), (1, 1), (0, 0)))               # (B, 34, 34, C)

    w1 = _prep_conv_weight(params["conv1"])
    w2 = _prep_conv_weight(params["conv2"])
    w3 = _prep_conv_weight(params["conv3"])
    w4 = _prep_conv_weight(params["conv4"])
    # conv5 weight laid out as the (B*2*8, c4) mask-matrix used by the in-kernel
    # masked dot-product (zeros for the padded kx columns, tiled over batch).
    w5t = jnp.transpose(params["conv5"], (2, 3, 1, 0)).reshape(2, 2, c4)
    w5m = jnp.tile(jnp.pad(w5t, ((0, 0), (0, 6), (0, 0))).reshape(16, c4),
                   (B, 1)).astype(jnp.float32)                     # (B*16, c4)

    inputs = (x, w1, w2, w3, w4, w5m,
              params["bn2_gamma"], params["bn2_beta"],
              params["bn3_gamma"], params["bn3_beta"],
              params["bn4_gamma"], params["bn4_beta"])

    scratch = [
        pltpu.VMEM((B, 18, 18, c1), jnp.float32),   # layer-1 output, padded 18x18
        pltpu.VMEM((B, 10, 18, c2), jnp.float32),   # layer-2 output (extra right zero-fill)
        pltpu.VMEM((B, 6, 18, c3), jnp.float32),    # layer-3 output (extra right zero-fill)
    ]

    flops = 2 * B * (16 * 16 * (16 * C) * c1
                     + 8 * 8 * (16 * c1) * c2
                     + 4 * 4 * (16 * c2) * c3
                     + 2 * 2 * (16 * c3) * c4
                     + 4 * c4)
    bytes_accessed = sum(int(a.size) * a.dtype.itemsize for a in inputs) + B * 4
    cost = pl.CostEstimate(flops=flops, transcendentals=64,
                           bytes_accessed=bytes_accessed)

    return pl.pallas_call(
        _disc_fused_kernel,
        out_shape=jax.ShapeDtypeStruct((B, 1, 1, 1), jnp.float32),
        grid=(1,),
        in_specs=[_full_spec(a.shape) for a in inputs],
        out_specs=_full_spec((B, 1, 1, 1)),
        scratch_shapes=scratch,
        compiler_params=pltpu.CompilerParams(dimension_semantics=("arbitrary",)),
        cost_estimate=cost,
    )(*inputs)


# ------------------------- pure-JAX reference (f32) ------------------------- #

def _conv(x, w, stride, pad):
    return jax.lax.conv_general_dilated(
        x, w, window_strides=(stride, stride),
        padding=((pad, pad), (pad, pad)),
        dimension_numbers=("NCHW", "OIHW", "NCHW"))


def reference_forward(params, x):
    def bn(y, g, b):
        mean = jnp.mean(y, axis=(0, 2, 3), keepdims=True)
        var = jnp.mean((y - mean) ** 2, axis=(0, 2, 3), keepdims=True)
        return ((y - mean) * jax.lax.rsqrt(var + BN_EPS)
                * g.reshape(1, -1, 1, 1) + b.reshape(1, -1, 1, 1))

    lrelu = lambda z: jnp.where(z >= 0, z, LRELU_SLOPE * z)
    y = lrelu(_conv(x, params["conv1"], 2, 1))
    y = lrelu(bn(_conv(y, params["conv2"], 2, 1), params["bn2_gamma"], params["bn2_beta"]))
    y = lrelu(bn(_conv(y, params["conv3"], 2, 1), params["bn3_gamma"], params["bn3_beta"]))
    y = lrelu(bn(_conv(y, params["conv4"], 2, 1), params["bn4_gamma"], params["bn4_beta"]))
    return jax.nn.sigmoid(_conv(y, params["conv5"], 1, 0))


# ----------------------------------- main ----------------------------------- #

def init_params(key, num_channels=3, hidden_size=16):
    hs = hidden_size
    conv_shapes = {
        "conv1": (hs, num_channels, 4, 4),
        "conv2": (hs * 2, hs, 4, 4),
        "conv3": (hs * 4, hs * 2, 4, 4),
        "conv4": (hs * 8, hs * 4, 4, 4),
        "conv5": (1, hs * 8, 2, 2),
    }
    params = {}
    for name, shp in conv_shapes.items():
        key, sub = jax.random.split(key)
        params[name] = 0.02 * jax.random.normal(sub, shp, dtype=jnp.float32)
    for idx, c in (("2", hs * 2), ("3", hs * 4), ("4", hs * 8)):
        key, g, b = jax.random.split(key, 3)
        params[f"bn{idx}_gamma"] = (1.0 + 0.1 * jax.random.normal(g, (1, c))).astype(jnp.float32)
        params[f"bn{idx}_beta"] = (0.1 * jax.random.normal(b, (1, c))).astype(jnp.float32)
    return params


if __name__ == "__main__":
    key = jax.random.PRNGKey(0)
    k_param, k_x = jax.random.split(key)
    params = init_params(k_param, num_channels=3, hidden_size=16)
    # 32x32 input: four stride-2 convs -> 2x2, final 2x2 conv -> 1x1.
    x = jax.random.normal(k_x, (2, 3, 32, 32), dtype=jnp.float32)

    out = discriminator_forward(params, x)
    jax.block_until_ready(out)

    assert out.shape == (2, 1, 1, 1)
    assert bool(jnp.all(jnp.isfinite(out)))
    assert bool(jnp.all((out >= 0.0) & (out <= 1.0)))

    ref = reference_forward(params, x)
    max_err = float(jnp.max(jnp.abs(out - ref)))
    assert max_err < 5e-2, f"mismatch vs f32 reference: {max_err}"
    print("KERNEL_OK")
</pallas_src>

<mosaic_0001>
module attributes {stable_mosaic.version = 11 : i64} {
  func.func @_disc_fused_kernel(%arg0: i32, %arg1: memref<2x34x34x3xf32, #tpu.memory_space<vmem>>, %arg2: memref<48x16xbf16, #tpu.memory_space<vmem>>, %arg3: memref<256x32xbf16, #tpu.memory_space<vmem>>, %arg4: memref<512x64xbf16, #tpu.memory_space<vmem>>, %arg5: memref<1024x128xbf16, #tpu.memory_space<vmem>>, %arg6: memref<32x128xf32, #tpu.memory_space<vmem>>, %arg7: memref<1x32xf32, #tpu.memory_space<vmem>>, %arg8: memref<1x32xf32, #tpu.memory_space<vmem>>, %arg9: memref<1x64xf32, #tpu.memory_space<vmem>>, %arg10: memref<1x64xf32, #tpu.memory_space<vmem>>, %arg11: memref<1x128xf32, #tpu.memory_space<vmem>>, %arg12: memref<1x128xf32, #tpu.memory_space<vmem>>, %arg13: memref<2x1x1x1xf32, #tpu.memory_space<vmem>>, %arg14: memref<2x18x18x16xf32, #tpu.memory_space<vmem>>, %arg15: memref<2x10x18x32xf32, #tpu.memory_space<vmem>>, %arg16: memref<2x6x18x64xf32, #tpu.memory_space<vmem>>) attributes {dimension_semantics = [#tpu.dimension_semantics<arbitrary>], iteration_bounds = array<i64: 1>, scalar_prefetch = 0 : i64, scratch_operands = 3 : i64, tpu.core_type = #tpu.core_type<tc>, window_params = [{pipeline_mode = #tpu.pipeline_mode<synchronous>, transform_indices = @transform_0, window_bounds = array<i64: 2, 34, 34, 3>}, {pipeline_mode = #tpu.pipeline_mode<synchronous>, transform_indices = @transform_1, window_bounds = array<i64: 48, 16>}, {pipeline_mode = #tpu.pipeline_mode<synchronous>, transform_indices = @transform_2, window_bounds = array<i64: 256, 32>}, {pipeline_mode = #tpu.pipeline_mode<synchronous>, transform_indices = @transform_3, window_bounds = array<i64: 512, 64>}, {pipeline_mode = #tpu.pipeline_mode<synchronous>, transform_indices = @transform_4, window_bounds = array<i64: 1024, 128>}, {pipeline_mode = #tpu.pipeline_mode<synchronous>, transform_indices = @transform_5, window_bounds = array<i64: 32, 128>}, {pipeline_mode = #tpu.pipeline_mode<synchronous>, transform_indices = @transform_6, window_bounds = array<i64: 1, 32>}, {pipeline_mode = #tpu.pipeline_mode<synchronous>, transform_indices = @transform_7, window_bounds = array<i64: 1, 32>}, {pipeline_mode = #tpu.pipeline_mode<synchronous>, transform_indices = @transform_8, window_bounds = array<i64: 1, 64>}, {pipeline_mode = #tpu.pipeline_mode<synchronous>, transform_indices = @transform_9, window_bounds = array<i64: 1, 64>}, {pipeline_mode = #tpu.pipeline_mode<synchronous>, transform_indices = @transform_10, window_bounds = array<i64: 1, 128>}, {pipeline_mode = #tpu.pipeline_mode<synchronous>, transform_indices = @transform_11, window_bounds = array<i64: 1, 128>}, {pipeline_mode = #tpu.pipeline_mode<synchronous>, transform_indices = @transform_12, window_bounds = array<i64: 2, 1, 1, 1>}]} {
    %cst = arith.constant 0.000000e+00 : f32
    %0 = vector.broadcast %cst : f32 to vector<2x1x18x16xf32>
    %c0 = arith.constant 0 : index
    %c0_0 = arith.constant 0 : index
    %c0_1 = arith.constant 0 : index
    %c0_2 = arith.constant 0 : index
    %1 = vector.load %arg14[%c0, %c0_0, %c0_1, %c0_2] : memref<2x18x18x16xf32, #tpu.memory_space<vmem>>, vector<2x1x18x16xf32>
    tpu.vector_store %arg14[%c0, %c0_0, %c0_1, %c0_2], %0 {strides = array<i32>} : memref<2x18x18x16xf32, #tpu.memory_space<vmem>>, vector<2x1x18x16xf32>,
    %c0_3 = arith.constant 0 : index
    %c17 = arith.constant 17 : index
    %c0_4 = arith.constant 0 : index
    %c0_5 = arith.constant 0 : index
    %2 = vector.load %arg14[%c0_3, %c17, %c0_4, %c0_5] : memref<2x18x18x16xf32, #tpu.memory_space<vmem>>, vector<2x1x18x16xf32>
    tpu.vector_store %arg14[%c0_3, %c17, %c0_4, %c0_5], %0 {strides = array<i32>} : memref<2x18x18x16xf32, #tpu.memory_space<vmem>>, vector<2x1x18x16xf32>,
    %cst_6 = arith.constant 0.000000e+00 : f32
    %3 = vector.broadcast %cst_6 : f32 to vector<2x18x1x16xf32>
    %c0_7 = arith.constant 0 : index
    %c0_8 = arith.constant 0 : index
    %c0_9 = arith.constant 0 : index
    %c0_10 = arith.constant 0 : index
    %4 = vector.load %arg14[%c0_7, %c0_8, %c0_9, %c0_10] : memref<2x18x18x16xf32, #tpu.memory_space<vmem>>, vector<2x18x1x16xf32>
    tpu.vector_store %arg14[%c0_7, %c0_8, %c0_9, %c0_10], %3 {strides = array<i32>} : memref<2x18x18x16xf32, #tpu.memory_space<vmem>>, vector<2x18x1x16xf32>,
    %cst_11 = arith.constant 0.000000e+00 : f32
    %5 = vector.broadcast %cst_11 : f32 to vector<2x18x1x16xf32>
    %c0_12 = arith.constant 0 : index
    %c0_13 = arith.constant 0 : index
    %c17_14 = arith.constant 17 : index
    %c0_15 = arith.constant 0 : index
    %6 = vector.load %arg14[%c0_12, %c0_13, %c17_14, %c0_15] : memref<2x18x18x16xf32, #tpu.memory_space<vmem>>, vector<2x18x1x16xf32>
    tpu.vector_store %arg14[%c0_12, %c0_13, %c17_14, %c0_15], %5 {strides = array<i32>} : memref<2x18x18x16xf32, #tpu.memory_space<vmem>>, vector<2x18x1x16xf32>,
    %cst_16 = arith.constant 0.000000e+00 : f32
    %7 = vector.broadcast %cst_16 : f32 to vector<2x1x18x32xf32>
    %c0_17 = arith.constant 0 : index
    %c0_18 = arith.constant 0 : index
    %c0_19 = arith.constant 0 : index
    %c0_20 = arith.constant 0 : index
    %8 = vector.load %arg15[%c0_17, %c0_18, %c0_19, %c0_20] : memref<2x10x18x32xf32, #tpu.memory_space<vmem>>, vector<2x1x18x32xf32>
    tpu.vector_store %arg15[%c0_17, %c0_18, %c0_19, %c0_20], %7 {strides = array<i32>} : memref<2x10x18x32xf32, #tpu.memory_space<vmem>>, vector<2x1x18x32xf32>,
    %c0_21 = arith.constant 0 : index
    %c9 = arith.constant 9 : index
    %c0_22 = arith.constant 0 : index
    %c0_23 = arith.constant 0 : index
    %9 = vector.load %arg15[%c0_21, %c9, %c0_22, %c0_23] : memref<2x10x18x32xf32, #tpu.memory_space<vmem>>, vector<2x1x18x32xf32>
    tpu.vector_store %arg15[%c0_21, %c9, %c0_22, %c0_23], %7 {strides = array<i32>} : memref<2x10x18x32xf32, #tpu.memory_space<vmem>>, vector<2x1x18x32xf32>,
    %cst_24 = arith.constant 0.000000e+00 : f32
    %10 = vector.broadcast %cst_24 : f32 to vector<2x10x1x32xf32>
    %c0_25 = arith.constant 0 : index
    %c0_26 = arith.constant 0 : index
    %c0_27 = arith.constant 0 : index
    %c0_28 = arith.constant 0 : index
    %11 = vector.load %arg15[%c0_25, %c0_26, %c0_27, %c0_28] : memref<2x10x18x32xf32, #tpu.memory_space<vmem>>, vector<2x10x1x32xf32>
    tpu.vector_store %arg15[%c0_25, %c0_26, %c0_27, %c0_28], %10 {strides = array<i32>} : memref<2x10x18x32xf32, #tpu.memory_space<vmem>>, vector<2x10x1x32xf32>,
    %cst_29 = arith.constant 0.000000e+00 : f32
    %12 = vector.broadcast %cst_29 : f32 to vector<2x10x9x32xf32>
    %c0_30 = arith.constant 0 : index
    %c0_31 = arith.constant 0 : index
    %c9_32 = arith.constant 9 : index
    %c0_33 = arith.constant 0 : index
    %13 = vector.load %arg15[%c0_30, %c0_31, %c9_32, %c0_33] : memref<2x10x18x32xf32, #tpu.memory_space<vmem>>, vector<2x10x9x32xf32>
    tpu.vector_store %arg15[%c0_30, %c0_31, %c9_32, %c0_33], %12 {strides = array<i32>} : memref<2x10x18x32xf32, #tpu.memory_space<vmem>>, vector<2x10x9x32xf32>,
    %cst_34 = arith.constant 0.000000e+00 : f32
    %14 = vector.broadcast %cst_34 : f32 to vector<2x1x18x64xf32>
    %c0_35 = arith.constant 0 : index
    %c0_36 = arith.constant 0 : index
    %c0_37 = arith.constant 0 : index
    %c0_38 = arith.constant 0 : index
    %15 = vector.load %arg16[%c0_35, %c0_36, %c0_37, %c0_38] : memref<2x6x18x64xf32, #tpu.memory_space<vmem>>, vector<2x1x18x64xf32>
    tpu.vector_store %arg16[%c0_35, %c0_36, %c0_37, %c0_38], %14 {strides = array<i32>} : memref<2x6x18x64xf32, #tpu.memory_space<vmem>>, vector<2x1x18x64xf32>,
    %c0_39 = arith.constant 0 : index
    %c5 = arith.constant 5 : index
    %c0_40 = arith.constant 0 : index
    %c0_41 = arith.constant 0 : index
    %16 = vector.load %arg16[%c0_39, %c5, %c0_40, %c0_41] : memref<2x6x18x64xf32, #tpu.memory_space<vmem>>, vector<2x1x18x64xf32>
    tpu.vector_store %arg16[%c0_39, %c5, %c0_40, %c0_41], %14 {strides = array<i32>} : memref<2x6x18x64xf32, #tpu.memory_space<vmem>>, vector<2x1x18x64xf32>,
    %cst_42 = arith.constant 0.000000e+00 : f32
    %17 = vector.broadcast %cst_42 : f32 to vector<2x6x1x64xf32>
    %c0_43 = arith.constant 0 : index
    %c0_44 = arith.constant 0 : index
    %c0_45 = arith.constant 0 : index
    %c0_46 = arith.constant 0 : index
    %18 = vector.load %arg16[%c0_43, %c0_44, %c0_45, %c0_46] : memref<2x6x18x64xf32, #tpu.memory_space<vmem>>, vector<2x6x1x64xf32>
    tpu.vector_store %arg16[%c0_43, %c0_44, %c0_45, %c0_46], %17 {strides = array<i32>} : memref<2x6x18x64xf32, #tpu.memory_space<vmem>>, vector<2x6x1x64xf32>,
    %cst_47 = arith.constant 0.000000e+00 : f32
    %19 = vector.broadcast %cst_47 : f32 to vector<2x6x13x64xf32>
    %c0_48 = arith.constant 0 : index
    %c0_49 = arith.constant 0 : index
    %c5_50 = arith.constant 5 : index
    %c0_51 = arith.constant 0 : index
    %20 = vector.load %arg16[%c0_48, %c0_49, %c5_50, %c0_51] : memref<2x6x18x64xf32, #tpu.memory_space<vmem>>, vector<2x6x13x64xf32>
    tpu.vector_store %arg16[%c0_48, %c0_49, %c5_50, %c0_51], %19 {strides = array<i32>} : memref<2x6x18x64xf32, #tpu.memory_space<vmem>>, vector<2x6x13x64xf32>,
    %c0_52 = arith.constant 0 : index
    %c0_53 = arith.constant 0 : index
    %c0_54 = arith.constant 0 : index
    %c0_55 = arith.constant 0 : index
    %21 = tpu.strided_load %arg1[%c0_52, %c0_53, %c0_54, %c0_55] {strides = array<i32: 1, 2, 2, 1>} : memref<2x34x34x3xf32, #tpu.memory_space<vmem>>, vector<2x16x16x3xf32>
    %c0_56 = arith.constant 0 : index
    %c0_57 = arith.constant 0 : index
    %c1 = arith.constant 1 : index
    %c0_58 = arith.constant 0 : index
    %22 = tpu.strided_load %arg1[%c0_56, %c0_57, %c1, %c0_58] {strides = array<i32: 1, 2, 2, 1>} : memref<2x34x34x3xf32, #tpu.memory_space<vmem>>, vector<2x16x16x3xf32>
    %c0_59 = arith.constant 0 : index
    %c0_60 = arith.constant 0 : index
    %c2 = arith.constant 2 : index
    %c0_61 = arith.constant 0 : index
    %23 = tpu.strided_load %arg1[%c0_59, %c0_60, %c2, %c0_61] {strides = array<i32: 1, 2, 2, 1>} : memref<2x34x34x3xf32, #tpu.memory_space<vmem>>, vector<2x16x16x3xf32>
    %c0_62 = arith.constant 0 : index
    %c0_63 = arith.constant 0 : index
    %c3 = arith.constant 3 : index
    %c0_64 = arith.constant 0 : index
    %24 = tpu.strided_load %arg1[%c0_62, %c0_63, %c3, %c0_64] {strides = array<i32: 1, 2, 2, 1>} : memref<2x34x34x3xf32, #tpu.memory_space<vmem>>, vector<2x16x16x3xf32>
    %c0_65 = arith.constant 0 : index
    %c1_66 = arith.constant 1 : index
    %c0_67 = arith.constant 0 : index
    %c0_68 = arith.constant 0 : index
    %25 = tpu.strided_load %arg1[%c0_65, %c1_66, %c0_67, %c0_68] {strides = array<i32: 1, 2, 2, 1>} : memref<2x34x34x3xf32, #tpu.memory_space<vmem>>, vector<2x16x16x3xf32>
    %c0_69 = arith.constant 0 : index
    %c1_70 = arith.constant 1 : index
    %c1_71 = arith.constant 1 : index
    %c0_72 = arith.constant 0 : index
    %26 = tpu.strided_load %arg1[%c0_69, %c1_70, %c1_71, %c0_72] {strides = array<i32: 1, 2, 2, 1>} : memref<2x34x34x3xf32, #tpu.memory_space<vmem>>, vector<2x16x16x3xf32>
    %c0_73 = arith.constant 0 : index
    %c1_74 = arith.constant 1 : index
    %c2_75 = arith.constant 2 : index
    %c0_76 = arith.constant 0 : index
    %27 = tpu.strided_load %arg1[%c0_73, %c1_74, %c2_75, %c0_76] {strides = array<i32: 1, 2, 2, 1>} : memref<2x34x34x3xf32, #tpu.memory_space<vmem>>, vector<2x16x16x3xf32>
    %c0_77 = arith.constant 0 : index
    %c1_78 = arith.constant 1 : index
    %c3_79 = arith.constant 3 : index
    %c0_80 = arith.constant 0 : index
    %28 = tpu.strided_load %arg1[%c0_77, %c1_78, %c3_79, %c0_80] {strides = array<i32: 1, 2, 2, 1>} : memref<2x34x34x3xf32, #tpu.memory_space<vmem>>, vector<2x16x16x3xf32>
    %c0_81 = arith.constant 0 : index
    %c2_82 = arith.constant 2 : index
    %c0_83 = arith.constant 0 : index
    %c0_84 = arith.constant 0 : index
    %29 = tpu.strided_load %arg1[%c0_81, %c2_82, %c0_83, %c0_84] {strides = array<i32: 1, 2, 2, 1>} : memref<2x34x34x3xf32, #tpu.memory_space<vmem>>, vector<2x16x16x3xf32>
    %c0_85 = arith.constant 0 : index
    %c2_86 = arith.constant 2 : index
    %c1_87 = arith.constant 1 : index
    %c0_88 = arith.constant 0 : index
    %30 = tpu.strided_load %arg1[%c0_85, %c2_86, %c1_87, %c0_88] {strides = array<i32: 1, 2, 2, 1>} : memref<2x34x34x3xf32, #tpu.memory_space<vmem>>, vector<2x16x16x3xf32>
    %c0_89 = arith.constant 0 : index
    %c2_90 = arith.constant 2 : index
    %c2_91 = arith.constant 2 : index
    %c0_92 = arith.constant 0 : index
    %31 = tpu.strided_load %arg1[%c0_89, %c2_90, %c2_91, %c0_92] {strides = array<i32: 1, 2, 2, 1>} : memref<2x34x34x3xf32, #tpu.memory_space<vmem>>, vector<2x16x16x3xf32>
    %c0_93 = arith.constant 0 : index
    %c2_94 = arith.constant 2 : index
    %c3_95 = arith.constant 3 : index
    %c0_96 = arith.constant 0 : index
    %32 = tpu.strided_load %arg1[%c0_93, %c2_94, %c3_95, %c0_96] {strides = array<i32: 1, 2, 2, 1>} : memref<2x34x34x3xf32, #tpu.memory_space<vmem>>, vector<2x16x16x3xf32>
    %c0_97 = arith.constant 0 : index
    %c3_98 = arith.constant 3 : index
    %c0_99 = arith.constant 0 : index
    %c0_100 = arith.constant 0 : index
    %33 = tpu.strided_load %arg1[%c0_97, %c3_98, %c0_99, %c0_100] {strides = array<i32: 1, 2, 2, 1>} : memref<2x34x34x3xf32, #tpu.memory_space<vmem>>, vector<2x16x16x3xf32>
    %c0_101 = arith.constant 0 : index
    %c3_102 = arith.constant 3 : index
    %c1_103 = arith.constant 1 : index
    %c0_104 = arith.constant 0 : index
    %34 = tpu.strided_load %arg1[%c0_101, %c3_102, %c1_103, %c0_104] {strides = array<i32: 1, 2, 2, 1>} : memref<2x34x34x3xf32, #tpu.memory_space<vmem>>, vector<2x16x16x3xf32>
    %c0_105 = arith.constant 0 : index
    %c3_106 = arith.constant 3 : index
    %c2_107 = arith.constant 2 : index
    %c0_108 = arith.constant 0 : index
    %35 = tpu.strided_load %arg1[%c0_105, %c3_106, %c2_107, %c0_108] {strides = array<i32: 1, 2, 2, 1>} : memref<2x34x34x3xf32, #tpu.memory_space<vmem>>, vector<2x16x16x3xf32>
    %c0_109 = arith.constant 0 : index
    %c3_110 = arith.constant 3 : index
    %c3_111 = arith.constant 3 : index
    %c0_112 = arith.constant 0 : index
    %36 = tpu.strided_load %arg1[%c0_109, %c3_110, %c3_111, %c0_112] {strides = array<i32: 1, 2, 2, 1>} : memref<2x34x34x3xf32, #tpu.memory_space<vmem>>, vector<2x16x16x3xf32>
    %37 = tpu.concatenate %21, %22, %23, %24, %25, %26, %27, %28, %29, %30, %31, %32, %33, %34, %35, %36 in 3 : vector<2x16x16x3xf32>, vector<2x16x16x3xf32>, vector<2x16x16x3xf32>, vector<2x16x16x3xf32>, vector<2x16x16x3xf32>, vector<2x16x16x3xf32>, vector<2x16x16x3xf32>, vector<2x16x16x3xf32>, vector<2x16x16x3xf32>, vector<2x16x16x3xf32>, vector<2x16x16x3xf32>, vector<2x16x16x3xf32>, vector<2x16x16x3xf32>, vector<2x16x16x3xf32>, vector<2x16x16x3xf32>, vector<2x16x16x3xf32> -> vector<2x16x16x48xf32>
    %38 = vector.shape_cast %37 : vector<2x16x16x48xf32> to vector<512x48xf32>
    %39 = arith.truncf %38 : vector<512x48xf32> to vector<512x48xbf16>
    %c0_113 = arith.constant 0 : index
    %c0_114 = arith.constant 0 : index
    %40 = vector.load %arg2[%c0_113, %c0_114] : memref<48x16xbf16, #tpu.memory_space<vmem>>, vector<48x16xbf16>
    %cst_115 = arith.constant dense<0.000000e+00> : vector<512x16xf32>
    %41 = tpu.matmul %39, %40, %cst_115 {dimension_numbers = #tpu.dot_dimension_numbers<[1], [0], [0], [1], [0, 0, 1, 1], [], []>} : vector<512x48xbf16>, vector<48x16xbf16>, vector<512x16xf32> -> vector<512x16xf32>
    %cst_116 = arith.constant 2.000000e-01 : f32
    %42 = vector.broadcast %cst_116 : f32 to vector<512x16xf32>
    %43 = arith.mulf %42, %41 : vector<512x16xf32>
    %44 = arith.maximumf %41, %43 : vector<512x16xf32>
    %45 = vector.shape_cast %44 : vector<512x16xf32> to vector<2x16x16x16xf32>
    %c0_117 = arith.constant 0 : index
    %c1_118 = arith.constant 1 : index
    %c1_119 = arith.constant 1 : index
    %c0_120 = arith.constant 0 : index
    %46 = vector.load %arg14[%c0_117, %c1_118, %c1_119, %c0_120] : memref<2x18x18x16xf32, #tpu.memory_space<vmem>>, vector<2x16x16x16xf32>
    tpu.vector_store %arg14[%c0_117, %c1_118, %c1_119, %c0_120], %45 {strides = array<i32>} : memref<2x18x18x16xf32, #tpu.memory_space<vmem>>, vector<2x16x16x16xf32>,
    %c0_121 = arith.constant 0 : index
    %c0_122 = arith.constant 0 : index
    %c0_123 = arith.constant 0 : index
    %c0_124 = arith.constant 0 : index
    %47 = tpu.strided_load %arg14[%c0_121, %c0_122, %c0_123, %c0_124] {strides = array<i32: 1, 2, 2, 1>} : memref<2x18x18x16xf32, #tpu.memory_space<vmem>>, vector<2x8x8x16xf32>
    %c0_125 = arith.constant 0 : index
    %c0_126 = arith.constant 0 : index
    %c1_127 = arith.constant 1 : index
    %c0_128 = arith.constant 0 : index
    %48 = tpu.strided_load %arg14[%c0_125, %c0_126, %c1_127, %c0_128] {strides = array<i32: 1, 2, 2, 1>} : memref<2x18x18x16xf32, #tpu.memory_space<vmem>>, vector<2x8x8x16xf32>
    %c0_129 = arith.constant 0 : index
    %c0_130 = arith.constant 0 : index
    %c2_131 = arith.constant 2 : index
    %c0_132 = arith.constant 0 : index
    %49 = tpu.strided_load %arg14[%c0_129, %c0_130, %c2_131, %c0_132] {strides = array<i32: 1, 2, 2, 1>} : memref<2x18x18x16xf32, #tpu.memory_space<vmem>>, vector<2x8x8x16xf32>
    %c0_133 = arith.constant 0 : index
    %c0_134 = arith.constant 0 : index
    %c3_135 = arith.constant 3 : index
    %c0_136 = arith.constant 0 : index
    %50 = tpu.strided_load %arg14[%c0_133, %c0_134, %c3_135, %c0_136] {strides = array<i32: 1, 2, 2, 1>} : memref<2x18x18x16xf32, #tpu.memory_space<vmem>>, vector<2x8x8x16xf32>
    %c0_137 = arith.constant 0 : index
    %c1_138 = arith.constant 1 : index
    %c0_139 = arith.constant 0 : index
    %c0_140 = arith.constant 0 : index
    %51 = tpu.strided_load %arg14[%c0_137, %c1_138, %c0_139, %c0_140] {strides = array<i32: 1, 2, 2, 1>} : memref<2x18x18x16xf32, #tpu.memory_space<vmem>>, vector<2x8x8x16xf32>
    %c0_141 = arith.constant 0 : index
    %c1_142 = arith.constant 1 : index
    %c1_143 = arith.constant 1 : index
    %c0_144 = arith.constant 0 : index
    %52 = tpu.strided_load %arg14[%c0_141, %c1_142, %c1_143, %c0_144] {strides = array<i32: 1, 2, 2, 1>} : memref<2x18x18x16xf32, #tpu.memory_space<vmem>>, vector<2x8x8x16xf32>
    %c0_145 = arith.constant 0 : index
    %c1_146 = arith.constant 1 : index
    %c2_147 = arith.constant 2 : index
    %c0_148 = arith.constant 0 : index
    %53 = tpu.strided_load %arg14[%c0_145, %c1_146, %c2_147, %c0_148] {strides = array<i32: 1, 2, 2, 1>} : memref<2x18x18x16xf32, #tpu.memory_space<vmem>>, vector<2x8x8x16xf32>
    %c0_149 = arith.constant 0 : index
    %c1_150 = arith.constant 1 : index
    %c3_151 = arith.constant 3 : index
    %c0_152 = arith.constant 0 : index
    %54 = tpu.strided_load %arg14[%c0_149, %c1_150, %c3_151, %c0_152] {strides = array<i32: 1, 2, 2, 1>} : memref<2x18x18x16xf32, #tpu.memory_space<vmem>>, vector<2x8x8x16xf32>
    %c0_153 = arith.constant 0 : index
    %c2_154 = arith.constant 2 : index
    %c0_155 = arith.constant 0 : index
    %c0_156 = arith.constant 0 : index
    %55 = tpu.strided_load %arg14[%c0_153, %c2_154, %c0_155, %c0_156] {strides = array<i32: 1, 2, 2, 1>} : memref<2x18x18x16xf32, #tpu.memory_space<vmem>>, vector<2x8x8x16xf32>
    %c0_157 = arith.constant 0 : index
    %c2_158 = arith.constant 2 : index
    %c1_159 = arith.constant 1 : index
    %c0_160 = arith.constant 0 : index
    %56 = tpu.strided_load %arg14[%c0_157, %c2_158, %c1_159, %c0_160] {strides = array<i32: 1, 2, 2, 1>} : memref<2x18x18x16xf32, #tpu.memory_space<vmem>>, vector<2x8x8x16xf32>
    %c0_161 = arith.constant 0 : index
    %c2_162 = arith.constant 2 : index
    %c2_163 = arith.constant 2 : index
    %c0_164 = arith.constant 0 : index
    %57 = tpu.strided_load %arg14[%c0_161, %c2_162, %c2_163, %c0_164] {strides = array<i32: 1, 2, 2, 1>} : memref<2x18x18x16xf32, #tpu.memory_space<vmem>>, vector<2x8x8x16xf32>
    %c0_165 = arith.constant 0 : index
    %c2_166 = arith.constant 2 : index
    %c3_167 = arith.constant 3 : index
    %c0_168 = arith.constant 0 : index
    %58 = tpu.strided_load %arg14[%c0_165, %c2_166, %c3_167, %c0_168] {strides = array<i32: 1, 2, 2, 1>} : memref<2x18x18x16xf32, #tpu.memory_space<vmem>>, vector<2x8x8x16xf32>
    %c0_169 = arith.constant 0 : index
    %c3_170 = arith.constant 3 : index
    %c0_171 = arith.constant 0 : index
    %c0_172 = arith.constant 0 : index
    %59 = tpu.strided_load %arg14[%c0_169, %c3_170, %c0_171, %c0_172] {strides = array<i32: 1, 2, 2, 1>} : memref<2x18x18x16xf32, #tpu.memory_space<vmem>>, vector<2x8x8x16xf32>
    %c0_173 = arith.constant 0 : index
    %c3_174 = arith.constant 3 : index
    %c1_175 = arith.constant 1 : index
    %c0_176 = arith.constant 0 : index
    %60 = tpu.strided_load %arg14[%c0_173, %c3_174, %c1_175, %c0_176] {strides = array<i32: 1, 2, 2, 1>} : memref<2x18x18x16xf32, #tpu.memory_space<vmem>>, vector<2x8x8x16xf32>
    %c0_177 = arith.constant 0 : index
    %c3_178 = arith.constant 3 : index
    %c2_179 = arith.constant 2 : index
    %c0_180 = arith.constant 0 : index
    %61 = tpu.strided_load %arg14[%c0_177, %c3_178, %c2_179, %c0_180] {strides = array<i32: 1, 2, 2, 1>} : memref<2x18x18x16xf32, #tpu.memory_space<vmem>>, vector<2x8x8x16xf32>
    %c0_181 = arith.constant 0 : index
    %c3_182 = arith.constant 3 : index
    %c3_183 = arith.constant 3 : index
    %c0_184 = arith.constant 0 : index
    %62 = tpu.strided_load %arg14[%c0_181, %c3_182, %c3_183, %c0_184] {strides = array<i32: 1, 2, 2, 1>} : memref<2x18x18x16xf32, #tpu.memory_space<vmem>>, vector<2x8x8x16xf32>
    %63 = tpu.concatenate %47, %48, %49, %50, %51, %52, %53, %54, %55, %56, %57, %58, %59, %60, %61, %62 in 3 : vector<2x8x8x16xf32>, vector<2x8x8x16xf32>, vector<2x8x8x16xf32>, vector<2x8x8x16xf32>, vector<2x8x8x16xf32>, vector<2x8x8x16xf32>, vector<2x8x8x16xf32>, vector<2x8x8x16xf32>, vector<2x8x8x16xf32>, vector<2x8x8x16xf32>, vector<2x8x8x16xf32>, vector<2x8x8x16xf32>, vector<2x8x8x16xf32>, vector<2x8x8x16xf32>, vector<2x8x8x16xf32>, vector<2x8x8x16xf32> -> vector<2x8x8x256xf32>
    %64 = vector.shape_cast %63 : vector<2x8x8x256xf32> to vector<128x256xf32>
    %65 = arith.truncf %64 : vector<128x256xf32> to vector<128x256xbf16>
    %c0_185 = arith.constant 0 : index
    %c0_186 = arith.constant 0 : index
    %66 = vector.load %arg3[%c0_185, %c0_186] : memref<256x32xbf16, #tpu.memory_space<vmem>>, vector<256x32xbf16>
    %cst_187 = arith.constant dense<0.000000e+00> : vector<128x32xf32>
    %67 = tpu.matmul %65, %66, %cst_187 {dimension_numbers = #tpu.dot_dimension_numbers<[1], [0], [0], [1], [0, 0, 1, 1], [], []>} : vector<128x256xbf16>, vector<256x32xbf16>, vector<128x32xf32> -> vector<128x32xf32>
    %cst_188 = arith.constant dense<0.000000e+00> : vector<32xf32>
    %68 = vector.multi_reduction <add>, %67, %cst_188 [0] : vector<128x32xf32> to vector<32xf32>
    %69 = vector.shape_cast %68 : vector<32xf32> to vector<1x32xf32>
    %70 = arith.mulf %67, %67 : vector<128x32xf32>
    %cst_189 = arith.constant dense<0.000000e+00> : vector<32xf32>
    %71 = vector.multi_reduction <add>, %70, %cst_189 [0] : vector<128x32xf32> to vector<32xf32>
    %72 = vector.shape_cast %71 : vector<32xf32> to vector<1x32xf32>
    %cst_190 = arith.constant 7.812500e-03 : f32
    %73 = vector.broadcast %cst_190 : f32 to vector<1x32xf32>
    %74 = arith.mulf %69, %73 : vector<1x32xf32>
    %cst_191 = arith.constant 7.812500e-03 : f32
    %75 = vector.broadcast %cst_191 : f32 to vector<1x32xf32>
    %76 = arith.mulf %72, %75 : vector<1x32xf32>
    %77 = arith.mulf %74, %74 : vector<1x32xf32>
    %78 = arith.subf %76, %77 : vector<1x32xf32>
    %cst_192 = arith.constant 0.000000e+00 : f32
    %79 = vector.broadcast %cst_192 : f32 to vector<1x32xf32>
    %80 = arith.maximumf %78, %79 : vector<1x32xf32>
    %c0_193 = arith.constant 0 : index
    %c0_194 = arith.constant 0 : index
    %81 = vector.load %arg7[%c0_193, %c0_194] : memref<1x32xf32, #tpu.memory_space<vmem>>, vector<1x32xf32>
    %cst_195 = arith.constant 9.99999974E-6 : f32
    %82 = vector.broadcast %cst_195 : f32 to vector<1x32xf32>
    %83 = arith.addf %80, %82 : vector<1x32xf32>
    %84 = math.rsqrt %83 : vector<1x32xf32>
    %85 = arith.mulf %81, %84 : vector<1x32xf32>
    %c0_196 = arith.constant 0 : index
    %c0_197 = arith.constant 0 : index
    %86 = vector.load %arg8[%c0_196, %c0_197] : memref<1x32xf32, #tpu.memory_space<vmem>>, vector<1x32xf32>
    %87 = arith.mulf %74, %85 : vector<1x32xf32>
    %88 = arith.subf %86, %87 : vector<1x32xf32>
    %89 = vector.broadcast %85 : vector<1x32xf32> to vector<128x32xf32>
    %90 = arith.mulf %67, %89 : vector<128x32xf32>
    %91 = vector.broadcast %88 : vector<1x32xf32> to vector<128x32xf32>
    %92 = arith.addf %90, %91 : vector<128x32xf32>
    %cst_198 = arith.constant 2.000000e-01 : f32
    %93 = vector.broadcast %cst_198 : f32 to vector<128x32xf32>
    %94 = arith.mulf %93, %92 : vector<128x32xf32>
    %95 = arith.maximumf %92, %94 : vector<128x32xf32>
    %96 = vector.shape_cast %95 : vector<128x32xf32> to vector<2x8x8x32xf32>
    %c0_199 = arith.constant 0 : index
    %c1_200 = arith.constant 1 : index
    %c1_201 = arith.constant 1 : index
    %c0_202 = arith.constant 0 : index
    %97 = vector.load %arg15[%c0_199, %c1_200, %c1_201, %c0_202] : memref<2x10x18x32xf32, #tpu.memory_space<vmem>>, vector<2x8x8x32xf32>
    tpu.vector_store %arg15[%c0_199, %c1_200, %c1_201, %c0_202], %96 {strides = array<i32>} : memref<2x10x18x32xf32, #tpu.memory_space<vmem>>, vector<2x8x8x32xf32>,
    %c0_203 = arith.constant 0 : index
    %c0_204 = arith.constant 0 : index
    %c0_205 = arith.constant 0 : index
    %c0_206 = arith.constant 0 : index
    %98 = tpu.strided_load %arg15[%c0_203, %c0_204, %c0_205, %c0_206] {strides = array<i32: 1, 2, 2, 1>} : memref<2x10x18x32xf32, #tpu.memory_space<vmem>>, vector<2x4x8x32xf32>
    %c0_207 = arith.constant 0 : index
    %c0_208 = arith.constant 0 : index
    %c1_209 = arith.constant 1 : index
    %c0_210 = arith.constant 0 : index
    %99 = tpu.strided_load %arg15[%c0_207, %c0_208, %c1_209, %c0_210] {strides = array<i32: 1, 2, 2, 1>} : memref<2x10x18x32xf32, #tpu.memory_space<vmem>>, vector<2x4x8x32xf32>
    %c0_211 = arith.constant 0 : index
    %c0_212 = arith.constant 0 : index
    %c2_213 = arith.constant 2 : index
    %c0_214 = arith.constant 0 : index
    %100 = tpu.strided_load %arg15[%c0_211, %c0_212, %c2_213, %c0_214] {strides = array<i32: 1, 2, 2, 1>} : memref<2x10x18x32xf32, #tpu.memory_space<vmem>>, vector<2x4x8x32xf32>
    %c0_215 = arith.constant 0 : index
    %c0_216 = arith.constant 0 : index
    %c3_217 = arith.constant 3 : index
    %c0_218 = arith.constant 0 : index
    %101 = tpu.strided_load %arg15[%c0_215, %c0_216, %c3_217, %c0_218] {strides = array<i32: 1, 2, 2, 1>} : memref<2x10x18x32xf32, #tpu.memory_space<vmem>>, vector<2x4x8x32xf32>
    %c0_219 = arith.constant 0 : index
    %c1_220 = arith.constant 1 : index
    %c0_221 = arith.constant 0 : index
    %c0_222 = arith.constant 0 : index
    %102 = tpu.strided_load %arg15[%c0_219, %c1_220, %c0_221, %c0_222] {strides = array<i32: 1, 2, 2, 1>} : memref<2x10x18x32xf32, #tpu.memory_space<vmem>>, vector<2x4x8x32xf32>
    %c0_223 = arith.constant 0 : index
    %c1_224 = arith.constant 1 : index
    %c1_225 = arith.constant 1 : index
    %c0_226 = arith.constant 0 : index
    %103 = tpu.strided_load %arg15[%c0_223, %c1_224, %c1_225, %c0_226] {strides = array<i32: 1, 2, 2, 1>} : memref<2x10x18x32xf32, #tpu.memory_space<vmem>>, vector<2x4x8x32xf32>
    %c0_227 = arith.constant 0 : index
    %c1_228 = arith.constant 1 : index
    %c2_229 = arith.constant 2 : index
    %c0_230 = arith.constant 0 : index
    %104 = tpu.strided_load %arg15[%c0_227, %c1_228, %c2_229, %c0_230] {strides = array<i32: 1, 2, 2, 1>} : memref<2x10x18x32xf32, #tpu.memory_space<vmem>>, vector<2x4x8x32xf32>
    %c0_231 = arith.constant 0 : index
    %c1_232 = arith.constant 1 : index
    %c3_233 = arith.constant 3 : index
    %c0_234 = arith.constant 0 : index
    %105 = tpu.strided_load %arg15[%c0_231, %c1_232, %c3_233, %c0_234] {strides = array<i32: 1, 2, 2, 1>} : memref<2x10x18x32xf32, #tpu.memory_space<vmem>>, vector<2x4x8x32xf32>
    %c0_235 = arith.constant 0 : index
    %c2_236 = arith.constant 2 : index
    %c0_237 = arith.constant 0 : index
    %c0_238 = arith.constant 0 : index
    %106 = tpu.strided_load %arg15[%c0_235, %c2_236, %c0_237, %c0_238] {strides = array<i32: 1, 2, 2, 1>} : memref<2x10x18x32xf32, #tpu.memory_space<vmem>>, vector<2x4x8x32xf32>
    %c0_239 = arith.constant 0 : index
    %c2_240 = arith.constant 2 : index
    %c1_241 = arith.constant 1 : index
    %c0_242 = arith.constant 0 : index
    %107 = tpu.strided_load %arg15[%c0_239, %c2_240, %c1_241, %c0_242] {strides = array<i32: 1, 2, 2, 1>} : memref<2x10x18x32xf32, #tpu.memory_space<vmem>>, vector<2x4x8x32xf32>
    %c0_243 = arith.constant 0 : index
    %c2_244 = arith.constant 2 : index
    %c2_245 = arith.constant 2 : index
    %c0_246 = arith.constant 0 : index
    %108 = tpu.strided_load %arg15[%c0_243, %c2_244, %c2_245, %c0_246] {strides = array<i32: 1, 2, 2, 1>} : memref<2x10x18x32xf32, #tpu.memory_space<vmem>>, vector<2x4x8x32xf32>
    %c0_247 = arith.constant 0 : index
    %c2_248 = arith.constant 2 : index
    %c3_249 = arith.constant 3 : index
    %c0_250 = arith.constant 0 : index
    %109 = tpu.strided_load %arg15[%c0_247, %c2_248, %c3_249, %c0_250] {strides = array<i32: 1, 2, 2, 1>} : memref<2x10x18x32xf32, #tpu.memory_space<vmem>>, vector<2x4x8x32xf32>
    %c0_251 = arith.constant 0 : index
    %c3_252 = arith.constant 3 : index
    %c0_253 = arith.constant 0 : index
    %c0_254 = arith.constant 0 : index
    %110 = tpu.strided_load %arg15[%c0_251, %c3_252, %c0_253, %c0_254] {strides = array<i32: 1, 2, 2, 1>} : memref<2x10x18x32xf32, #tpu.memory_space<vmem>>, vector<2x4x8x32xf32>
    %c0_255 = arith.constant 0 : index
    %c3_256 = arith.constant 3 : index
    %c1_257 = arith.constant 1 : index
    %c0_258 = arith.constant 0 : index
    %111 = tpu.strided_load %arg15[%c0_255, %c3_256, %c1_257, %c0_258] {strides = array<i32: 1, 2, 2, 1>} : memref<2x10x18x32xf32, #tpu.memory_space<vmem>>, vector<2x4x8x32xf32>
    %c0_259 = arith.constant 0 : index
    %c3_260 = arith.constant 3 : index
    %c2_261 = arith.constant 2 : index
    %c0_262 = arith.constant 0 : index
    %112 = tpu.strided_load %arg15[%c0_259, %c3_260, %c2_261, %c0_262] {strides = array<i32: 1, 2, 2, 1>} : memref<2x10x18x32xf32, #tpu.memory_space<vmem>>, vector<2x4x8x32xf32>
    %c0_263 = arith.constant 0 : index
    %c3_264 = arith.constant 3 : index
    %c3_265 = arith.constant 3 : index
    %c0_266 = arith.constant 0 : index
    %113 = tpu.strided_load %arg15[%c0_263, %c3_264, %c3_265, %c0_266] {strides = array<i32: 1, 2, 2, 1>} : memref<2x10x18x32xf32, #tpu.memory_space<vmem>>, vector<2x4x8x32xf32>
    %114 = tpu.concatenate %98, %99, %100, %101, %102, %103, %104, %105, %106, %107, %108, %109, %110, %111, %112, %113 in 3 : vector<2x4x8x32xf32>, vector<2x4x8x32xf32>, vector<2x4x8x32xf32>, vector<2x4x8x32xf32>, vector<2x4x8x32xf32>, vector<2x4x8x32xf32>, vector<2x4x8x32xf32>, vector<2x4x8x32xf32>, vector<2x4x8x32xf32>, vector<2x4x8x32xf32>, vector<2x4x8x32xf32>, vector<2x4x8x32xf32>, vector<2x4x8x32xf32>, vector<2x4x8x32xf32>, vector<2x4x8x32xf32>, vector<2x4x8x32xf32> -> vector<2x4x8x512xf32>
    %115 = vector.shape_cast %114 : vector<2x4x8x512xf32> to vector<64x512xf32>
    %116 = arith.truncf %115 : vector<64x512xf32> to vector<64x512xbf16>
    %c0_267 = arith.constant 0 : index
    %c0_268 = arith.constant 0 : index
    %117 = vector.load %arg4[%c0_267, %c0_268] : memref<512x64xbf16, #tpu.memory_space<vmem>>, vector<512x64xbf16>
    %cst_269 = arith.constant dense<0.000000e+00> : vector<64x64xf32>
    %118 = tpu.matmul %116, %117, %cst_269 {dimension_numbers = #tpu.dot_dimension_numbers<[1], [0], [0], [1], [0, 0, 1, 1], [], []>} : vector<64x512xbf16>, vector<512x64xbf16>, vector<64x64xf32> -> vector<64x64xf32>
    %119 = tpu.iota {dimensions = array<i32: 0>} : vector<64x1xi32>
    %c8_i32 = arith.constant 8 : i32
    %c0_i32 = arith.constant 0 : i32
    %120 = arith.cmpi eq, %c8_i32, %c0_i32 : i32
    %c1_i32 = arith.constant 1 : i32
    %121 = arith.select %120, %c1_i32, %c8_i32 : i32
    %122 = vector.broadcast %121 : i32 to vector<64x1xi32>
    %123 = arith.remsi %119, %122 : vector<64x1xi32>
    %c0_i32_270 = arith.constant 0 : i32
    %124 = vector.broadcast %c0_i32_270 : i32 to vector<64x1xi32>
    %125 = arith.cmpi ne, %123, %124 : vector<64x1xi32>
    %c0_i32_271 = arith.constant 0 : i32
    %126 = vector.broadcast %c0_i32_271 : i32 to vector<64x1xi32>
    %127 = arith.cmpi slt, %123, %126 : vector<64x1xi32>
    %c0_i32_272 = arith.constant 0 : i32
    %128 = arith.cmpi slt, %121, %c0_i32_272 : i32
    %129 = vector.broadcast %128 : i1 to vector<64x1xi1>
    %130 = vector.broadcast %129 : vector<64x1xi1> to vector<64x1xi1>
    %131 = arith.xori %127, %130 : vector<64x1xi1>
    %132 = arith.andi %131, %125 : vector<64x1xi1>
    %133 = vector.broadcast %121 : i32 to vector<64x1xi32>
    %134 = arith.addi %123, %133 : vector<64x1xi32>
    %135 = arith.select %132, %134, %123 : vector<64x1xi1>, vector<64x1xi32>
    %c4_i32 = arith.constant 4 : i32
    %136 = vector.broadcast %c4_i32 : i32 to vector<64x1xi32>
    %137 = arith.cmpi slt, %135, %136 : vector<64x1xi32>
    %138 = arith.extui %137 : vector<64x1xi1> to vector<64x1xi32>
    %139 = arith.sitofp %138 : vector<64x1xi32> to vector<64x1xf32>
    %140 = vector.broadcast %139 : vector<64x1xf32> to vector<64x64xf32>
    %141 = arith.mulf %118, %140 : vector<64x64xf32>
    %cst_273 = arith.constant dense<0.000000e+00> : vector<64xf32>
    %142 = vector.multi_reduction <add>, %141, %cst_273 [0] : vector<64x64xf32> to vector<64xf32>
    %143 = vector.shape_cast %142 : vector<64xf32> to vector<1x64xf32>
    %144 = arith.mulf %141, %118 : vector<64x64xf32>
    %cst_274 = arith.constant dense<0.000000e+00> : vector<64xf32>
    %145 = vector.multi_reduction <add>, %144, %cst_274 [0] : vector<64x64xf32> to vector<64xf32>
    %146 = vector.shape_cast %145 : vector<64xf32> to vector<1x64xf32>
    %cst_275 = arith.constant 3.125000e-02 : f32
    %147 = vector.broadcast %cst_275 : f32 to vector<1x64xf32>
    %148 = arith.mulf %143, %147 : vector<1x64xf32>
    %cst_276 = arith.constant 3.125000e-02 : f32
    %149 = vector.broadcast %cst_276 : f32 to vector<1x64xf32>
    %150 = arith.mulf %146, %149 : vector<1x64xf32>
    %151 = arith.mulf %148, %148 : vector<1x64xf32>
    %152 = arith.subf %150, %151 : vector<1x64xf32>
    %cst_277 = arith.constant 0.000000e+00 : f32
    %153 = vector.broadcast %cst_277 : f32 to vector<1x64xf32>
    %154 = arith.maximumf %152, %153 : vector<1x64xf32>
    %c0_278 = arith.constant 0 : index
    %c0_279 = arith.constant 0 : index
    %155 = vector.load %arg9[%c0_278, %c0_279] : memref<1x64xf32, #tpu.memory_space<vmem>>, vector<1x64xf32>
    %cst_280 = arith.constant 9.99999974E-6 : f32
    %156 = vector.broadcast %cst_280 : f32 to vector<1x64xf32>
    %157 = arith.addf %154, %156 : vector<1x64xf32>
    %158 = math.rsqrt %157 : vector<1x64xf32>
    %159 = arith.mulf %155, %158 : vector<1x64xf32>
    %c0_281 = arith.constant 0 : index
    %c0_282 = arith.constant 0 : index
    %160 = vector.load %arg10[%c0_281, %c0_282] : memref<1x64xf32, #tpu.memory_space<vmem>>, vector<1x64xf32>
    %161 = arith.mulf %148, %159 : vector<1x64xf32>
    %162 = arith.subf %160, %161 : vector<1x64xf32>
    %163 = vector.broadcast %159 : vector<1x64xf32> to vector<64x64xf32>
    %164 = arith.mulf %118, %163 : vector<64x64xf32>
    %165 = vector.broadcast %162 : vector<1x64xf32> to vector<64x64xf32>
    %166 = arith.addf %164, %165 : vector<64x64xf32>
    %cst_283 = arith.constant 2.000000e-01 : f32
    %167 = vector.broadcast %cst_283 : f32 to vector<64x64xf32>
    %168 = arith.mulf %167, %166 : vector<64x64xf32>
    %169 = arith.maximumf %166, %168 : vector<64x64xf32>
    %170 = vector.shape_cast %169 : vector<64x64xf32> to vector<2x4x8x64xf32>
    %171 = vector.extract_strided_slice %170 {offsets = [0, 0, 0, 0], sizes = [2, 4, 4, 64], strides = [1, 1, 1, 1]} : vector<2x4x8x64xf32> to vector<2x4x4x64xf32>
    %c0_284 = arith.constant 0 : index
    %c1_285 = arith.constant 1 : index
    %c1_286 = arith.constant 1 : index
    %c0_287 = arith.constant 0 : index
    %172 = vector.load %arg16[%c0_284, %c1_285, %c1_286, %c0_287] : memref<2x6x18x64xf32, #tpu.memory_space<vmem>>, vector<2x4x4x64xf32>
    tpu.vector_store %arg16[%c0_284, %c1_285, %c1_286, %c0_287], %171 {strides = array<i32>} : memref<2x6x18x64xf32, #tpu.memory_space<vmem>>, vector<2x4x4x64xf32>,
    %c0_288 = arith.constant 0 : index
    %c0_289 = arith.constant 0 : index
    %c0_290 = arith.constant 0 : index
    %c0_291 = arith.constant 0 : index
    %173 = tpu.strided_load %arg16[%c0_288, %c0_289, %c0_290, %c0_291] {strides = array<i32: 1, 2, 2, 1>} : memref<2x6x18x64xf32, #tpu.memory_space<vmem>>, vector<2x2x8x64xf32>
    %c0_292 = arith.constant 0 : index
    %c0_293 = arith.constant 0 : index
    %c1_294 = arith.constant 1 : index
    %c0_295 = arith.constant 0 : index
    %174 = tpu.strided_load %arg16[%c0_292, %c0_293, %c1_294, %c0_295] {strides = array<i32: 1, 2, 2, 1>} : memref<2x6x18x64xf32, #tpu.memory_space<vmem>>, vector<2x2x8x64xf32>
    %c0_296 = arith.constant 0 : index
    %c0_297 = arith.constant 0 : index
    %c2_298 = arith.constant 2 : index
    %c0_299 = arith.constant 0 : index
    %175 = tpu.strided_load %arg16[%c0_296, %c0_297, %c2_298, %c0_299] {strides = array<i32: 1, 2, 2, 1>} : memref<2x6x18x64xf32, #tpu.memory_space<vmem>>, vector<2x2x8x64xf32>
    %c0_300 = arith.constant 0 : index
    %c0_301 = arith.constant 0 : index
    %c3_302 = arith.constant 3 : index
    %c0_303 = arith.constant 0 : index
    %176 = tpu.strided_load %arg16[%c0_300, %c0_301, %c3_302, %c0_303] {strides = array<i32: 1, 2, 2, 1>} : memref<2x6x18x64xf32, #tpu.memory_space<vmem>>, vector<2x2x8x64xf32>
    %c0_304 = arith.constant 0 : index
    %c1_305 = arith.constant 1 : index
    %c0_306 = arith.constant 0 : index
    %c0_307 = arith.constant 0 : index
    %177 = tpu.strided_load %arg16[%c0_304, %c1_305, %c0_306, %c0_307] {strides = array<i32: 1, 2, 2, 1>} : memref<2x6x18x64xf32, #tpu.memory_space<vmem>>, vector<2x2x8x64xf32>
    %c0_308 = arith.constant 0 : index
    %c1_309 = arith.constant 1 : index
    %c1_310 = arith.constant 1 : index
    %c0_311 = arith.constant 0 : index
    %178 = tpu.strided_load %arg16[%c0_308, %c1_309, %c1_310, %c0_311] {strides = array<i32: 1, 2, 2, 1>} : memref<2x6x18x64xf32, #tpu.memory_space<vmem>>, vector<2x2x8x64xf32>
    %c0_312 = arith.constant 0 : index
    %c1_313 = arith.constant 1 : index
    %c2_314 = arith.constant 2 : index
    %c0_315 = arith.constant 0 : index
    %179 = tpu.strided_load %arg16[%c0_312, %c1_313, %c2_314, %c0_315] {strides = array<i32: 1, 2, 2, 1>} : memref<2x6x18x64xf32, #tpu.memory_space<vmem>>, vector<2x2x8x64xf32>
    %c0_316 = arith.constant 0 : index
    %c1_317 = arith.constant 1 : index
    %c3_318 = arith.constant 3 : index
    %c0_319 = arith.constant 0 : index
    %180 = tpu.strided_load %arg16[%c0_316, %c1_317, %c3_318, %c0_319] {strides = array<i32: 1, 2, 2, 1>} : memref<2x6x18x64xf32, #tpu.memory_space<vmem>>, vector<2x2x8x64xf32>
    %c0_320 = arith.constant 0 : index
    %c2_321 = arith.constant 2 : index
    %c0_322 = arith.constant 0 : index
    %c0_323 = arith.constant 0 : index
    %181 = tpu.strided_load %arg16[%c0_320, %c2_321, %c0_322, %c0_323] {strides = array<i32: 1, 2, 2, 1>} : memref<2x6x18x64xf32, #tpu.memory_space<vmem>>, vector<2x2x8x64xf32>
    %c0_324 = arith.constant 0 : index
    %c2_325 = arith.constant 2 : index
    %c1_326 = arith.constant 1 : index
    %c0_327 = arith.constant 0 : index
    %182 = tpu.strided_load %arg16[%c0_324, %c2_325, %c1_326, %c0_327] {strides = array<i32: 1, 2, 2, 1>} : memref<2x6x18x64xf32, #tpu.memory_space<vmem>>, vector<2x2x8x64xf32>
    %c0_328 = arith.constant 0 : index
    %c2_329 = arith.constant 2 : index
    %c2_330 = arith.constant 2 : index
    %c0_331 = arith.constant 0 : index
    %183 = tpu.strided_load %arg16[%c0_328, %c2_329, %c2_330, %c0_331] {strides = array<i32: 1, 2, 2, 1>} : memref<2x6x18x64xf32, #tpu.memory_space<vmem>>, vector<2x2x8x64xf32>
    %c0_332 = arith.constant 0 : index
    %c2_333 = arith.constant 2 : index
    %c3_334 = arith.constant 3 : index
    %c0_335 = arith.constant 0 : index
    %184 = tpu.strided_load %arg16[%c0_332, %c2_333, %c3_334, %c0_335] {strides = array<i32: 1, 2, 2, 1>} : memref<2x6x18x64xf32, #tpu.memory_space<vmem>>, vector<2x2x8x64xf32>
    %c0_336 = arith.constant 0 : index
    %c3_337 = arith.constant 3 : index
    %c0_338 = arith.constant 0 : index
    %c0_339 = arith.constant 0 : index
    %185 = tpu.strided_load %arg16[%c0_336, %c3_337, %c0_338, %c0_339] {strides = array<i32: 1, 2, 2, 1>} : memref<2x6x18x64xf32, #tpu.memory_space<vmem>>, vector<2x2x8x64xf32>
    %c0_340 = arith.constant 0 : index
    %c3_341 = arith.constant 3 : index
    %c1_342 = arith.constant 1 : index
    %c0_343 = arith.constant 0 : index
    %186 = tpu.strided_load %arg16[%c0_340, %c3_341, %c1_342, %c0_343] {strides = array<i32: 1, 2, 2, 1>} : memref<2x6x18x64xf32, #tpu.memory_space<vmem>>, vector<2x2x8x64xf32>
    %c0_344 = arith.constant 0 : index
    %c3_345 = arith.constant 3 : index
    %c2_346 = arith.constant 2 : index
    %c0_347 = arith.constant 0 : index
    %187 = tpu.strided_load %arg16[%c0_344, %c3_345, %c2_346, %c0_347] {strides = array<i32: 1, 2, 2, 1>} : memref<2x6x18x64xf32, #tpu.memory_space<vmem>>, vector<2x2x8x64xf32>
    %c0_348 = arith.constant 0 : index
    %c3_349 = arith.constant 3 : index
    %c3_350 = arith.constant 3 : index
    %c0_351 = arith.constant 0 : index
    %188 = tpu.strided_load %arg16[%c0_348, %c3_349, %c3_350, %c0_351] {strides = array<i32: 1, 2, 2, 1>} : memref<2x6x18x64xf32, #tpu.memory_space<vmem>>, vector<2x2x8x64xf32>
    %189 = tpu.concatenate %173, %174, %175, %176, %177, %178, %179, %180, %181, %182, %183, %184, %185, %186, %187, %188 in 3 : vector<2x2x8x64xf32>, vector<2x2x8x64xf32>, vector<2x2x8x64xf32>, vector<2x2x8x64xf32>, vector<2x2x8x64xf32>, vector<2x2x8x64xf32>, vector<2x2x8x64xf32>, vector<2x2x8x64xf32>, vector<2x2x8x64xf32>, vector<2x2x8x64xf32>, vector<2x2x8x64xf32>, vector<2x2x8x64xf32>, vector<2x2x8x64xf32>, vector<2x2x8x64xf32>, vector<2x2x8x64xf32>, vector<2x2x8x64xf32> -> vector<2x2x8x1024xf32>
    %190 = vector.shape_cast %189 : vector<2x2x8x1024xf32> to vector<32x1024xf32>
    %191 = arith.truncf %190 : vector<32x1024xf32> to vector<32x1024xbf16>
    %c0_352 = arith.constant 0 : index
    %c0_353 = arith.constant 0 : index
    %192 = vector.load %arg5[%c0_352, %c0_353] : memref<1024x128xbf16, #tpu.memory_space<vmem>>, vector<1024x128xbf16>
    %cst_354 = arith.constant dense<0.000000e+00> : vector<32x128xf32>
    %193 = tpu.matmul %191, %192, %cst_354 {dimension_numbers = #tpu.dot_dimension_numbers<[1], [0], [0], [1], [0, 0, 1, 1], [], []>} : vector<32x1024xbf16>, vector<1024x128xbf16>, vector<32x128xf32> -> vector<32x128xf32>
    %194 = tpu.iota {dimensions = array<i32: 0>} : vector<32x1xi32>
    %c8_i32_355 = arith.constant 8 : i32
    %c0_i32_356 = arith.constant 0 : i32
    %195 = arith.cmpi eq, %c8_i32_355, %c0_i32_356 : i32
    %c1_i32_357 = arith.constant 1 : i32
    %196 = arith.select %195, %c1_i32_357, %c8_i32_355 : i32
    %197 = vector.broadcast %196 : i32 to vector<32x1xi32>
    %198 = arith.remsi %194, %197 : vector<32x1xi32>
    %c0_i32_358 = arith.constant 0 : i32
    %199 = vector.broadcast %c0_i32_358 : i32 to vector<32x1xi32>
    %200 = arith.cmpi ne, %198, %199 : vector<32x1xi32>
    %c0_i32_359 = arith.constant 0 : i32
    %201 = vector.broadcast %c0_i32_359 : i32 to vector<32x1xi32>
    %202 = arith.cmpi slt, %198, %201 : vector<32x1xi32>
    %c0_i32_360 = arith.constant 0 : i32
    %203 = arith.cmpi slt, %196, %c0_i32_360 : i32
    %204 = vector.broadcast %203 : i1 to vector<32x1xi1>
    %205 = vector.broadcast %204 : vector<32x1xi1> to vector<32x1xi1>
    %206 = arith.xori %202, %205 : vector<32x1xi1>
    %207 = arith.andi %206, %200 : vector<32x1xi1>
    %208 = vector.broadcast %196 : i32 to vector<32x1xi32>
    %209 = arith.addi %198, %208 : vector<32x1xi32>
    %210 = arith.select %207, %209, %198 : vector<32x1xi1>, vector<32x1xi32>
    %c2_i32 = arith.constant 2 : i32
    %211 = vector.broadcast %c2_i32 : i32 to vector<32x1xi32>
    %212 = arith.cmpi slt, %210, %211 : vector<32x1xi32>
    %213 = arith.extui %212 : vector<32x1xi1> to vector<32x1xi32>
    %214 = arith.sitofp %213 : vector<32x1xi32> to vector<32x1xf32>
    %215 = vector.broadcast %214 : vector<32x1xf32> to vector<32x128xf32>
    %216 = arith.mulf %193, %215 : vector<32x128xf32>
    %cst_361 = arith.constant dense<0.000000e+00> : vector<128xf32>
    %217 = vector.multi_reduction <add>, %216, %cst_361 [0] : vector<32x128xf32> to vector<128xf32>
    %218 = vector.shape_cast %217 : vector<128xf32> to vector<1x128xf32>
    %219 = arith.mulf %216, %193 : vector<32x128xf32>
    %cst_362 = arith.constant dense<0.000000e+00> : vector<128xf32>
    %220 = vector.multi_reduction <add>, %219, %cst_362 [0] : vector<32x128xf32> to vector<128xf32>
    %221 = vector.shape_cast %220 : vector<128xf32> to vector<1x128xf32>
    %cst_363 = arith.constant 1.250000e-01 : f32
    %222 = vector.broadcast %cst_363 : f32 to vector<1x128xf32>
    %223 = arith.mulf %218, %222 : vector<1x128xf32>
    %cst_364 = arith.constant 1.250000e-01 : f32
    %224 = vector.broadcast %cst_364 : f32 to vector<1x128xf32>
    %225 = arith.mulf %221, %224 : vector<1x128xf32>
    %226 = arith.mulf %223, %223 : vector<1x128xf32>
    %227 = arith.subf %225, %226 : vector<1x128xf32>
    %cst_365 = arith.constant 0.000000e+00 : f32
    %228 = vector.broadcast %cst_365 : f32 to vector<1x128xf32>
    %229 = arith.maximumf %227, %228 : vector<1x128xf32>
    %c0_366 = arith.constant 0 : index
    %c0_367 = arith.constant 0 : index
    %230 = vector.load %arg11[%c0_366, %c0_367] : memref<1x128xf32, #tpu.memory_space<vmem>>, vector<1x128xf32>
    %cst_368 = arith.constant 9.99999974E-6 : f32
    %231 = vector.broadcast %cst_368 : f32 to vector<1x128xf32>
    %232 = arith.addf %229, %231 : vector<1x128xf32>
    %233 = math.rsqrt %232 : vector<1x128xf32>
    %234 = arith.mulf %230, %233 : vector<1x128xf32>
    %c0_369 = arith.constant 0 : index
    %c0_370 = arith.constant 0 : index
    %235 = vector.load %arg12[%c0_369, %c0_370] : memref<1x128xf32, #tpu.memory_space<vmem>>, vector<1x128xf32>
    %236 = arith.mulf %223, %234 : vector<1x128xf32>
    %237 = arith.subf %235, %236 : vector<1x128xf32>
    %238 = vector.broadcast %234 : vector<1x128xf32> to vector<32x128xf32>
    %239 = arith.mulf %193, %238 : vector<32x128xf32>
    %240 = vector.broadcast %237 : vector<1x128xf32> to vector<32x128xf32>
    %241 = arith.addf %239, %240 : vector<32x128xf32>
    %cst_371 = arith.constant 2.000000e-01 : f32
    %242 = vector.broadcast %cst_371 : f32 to vector<32x128xf32>
    %243 = arith.mulf %242, %241 : vector<32x128xf32>
    %244 = arith.maximumf %241, %243 : vector<32x128xf32>
    %c0_372 = arith.constant 0 : index
    %c0_373 = arith.constant 0 : index
    %245 = vector.load %arg6[%c0_372, %c0_373] : memref<32x128xf32, #tpu.memory_space<vmem>>, vector<32x128xf32>
    %246 = arith.mulf %244, %245 : vector<32x128xf32>
    %247 = vector.shape_cast %246 : vector<32x128xf32> to vector<2x16x128xf32>
    %cst_374 = arith.constant dense<0.000000e+00> : vector<2x16xf32>
    %248 = vector.multi_reduction <add>, %247, %cst_374 [2] : vector<2x16x128xf32> to vector<2x16xf32>
    %249 = vector.shape_cast %248 : vector<2x16xf32> to vector<2x16x1xf32>
    %cst_375 = arith.constant dense<0.000000e+00> : vector<2x1xf32>
    %250 = vector.multi_reduction <add>, %249, %cst_375 [1] : vector<2x16x1xf32> to vector<2x1xf32>
    %251 = vector.shape_cast %250 : vector<2x1xf32> to vector<2x1x1xf32>
    %252 = arith.negf %251 : vector<2x1x1xf32>
    %253 = math.exp %252 : vector<2x1x1xf32>
    %cst_376 = arith.constant 1.000000e+00 : f32
    %254 = vector.broadcast %cst_376 : f32 to vector<2x1x1xf32>
    %255 = arith.addf %254, %253 : vector<2x1x1xf32>
    %256 = arith.divf %254, %255 : vector<2x1x1xf32>
    %257 = vector.shape_cast %256 : vector<2x1x1xf32> to vector<2x1x1x1xf32>
    %c0_377 = arith.constant 0 : index
    %c0_378 = arith.constant 0 : index
    %c0_379 = arith.constant 0 : index
    %c0_380 = arith.constant 0 : index
    %258 = vector.load %arg13[%c0_377, %c0_378, %c0_379, %c0_380] : memref<2x1x1x1xf32, #tpu.memory_space<vmem>>, vector<2x1x1x1xf32>
    tpu.vector_store %arg13[%c0_377, %c0_378, %c0_379, %c0_380], %257 {strides = array<i32>} : memref<2x1x1x1xf32, #tpu.memory_space<vmem>>, vector<2x1x1x1xf32>,
    return
  }
  func.func @transform_0(%arg0: i32) -> (i32, i32, i32, i32) {
    %c0_i32 = arith.constant 0 : i32
    %c0_i32_0 = arith.constant 0 : i32
    %c0_i32_1 = arith.constant 0 : i32
    %c0_i32_2 = arith.constant 0 : i32
    %c0_i32_3 = arith.constant 0 : i32
    return %c0_i32, %c0_i32_0, %c0_i32_1, %c0_i32_2 : i32, i32, i32, i32
  }
  func.func @transform_1(%arg0: i32) -> (i32, i32) {
    %c0_i32 = arith.constant 0 : i32
    %c0_i32_0 = arith.constant 0 : i32
    %c0_i32_1 = arith.constant 0 : i32
    return %c0_i32, %c0_i32_0 : i32, i32
  }
  func.func @transform_2(%arg0: i32) -> (i32, i32) {
    %c0_i32 = arith.constant 0 : i32
    %c0_i32_0 = arith.constant 0 : i32
    %c0_i32_1 = arith.constant 0 : i32
    return %c0_i32, %c0_i32_0 : i32, i32
  }
  func.func @transform_3(%arg0: i32) -> (i32, i32) {
    %c0_i32 = arith.constant 0 : i32
    %c0_i32_0 = arith.constant 0 : i32
    %c0_i32_1 = arith.constant 0 : i32
    return %c0_i32, %c0_i32_0 : i32, i32
  }
  func.func @transform_4(%arg0: i32) -> (i32, i32) {
    %c0_i32 = arith.constant 0 : i32
    %c0_i32_0 = arith.constant 0 : i32
    %c0_i32_1 = arith.constant 0 : i32
    return %c0_i32, %c0_i32_0 : i32, i32
  }
  func.func @transform_5(%arg0: i32) -> (i32, i32) {
    %c0_i32 = arith.constant 0 : i32
    %c0_i32_0 = arith.constant 0 : i32
    %c0_i32_1 = arith.constant 0 : i32
    return %c0_i32, %c0_i32_0 : i32, i32
  }
  func.func @transform_6(%arg0: i32) -> (i32, i32) {
    %c0_i32 = arith.constant 0 : i32
    %c0_i32_0 = arith.constant 0 : i32
    %c0_i32_1 = arith.constant 0 : i32
    return %c0_i32, %c0_i32_0 : i32, i32
  }
  func.func @transform_7(%arg0: i32) -> (i32, i32) {
    %c0_i32 = arith.constant 0 : i32
    %c0_i32_0 = arith.constant 0 : i32
    %c0_i32_1 = arith.constant 0 : i32
    return %c0_i32, %c0_i32_0 : i32, i32
  }
  func.func @transform_8(%arg0: i32) -> (i32, i32) {
    %c0_i32 = arith.constant 0 : i32
    %c0_i32_0 = arith.constant 0 : i32
    %c0_i32_1 = arith.constant 0 : i32
    return %c0_i32, %c0_i32_0 : i32, i32
  }
  func.func @transform_9(%arg0: i32) -> (i32, i32) {
    %c0_i32 = arith.constant 0 : i32
    %c0_i32_0 = arith.constant 0 : i32
    %c0_i32_1 = arith.constant 0 : i32
    return %c0_i32, %c0_i32_0 : i32, i32
  }
  func.func @transform_10(%arg0: i32) -> (i32, i32) {
    %c0_i32 = arith.constant 0 : i32
    %c0_i32_0 = arith.constant 0 : i32
    %c0_i32_1 = arith.constant 0 : i32
    return %c0_i32, %c0_i32_0 : i32, i32
  }
  func.func @transform_11(%arg0: i32) -> (i32, i32) {
    %c0_i32 = arith.constant 0 : i32
    %c0_i32_0 = arith.constant 0 : i32
    %c0_i32_1 = arith.constant 0 : i32
    return %c0_i32, %c0_i32_0 : i32, i32
  }
  func.func @transform_12(%arg0: i32) -> (i32, i32, i32, i32) {
    %c0_i32 = arith.constant 0 : i32
    %c0_i32_0 = arith.constant 0 : i32
    %c0_i32_1 = arith.constant 0 : i32
    %c0_i32_2 = arith.constant 0 : i32
    %c0_i32_3 = arith.constant 0 : i32
    return %c0_i32, %c0_i32_0, %c0_i32_1, %c0_i32_2 : i32, i32, i32, i32
  }
}

</mosaic_0001>

<llo_original>
// kernel: discriminator_forward.1
$region0: #{discriminator_forward.1}
  #allocation0 [shape = 'u32[]', space=smem, size = 0x4, offset = 0x4, fixed_abs, tag = 'smem constant byte address 0x4 - core index']
  #allocation1 [shape = 'u32[144,128]{1,0:T(1,128)}', space=vmem, size = 0x12000, scoped, tag = 'internal scratch']
  #allocation2 [shape = 'f32[2,18,18,16]{3,2,1,0:T(8,128)}', space=vmem, size = 0x6c000, scoped, tag = 'scratch operand']
  #allocation3 [shape = 'f32[2,10,18,32]{3,2,1,0:T(8,128)}', space=vmem, size = 0x3c000, scoped, tag = 'scratch operand']
  #allocation4 [shape = 'f32[2,6,18,64]{3,2,1,0:T(8,128)}', space=vmem, size = 0x24000, scoped, tag = 'scratch operand']
  %s0 = inlined_call_operand.vmem [shape: f32[2,34,34,3], index: 0, kind: input, shape index: {}]
  %s1 = inlined_call_operand.vmem [shape: bf16[48,16], index: 1, kind: input, shape index: {}]
  %s2 = inlined_call_operand.vmem [shape: bf16[256,32], index: 2, kind: input, shape index: {}]
  %s3 = inlined_call_operand.vmem [shape: bf16[512,64], index: 3, kind: input, shape index: {}]
  %s4 = inlined_call_operand.vmem [shape: bf16[1024,128], index: 4, kind: input, shape index: {}]
  %s5 = inlined_call_operand.vmem [shape: f32[32,128], index: 5, kind: input, shape index: {}]
  %s6 = inlined_call_operand.vmem [shape: f32[1,32], index: 6, kind: input, shape index: {}]
  %s7 = inlined_call_operand.vmem [shape: f32[1,32], index: 7, kind: input, shape index: {}]
  %s8 = inlined_call_operand.vmem [shape: f32[1,64], index: 8, kind: input, shape index: {}]
  %s9 = inlined_call_operand.vmem [shape: f32[1,64], index: 9, kind: input, shape index: {}]
  %s10 = inlined_call_operand.vmem [shape: f32[1,128], index: 10, kind: input, shape index: {}]
  %s11 = inlined_call_operand.vmem [shape: f32[1,128], index: 11, kind: input, shape index: {}]
  %s12 = inlined_call_operand.vmem [shape: f32[2,1,1,1], index: 12, kind: output, shape index: {}]
  %s13 = sld [smem:[#allocation0]]
  $region58: #{discriminator_forward.1} parent=0
    _
  %s15 = ssub.s32 1, %s13
  %s16 = scalar_select 0, %s15, %s13
  // Predicated region
  $region2: #{discriminator_forward.1} parent=0 // pred_check
    _
  $region3: #{discriminator_forward.1} parent=0 // pred_check_branch
    %18 = sbr.rel (0) target = $region5
  $region4: #{discriminator_forward.1} parent=0 // pred_region
    _
  $region5: #{discriminator_forward.1} parent=0 // pred_fallthru
    _
  // Predicated region
  $region6: #{discriminator_forward.1} parent=0 // pred_check
    _
  $region7: #{discriminator_forward.1} parent=0 // pred_check_branch
    %20 = sbr.rel (0) target = $region9
  $region8: #{discriminator_forward.1} parent=0 // pred_region
    _
  $region9: #{discriminator_forward.1} parent=0 // pred_fallthru
    _
  // Predicated region
  $region10: #{discriminator_forward.1} parent=0 // pred_check
    _
  $region11: #{discriminator_forward.1} parent=0 // pred_check_branch
    %22 = sbr.rel (0) target = $region13
  $region12: #{discriminator_forward.1} parent=0 // pred_region
    _
  $region13: #{discriminator_forward.1} parent=0 // pred_fallthru
    _
  // Predicated region
  $region14: #{discriminator_forward.1} parent=0 // pred_check
    _
  $region15: #{discriminator_forward.1} parent=0 // pred_check_branch
    %24 = sbr.rel (0) target = $region17
  $region16: #{discriminator_forward.1} parent=0 // pred_region
    _
  $region17: #{discriminator_forward.1} parent=0 // pred_fallthru
    _
  // Predicated region
  $region18: #{discriminator_forward.1} parent=0 // pred_check
    _
  $region19: #{discriminator_forward.1} parent=0 // pred_check_branch
    %26 = sbr.rel (0) target = $region21
  $region20: #{discriminator_forward.1} parent=0 // pred_region
    _
  $region21: #{discriminator_forward.1} parent=0 // pred_fallthru
    _
  // Predicated region
  $region22: #{discriminator_forward.1} parent=0 // pred_check
    _
  $region23: #{discriminator_forward.1} parent=0 // pred_check_branch
    %28 = sbr.rel (0) target = $region25
  $region24: #{discriminator_forward.1} parent=0 // pred_region
    _
  $region25: #{discriminator_forward.1} parent=0 // pred_fallthru
    _
  // Predicated region
  $region26: #{discriminator_forward.1} parent=0 // pred_check
    _
  $region27: #{discriminator_forward.1} parent=0 // pred_check_branch
    %30 = sbr.rel (0) target = $region29
  $region28: #{discriminator_forward.1} parent=0 // pred_region
    _
  $region29: #{discriminator_forward.1} parent=0 // pred_fallthru
    _
  // Predicated region
  $region30: #{discriminator_forward.1} parent=0 // pred_check
    _
  $region31: #{discriminator_forward.1} parent=0 // pred_check_branch
    %32 = sbr.rel (0) target = $region33
  $region32: #{discriminator_forward.1} parent=0 // pred_region
    _
  $region33: #{discriminator_forward.1} parent=0 // pred_fallthru
    _
  // Predicated region
  $region34: #{discriminator_forward.1} parent=0 // pred_check
    _
  $region35: #{discriminator_forward.1} parent=0 // pred_check_branch
    %34 = sbr.rel (0) target = $region37
  $region36: #{discriminator_forward.1} parent=0 // pred_region
    _
  $region37: #{discriminator_forward.1} parent=0 // pred_fallthru
    _
  // Predicated region
  $region38: #{discriminator_forward.1} parent=0 // pred_check
    _
  $region39: #{discriminator_forward.1} parent=0 // pred_check_branch
    %36 = sbr.rel (0) target = $region41
  $region40: #{discriminator_forward.1} parent=0 // pred_region
    _
  $region41: #{discriminator_forward.1} parent=0 // pred_fallthru
    _
  // Predicated region
  $region42: #{discriminator_forward.1} parent=0 // pred_check
    _
  $region43: #{discriminator_forward.1} parent=0 // pred_check_branch
    %38 = sbr.rel (0) target = $region45
  $region44: #{discriminator_forward.1} parent=0 // pred_region
    _
  $region45: #{discriminator_forward.1} parent=0 // pred_fallthru
    _
  // Predicated region
  $region46: #{discriminator_forward.1} parent=0 // pred_check
    _
  $region47: #{discriminator_forward.1} parent=0 // pred_check_branch
    %40 = sbr.rel (0) target = $region49
  $region48: #{discriminator_forward.1} parent=0 // pred_region
    _
  $region49: #{discriminator_forward.1} parent=0 // pred_fallthru
    _
  %vm42 = vcmask 130048
  %43 = vst.msk [vmem:[#allocation2] sm:$0xff] %vm42, 0.0
  %44 = vst.msk [vmem:[#allocation2 + $0x8] sm:$0xff] %vm42, 0.0
  %vm45 = vcmask 123904
  %46 = vst.msk [vmem:[#allocation2 + $0x10] sm:$0x3] %vm45, 0.0
  %47 = vst.msk [vmem:[#allocation2 + $0x1b0] sm:$0xff] %vm42, 0.0
  %48 = vst.msk [vmem:[#allocation2 + $0x1b8] sm:$0xff] %vm42, 0.0
  %49 = vst.msk [vmem:[#allocation2 + $0x1c0] sm:$0x3] %vm45, 0.0
  %s50 = scalar_lea.vmem [#allocation2], 408
  %51 = vst.msk [vmem:[%s50] sm:$0xff] %vm42, 0.0
  %52 = vst.msk [vmem:[%s50 + $0x8] sm:$0xff] %vm42, 0.0
  %53 = vst.msk [vmem:[%s50 + $0x10] sm:$0x3] %vm45, 0.0
  %54 = vst.msk [vmem:[%s50 + $0x1b0] sm:$0xff] %vm42, 0.0
  %55 = vst.msk [vmem:[%s50 + $0x1b8] sm:$0xff] %vm42, 0.0
  %56 = vst.msk [vmem:[%s50 + $0x1c0] sm:$0x3] %vm45, 0.0
  %vm57 = vcmask 122880
  %58 = vst.msk [vmem:[#allocation2] sm:$0x1] %vm57, 0.0
  %59 = vst.msk [vmem:[#allocation2 + $0x18] sm:$0x1] %vm57, 0.0
  %60 = vst.msk [vmem:[#allocation2 + $0x30] sm:$0x1] %vm57, 0.0
  %61 = vst.msk [vmem:[#allocation2 + $0x48] sm:$0x1] %vm57, 0.0
  %62 = vst.msk [vmem:[#allocation2 + $0x60] sm:$0x1] %vm57, 0.0
  %63 = vst.msk [vmem:[#allocation2 + $0x78] sm:$0x1] %vm57, 0.0
  %64 = vst.msk [vmem:[#allocation2 + $0x90] sm:$0x1] %vm57, 0.0
  %65 = vst.msk [vmem:[#allocation2 + $0xa8] sm:$0x1] %vm57, 0.0
  %66 = vst.msk [vmem:[#allocation2 + $0xc0] sm:$0x1] %vm57, 0.0
  %67 = vst.msk [vmem:[#allocation2 + $0xd8] sm:$0x1] %vm57, 0.0
  %68 = vst.msk [vmem:[#allocation2 + $0xf0] sm:$0x1] %vm57, 0.0
  %69 = vst.msk [vmem:[#allocation2 + $0x108] sm:$0x1] %vm57, 0.0
  %70 = vst.msk [vmem:[#allocation2 + $0x120] sm:$0x1] %vm57, 0.0
  %71 = vst.msk [vmem:[#allocation2 + $0x138] sm:$0x1] %vm57, 0.0
  %72 = vst.msk [vmem:[#allocation2 + $0x150] sm:$0x1] %vm57, 0.0
  %73 = vst.msk [vmem:[#allocation2 + $0x168] sm:$0x1] %vm57, 0.0
  %74 = vst.msk [vmem:[#allocation2 + $0x180] sm:$0x1] %vm57, 0.0
  %75 = vst.msk [vmem:[#allocation2 + $0x198] sm:$0x1] %vm57, 0.0
  %76 = vst.msk [vmem:[#allocation2 + $0x1b0] sm:$0x1] %vm57, 0.0
  %77 = vst.msk [vmem:[#allocation2 + $0x1c8] sm:$0x1] %vm57, 0.0
  %78 = vst.msk [vmem:[#allocation2 + $0x1e0] sm:$0x1] %vm57, 0.0
  %79 = vst.msk [vmem:[#allocation2 + $0x1f8] sm:$0x1] %vm57, 0.0
  %80 = vst.msk [vmem:[#allocation2 + $0x210] sm:$0x1] %vm57, 0.0
  %81 = vst.msk [vmem:[#allocation2 + $0x228] sm:$0x1] %vm57, 0.0
  %82 = vst.msk [vmem:[#allocation2 + $0x240] sm:$0x1] %vm57, 0.0
  %83 = vst.msk [vmem:[#allocation2 + $0x258] sm:$0x1] %vm57, 0.0
  %84 = vst.msk [vmem:[#allocation2 + $0x270] sm:$0x1] %vm57, 0.0
  %85 = vst.msk [vmem:[#allocation2 + $0x288] sm:$0x1] %vm57, 0.0
  %86 = vst.msk [vmem:[#allocation2 + $0x2a0] sm:$0x1] %vm57, 0.0
  %87 = vst.msk [vmem:[#allocation2 + $0x2b8] sm:$0x1] %vm57, 0.0
  %88 = vst.msk [vmem:[#allocation2 + $0x2d0] sm:$0x1] %vm57, 0.0
  %89 = vst.msk [vmem:[#allocation2 + $0x2e8] sm:$0x1] %vm57, 0.0
  %90 = vst.msk [vmem:[#allocation2 + $0x300] sm:$0x1] %vm57, 0.0
  %91 = vst.msk [vmem:[#allocation2 + $0x318] sm:$0x1] %vm57, 0.0
  %92 = vst.msk [vmem:[#allocation2 + $0x330] sm:$0x1] %vm57, 0.0
  %93 = vst.msk [vmem:[#allocation2 + $0x348] sm:$0x1] %vm57, 0.0
  %94 = vst.msk [vmem:[#allocation2 + $0x11] sm:$0x1] %vm57, 0.0
  %95 = vst.msk [vmem:[#allocation2 + $0x29] sm:$0x1] %vm57, 0.0
  %96 = vst.msk [vmem:[#allocation2 + $0x41] sm:$0x1] %vm57, 0.0
  %97 = vst.msk [vmem:[#allocation2 + $0x59] sm:$0x1] %vm57, 0.0
  %98 = vst.msk [vmem:[#allocation2 + $0x71] sm:$0x1] %vm57, 0.0
  %99 = vst.msk [vmem:[#allocation2 + $0x89] sm:$0x1] %vm57, 0.0
  %100 = vst.msk [vmem:[#allocation2 + $0xa1] sm:$0x1] %vm57, 0.0
  %101 = vst.msk [vmem:[#allocation2 + $0xb9] sm:$0x1] %vm57, 0.0
  %102 = vst.msk [vmem:[#allocation2 + $0xd1] sm:$0x1] %vm57, 0.0
  %103 = vst.msk [vmem:[#allocation2 + $0xe9] sm:$0x1] %vm57, 0.0
  %104 = vst.msk [vmem:[#allocation2 + $0x101] sm:$0x1] %vm57, 0.0
  %105 = vst.msk [vmem:[#allocation2 + $0x119] sm:$0x1] %vm57, 0.0
  %106 = vst.msk [vmem:[#allocation2 + $0x131] sm:$0x1] %vm57, 0.0
  %107 = vst.msk [vmem:[#allocation2 + $0x149] sm:$0x1] %vm57, 0.0
  %108 = vst.msk [vmem:[#allocation2 + $0x161] sm:$0x1] %vm57, 0.0
  %109 = vst.msk [vmem:[#allocation2 + $0x179] sm:$0x1] %vm57, 0.0
  %110 = vst.msk [vmem:[#allocation2 + $0x191] sm:$0x1] %vm57, 0.0
  %111 = vst.msk [vmem:[#allocation2 + $0x1a9] sm:$0x1] %vm57, 0.0
  %112 = vst.msk [vmem:[#allocation2 + $0x1c1] sm:$0x1] %vm57, 0.0
  %113 = vst.msk [vmem:[#allocation2 + $0x1d9] sm:$0x1] %vm57, 0.0
  %114 = vst.msk [vmem:[#allocation2 + $0x1f1] sm:$0x1] %vm57, 0.0
  %115 = vst.msk [vmem:[#allocation2 + $0x209] sm:$0x1] %vm57, 0.0
  %116 = vst.msk [vmem:[#allocation2 + $0x221] sm:$0x1] %vm57, 0.0
  %117 = vst.msk [vmem:[#allocation2 + $0x239] sm:$0x1] %vm57, 0.0
  %118 = vst.msk [vmem:[#allocation2 + $0x251] sm:$0x1] %vm57, 0.0
  %119 = vst.msk [vmem:[#allocation2 + $0x269] sm:$0x1] %vm57, 0.0
  %120 = vst.msk [vmem:[#allocation2 + $0x281] sm:$0x1] %vm57, 0.0
  %121 = vst.msk [vmem:[#allocation2 + $0x299] sm:$0x1] %vm57, 0.0
  %122 = vst.msk [vmem:[#allocation2 + $0x2b1] sm:$0x1] %vm57, 0.0
  %123 = vst.msk [vmem:[#allocation2 + $0x2c9] sm:$0x1] %vm57, 0.0
  %124 = vst.msk [vmem:[#allocation2 + $0x2e1] sm:$0x1] %vm57, 0.0
  %125 = vst.msk [vmem:[#allocation2 + $0x2f9] sm:$0x1] %vm57, 0.0
  %126 = vst.msk [vmem:[#allocation2 + $0x311] sm:$0x1] %vm57, 0.0
  %127 = vst.msk [vmem:[#allocation2 + $0x329] sm:$0x1] %vm57, 0.0
  %128 = vst.msk [vmem:[#allocation2 + $0x341] sm:$0x1] %vm57, 0.0
  %129 = vst.msk [vmem:[#allocation2 + $0x359] sm:$0x1] %vm57, 0.0
  %vm130 = vcmask 261120
  %131 = vst.msk [vmem:[#allocation3] sm:$0xff] %vm130, 0.0
  %132 = vst.msk [vmem:[#allocation3 + $0x8] sm:$0xff] %vm130, 0.0
  %vm133 = vcmask 254976
  %134 = vst.msk [vmem:[#allocation3 + $0x10] sm:$0x3] %vm133, 0.0
  %135 = vst.msk [vmem:[#allocation3 + $0xf0] sm:$0xff] %vm130, 0.0
  %136 = vst.msk [vmem:[#allocation3 + $0xf8] sm:$0xff] %vm130, 0.0
  %137 = vst.msk [vmem:[#allocation3 + $0x100] sm:$0x3] %vm133, 0.0
  %s138 = scalar_lea.vmem [#allocation3], 216
  %139 = vst.msk [vmem:[%s138] sm:$0xff] %vm130, 0.0
  %140 = vst.msk [vmem:[%s138 + $0x8] sm:$0xff] %vm130, 0.0
  %141 = vst.msk [vmem:[%s138 + $0x10] sm:$0x3] %vm133, 0.0
  %142 = vst.msk [vmem:[%s138 + $0xf0] sm:$0xff] %vm130, 0.0
  %143 = vst.msk [vmem:[%s138 + $0xf8] sm:$0xff] %vm130, 0.0
  %144 = vst.msk [vmem:[%s138 + $0x100] sm:$0x3] %vm133, 0.0
  %vm145 = vcmask 253952
  %146 = vst.msk [vmem:[#allocation3] sm:$0x1] %vm145, 0.0
  %147 = vst.msk [vmem:[#allocation3 + $0x18] sm:$0x1] %vm145, 0.0
  %148 = vst.msk [vmem:[#allocation3 + $0x30] sm:$0x1] %vm145, 0.0
  %149 = vst.msk [vmem:[#allocation3 + $0x48] sm:$0x1] %vm145, 0.0
  %150 = vst.msk [vmem:[#allocation3 + $0x60] sm:$0x1] %vm145, 0.0
  %151 = vst.msk [vmem:[#allocation3 + $0x78] sm:$0x1] %vm145, 0.0
  %152 = vst.msk [vmem:[#allocation3 + $0x90] sm:$0x1] %vm145, 0.0
  %153 = vst.msk [vmem:[#allocation3 + $0xa8] sm:$0x1] %vm145, 0.0
  %154 = vst.msk [vmem:[#allocation3 + $0xc0] sm:$0x1] %vm145, 0.0
  %155 = vst.msk [vmem:[#allocation3 + $0xd8] sm:$0x1] %vm145, 0.0
  %156 = vst.msk [vmem:[#allocation3 + $0xf0] sm:$0x1] %vm145, 0.0
  %157 = vst.msk [vmem:[#allocation3 + $0x108] sm:$0x1] %vm145, 0.0
  %158 = vst.msk [vmem:[#allocation3 + $0x120] sm:$0x1] %vm145, 0.0
  %159 = vst.msk [vmem:[#allocation3 + $0x138] sm:$0x1] %vm145, 0.0
  %160 = vst.msk [vmem:[#allocation3 + $0x150] sm:$0x1] %vm145, 0.0
  %161 = vst.msk [vmem:[#allocation3 + $0x168] sm:$0x1] %vm145, 0.0
  %162 = vst.msk [vmem:[#allocation3 + $0x180] sm:$0x1] %vm145, 0.0
  %163 = vst.msk [vmem:[#allocation3 + $0x198] sm:$0x1] %vm145, 0.0
  %164 = vst.msk [vmem:[#allocation3 + $0x1b0] sm:$0x1] %vm145, 0.0
  %165 = vst.msk [vmem:[#allocation3 + $0x1c8] sm:$0x1] %vm145, 0.0
  %166 = vst.msk [vmem:[#allocation3 + $0x9] sm:$0xff] %vm130, 0.0
  %167 = vst.msk [vmem:[#allocation3 + $0x11] sm:$0x1] %vm145, 0.0
  %168 = vst.msk [vmem:[#allocation3 + $0x21] sm:$0xff] %vm130, 0.0
  %169 = vst.msk [vmem:[#allocation3 + $0x29] sm:$0x1] %vm145, 0.0
  %170 = vst.msk [vmem:[#allocation3 + $0x39] sm:$0xff] %vm130, 0.0
  %171 = vst.msk [vmem:[#allocation3 + $0x41] sm:$0x1] %vm145, 0.0
  %172 = vst.msk [vmem:[#allocation3 + $0x51] sm:$0xff] %vm130, 0.0
  %173 = vst.msk [vmem:[#allocation3 + $0x59] sm:$0x1] %vm145, 0.0
  %174 = vst.msk [vmem:[#allocation3 + $0x69] sm:$0xff] %vm130, 0.0
  %175 = vst.msk [vmem:[#allocation3 + $0x71] sm:$0x1] %vm145, 0.0
  %176 = vst.msk [vmem:[#allocation3 + $0x81] sm:$0xff] %vm130, 0.0
  %177 = vst.msk [vmem:[#allocation3 + $0x89] sm:$0x1] %vm145, 0.0
  %178 = vst.msk [vmem:[#allocation3 + $0x99] sm:$0xff] %vm130, 0.0
  %179 = vst.msk [vmem:[#allocation3 + $0xa1] sm:$0x1] %vm145, 0.0
  %180 = vst.msk [vmem:[#allocation3 + $0xb1] sm:$0xff] %vm130, 0.0
  %181 = vst.msk [vmem:[#allocation3 + $0xb9] sm:$0x1] %vm145, 0.0
  %182 = vst.msk [vmem:[#allocation3 + $0xc9] sm:$0xff] %vm130, 0.0
  %183 = vst.msk [vmem:[#allocation3 + $0xd1] sm:$0x1] %vm145, 0.0
  %184 = vst.msk [vmem:[#allocation3 + $0xe1] sm:$0xff] %vm130, 0.0
  %185 = vst.msk [vmem:[#allocation3 + $0xe9] sm:$0x1] %vm145, 0.0
  %186 = vst.msk [vmem:[#allocation3 + $0xf9] sm:$0xff] %vm130, 0.0
  %187 = vst.msk [vmem:[#allocation3 + $0x101] sm:$0x1] %vm145, 0.0
  %188 = vst.msk [vmem:[#allocation3 + $0x111] sm:$0xff] %vm130, 0.0
  %189 = vst.msk [vmem:[#allocation3 + $0x119] sm:$0x1] %vm145, 0.0
  %190 = vst.msk [vmem:[#allocation3 + $0x129] sm:$0xff] %vm130, 0.0
  %191 = vst.msk [vmem:[#allocation3 + $0x131] sm:$0x1] %vm145, 0.0
  %192 = vst.msk [vmem:[#allocation3 + $0x141] sm:$0xff] %vm130, 0.0
  %193 = vst.msk [vmem:[#allocation3 + $0x149] sm:$0x1] %vm145, 0.0
  %194 = vst.msk [vmem:[#allocation3 + $0x159] sm:$0xff] %vm130, 0.0
  %195 = vst.msk [vmem:[#allocation3 + $0x161] sm:$0x1] %vm145, 0.0
  %196 = vst.msk [vmem:[#allocation3 + $0x171] sm:$0xff] %vm130, 0.0
  %197 = vst.msk [vmem:[#allocation3 + $0x179] sm:$0x1] %vm145, 0.0
  %198 = vst.msk [vmem:[#allocation3 + $0x189] sm:$0xff] %vm130, 0.0
  %199 = vst.msk [vmem:[#allocation3 + $0x191] sm:$0x1] %vm145, 0.0
  %200 = vst.msk [vmem:[#allocation3 + $0x1a1] sm:$0xff] %vm130, 0.0
  %201 = vst.msk [vmem:[#allocation3 + $0x1a9] sm:$0x1] %vm145, 0.0
  %202 = vst.msk [vmem:[#allocation3 + $0x1b9] sm:$0xff] %vm130, 0.0
  %203 = vst.msk [vmem:[#allocation3 + $0x1c1] sm:$0x1] %vm145, 0.0
  %204 = vst.msk [vmem:[#allocation3 + $0x1d1] sm:$0xff] %vm130, 0.0
  %205 = vst.msk [vmem:[#allocation3 + $0x1d9] sm:$0x1] %vm145, 0.0
  %vm206 = vcmask 523264
  %207 = vst.msk [vmem:[#allocation4] sm:$0xff] %vm206, 0.0
  %208 = vst.msk [vmem:[#allocation4 + $0x8] sm:$0xff] %vm206, 0.0
  %vm209 = vcmask 517120
  %210 = vst.msk [vmem:[#allocation4 + $0x10] sm:$0x3] %vm209, 0.0
  %211 = vst.msk [vmem:[#allocation4 + $0x90] sm:$0xff] %vm206, 0.0
  %212 = vst.msk [vmem:[#allocation4 + $0x98] sm:$0xff] %vm206, 0.0
  %213 = vst.msk [vmem:[#allocation4 + $0xa0] sm:$0x3] %vm209, 0.0
  %s214 = scalar_lea.vmem [#allocation4], 120
  %215 = vst.msk [vmem:[%s214] sm:$0xff] %vm206, 0.0
  %216 = vst.msk [vmem:[%s214 + $0x8] sm:$0xff] %vm206, 0.0
  %217 = vst.msk [vmem:[%s214 + $0x10] sm:$0x3] %vm209, 0.0
  %218 = vst.msk [vmem:[%s214 + $0x90] sm:$0xff] %vm206, 0.0
  %219 = vst.msk [vmem:[%s214 + $0x98] sm:$0xff] %vm206, 0.0
  %220 = vst.msk [vmem:[%s214 + $0xa0] sm:$0x3] %vm209, 0.0
  %vm221 = vcmask 516096
  %222 = vst.msk [vmem:[#allocation4] sm:$0x1] %vm221, 0.0
  %223 = vst.msk [vmem:[#allocation4 + $0x18] sm:$0x1] %vm221, 0.0
  %224 = vst.msk [vmem:[#allocation4 + $0x30] sm:$0x1] %vm221, 0.0
  %225 = vst.msk [vmem:[#allocation4 + $0x48] sm:$0x1] %vm221, 0.0
  %226 = vst.msk [vmem:[#allocation4 + $0x60] sm:$0x1] %vm221, 0.0
  %227 = vst.msk [vmem:[#allocation4 + $0x78] sm:$0x1] %vm221, 0.0
  %228 = vst.msk [vmem:[#allocation4 + $0x90] sm:$0x1] %vm221, 0.0
  %229 = vst.msk [vmem:[#allocation4 + $0xa8] sm:$0x1] %vm221, 0.0
  %230 = vst.msk [vmem:[#allocation4 + $0xc0] sm:$0x1] %vm221, 0.0
  %231 = vst.msk [vmem:[#allocation4 + $0xd8] sm:$0x1] %vm221, 0.0
  %232 = vst.msk [vmem:[#allocation4 + $0xf0] sm:$0x1] %vm221, 0.0
  %233 = vst.msk [vmem:[#allocation4 + $0x108] sm:$0x1] %vm221, 0.0
  %234 = vst.msk [vmem:[#allocation4 + $0x5] sm:$0xff] %vm206, 0.0
  %vm235 = vcmask 520192
  %236 = vst.msk [vmem:[#allocation4 + $0xd] sm:$0x1f] %vm235, 0.0
  %237 = vst.msk [vmem:[#allocation4 + $0x1d] sm:$0xff] %vm206, 0.0
  %238 = vst.msk [vmem:[#allocation4 + $0x25] sm:$0x1f] %vm235, 0.0
  %239 = vst.msk [vmem:[#allocation4 + $0x35] sm:$0xff] %vm206, 0.0
  %240 = vst.msk [vmem:[#allocation4 + $0x3d] sm:$0x1f] %vm235, 0.0
  %241 = vst.msk [vmem:[#allocation4 + $0x4d] sm:$0xff] %vm206, 0.0
  %242 = vst.msk [vmem:[#allocation4 + $0x55] sm:$0x1f] %vm235, 0.0
  %243 = vst.msk [vmem:[#allocation4 + $0x65] sm:$0xff] %vm206, 0.0
  %244 = vst.msk [vmem:[#allocation4 + $0x6d] sm:$0x1f] %vm235, 0.0
  %245 = vst.msk [vmem:[#allocation4 + $0x7d] sm:$0xff] %vm206, 0.0
  %246 = vst.msk [vmem:[#allocation4 + $0x85] sm:$0x1f] %vm235, 0.0
  %247 = vst.msk [vmem:[#allocation4 + $0x95] sm:$0xff] %vm206, 0.0
  %248 = vst.msk [vmem:[#allocation4 + $0x9d] sm:$0x1f] %vm235, 0.0
  %249 = vst.msk [vmem:[#allocation4 + $0xad] sm:$0xff] %vm206, 0.0
  %250 = vst.msk [vmem:[#allocation4 + $0xb5] sm:$0x1f] %vm235, 0.0
  %251 = vst.msk [vmem:[#allocation4 + $0xc5] sm:$0xff] %vm206, 0.0
  %252 = vst.msk [vmem:[#allocation4 + $0xcd] sm:$0x1f] %vm235, 0.0
  %253 = vst.msk [vmem:[#allocation4 + $0xdd] sm:$0xff] %vm206, 0.0
  %254 = vst.msk [vmem:[#allocation4 + $0xe5] sm:$0x1f] %vm235, 0.0
  %255 = vst.msk [vmem:[#allocation4 + $0xf5] sm:$0xff] %vm206, 0.0
  %256 = vst.msk [vmem:[#allocation4 + $0xfd] sm:$0x1f] %vm235, 0.0
  %257 = vst.msk [vmem:[#allocation4 + $0x10d] sm:$0xff] %vm206, 0.0
  %258 = vst.msk [vmem:[#allocation4 + $0x115] sm:$0x1f] %vm235, 0.0
  %v259 = vld [vmem:[%s0] ss:$2 sm:$0xff]
  %s260 = scalar_lea.vmem %s0, 16
  %v261 = vld [vmem:[%s260] ss:$2 sm:$0xff]
  %s262 = scalar_lea.vmem %s0, 80
  %v263 = vld [vmem:[%s262] ss:$2 sm:$0xff]
  %s264 = scalar_lea.vmem %s0, 96
  %v265 = vld [vmem:[%s264] ss:$2 sm:$0xff]
  %s266 = scalar_lea.vmem %s0, 160
  %v267 = vld [vmem:[%s266] ss:$2 sm:$0xff]
  %s268 = scalar_lea.vmem %s0, 176
  %v269 = vld [vmem:[%s268] ss:$2 sm:$0xff]
  %s270 = scalar_lea.vmem %s0, 240
  %v271 = vld [vmem:[%s270] ss:$2 sm:$0xff]
  %s272 = scalar_lea.vmem %s0, 256
  %v273 = vld [vmem:[%s272] ss:$2 sm:$0xff]
  %s274 = scalar_lea.vmem %s0, 320
  %v275 = vld [vmem:[%s274] ss:$2 sm:$0xff]
  %s276 = scalar_lea.vmem %s0, 336
  %v277 = vld [vmem:[%s276] ss:$2 sm:$0xff]
  %s278 = scalar_lea.vmem %s0, 400
  %v279 = vld [vmem:[%s278] ss:$2 sm:$0xff]
  %s280 = scalar_lea.vmem %s0, 416
  %v281 = vld [vmem:[%s280] ss:$2 sm:$0xff]
  %s282 = scalar_lea.vmem %s0, 480
  %v283 = vld [vmem:[%s282] ss:$2 sm:$0xff]
  %s284 = scalar_lea.vmem %s0, 496
  %v285 = vld [vmem:[%s284] ss:$2 sm:$0xff]
  %s286 = scalar_lea.vmem %s0, 560
  %v287 = vld [vmem:[%s286] ss:$2 sm:$0xff]
  %s288 = scalar_lea.vmem %s0, 576
  %v289 = vld [vmem:[%s288] ss:$2 sm:$0xff]
  %s290 = scalar_lea.vmem %s0, 640
  %v291 = vld [vmem:[%s290] ss:$2 sm:$0xff]
  %s292 = scalar_lea.vmem %s0, 656
  %v293 = vld [vmem:[%s292] ss:$2 sm:$0xff]
  %s294 = scalar_lea.vmem %s0, 720
  %v295 = vld [vmem:[%s294] ss:$2 sm:$0xff]
  %s296 = scalar_lea.vmem %s0, 736
  %v297 = vld [vmem:[%s296] ss:$2 sm:$0xff]
  %s298 = scalar_lea.vmem %s0, 800
  %v299 = vld [vmem:[%s298] ss:$2 sm:$0xff]
  %s300 = scalar_lea.vmem %s0, 816
  %v301 = vld [vmem:[%s300] ss:$2 sm:$0xff]
  %s302 = scalar_lea.vmem %s0, 880
  %v303 = vld [vmem:[%s302] ss:$2 sm:$0xff]
  %s304 = scalar_lea.vmem %s0, 896
  %v305 = vld [vmem:[%s304] ss:$2 sm:$0xff]
  %s306 = scalar_lea.vmem %s0, 960
  %v307 = vld [vmem:[%s306] ss:$2 sm:$0xff]
  %s308 = scalar_lea.vmem %s0, 976
  %v309 = vld [vmem:[%s308] ss:$2 sm:$0xff]
  %s310 = scalar_lea.vmem %s0, 1040
  %v311 = vld [vmem:[%s310] ss:$2 sm:$0xff]
  %s312 = scalar_lea.vmem %s0, 1056
  %v313 = vld [vmem:[%s312] ss:$2 sm:$0xff]
  %s314 = scalar_lea.vmem %s0, 1120
  %v315 = vld [vmem:[%s314] ss:$2 sm:$0xff]
  %s316 = scalar_lea.vmem %s0, 1136
  %v317 = vld [vmem:[%s316] ss:$2 sm:$0xff]
  %s318 = scalar_lea.vmem %s0, 1200
  %v319 = vld [vmem:[%s318] ss:$2 sm:$0xff]
  %s320 = scalar_lea.vmem %s0, 1216
  %v321 = vld [vmem:[%s320] ss:$2 sm:$0xff]
  %s322 = scalar_lea.vmem %s0, 1360
  %v323 = vld [vmem:[%s322] ss:$2 sm:$0xff]
  %s324 = scalar_lea.vmem %s0, 1376
  %v325 = vld [vmem:[%s324] ss:$2 sm:$0xff]
  %s326 = scalar_lea.vmem %s0, 1440
  %v327 = vld [vmem:[%s326] ss:$2 sm:$0xff]
  %s328 = scalar_lea.vmem %s0, 1456
  %v329 = vld [vmem:[%s328] ss:$2 sm:$0xff]
  %s330 = scalar_lea.vmem %s0, 1520
  %v331 = vld [vmem:[%s330] ss:$2 sm:$0xff]
  %s332 = scalar_lea.vmem %s0, 1536
  %v333 = vld [vmem:[%s332] ss:$2 sm:$0xff]
  %s334 = scalar_lea.vmem %s0, 1600
  %v335 = vld [vmem:[%s334] ss:$2 sm:$0xff]
  %s336 = scalar_lea.vmem %s0, 1616
  %v337 = vld [vmem:[%s336] ss:$2 sm:$0xff]
  %s338 = scalar_lea.vmem %s0, 1680
  %v339 = vld [vmem:[%s338] ss:$2 sm:$0xff]
  %s340 = scalar_lea.vmem %s0, 1696
  %v341 = vld [vmem:[%s340] ss:$2 sm:$0xff]
  %s342 = scalar_lea.vmem %s0, 1760
  %v343 = vld [vmem:[%s342] ss:$2 sm:$0xff]
  %s344 = scalar_lea.vmem %s0, 1776
  %v345 = vld [vmem:[%s344] ss:$2 sm:$0xff]
  %s346 = scalar_lea.vmem %s0, 1840
  %v347 = vld [vmem:[%s346] ss:$2 sm:$0xff]
  %s348 = scalar_lea.vmem %s0, 1856
  %v349 = vld [vmem:[%s348] ss:$2 sm:$0xff]
  %s350 = scalar_lea.vmem %s0, 1920
  %v351 = vld [vmem:[%s350] ss:$2 sm:$0xff]
  %s352 = scalar_lea.vmem %s0, 1936
  %v353 = vld [vmem:[%s352] ss:$2 sm:$0xff]
  %s354 = scalar_lea.vmem %s0, 2000
  %v355 = vld [vmem:[%s354] ss:$2 sm:$0xff]
  %s356 = scalar_lea.vmem %s0, 2016
  %v357 = vld [vmem:[%s356] ss:$2 sm:$0xff]
  %s358 = scalar_lea.vmem %s0, 2080
  %v359 = vld [vmem:[%s358] ss:$2 sm:$0xff]
  %s360 = scalar_lea.vmem %s0, 2096
  %v361 = vld [vmem:[%s360] ss:$2 sm:$0xff]
  %s362 = scalar_lea.vmem %s0, 2160
  %v363 = vld [vmem:[%s362] ss:$2 sm:$0xff]
  %s364 = scalar_lea.vmem %s0, 2176
  %v365 = vld [vmem:[%s364] ss:$2 sm:$0xff]
  %s366 = scalar_lea.vmem %s0, 2240
  %v367 = vld [vmem:[%s366] ss:$2 sm:$0xff]
  %s368 = scalar_lea.vmem %s0, 2256
  %v369 = vld [vmem:[%s368] ss:$2 sm:$0xff]
  %s370 = scalar_lea.vmem %s0, 2320
  %v371 = vld [vmem:[%s370] ss:$2 sm:$0xff]
  %s372 = scalar_lea.vmem %s0, 2336
  %v373 = vld [vmem:[%s372] ss:$2 sm:$0xff]
  %s374 = scalar_lea.vmem %s0, 2400
  %v375 = vld [vmem:[%s374] ss:$2 sm:$0xff]
  %s376 = scalar_lea.vmem %s0, 2416
  %v377 = vld [vmem:[%s376] ss:$2 sm:$0xff]
  %s378 = scalar_lea.vmem %s0, 2480
  %v379 = vld [vmem:[%s378] ss:$2 sm:$0xff]
  %s380 = scalar_lea.vmem %s0, 2496
  %v381 = vld [vmem:[%s380] ss:$2 sm:$0xff]
  %s382 = scalar_lea.vmem %s0, 2560
  %v383 = vld [vmem:[%s382] ss:$2 sm:$0xff]
  %s384 = scalar_lea.vmem %s0, 2576
  %v385 = vld [vmem:[%s384] ss:$2 sm:$0xff]
  %s386 = scalar_lea.vmem %s0, 1
  %v387 = vld [vmem:[%s386] ss:$2 sm:$0xff]
  %s388 = scalar_lea.vmem %s0, 17
  %v389 = vld [vmem:[%s388] ss:$2 sm:$0xff]
  %s390 = scalar_lea.vmem %s0, 81
  %v391 = vld [vmem:[%s390] ss:$2 sm:$0xff]
  %s392 = scalar_lea.vmem %s0, 97
  %v393 = vld [vmem:[%s392] ss:$2 sm:$0xff]
  %s394 = scalar_lea.vmem %s0, 161
  %v395 = vld [vmem:[%s394] ss:$2 sm:$0xff]
  %s396 = scalar_lea.vmem %s0, 177
  %v397 = vld [vmem:[%s396] ss:$2 sm:$0xff]
  %s398 = scalar_lea.vmem %s0, 241
  %v399 = vld [vmem:[%s398] ss:$2 sm:$0xff]
  %s400 = scalar_lea.vmem %s0, 257
  %v401 = vld [vmem:[%s400] ss:$2 sm:$0xff]
  %s402 = scalar_lea.vmem %s0, 321
  %v403 = vld [vmem:[%s402] ss:$2 sm:$0xff]
  %s404 = scalar_lea.vmem %s0, 337
  %v405 = vld [vmem:[%s404] ss:$2 sm:$0xff]
  %s406 = scalar_lea.vmem %s0, 401
  %v407 = vld [vmem:[%s406] ss:$2 sm:$0xff]
  %s408 = scalar_lea.vmem %s0, 417
  %v409 = vld [vmem:[%s408] ss:$2 sm:$0xff]
  %s410 = scalar_lea.vmem %s0, 481
  %v411 = vld [vmem:[%s410] ss:$2 sm:$0xff]
  %s412 = scalar_lea.vmem %s0, 497
  %v413 = vld [vmem:[%s412] ss:$2 sm:$0xff]
  %s414 = scalar_lea.vmem %s0, 561
  %v415 = vld [vmem:[%s414] ss:$2 sm:$0xff]
  %s416 = scalar_lea.vmem %s0, 577
  %v417 = vld [vmem:[%s416] ss:$2 sm:$0xff]
  %s418 = scalar_lea.vmem %s0, 641
  %v419 = vld [vmem:[%s418] ss:$2 sm:$0xff]
  %s420 = scalar_lea.vmem %s0, 657
  %v421 = vld [vmem:[%s420] ss:$2 sm:$0xff]
  %s422 = scalar_lea.vmem %s0, 721
  %v423 = vld [vmem:[%s422] ss:$2 sm:$0xff]
  %s424 = scalar_lea.vmem %s0, 737
  %v425 = vld [vmem:[%s424] ss:$2 sm:$0xff]
  %s426 = scalar_lea.vmem %s0, 801
  %v427 = vld [vmem:[%s426] ss:$2 sm:$0xff]
  %s428 = scalar_lea.vmem %s0, 817
  %v429 = vld [vmem:[%s428] ss:$2 sm:$0xff]
  %s430 = scalar_lea.vmem %s0, 881
  %v431 = vld [vmem:[%s430] ss:$2 sm:$0xff]
  %s432 = scalar_lea.vmem %s0, 897
  %v433 = vld [vmem:[%s432] ss:$2 sm:$0xff]
  %s434 = scalar_lea.vmem %s0, 961
  %v435 = vld [vmem:[%s434] ss:$2 sm:$0xff]
  %s436 = scalar_lea.vmem %s0, 977
  %v437 = vld [vmem:[%s436] ss:$2 sm:$0xff]
  %s438 = scalar_lea.vmem %s0, 1041
  %v439 = vld [vmem:[%s438] ss:$2 sm:$0xff]
  %s440 = scalar_lea.vmem %s0, 1057
  %v441 = vld [vmem:[%s440] ss:$2 sm:$0xff]
  %s442 = scalar_lea.vmem %s0, 1121
  %v443 = vld [vmem:[%s442] ss:$2 sm:$0xff]
  %s444 = scalar_lea.vmem %s0, 1137
  %v445 = vld [vmem:[%s444] ss:$2 sm:$0xff]
  %s446 = scalar_lea.vmem %s0, 1201
  %v447 = vld [vmem:[%s446] ss:$2 sm:$0xff]
  %s448 = scalar_lea.vmem %s0, 1217
  %v449 = vld [vmem:[%s448] ss:$2 sm:$0xff]
  %s450 = scalar_lea.vmem %s0, 1361
  %v451 = vld [vmem:[%s450] ss:$2 sm:$0xff]
  %s452 = scalar_lea.vmem %s0, 1377
  %v453 = vld [vmem:[%s452] ss:$2 sm:$0xff]
  %s454 = scalar_lea.vmem %s0, 1441
  %v455 = vld [vmem:[%s454] ss:$2 sm:$0xff]
  %s456 = scalar_lea.vmem %s0, 1457
  %v457 = vld [vmem:[%s456] ss:$2 sm:$0xff]
  %s458 = scalar_lea.vmem %s0, 1521
  %v459 = vld [vmem:[%s458] ss:$2 sm:$0xff]
  %s460 = scalar_lea.vmem %s0, 1537
  %v461 = vld [vmem:[%s460] ss:$2 sm:$0xff]
  %s462 = scalar_lea.vmem %s0, 1601
  %v463 = vld [vmem:[%s462] ss:$2 sm:$0xff]
  %s464 = scalar_lea.vmem %s0, 1617
  %v465 = vld [vmem:[%s464] ss:$2 sm:$0xff]
  %s466 = scalar_lea.vmem %s0, 1681
  %v467 = vld [vmem:[%s466] ss:$2 sm:$0xff]
  %s468 = scalar_lea.vmem %s0, 1697
  %v469 = vld [vmem:[%s468] ss:$2 sm:$0xff]
  %s470 = scalar_lea.vmem %s0, 1761
  %v471 = vld [vmem:[%s470] ss:$2 sm:$0xff]
  %s472 = scalar_lea.vmem %s0, 1777
  %v473 = vld [vmem:[%s472] ss:$2 sm:$0xff]
  %s474 = scalar_lea.vmem %s0, 1841
  %v475 = vld [vmem:[%s474] ss:$2 sm:$0xff]
  %s476 = scalar_lea.vmem %s0, 1857
  %v477 = vld [vmem:[%s476] ss:$2 sm:$0xff]
  %s478 = scalar_lea.vmem %s0, 1921
  %v479 = vld [vmem:[%s478] ss:$2 sm:$0xff]
  %s480 = scalar_lea.vmem %s0, 1937
  %v481 = vld [vmem:[%s480] ss:$2 sm:$0xff]
  %s482 = scalar_lea.vmem %s0, 2001
  %v483 = vld [vmem:[%s482] ss:$2 sm:$0xff]
  %s484 = scalar_lea.vmem %s0, 2017
  %v485 = vld [vmem:[%s484] ss:$2 sm:$0xff]
  %s486 = scalar_lea.vmem %s0, 2081
  %v487 = vld [vmem:[%s486] ss:$2 sm:$0xff]
  %s488 = scalar_lea.vmem %s0, 2097
  %v489 = vld [vmem:[%s488] ss:$2 sm:$0xff]
  %s490 = scalar_lea.vmem %s0, 2161
  %v491 = vld [vmem:[%s490] ss:$2 sm:$0xff]
  %s492 = scalar_lea.vmem %s0, 2177
  %v493 = vld [vmem:[%s492] ss:$2 sm:$0xff]
  %s494 = scalar_lea.vmem %s0, 2241
  %v495 = vld [vmem:[%s494] ss:$2 sm:$0xff]
  %s496 = scalar_lea.vmem %s0, 2257
  %v497 = vld [vmem:[%s496] ss:$2 sm:$0xff]
  %s498 = scalar_lea.vmem %s0, 2321
  %v499 = vld [vmem:[%s498] ss:$2 sm:$0xff]
  %s500 = scalar_lea.vmem %s0, 2337
  %v501 = vld [vmem:[%s500] ss:$2 sm:$0xff]
  %s502 = scalar_lea.vmem %s0, 2401
  %v503 = vld [vmem:[%s502] ss:$2 sm:$0xff]
  %s504 = scalar_lea.vmem %s0, 2417
  %v505 = vld [vmem:[%s504] ss:$2 sm:$0xff]
  %s506 = scalar_lea.vmem %s0, 2481
  %v507 = vld [vmem:[%s506] ss:$2 sm:$0xff]
  %s508 = scalar_lea.vmem %s0, 2497
  %v509 = vld [vmem:[%s508] ss:$2 sm:$0xff]
  %s510 = scalar_lea.vmem %s0, 2561
  %v511 = vld [vmem:[%s510] ss:$2 sm:$0xff]
  %s512 = scalar_lea.vmem %s0, 2577
  %v513 = vld [vmem:[%s512] ss:$2 sm:$0xff]
  %s514 = scalar_lea.vmem %s0, 2
  %v515 = vld [vmem:[%s514] ss:$2 sm:$0xff]
  %s516 = scalar_lea.vmem %s0, 18
  %v517 = vld [vmem:[%s516] ss:$2 sm:$0xff]
  %s518 = scalar_lea.vmem %s0, 82
  %v519 = vld [vmem:[%s518] ss:$2 sm:$0xff]
  %s520 = scalar_lea.vmem %s0, 98
  %v521 = vld [vmem:[%s520] ss:$2 sm:$0xff]
  %s522 = scalar_lea.vmem %s0, 162
  %v523 = vld [vmem:[%s522] ss:$2 sm:$0xff]
  %s524 = scalar_lea.vmem %s0, 178
  %v525 = vld [vmem:[%s524] ss:$2 sm:$0xff]
  %s526 = scalar_lea.vmem %s0, 242
  %v527 = vld [vmem:[%s526] ss:$2 sm:$0xff]
  %s528 = scalar_lea.vmem %s0, 258
  %v529 = vld [vmem:[%s528] ss:$2 sm:$0xff]
  %s530 = scalar_lea.vmem %s0, 322
  %v531 = vld [vmem:[%s530] ss:$2 sm:$0xff]
  %s532 = scalar_lea.vmem %s0, 338
  %v533 = vld [vmem:[%s532] ss:$2 sm:$0xff]
  %s534 = scalar_lea.vmem %s0, 402
  %v535 = vld [vmem:[%s534] ss:$2 sm:$0xff]
  %s536 = scalar_lea.vmem %s0, 418
  %v537 = vld [vmem:[%s536] ss:$2 sm:$0xff]
  %s538 = scalar_lea.vmem %s0, 482
  %v539 = vld [vmem:[%s538] ss:$2 sm:$0xff]
  %s540 = scalar_lea.vmem %s0, 498
  %v541 = vld [vmem:[%s540] ss:$2 sm:$0xff]
  %s542 = scalar_lea.vmem %s0, 562
  %v543 = vld [vmem:[%s542] ss:$2 sm:$0xff]
  %s544 = scalar_lea.vmem %s0, 578
  %v545 = vld [vmem:[%s544] ss:$2 sm:$0xff]
  %s546 = scalar_lea.vmem %s0, 642
  %v547 = vld [vmem:[%s546] ss:$2 sm:$0xff]
  %s548 = scalar_lea.vmem %s0, 658
  %v549 = vld [vmem:[%s548] ss:$2 sm:$0xff]
  %s550 = scalar_lea.vmem %s0, 722
  %v551 = vld [vmem:[%s550] ss:$2 sm:$0xff]
  %s552 = scalar_lea.vmem %s0, 738
  %v553 = vld [vmem:[%s552] ss:$2 sm:$0xff]
  %s554 = scalar_lea.vmem %s0, 802
  %v555 = vld [vmem:[%s554] ss:$2 sm:$0xff]
  %s556 = scalar_lea.vmem %s0, 818
  %v557 = vld [vmem:[%s556] ss:$2 sm:$0xff]
  %s558 = scalar_lea.vmem %s0, 882
  %v559 = vld [vmem:[%s558] ss:$2 sm:$0xff]
  %s560 = scalar_lea.vmem %s0, 898
  %v561 = vld [vmem:[%s560] ss:$2 sm:$0xff]
  %s562 = scalar_lea.vmem %s0, 962
  %v563 = vld [vmem:[%s562] ss:$2 sm:$0xff]
  %s564 = scalar_lea.vmem %s0, 978
  %v565 = vld [vmem:[%s564] ss:$2 sm:$0xff]
  %s566 = scalar_lea.vmem %s0, 1042
  %v567 = vld [vmem:[%s566] ss:$2 sm:$0xff]
  %s568 = scalar_lea.vmem %s0, 1058
  %v569 = vld [vmem:[%s568] ss:$2 sm:$0xff]
  %s570 = scalar_lea.vmem %s0, 1122
  %v571 = vld [vmem:[%s570] ss:$2 sm:$0xff]
  %s572 = scalar_lea.vmem %s0, 1138
  %v573 = vld [vmem:[%s572] ss:$2 sm:$0xff]
  %s574 = scalar_lea.vmem %s0, 1202
  %v575 = vld [vmem:[%s574] ss:$2 sm:$0xff]
  %s576 = scalar_lea.vmem %s0, 1218
  %v577 = vld [vmem:[%s576] ss:$2 sm:$0xff]
  %s578 = scalar_lea.vmem %s0, 1362
  %v579 = vld [vmem:[%s578] ss:$2 sm:$0xff]
  %s580 = scalar_lea.vmem %s0, 1378
  %v581 = vld [vmem:[%s580] ss:$2 sm:$0xff]
  %s582 = scalar_lea.vmem %s0, 1442
  %v583 = vld [vmem:[%s582] ss:$2 sm:$0xff]
  %s584 = scalar_lea.vmem %s0, 1458
  %v585 = vld [vmem:[%s584] ss:$2 sm:$0xff]
  %s586 = scalar_lea.vmem %s0, 1522
  %v587 = vld [vmem:[%s586] ss:$2 sm:$0xff]
  %s588 = scalar_lea.vmem %s0, 1538
  %v589 = vld [vmem:[%s588] ss:$2 sm:$0xff]
  %s590 = scalar_lea.vmem %s0, 1602
  %v591 = vld [vmem:[%s590] ss:$2 sm:$0xff]
  %s592 = scalar_lea.vmem %s0, 1618
  %v593 = vld [vmem:[%s592] ss:$2 sm:$0xff]
  %s594 = scalar_lea.vmem %s0, 1682
  %v595 = vld [vmem:[%s594] ss:$2 sm:$0xff]
  %s596 = scalar_lea.vmem %s0, 1698
  %v597 = vld [vmem:[%s596] ss:$2 sm:$0xff]
  %s598 = scalar_lea.vmem %s0, 1762
  %v599 = vld [vmem:[%s598] ss:$2 sm:$0xff]
  %s600 = scalar_lea.vmem %s0, 1778
  %v601 = vld [vmem:[%s600] ss:$2 sm:$0xff]
  %s602 = scalar_lea.vmem %s0, 1842
  %v603 = vld [vmem:[%s602] ss:$2 sm:$0xff]
  %s604 = scalar_lea.vmem %s0, 1858
  %v605 = vld [vmem:[%s604] ss:$2 sm:$0xff]
  %s606 = scalar_lea.vmem %s0, 1922
  %v607 = vld [vmem:[%s606] ss:$2 sm:$0xff]
  %s608 = scalar_lea.vmem %s0, 1938
  %v609 = vld [vmem:[%s608] ss:$2 sm:$0xff]
  %s610 = scalar_lea.vmem %s0, 2002
  %v611 = vld [vmem:[%s610] ss:$2 sm:$0xff]
  %s612 = scalar_lea.vmem %s0, 2018
  %v613 = vld [vmem:[%s612] ss:$2 sm:$0xff]
  %s614 = scalar_lea.vmem %s0, 2082
  %v615 = vld [vmem:[%s614] ss:$2 sm:$0xff]
  %s616 = scalar_lea.vmem %s0, 2098
  %v617 = vld [vmem:[%s616] ss:$2 sm:$0xff]
  %s618 = scalar_lea.vmem %s0, 2162
  %v619 = vld [vmem:[%s618] ss:$2 sm:$0xff]
  %s620 = scalar_lea.vmem %s0, 2178
  %v621 = vld [vmem:[%s620] ss:$2 sm:$0xff]
  %s622 = scalar_lea.vmem %s0, 2242
  %v623 = vld [vmem:[%s622] ss:$2 sm:$0xff]
  %s624 = scalar_lea.vmem %s0, 2258
  %v625 = vld [vmem:[%s624] ss:$2 sm:$0xff]
  %s626 = scalar_lea.vmem %s0, 2322
  %v627 = vld [vmem:[%s626] ss:$2 sm:$0xff]
  %s628 = scalar_lea.vmem %s0, 2338
  %v629 = vld [vmem:[%s628] ss:$2 sm:$0xff]
  %s630 = scalar_lea.vmem %s0, 2402
  %v631 = vld [vmem:[%s630] ss:$2 sm:$0xff]
  %s632 = scalar_lea.vmem %s0, 2418
  %v633 = vld [vmem:[%s632] ss:$2 sm:$0xff]
  %s634 = scalar_lea.vmem %s0, 2482
  %v635 = vld [vmem:[%s634] ss:$2 sm:$0xff]
  %s636 = scalar_lea.vmem %s0, 2498
  %v637 = vld [vmem:[%s636] ss:$2 sm:$0xff]
  %s638 = scalar_lea.vmem %s0, 2562
  %v639 = vld [vmem:[%s638] ss:$2 sm:$0xff]
  %s640 = scalar_lea.vmem %s0, 2578
  %v641 = vld [vmem:[%s640] ss:$2 sm:$0xff]
  %s642 = scalar_lea.vmem %s0, 3
  %v643 = vld [vmem:[%s642] ss:$2 sm:$0xff]
  %s644 = scalar_lea.vmem %s0, 19
  %v645 = vld [vmem:[%s644] ss:$2 sm:$0xff]
  %s646 = scalar_lea.vmem %s0, 83
  %v647 = vld [vmem:[%s646] ss:$2 sm:$0xff]
  %s648 = scalar_lea.vmem %s0, 99
  %v649 = vld [vmem:[%s648] ss:$2 sm:$0xff]
  %s650 = scalar_lea.vmem %s0, 163
  %v651 = vld [vmem:[%s650] ss:$2 sm:$0xff]
  %s652 = scalar_lea.vmem %s0, 179
  %v653 = vld [vmem:[%s652] ss:$2 sm:$0xff]
  %s654 = scalar_lea.vmem %s0, 243
  %v655 = vld [vmem:[%s654] ss:$2 sm:$0xff]
  %s656 = scalar_lea.vmem %s0, 259
  %v657 = vld [vmem:[%s656] ss:$2 sm:$0xff]
  %s658 = scalar_lea.vmem %s0, 323
  %v659 = vld [vmem:[%s658] ss:$2 sm:$0xff]
  %s660 = scalar_lea.vmem %s0, 339
  %v661 = vld [vmem:[%s660] ss:$2 sm:$0xff]
  %s662 = scalar_lea.vmem %s0, 403
  %v663 = vld [vmem:[%s662] ss:$2 sm:$0xff]
  %s664 = scalar_lea.vmem %s0, 419
  %v665 = vld [vmem:[%s664] ss:$2 sm:$0xff]
  %s666 = scalar_lea.vmem %s0, 483
  %v667 = vld [vmem:[%s666] ss:$2 sm:$0xff]
  %s668 = scalar_lea.vmem %s0, 499
  %v669 = vld [vmem:[%s668] ss:$2 sm:$0xff]
  %s670 = scalar_lea.vmem %s0, 563
  %v671 = vld [vmem:[%s670] ss:$2 sm:$0xff]
  %s672 = scalar_lea.vmem %s0, 579
  %v673 = vld [vmem:[%s672] ss:$2 sm:$0xff]
  %s674 = scalar_lea.vmem %s0, 643
  %v675 = vld [vmem:[%s674] ss:$2 sm:$0xff]
  %s676 = scalar_lea.vmem %s0, 659
  %v677 = vld [vmem:[%s676] ss:$2 sm:$0xff]
  %s678 = scalar_lea.vmem %s0, 723
  %v679 = vld [vmem:[%s678] ss:$2 sm:$0xff]
  %s680 = scalar_lea.vmem %s0, 739
  %v681 = vld [vmem:[%s680] ss:$2 sm:$0xff]
  %s682 = scalar_lea.vmem %s0, 803
  %v683 = vld [vmem:[%s682] ss:$2 sm:$0xff]
  %s684 = scalar_lea.vmem %s0, 819
  %v685 = vld [vmem:[%s684] ss:$2 sm:$0xff]
  %s686 = scalar_lea.vmem %s0, 883
  %v687 = vld [vmem:[%s686] ss:$2 sm:$0xff]
  %s688 = scalar_lea.vmem %s0, 899
  %v689 = vld [vmem:[%s688] ss:$2 sm:$0xff]
  %s690 = scalar_lea.vmem %s0, 963
  %v691 = vld [vmem:[%s690] ss:$2 sm:$0xff]
  %s692 = scalar_lea.vmem %s0, 979
  %v693 = vld [vmem:[%s692] ss:$2 sm:$0xff]
  %s694 = scalar_lea.vmem %s0, 1043
  %v695 = vld [vmem:[%s694] ss:$2 sm:$0xff]
  %s696 = scalar_lea.vmem %s0, 1059
  %v697 = vld [vmem:[%s696] ss:$2 sm:$0xff]
  %s698 = scalar_lea.vmem %s0, 1123
  %v699 = vld [vmem:[%s698] ss:$2 sm:$0xff]
  %s700 = scalar_lea.vmem %s0, 1139
  %v701 = vld [vmem:[%s700] ss:$2 sm:$0xff]
  %s702 = scalar_lea.vmem %s0, 1203
  %v703 = vld [vmem:[%s702] ss:$2 sm:$0xff]
  %s704 = scalar_lea.vmem %s0, 1219
  %v705 = vld [vmem:[%s704] ss:$2 sm:$0xff]
  %s706 = scalar_lea.vmem %s0, 1363
  %v707 = vld [vmem:[%s706] ss:$2 sm:$0xff]
  %s708 = scalar_lea.vmem %s0, 1379
  %v709 = vld [vmem:[%s708] ss:$2 sm:$0xff]
  %s710 = scalar_lea.vmem %s0, 1443
  %v711 = vld [vmem:[%s710] ss:$2 sm:$0xff]
  %s712 = scalar_lea.vmem %s0, 1459
  %v713 = vld [vmem:[%s712] ss:$2 sm:$0xff]
  %s714 = scalar_lea.vmem %s0, 1523
  %v715 = vld [vmem:[%s714] ss:$2 sm:$0xff]
  %s716 = scalar_lea.vmem %s0, 1539
  %v717 = vld [vmem:[%s716] ss:$2 sm:$0xff]
  %s718 = scalar_lea.vmem %s0, 1603
  %v719 = vld [vmem:[%s718] ss:$2 sm:$0xff]
  %s720 = scalar_lea.vmem %s0, 1619
  %v721 = vld [vmem:[%s720] ss:$2 sm:$0xff]
  %s722 = scalar_lea.vmem %s0, 1683
  %v723 = vld [vmem:[%s722] ss:$2 sm:$0xff]
  %s724 = scalar_lea.vmem %s0, 1699
  %v725 = vld [vmem:[%s724] ss:$2 sm:$0xff]
  %s726 = scalar_lea.vmem %s0, 1763
  %v727 = vld [vmem:[%s726] ss:$2 sm:$0xff]
  %s728 = scalar_lea.vmem %s0, 1779
  %v729 = vld [vmem:[%s728] ss:$2 sm:$0xff]
  %s730 = scalar_lea.vmem %s0, 1843
  %v731 = vld [vmem:[%s730] ss:$2 sm:$0xff]
  %s732 = scalar_lea.vmem %s0, 1859
  %v733 = vld [vmem:[%s732] ss:$2 sm:$0xff]
  %s734 = scalar_lea.vmem %s0, 1923
  %v735 = vld [vmem:[%s734] ss:$2 sm:$0xff]
  %s736 = scalar_lea.vmem %s0, 1939
  %v737 = vld [vmem:[%s736] ss:$2 sm:$0xff]
  %s738 = scalar_lea.vmem %s0, 2003
  %v739 = vld [vmem:[%s738] ss:$2 sm:$0xff]
  %s740 = scalar_lea.vmem %s0, 2019
  %v741 = vld [vmem:[%s740] ss:$2 sm:$0xff]
  %s742 = scalar_lea.vmem %s0, 2083
  %v743 = vld [vmem:[%s742] ss:$2 sm:$0xff]
  %s744 = scalar_lea.vmem %s0, 2099
  %v745 = vld [vmem:[%s744] ss:$2 sm:$0xff]
  %s746 = scalar_lea.vmem %s0, 2163
  %v747 = vld [vmem:[%s746] ss:$2 sm:$0xff]
  %s748 = scalar_lea.vmem %s0, 2179
  %v749 = vld [vmem:[%s748] ss:$2 sm:$0xff]
  %s750 = scalar_lea.vmem %s0, 2243
  %v751 = vld [vmem:[%s750] ss:$2 sm:$0xff]
  %s752 = scalar_lea.vmem %s0, 2259
  %v753 = vld [vmem:[%s752] ss:$2 sm:$0xff]
  %s754 = scalar_lea.vmem %s0, 2323
  %v755 = vld [vmem:[%s754] ss:$2 sm:$0xff]
  %s756 = scalar_lea.vmem %s0, 2339
  %v757 = vld [vmem:[%s756] ss:$2 sm:$0xff]
  %s758 = scalar_lea.vmem %s0, 2403
  %v759 = vld [vmem:[%s758] ss:$2 sm:$0xff]
  %s760 = scalar_lea.vmem %s0, 2419
  %v761 = vld [vmem:[%s760] ss:$2 sm:$0xff]
  %s762 = scalar_lea.vmem %s0, 2483
  %v763 = vld [vmem:[%s762] ss:$2 sm:$0xff]
  %s764 = scalar_lea.vmem %s0, 2499
  %v765 = vld [vmem:[%s764] ss:$2 sm:$0xff]
  %s766 = scalar_lea.vmem %s0, 2563
  %v767 = vld [vmem:[%s766] ss:$2 sm:$0xff]
  %s768 = scalar_lea.vmem %s0, 2579
  %v769 = vld [vmem:[%s768] ss:$2 sm:$0xff]
  %s770 = scalar_lea.vmem %s0, 40
  %v771 = vld [vmem:[%s770] ss:$2 sm:$0xff]
  %s772 = scalar_lea.vmem %s770, 16
  %v773 = vld [vmem:[%s772] ss:$2 sm:$0xff]
  %s774 = scalar_lea.vmem %s770, 80
  %v775 = vld [vmem:[%s774] ss:$2 sm:$0xff]
  %s776 = scalar_lea.vmem %s770, 96
  %v777 = vld [vmem:[%s776] ss:$2 sm:$0xff]
  %s778 = scalar_lea.vmem %s770, 160
  %v779 = vld [vmem:[%s778] ss:$2 sm:$0xff]
  %s780 = scalar_lea.vmem %s770, 176
  %v781 = vld [vmem:[%s780] ss:$2 sm:$0xff]
  %s782 = scalar_lea.vmem %s770, 240
  %v783 = vld [vmem:[%s782] ss:$2 sm:$0xff]
  %s784 = scalar_lea.vmem %s770, 256
  %v785 = vld [vmem:[%s784] ss:$2 sm:$0xff]
  %s786 = scalar_lea.vmem %s770, 320
  %v787 = vld [vmem:[%s786] ss:$2 sm:$0xff]
  %s788 = scalar_lea.vmem %s770, 336
  %v789 = vld [vmem:[%s788] ss:$2 sm:$0xff]
  %s790 = scalar_lea.vmem %s770, 400
  %v791 = vld [vmem:[%s790] ss:$2 sm:$0xff]
  %s792 = scalar_lea.vmem %s770, 416
  %v793 = vld [vmem:[%s792] ss:$2 sm:$0xff]
  %s794 = scalar_lea.vmem %s770, 480
  %v795 = vld [vmem:[%s794] ss:$2 sm:$0xff]
  %s796 = scalar_lea.vmem %s770, 496
  %v797 = vld [vmem:[%s796] ss:$2 sm:$0xff]
  %s798 = scalar_lea.vmem %s770, 560
  %v799 = vld [vmem:[%s798] ss:$2 sm:$0xff]
  %s800 = scalar_lea.vmem %s770, 576
  %v801 = vld [vmem:[%s800] ss:$2 sm:$0xff]
  %s802 = scalar_lea.vmem %s770, 640
  %v803 = vld [vmem:[%s802] ss:$2 sm:$0xff]
  %s804 = scalar_lea.vmem %s770, 656
  %v805 = vld [vmem:[%s804] ss:$2 sm:$0xff]
  %s806 = scalar_lea.vmem %s770, 720
  %v807 = vld [vmem:[%s806] ss:$2 sm:$0xff]
  %s808 = scalar_lea.vmem %s770, 736
  %v809 = vld [vmem:[%s808] ss:$2 sm:$0xff]
  %s810 = scalar_lea.vmem %s770, 800
  %v811 = vld [vmem:[%s810] ss:$2 sm:$0xff]
  %s812 = scalar_lea.vmem %s770, 816
  %v813 = vld [vmem:[%s812] ss:$2 sm:$0xff]
  %s814 = scalar_lea.vmem %s770, 880
  %v815 = vld [vmem:[%s814] ss:$2 sm:$0xff]
  %s816 = scalar_lea.vmem %s770, 896
  %v817 = vld [vmem:[%s816] ss:$2 sm:$0xff]
  %s818 = scalar_lea.vmem %s770, 960
  %v819 = vld [vmem:[%s818] ss:$2 sm:$0xff]
  %s820 = scalar_lea.vmem %s770, 976
  %v821 = vld [vmem:[%s820] ss:$2 sm:$0xff]
  %s822 = scalar_lea.vmem %s770, 1040
  %v823 = vld [vmem:[%s822] ss:$2 sm:$0xff]
  %s824 = scalar_lea.vmem %s770, 1056
  %v825 = vld [vmem:[%s824] ss:$2 sm:$0xff]
  %s826 = scalar_lea.vmem %s770, 1120
  %v827 = vld [vmem:[%s826] ss:$2 sm:$0xff]
  %s828 = scalar_lea.vmem %s770, 1136
  %v829 = vld [vmem:[%s828] ss:$2 sm:$0xff]
  %s830 = scalar_lea.vmem %s770, 1200
  %v831 = vld [vmem:[%s830] ss:$2 sm:$0xff]
  %s832 = scalar_lea.vmem %s770, 1216
  %v833 = vld [vmem:[%s832] ss:$2 sm:$0xff]
  %s834 = scalar_lea.vmem %s770, 1360
  %v835 = vld [vmem:[%s834] ss:$2 sm:$0xff]
  %s836 = scalar_lea.vmem %s770, 1376
  %v837 = vld [vmem:[%s836] ss:$2 sm:$0xff]
  %s838 = scalar_lea.vmem %s770, 1440
  %v839 = vld [vmem:[%s838] ss:$2 sm:$0xff]
  %s840 = scalar_lea.vmem %s770, 1456
  %v841 = vld [vmem:[%s840] ss:$2 sm:$0xff]
  %s842 = scalar_lea.vmem %s770, 1520
  %v843 = vld [vmem:[%s842] ss:$2 sm:$0xff]
  %s844 = scalar_lea.vmem %s770, 1536
  %v845 = vld [vmem:[%s844] ss:$2 sm:$0xff]
  %s846 = scalar_lea.vmem %s770, 1600
  %v847 = vld [vmem:[%s846] ss:$2 sm:$0xff]
  %s848 = scalar_lea.vmem %s770, 1616
  %v849 = vld [vmem:[%s848] ss:$2 sm:$0xff]
  %s850 = scalar_lea.vmem %s770, 1680
  %v851 = vld [vmem:[%s850] ss:$2 sm:$0xff]
  %s852 = scalar_lea.vmem %s770, 1696
  %v853 = vld [vmem:[%s852] ss:$2 sm:$0xff]
  %s854 = scalar_lea.vmem %s770, 1760
  %v855 = vld [vmem:[%s854] ss:$2 sm:$0xff]
  %s856 = scalar_lea.vmem %s770, 1776
  %v857 = vld [vmem:[%s856] ss:$2 sm:$0xff]
  %s858 = scalar_lea.vmem %s770, 1840
  %v859 = vld [vmem:[%s858] ss:$2 sm:$0xff]
  %s860 = scalar_lea.vmem %s770, 1856
  %v861 = vld [vmem:[%s860] ss:$2 sm:$0xff]
  %s862 = scalar_lea.vmem %s770, 1920
  %v863 = vld [vmem:[%s862] ss:$2 sm:$0xff]
  %s864 = scalar_lea.vmem %s770, 1936
  %v865 = vld [vmem:[%s864] ss:$2 sm:$0xff]
  %s866 = scalar_lea.vmem %s770, 2000
  %v867 = vld [vmem:[%s866] ss:$2 sm:$0xff]
  %s868 = scalar_lea.vmem %s770, 2016
  %v869 = vld [vmem:[%s868] ss:$2 sm:$0xff]
  %s870 = scalar_lea.vmem %s770, 2080
  %v871 = vld [vmem:[%s870] ss:$2 sm:$0xff]
  %s872 = scalar_lea.vmem %s770, 2096
  %v873 = vld [vmem:[%s872] ss:$2 sm:$0xff]
  %s874 = scalar_lea.vmem %s770, 2160
  %v875 = vld [vmem:[%s874] ss:$2 sm:$0xff]
  %s876 = scalar_lea.vmem %s770, 2176
  %v877 = vld [vmem:[%s876] ss:$2 sm:$0xff]
  %s878 = scalar_lea.vmem %s770, 2240
  %v879 = vld [vmem:[%s878] ss:$2 sm:$0xff]
  %s880 = scalar_lea.vmem %s770, 2256
  %v881 = vld [vmem:[%s880] ss:$2 sm:$0xff]
  %s882 = scalar_lea.vmem %s770, 2320
  %v883 = vld [vmem:[%s882] ss:$2 sm:$0xff]
  %s884 = scalar_lea.vmem %s770, 2336
  %v885 = vld [vmem:[%s884] ss:$2 sm:$0xff]
  %s886 = scalar_lea.vmem %s770, 2400
  %v887 = vld [vmem:[%s886] ss:$2 sm:$0xff]
  %s888 = scalar_lea.vmem %s770, 2416
  %v889 = vld [vmem:[%s888] ss:$2 sm:$0xff]
  %s890 = scalar_lea.vmem %s770, 2480
  %v891 = vld [vmem:[%s890] ss:$2 sm:$0xff]
  %s892 = scalar_lea.vmem %s770, 2496
  %v893 = vld [vmem:[%s892] ss:$2 sm:$0xff]
  %s894 = scalar_lea.vmem %s770, 2560
  %v895 = vld [vmem:[%s894] ss:$2 sm:$0xff]
  %s896 = scalar_lea.vmem %s770, 2576
  %v897 = vld [vmem:[%s896] ss:$2 sm:$0xff]
  %s898 = scalar_lea.vmem %s770, 1
  %v899 = vld [vmem:[%s898] ss:$2 sm:$0xff]
  %s900 = scalar_lea.vmem %s770, 17
  %v901 = vld [vmem:[%s900] ss:$2 sm:$0xff]
  %s902 = scalar_lea.vmem %s770, 81
  %v903 = vld [vmem:[%s902] ss:$2 sm:$0xff]
  %s904 = scalar_lea.vmem %s770, 97
  %v905 = vld [vmem:[%s904] ss:$2 sm:$0xff]
  %s906 = scalar_lea.vmem %s770, 161
  %v907 = vld [vmem:[%s906] ss:$2 sm:$0xff]
  %s908 = scalar_lea.vmem %s770, 177
  %v909 = vld [vmem:[%s908] ss:$2 sm:$0xff]
  %s910 = scalar_lea.vmem %s770, 241
  %v911 = vld [vmem:[%s910] ss:$2 sm:$0xff]
  %s912 = scalar_lea.vmem %s770, 257
  %v913 = vld [vmem:[%s912] ss:$2 sm:$0xff]
  %s914 = scalar_lea.vmem %s770, 321
  %v915 = vld [vmem:[%s914] ss:$2 sm:$0xff]
  %s916 = scalar_lea.vmem %s770, 337
  %v917 = vld [vmem:[%s916] ss:$2 sm:$0xff]
  %s918 = scalar_lea.vmem %s770, 401
  %v919 = vld [vmem:[%s918] ss:$2 sm:$0xff]
  %s920 = scalar_lea.vmem %s770, 417
  %v921 = vld [vmem:[%s920] ss:$2 sm:$0xff]
  %s922 = scalar_lea.vmem %s770, 481
  %v923 = vld [vmem:[%s922] ss:$2 sm:$0xff]
  %s924 = scalar_lea.vmem %s770, 497
  %v925 = vld [vmem:[%s924] ss:$2 sm:$0xff]
  %s926 = scalar_lea.vmem %s770, 561
  %v927 = vld [vmem:[%s926] ss:$2 sm:$0xff]
  %s928 = scalar_lea.vmem %s770, 577
  %v929 = vld [vmem:[%s928] ss:$2 sm:$0xff]
  %s930 = scalar_lea.vmem %s770, 641
  %v931 = vld [vmem:[%s930] ss:$2 sm:$0xff]
  %s932 = scalar_lea.vmem %s770, 657
  %v933 = vld [vmem:[%s932] ss:$2 sm:$0xff]
  %s934 = scalar_lea.vmem %s770, 721
  %v935 = vld [vmem:[%s934] ss:$2 sm:$0xff]
  %s936 = scalar_lea.vmem %s770, 737
  %v937 = vld [vmem:[%s936] ss:$2 sm:$0xff]
  %s938 = scalar_lea.vmem %s770, 801
  %v939 = vld [vmem:[%s938] ss:$2 sm:$0xff]
  %s940 = scalar_lea.vmem %s770, 817
  %v941 = vld [vmem:[%s940] ss:$2 sm:$0xff]
  %s942 = scalar_lea.vmem %s770, 881
  %v943 = vld [vmem:[%s942] ss:$2 sm:$0xff]
  %s944 = scalar_lea.vmem %s770, 897
  %v945 = vld [vmem:[%s944] ss:$2 sm:$0xff]
  %s946 = scalar_lea.vmem %s770, 961
  %v947 = vld [vmem:[%s946] ss:$2 sm:$0xff]
  %s948 = scalar_lea.vmem %s770, 977
  %v949 = vld [vmem:[%s948] ss:$2 sm:$0xff]
  %s950 = scalar_lea.vmem %s770, 1041
  %v951 = vld [vmem:[%s950] ss:$2 sm:$0xff]
  %s952 = scalar_lea.vmem %s770, 1057
  %v953 = vld [vmem:[%s952] ss:$2 sm:$0xff]
  %s954 = scalar_lea.vmem %s770, 1121
  %v955 = vld [vmem:[%s954] ss:$2 sm:$0xff]
  %s956 = scalar_lea.vmem %s770, 1137
  %v957 = vld [vmem:[%s956] ss:$2 sm:$0xff]
  %s958 = scalar_lea.vmem %s770, 1201
  %v959 = vld [vmem:[%s958] ss:$2 sm:$0xff]
  %s960 = scalar_lea.vmem %s770, 1217
  %v961 = vld [vmem:[%s960] ss:$2 sm:$0xff]
  %s962 = scalar_lea.vmem %s770, 1361
  %v963 = vld [vmem:[%s962] ss:$2 sm:$0xff]
  %s964 = scalar_lea.vmem %s770, 1377
  %v965 = vld [vmem:[%s964] ss:$2 sm:$0xff]
  %s966 = scalar_lea.vmem %s770, 1441
  %v967 = vld [vmem:[%s966] ss:$2 sm:$0xff]
  %s968 = scalar_lea.vmem %s770, 1457
  %v969 = vld [vmem:[%s968] ss:$2 sm:$0xff]
  %s970 = scalar_lea.vmem %s770, 1521
  %v971 = vld [vmem:[%s970] ss:$2 sm:$0xff]
  %s972 = scalar_lea.vmem %s770, 1537
  %v973 = vld [vmem:[%s972] ss:$2 sm:$0xff]
  %s974 = scalar_lea.vmem %s770, 1601
  %v975 = vld [vmem:[%s974] ss:$2 sm:$0xff]
  %s976 = scalar_lea.vmem %s770, 1617
  %v977 = vld [vmem:[%s976] ss:$2 sm:$0xff]
  %s978 = scalar_lea.vmem %s770, 1681
  %v979 = vld [vmem:[%s978] ss:$2 sm:$0xff]
  %s980 = scalar_lea.vmem %s770, 1697
  %v981 = vld [vmem:[%s980] ss:$2 sm:$0xff]
  %s982 = scalar_lea.vmem %s770, 1761
  %v983 = vld [vmem:[%s982] ss:$2 sm:$0xff]
  %s984 = scalar_lea.vmem %s770, 1777
  %v985 = vld [vmem:[%s984] ss:$2 sm:$0xff]
  %s986 = scalar_lea.vmem %s770, 1841
  %v987 = vld [vmem:[%s986] ss:$2 sm:$0xff]
  %s988 = scalar_lea.vmem %s770, 1857
  %v989 = vld [vmem:[%s988] ss:$2 sm:$0xff]
  %s990 = scalar_lea.vmem %s770, 1921
  %v991 = vld [vmem:[%s990] ss:$2 sm:$0xff]
  %s992 = scalar_lea.vmem %s770, 1937
  %v993 = vld [vmem:[%s992] ss:$2 sm:$0xff]
  %s994 = scalar_lea.vmem %s770, 2001
  %v995 = vld [vmem:[%s994] ss:$2 sm:$0xff]
  %s996 = scalar_lea.vmem %s770, 2017
  %v997 = vld [vmem:[%s996] ss:$2 sm:$0xff]
  %s998 = scalar_lea.vmem %s770, 2081
  %v999 = vld [vmem:[%s998] ss:$2 sm:$0xff]
  %s1000 = scalar_lea.vmem %s770, 2097
  %v1001 = vld [vmem:[%s1000] ss:$2 sm:$0xff]
  %s1002 = scalar_lea.vmem %s770, 2161
  %v1003 = vld [vmem:[%s1002] ss:$2 sm:$0xff]
  %s1004 = scalar_lea.vmem %s770, 2177
  %v1005 = vld [vmem:[%s1004] ss:$2 sm:$0xff]
  %s1006 = scalar_lea.vmem %s770, 2241
  %v1007 = vld [vmem:[%s1006] ss:$2 sm:$0xff]
  %s1008 = scalar_lea.vmem %s770, 2257
  %v1009 = vld [vmem:[%s1008] ss:$2 sm:$0xff]
  %s1010 = scalar_lea.vmem %s770, 2321
  %v1011 = vld [vmem:[%s1010] ss:$2 sm:$0xff]
  %s1012 = scalar_lea.vmem %s770, 2337
  %v1013 = vld [vmem:[%s1012] ss:$2 sm:$0xff]
  %s1014 = scalar_lea.vmem %s770, 2401
  %v1015 = vld [vmem:[%s1014] ss:$2 sm:$0xff]
  %s1016 = scalar_lea.vmem %s770, 2417
  %v1017 = vld [vmem:[%s1016] ss:$2 sm:$0xff]
  %s1018 = scalar_lea.vmem %s770, 2481
  %v1019 = vld [vmem:[%s1018] ss:$2 sm:$0xff]
  %s1020 = scalar_lea.vmem %s770, 2497
  %v1021 = vld [vmem:[%s1020] ss:$2 sm:$0xff]
  %s1022 = scalar_lea.vmem %s770, 2561
  %v1023 = vld [vmem:[%s1022] ss:$2 sm:$0xff]
  %s1024 = scalar_lea.vmem %s770, 2577
  %v1025 = vld [vmem:[%s1024] ss:$2 sm:$0xff]
  %s1026 = scalar_lea.vmem %s770, 2
  %v1027 = vld [vmem:[%s1026] ss:$2 sm:$0xff]
  %s1028 = scalar_lea.vmem %s770, 18
  %v1029 = vld [vmem:[%s1028] ss:$2 sm:$0xff]
  %s1030 = scalar_lea.vmem %s770, 82
  %v1031 = vld [vmem:[%s1030] ss:$2 sm:$0xff]
  %s1032 = scalar_lea.vmem %s770, 98
  %v1033 = vld [vmem:[%s1032] ss:$2 sm:$0xff]
  %s1034 = scalar_lea.vmem %s770, 162
  %v1035 = vld [vmem:[%s1034] ss:$2 sm:$0xff]
  %s1036 = scalar_lea.vmem %s770, 178
  %v1037 = vld [vmem:[%s1036] ss:$2 sm:$0xff]
  %s1038 = scalar_lea.vmem %s770, 242
  %v1039 = vld [vmem:[%s1038] ss:$2 sm:$0xff]
  %s1040 = scalar_lea.vmem %s770, 258
  %v1041 = vld [vmem:[%s1040] ss:$2 sm:$0xff]
  %s1042 = scalar_lea.vmem %s770, 322
  %v1043 = vld [vmem:[%s1042] ss:$2 sm:$0xff]
  %s1044 = scalar_lea.vmem %s770, 338
  %v1045 = vld [vmem:[%s1044] ss:$2 sm:$0xff]
  %s1046 = scalar_lea.vmem %s770, 402
  %v1047 = vld [vmem:[%s1046] ss:$2 sm:$0xff]
  %s1048 = scalar_lea.vmem %s770, 418
  %v1049 = vld [vmem:[%s1048] ss:$2 sm:$0xff]
  %s1050 = scalar_lea.vmem %s770, 482
  %v1051 = vld [vmem:[%s1050] ss:$2 sm:$0xff]
  %s1052 = scalar_lea.vmem %s770, 498
  %v1053 = vld [vmem:[%s1052] ss:$2 sm:$0xff]
  %s1054 = scalar_lea.vmem %s770, 562
  %v1055 = vld [vmem:[%s1054] ss:$2 sm:$0xff]
  %s1056 = scalar_lea.vmem %s770, 578
  %v1057 = vld [vmem:[%s1056] ss:$2 sm:$0xff]
  %s1058 = scalar_lea.vmem %s770, 642
  %v1059 = vld [vmem:[%s1058] ss:$2 sm:$0xff]
  %s1060 = scalar_lea.vmem %s770, 658
  %v1061 = vld [vmem:[%s1060] ss:$2 sm:$0xff]
  %s1062 = scalar_lea.vmem %s770, 722
  %v1063 = vld [vmem:[%s1062] ss:$2 sm:$0xff]
  %s1064 = scalar_lea.vmem %s770, 738
  %v1065 = vld [vmem:[%s1064] ss:$2 sm:$0xff]
  %s1066 = scalar_lea.vmem %s770, 802
  %v1067 = vld [vmem:[%s1066] ss:$2 sm:$0xff]
  %s1068 = scalar_lea.vmem %s770, 818
  %v1069 = vld [vmem:[%s1068] ss:$2 sm:$0xff]
  %s1070 = scalar_lea.vmem %s770, 882
  %v1071 = vld [vmem:[%s1070] ss:$2 sm:$0xff]
  %s1072 = scalar_lea.vmem %s770, 898
  %v1073 = vld [vmem:[%s1072] ss:$2 sm:$0xff]
  %s1074 = scalar_lea.vmem %s770, 962
  %v1075 = vld [vmem:[%s1074] ss:$2 sm:$0xff]
  %s1076 = scalar_lea.vmem %s770, 978
  %v1077 = vld [vmem:[%s1076] ss:$2 sm:$0xff]
  %s1078 = scalar_lea.vmem %s770, 1042
  %v1079 = vld [vmem:[%s1078] ss:$2 sm:$0xff]
  %s1080 = scalar_lea.vmem %s770, 1058
  %v1081 = vld [vmem:[%s1080] ss:$2 sm:$0xff]
  %s1082 = scalar_lea.vmem %s770, 1122
  %v1083 = vld [vmem:[%s1082] ss:$2 sm:$0xff]
  %s1084 = scalar_lea.vmem %s770, 1138
  %v1085 = vld [vmem:[%s1084] ss:$2 sm:$0xff]
  %s1086 = scalar_lea.vmem %s770, 1202
  %v1087 = vld [vmem:[%s1086] ss:$2 sm:$0xff]
  %s1088 = scalar_lea.vmem %s770, 1218
  %v1089 = vld [vmem:[%s1088] ss:$2 sm:$0xff]
  %s1090 = scalar_lea.vmem %s770, 1362
  %v1091 = vld [vmem:[%s1090] ss:$2 sm:$0xff]
  %s1092 = scalar_lea.vmem %s770, 1378
  %v1093 = vld [vmem:[%s1092] ss:$2 sm:$0xff]
  %s1094 = scalar_lea.vmem %s770, 1442
  %v1095 = vld [vmem:[%s1094] ss:$2 sm:$0xff]
  %s1096 = scalar_lea.vmem %s770, 1458
  %v1097 = vld [vmem:[%s1096] ss:$2 sm:$0xff]
  %s1098 = scalar_lea.vmem %s770, 1522
  %v1099 = vld [vmem:[%s1098] ss:$2 sm:$0xff]
  %s1100 = scalar_lea.vmem %s770, 1538
  %v1101 = vld [vmem:[%s1100] ss:$2 sm:$0xff]
  %s1102 = scalar_lea.vmem %s770, 1602
  %v1103 = vld [vmem:[%s1102] ss:$2 sm:$0xff]
  %s1104 = scalar_lea.vmem %s770, 1618
  %v1105 = vld [vmem:[%s1104] ss:$2 sm:$0xff]
  %s1106 = scalar_lea.vmem %s770, 1682
  %v1107 = vld [vmem:[%s1106] ss:$2 sm:$0xff]
  %s1108 = scalar_lea.vmem %s770, 1698
  %v1109 = vld [vmem:[%s1108] ss:$2 sm:$0xff]
  %s1110 = scalar_lea.vmem %s770, 1762
  %v1111 = vld [vmem:[%s1110] ss:$2 sm:$0xff]
  %s1112 = scalar_lea.vmem %s770, 1778
  %v1113 = vld [vmem:[%s1112] ss:$2 sm:$0xff]
  %s1114 = scalar_lea.vmem %s770, 1842
  %v1115 = vld [vmem:[%s1114] ss:$2 sm:$0xff]
  %s1116 = scalar_lea.vmem %s770, 1858
  %v1117 = vld [vmem:[%s1116] ss:$2 sm:$0xff]
  %s1118 = scalar_lea.vmem %s770, 1922
  %v1119 = vld [vmem:[%s1118] ss:$2 sm:$0xff]
  %s1120 = scalar_lea.vmem %s770, 1938
  %v1121 = vld [vmem:[%s1120] ss:$2 sm:$0xff]
  %s1122 = scalar_lea.vmem %s770, 2002
  %v1123 = vld [vmem:[%s1122] ss:$2 sm:$0xff]
  %s1124 = scalar_lea.vmem %s770, 2018
  %v1125 = vld [vmem:[%s1124] ss:$2 sm:$0xff]
  %s1126 = scalar_lea.vmem %s770, 2082
  %v1127 = vld [vmem:[%s1126] ss:$2 sm:$0xff]
  %s1128 = scalar_lea.vmem %s770, 2098
  %v1129 = vld [vmem:[%s1128] ss:$2 sm:$0xff]
  %s1130 = scalar_lea.vmem %s770, 2162
  %v1131 = vld [vmem:[%s1130] ss:$2 sm:$0xff]
  %s1132 = scalar_lea.vmem %s770, 2178
  %v1133 = vld [vmem:[%s1132] ss:$2 sm:$0xff]
  %s1134 = scalar_lea.vmem %s770, 2242
  %v1135 = vld [vmem:[%s1134] ss:$2 sm:$0xff]
  %s1136 = scalar_lea.vmem %s770, 2258
  %v1137 = vld [vmem:[%s1136] ss:$2 sm:$0xff]
  %s1138 = scalar_lea.vmem %s770, 2322
  %v1139 = vld [vmem:[%s1138] ss:$2 sm:$0xff]
  %s1140 = scalar_lea.vmem %s770, 2338
  %v1141 = vld [vmem:[%s1140] ss:$2 sm:$0xff]
  %s1142 = scalar_lea.vmem %s770, 2402
  %v1143 = vld [vmem:[%s1142] ss:$2 sm:$0xff]
  %s1144 = scalar_lea.vmem %s770, 2418
  %v1145 = vld [vmem:[%s1144] ss:$2 sm:$0xff]
  %s1146 = scalar_lea.vmem %s770, 2482
  %v1147 = vld [vmem:[%s1146] ss:$2 sm:$0xff]
  %s1148 = scalar_lea.vmem %s770, 2498
  %v1149 = vld [vmem:[%s1148] ss:$2 sm:$0xff]
  %s1150 = scalar_lea.vmem %s770, 2562
  %v1151 = vld [vmem:[%s1150] ss:$2 sm:$0xff]
  %s1152 = scalar_lea.vmem %s770, 2578
  %v1153 = vld [vmem:[%s1152] ss:$2 sm:$0xff]
  %s1154 = scalar_lea.vmem %s770, 3
  %v1155 = vld [vmem:[%s1154] ss:$2 sm:$0xff]
  %s1156 = scalar_lea.vmem %s770, 19
  %v1157 = vld [vmem:[%s1156] ss:$2 sm:$0xff]
  %s1158 = scalar_lea.vmem %s770, 83
  %v1159 = vld [vmem:[%s1158] ss:$2 sm:$0xff]
  %s1160 = scalar_lea.vmem %s770, 99
  %v1161 = vld [vmem:[%s1160] ss:$2 sm:$0xff]
  %s1162 = scalar_lea.vmem %s770, 163
  %v1163 = vld [vmem:[%s1162] ss:$2 sm:$0xff]
  %s1164 = scalar_lea.vmem %s770, 179
  %v1165 = vld [vmem:[%s1164] ss:$2 sm:$0xff]
  %s1166 = scalar_lea.vmem %s770, 243
  %v1167 = vld [vmem:[%s1166] ss:$2 sm:$0xff]
  %s1168 = scalar_lea.vmem %s770, 259
  %v1169 = vld [vmem:[%s1168] ss:$2 sm:$0xff]
  %s1170 = scalar_lea.vmem %s770, 323
  %v1171 = vld [vmem:[%s1170] ss:$2 sm:$0xff]
  %s1172 = scalar_lea.vmem %s770, 339
  %v1173 = vld [vmem:[%s1172] ss:$2 sm:$0xff]
  %s1174 = scalar_lea.vmem %s770, 403
  %v1175 = vld [vmem:[%s1174] ss:$2 sm:$0xff]
  %s1176 = scalar_lea.vmem %s770, 419
  %v1177 = vld [vmem:[%s1176] ss:$2 sm:$0xff]
  %s1178 = scalar_lea.vmem %s770, 483
  %v1179 = vld [vmem:[%s1178] ss:$2 sm:$0xff]
  %s1180 = scalar_lea.vmem %s770, 499
  %v1181 = vld [vmem:[%s1180] ss:$2 sm:$0xff]
  %s1182 = scalar_lea.vmem %s770, 563
  %v1183 = vld [vmem:[%s1182] ss:$2 sm:$0xff]
  %s1184 = scalar_lea.vmem %s770, 579
  %v1185 = vld [vmem:[%s1184] ss:$2 sm:$0xff]
  %s1186 = scalar_lea.vmem %s770, 643
  %v1187 = vld [vmem:[%s1186] ss:$2 sm:$0xff]
  %s1188 = scalar_lea.vmem %s770, 659
  %v1189 = vld [vmem:[%s1188] ss:$2 sm:$0xff]
  %s1190 = scalar_lea.vmem %s770, 723
  %v1191 = vld [vmem:[%s1190] ss:$2 sm:$0xff]
  %s1192 = scalar_lea.vmem %s770, 739
  %v1193 = vld [vmem:[%s1192] ss:$2 sm:$0xff]
  %s1194 = scalar_lea.vmem %s770, 803
  %v1195 = vld [vmem:[%s1194] ss:$2 sm:$0xff]
  %s1196 = scalar_lea.vmem %s770, 819
  %v1197 = vld [vmem:[%s1196] ss:$2 sm:$0xff]
  %s1198 = scalar_lea.vmem %s770, 883
  %v1199 = vld [vmem:[%s1198] ss:$2 sm:$0xff]
  %s1200 = scalar_lea.vmem %s770, 899
  %v1201 = vld [vmem:[%s1200] ss:$2 sm:$0xff]
  %s1202 = scalar_lea.vmem %s770, 963
  %v1203 = vld [vmem:[%s1202] ss:$2 sm:$0xff]
  %s1204 = scalar_lea.vmem %s770, 979
  %v1205 = vld [vmem:[%s1204] ss:$2 sm:$0xff]
  %s1206 = scalar_lea.vmem %s770, 1043
  %v1207 = vld [vmem:[%s1206] ss:$2 sm:$0xff]
  %s1208 = scalar_lea.vmem %s770, 1059
  %v1209 = vld [vmem:[%s1208] ss:$2 sm:$0xff]
  %s1210 = scalar_lea.vmem %s770, 1123
  %v1211 = vld [vmem:[%s1210] ss:$2 sm:$0xff]
  %s1212 = scalar_lea.vmem %s770, 1139
  %v1213 = vld [vmem:[%s1212] ss:$2 sm:$0xff]
  %s1214 = scalar_lea.vmem %s770, 1203
  %v1215 = vld [vmem:[%s1214] ss:$2 sm:$0xff]
  %s1216 = scalar_lea.vmem %s770, 1219
  %v1217 = vld [vmem:[%s1216] ss:$2 sm:$0xff]
  %s1218 = scalar_lea.vmem %s770, 1363
  %v1219 = vld [vmem:[%s1218] ss:$2 sm:$0xff]
  %s1220 = scalar_lea.vmem %s770, 1379
  %v1221 = vld [vmem:[%s1220] ss:$2 sm:$0xff]
  %s1222 = scalar_lea.vmem %s770, 1443
  %v1223 = vld [vmem:[%s1222] ss:$2 sm:$0xff]
  %s1224 = scalar_lea.vmem %s770, 1459
  %v1225 = vld [vmem:[%s1224] ss:$2 sm:$0xff]
  %s1226 = scalar_lea.vmem %s770, 1523
  %v1227 = vld [vmem:[%s1226] ss:$2 sm:$0xff]
  %s1228 = scalar_lea.vmem %s770, 1539
  %v1229 = vld [vmem:[%s1228] ss:$2 sm:$0xff]
  %s1230 = scalar_lea.vmem %s770, 1603
  %v1231 = vld [vmem:[%s1230] ss:$2 sm:$0xff]
  %s1232 = scalar_lea.vmem %s770, 1619
  %v1233 = vld [vmem:[%s1232] ss:$2 sm:$0xff]
  %s1234 = scalar_lea.vmem %s770, 1683
  %v1235 = vld [vmem:[%s1234] ss:$2 sm:$0xff]
  %s1236 = scalar_lea.vmem %s770, 1699
  %v1237 = vld [vmem:[%s1236] ss:$2 sm:$0xff]
  %s1238 = scalar_lea.vmem %s770, 1763
  %v1239 = vld [vmem:[%s1238] ss:$2 sm:$0xff]
  %s1240 = scalar_lea.vmem %s770, 1779
  %v1241 = vld [vmem:[%s1240] ss:$2 sm:$0xff]
  %s1242 = scalar_lea.vmem %s770, 1843
  %v1243 = vld [vmem:[%s1242] ss:$2 sm:$0xff]
  %s1244 = scalar_lea.vmem %s770, 1859
  %v1245 = vld [vmem:[%s1244] ss:$2 sm:$0xff]
  %s1246 = scalar_lea.vmem %s770, 1923
  %v1247 = vld [vmem:[%s1246] ss:$2 sm:$0xff]
  %s1248 = scalar_lea.vmem %s770, 1939
  %v1249 = vld [vmem:[%s1248] ss:$2 sm:$0xff]
  %s1250 = scalar_lea.vmem %s770, 2003
  %v1251 = vld [vmem:[%s1250] ss:$2 sm:$0xff]
  %s1252 = scalar_lea.vmem %s770, 2019
  %v1253 = vld [vmem:[%s1252] ss:$2 sm:$0xff]
  %s1254 = scalar_lea.vmem %s770, 2083
  %v1255 = vld [vmem:[%s1254] ss:$2 sm:$0xff]
  %s1256 = scalar_lea.vmem %s770, 2099
  %v1257 = vld [vmem:[%s1256] ss:$2 sm:$0xff]
  %s1258 = scalar_lea.vmem %s770, 2163
  %v1259 = vld [vmem:[%s1258] ss:$2 sm:$0xff]
  %s1260 = scalar_lea.vmem %s770, 2179
  %v1261 = vld [vmem:[%s1260] ss:$2 sm:$0xff]
  %s1262 = scalar_lea.vmem %s770, 2243
  %v1263 = vld [vmem:[%s1262] ss:$2 sm:$0xff]
  %s1264 = scalar_lea.vmem %s770, 2259
  %v1265 = vld [vmem:[%s1264] ss:$2 sm:$0xff]
  %s1266 = scalar_lea.vmem %s770, 2323
  %v1267 = vld [vmem:[%s1266] ss:$2 sm:$0xff]
  %s1268 = scalar_lea.vmem %s770, 2339
  %v1269 = vld [vmem:[%s1268] ss:$2 sm:$0xff]
  %s1270 = scalar_lea.vmem %s770, 2403
  %v1271 = vld [vmem:[%s1270] ss:$2 sm:$0xff]
  %s1272 = scalar_lea.vmem %s770, 2419
  %v1273 = vld [vmem:[%s1272] ss:$2 sm:$0xff]
  %s1274 = scalar_lea.vmem %s770, 2483
  %v1275 = vld [vmem:[%s1274] ss:$2 sm:$0xff]
  %s1276 = scalar_lea.vmem %s770, 2499
  %v1277 = vld [vmem:[%s1276] ss:$2 sm:$0xff]
  %s1278 = scalar_lea.vmem %s770, 2563
  %v1279 = vld [vmem:[%s1278] ss:$2 sm:$0xff]
  %s1280 = scalar_lea.vmem %s770, 2579
  %v1281 = vld [vmem:[%s1280] ss:$2 sm:$0xff]
  %s1282 = scalar_lea.vmem %s0, 80
  %v1283 = vld [vmem:[%s1282] ss:$2 sm:$0xff]
  %s1284 = scalar_lea.vmem %s1282, 16
  %v1285 = vld [vmem:[%s1284] ss:$2 sm:$0xff]
  %s1286 = scalar_lea.vmem %s1282, 80
  %v1287 = vld [vmem:[%s1286] ss:$2 sm:$0xff]
  %s1288 = scalar_lea.vmem %s1282, 96
  %v1289 = vld [vmem:[%s1288] ss:$2 sm:$0xff]
  %s1290 = scalar_lea.vmem %s1282, 160
  %v1291 = vld [vmem:[%s1290] ss:$2 sm:$0xff]
  %s1292 = scalar_lea.vmem %s1282, 176
  %v1293 = vld [vmem:[%s1292] ss:$2 sm:$0xff]
  %s1294 = scalar_lea.vmem %s1282, 240
  %v1295 = vld [vmem:[%s1294] ss:$2 sm:$0xff]
  %s1296 = scalar_lea.vmem %s1282, 256
  %v1297 = vld [vmem:[%s1296] ss:$2 sm:$0xff]
  %s1298 = scalar_lea.vmem %s1282, 320
  %v1299 = vld [vmem:[%s1298] ss:$2 sm:$0xff]
  %s1300 = scalar_lea.vmem %s1282, 336
  %v1301 = vld [vmem:[%s1300] ss:$2 sm:$0xff]
  %s1302 = scalar_lea.vmem %s1282, 400
  %v1303 = vld [vmem:[%s1302] ss:$2 sm:$0xff]
  %s1304 = scalar_lea.vmem %s1282, 416
  %v1305 = vld [vmem:[%s1304] ss:$2 sm:$0xff]
  %s1306 = scalar_lea.vmem %s1282, 480
  %v1307 = vld [vmem:[%s1306] ss:$2 sm:$0xff]
  %s1308 = scalar_lea.vmem %s1282, 496
  %v1309 = vld [vmem:[%s1308] ss:$2 sm:$0xff]
  %s1310 = scalar_lea.vmem %s1282, 560
  %v1311 = vld [vmem:[%s1310] ss:$2 sm:$0xff]
  %s1312 = scalar_lea.vmem %s1282, 576
  %v1313 = vld [vmem:[%s1312] ss:$2 sm:$0xff]
  %s1314 = scalar_lea.vmem %s1282, 640
  %v1315 = vld [vmem:[%s1314] ss:$2 sm:$0xff]
  %s1316 = scalar_lea.vmem %s1282, 656
  %v1317 = vld [vmem:[%s1316] ss:$2 sm:$0xff]
  %s1318 = scalar_lea.vmem %s1282, 720
  %v1319 = vld [vmem:[%s1318] ss:$2 sm:$0xff]
  %s1320 = scalar_lea.vmem %s1282, 736
  %v1321 = vld [vmem:[%s1320] ss:$2 sm:$0xff]
  %s1322 = scalar_lea.vmem %s1282, 800
  %v1323 = vld [vmem:[%s1322] ss:$2 sm:$0xff]
  %s1324 = scalar_lea.vmem %s1282, 816
  %v1325 = vld [vmem:[%s1324] ss:$2 sm:$0xff]
  %s1326 = scalar_lea.vmem %s1282, 880
  %v1327 = vld [vmem:[%s1326] ss:$2 sm:$0xff]
  %s1328 = scalar_lea.vmem %s1282, 896
  %v1329 = vld [vmem:[%s1328] ss:$2 sm:$0xff]
  %s1330 = scalar_lea.vmem %s1282, 960
  %v1331 = vld [vmem:[%s1330] ss:$2 sm:$0xff]
  %s1332 = scalar_lea.vmem %s1282, 976
  %v1333 = vld [vmem:[%s1332] ss:$2 sm:$0xff]
  %s1334 = scalar_lea.vmem %s1282, 1040
  %v1335 = vld [vmem:[%s1334] ss:$2 sm:$0xff]
  %s1336 = scalar_lea.vmem %s1282, 1056
  %v1337 = vld [vmem:[%s1336] ss:$2 sm:$0xff]
  %s1338 = scalar_lea.vmem %s1282, 1120
  %v1339 = vld [vmem:[%s1338] ss:$2 sm:$0xff]
  %s1340 = scalar_lea.vmem %s1282, 1136
  %v1341 = vld [vmem:[%s1340] ss:$2 sm:$0xff]
  %s1342 = scalar_lea.vmem %s1282, 1200
  %v1343 = vld [vmem:[%s1342] ss:$2 sm:$0xff]
  %s1344 = scalar_lea.vmem %s1282, 1216
  %v1345 = vld [vmem:[%s1344] ss:$2 sm:$0xff]
  %s1346 = scalar_lea.vmem %s1282, 1360
  %v1347 = vld [vmem:[%s1346] ss:$2 sm:$0xff]
  %s1348 = scalar_lea.vmem %s1282, 1376
  %v1349 = vld [vmem:[%s1348] ss:$2 sm:$0xff]
  %s1350 = scalar_lea.vmem %s1282, 1440
  %v1351 = vld [vmem:[%s1350] ss:$2 sm:$0xff]
  %s1352 = scalar_lea.vmem %s1282, 1456
  %v1353 = vld [vmem:[%s1352] ss:$2 sm:$0xff]
  %s1354 = scalar_lea.vmem %s1282, 1520
  %v1355 = vld [vmem:[%s1354] ss:$2 sm:$0xff]
  %s1356 = scalar_lea.vmem %s1282, 1536
  %v1357 = vld [vmem:[%s1356] ss:$2 sm:$0xff]
  %s1358 = scalar_lea.vmem %s1282, 1600
  %v1359 = vld [vmem:[%s1358] ss:$2 sm:$0xff]
  %s1360 = scalar_lea.vmem %s1282, 1616
  %v1361 = vld [vmem:[%s1360] ss:$2 sm:$0xff]
  %s1362 = scalar_lea.vmem %s1282, 1680
  %v1363 = vld [vmem:[%s1362] ss:$2 sm:$0xff]
  %s1364 = scalar_lea.vmem %s1282, 1696
  %v1365 = vld [vmem:[%s1364] ss:$2 sm:$0xff]
  %s1366 = scalar_lea.vmem %s1282, 1760
  %v1367 = vld [vmem:[%s1366] ss:$2 sm:$0xff]
  %s1368 = scalar_lea.vmem %s1282, 1776
  %v1369 = vld [vmem:[%s1368] ss:$2 sm:$0xff]
  %s1370 = scalar_lea.vmem %s1282, 1840
  %v1371 = vld [vmem:[%s1370] ss:$2 sm:$0xff]
  %s1372 = scalar_lea.vmem %s1282, 1856
  %v1373 = vld [vmem:[%s1372] ss:$2 sm:$0xff]
  %s1374 = scalar_lea.vmem %s1282, 1920
  %v1375 = vld [vmem:[%s1374] ss:$2 sm:$0xff]
  %s1376 = scalar_lea.vmem %s1282, 1936
  %v1377 = vld [vmem:[%s1376] ss:$2 sm:$0xff]
  %s1378 = scalar_lea.vmem %s1282, 2000
  %v1379 = vld [vmem:[%s1378] ss:$2 sm:$0xff]
  %s1380 = scalar_lea.vmem %s1282, 2016
  %v1381 = vld [vmem:[%s1380] ss:$2 sm:$0xff]
  %s1382 = scalar_lea.vmem %s1282, 2080
  %v1383 = vld [vmem:[%s1382] ss:$2 sm:$0xff]
  %s1384 = scalar_lea.vmem %s1282, 2096
  %v1385 = vld [vmem:[%s1384] ss:$2 sm:$0xff]
  %s1386 = scalar_lea.vmem %s1282, 2160
  %v1387 = vld [vmem:[%s1386] ss:$2 sm:$0xff]
  %s1388 = scalar_lea.vmem %s1282, 2176
  %v1389 = vld [vmem:[%s1388] ss:$2 sm:$0xff]
  %s1390 = scalar_lea.vmem %s1282, 2240
  %v1391 = vld [vmem:[%s1390] ss:$2 sm:$0xff]
  %s1392 = scalar_lea.vmem %s1282, 2256
  %v1393 = vld [vmem:[%s1392] ss:$2 sm:$0xff]
  %s1394 = scalar_lea.vmem %s1282, 2320
  %v1395 = vld [vmem:[%s1394] ss:$2 sm:$0xff]
  %s1396 = scalar_lea.vmem %s1282, 2336
  %v1397 = vld [vmem:[%s1396] ss:$2 sm:$0xff]
  %s1398 = scalar_lea.vmem %s1282, 2400
  %v1399 = vld [vmem:[%s1398] ss:$2 sm:$0xff]
  %s1400 = scalar_lea.vmem %s1282, 2416
  %v1401 = vld [vmem:[%s1400] ss:$2 sm:$0xff]
  %s1402 = scalar_lea.vmem %s1282, 2480
  %v1403 = vld [vmem:[%s1402] ss:$2 sm:$0xff]
  %s1404 = scalar_lea.vmem %s1282, 2496
  %v1405 = vld [vmem:[%s1404] ss:$2 sm:$0xff]
  %s1406 = scalar_lea.vmem %s1282, 2560
  %v1407 = vld [vmem:[%s1406] ss:$2 sm:$0xff]
  %s1408 = scalar_lea.vmem %s1282, 2576
  %v1409 = vld [vmem:[%s1408] ss:$2 sm:$0xff]
  %s1410 = scalar_lea.vmem %s1282, 1
  %v1411 = vld [vmem:[%s1410] ss:$2 sm:$0xff]
  %s1412 = scalar_lea.vmem %s1282, 17
  %v1413 = vld [vmem:[%s1412] ss:$2 sm:$0xff]
  %s1414 = scalar_lea.vmem %s1282, 81
  %v1415 = vld [vmem:[%s1414] ss:$2 sm:$0xff]
  %s1416 = scalar_lea.vmem %s1282, 97
  %v1417 = vld [vmem:[%s1416] ss:$2 sm:$0xff]
  %s1418 = scalar_lea.vmem %s1282, 161
  %v1419 = vld [vmem:[%s1418] ss:$2 sm:$0xff]
  %s1420 = scalar_lea.vmem %s1282, 177
  %v1421 = vld [vmem:[%s1420] ss:$2 sm:$0xff]
  %s1422 = scalar_lea.vmem %s1282, 241
  %v1423 = vld [vmem:[%s1422] ss:$2 sm:$0xff]
  %s1424 = scalar_lea.vmem %s1282, 257
  %v1425 = vld [vmem:[%s1424] ss:$2 sm:$0xff]
  %s1426 = scalar_lea.vmem %s1282, 321
  %v1427 = vld [vmem:[%s1426] ss:$2 sm:$0xff]
  %s1428 = scalar_lea.vmem %s1282, 337
  %v1429 = vld [vmem:[%s1428] ss:$2 sm:$0xff]
  %s1430 = scalar_lea.vmem %s1282, 401
  %v1431 = vld [vmem:[%s1430] ss:$2 sm:$0xff]
  %s1432 = scalar_lea.vmem %s1282, 417
  %v1433 = vld [vmem:[%s1432] ss:$2 sm:$0xff]
  %s1434 = scalar_lea.vmem %s1282, 481
  %v1435 = vld [vmem:[%s1434] ss:$2 sm:$0xff]
  %s1436 = scalar_lea.vmem %s1282, 497
  %v1437 = vld [vmem:[%s1436] ss:$2 sm:$0xff]
  %s1438 = scalar_lea.vmem %s1282, 561
  %v1439 = vld [vmem:[%s1438] ss:$2 sm:$0xff]
  %s1440 = scalar_lea.vmem %s1282, 577
  %v1441 = vld [vmem:[%s1440] ss:$2 sm:$0xff]
  %s1442 = scalar_lea.vmem %s1282, 641
  %v1443 = vld [vmem:[%s1442] ss:$2 sm:$0xff]
  %s1444 = scalar_lea.vmem %s1282, 657
  %v1445 = vld [vmem:[%s1444] ss:$2 sm:$0xff]
  %s1446 = scalar_lea.vmem %s1282, 721
  %v1447 = vld [vmem:[%s1446] ss:$2 sm:$0xff]
  %s1448 = scalar_lea.vmem %s1282, 737
  %v1449 = vld [vmem:[%s1448] ss:$2 sm:$0xff]
  %s1450 = scalar_lea.vmem %s1282, 801
  %v1451 = vld [vmem:[%s1450] ss:$2 sm:$0xff]
  %s1452 = scalar_lea.vmem %s1282, 817
  %v1453 = vld [vmem:[%s1452] ss:$2 sm:$0xff]
  %s1454 = scalar_lea.vmem %s1282, 881
  %v1455 = vld [vmem:[%s1454] ss:$2 sm:$0xff]
  %s1456 = scalar_lea.vmem %s1282, 897
  %v1457 = vld [vmem:[%s1456] ss:$2 sm:$0xff]
  %s1458 = scalar_lea.vmem %s1282, 961
  %v1459 = vld [vmem:[%s1458] ss:$2 sm:$0xff]
  %s1460 = scalar_lea.vmem %s1282, 977
  %v1461 = vld [vmem:[%s1460] ss:$2 sm:$0xff]
  %s1462 = scalar_lea.vmem %s1282, 1041
  %v1463 = vld [vmem:[%s1462] ss:$2 sm:$0xff]
  %s1464 = scalar_lea.vmem %s1282, 1057
  %v1465 = vld [vmem:[%s1464] ss:$2 sm:$0xff]
  %s1466 = scalar_lea.vmem %s1282, 1121
  %v1467 = vld [vmem:[%s1466] ss:$2 sm:$0xff]
  %s1468 = scalar_lea.vmem %s1282, 1137
  %v1469 = vld [vmem:[%s1468] ss:$2 sm:$0xff]
  %s1470 = scalar_lea.vmem %s1282, 1201
  %v1471 = vld [vmem:[%s1470] ss:$2 sm:$0xff]
  %s1472 = scalar_lea.vmem %s1282, 1217
  %v1473 = vld [vmem:[%s1472] ss:$2 sm:$0xff]
  %s1474 = scalar_lea.vmem %s1282, 1361
  %v1475 = vld [vmem:[%s1474] ss:$2 sm:$0xff]
  %s1476 = scalar_lea.vmem %s1282, 1377
  %v1477 = vld [vmem:[%s1476] ss:$2 sm:$0xff]
  %s1478 = scalar_lea.vmem %s1282, 1441
  %v1479 = vld [vmem:[%s1478] ss:$2 sm:$0xff]
  %s1480 = scalar_lea.vmem %s1282, 1457
  %v1481 = vld [vmem:[%s1480] ss:$2 sm:$0xff]
  %s1482 = scalar_lea.vmem %s1282, 1521
  %v1483 = vld [vmem:[%s1482] ss:$2 sm:$0xff]
  %s1484 = scalar_lea.vmem %s1282, 1537
  %v1485 = vld [vmem:[%s1484] ss:$2 sm:$0xff]
  %s1486 = scalar_lea.vmem %s1282, 1601
  %v1487 = vld [vmem:[%s1486] ss:$2 sm:$0xff]
  %s1488 = scalar_lea.vmem %s1282, 1617
  %v1489 = vld [vmem:[%s1488] ss:$2 sm:$0xff]
  %s1490 = scalar_lea.vmem %s1282, 1681
  %v1491 = vld [vmem:[%s1490] ss:$2 sm:$0xff]
  %s1492 = scalar_lea.vmem %s1282, 1697
  %v1493 = vld [vmem:[%s1492] ss:$2 sm:$0xff]
  %s1494 = scalar_lea.vmem %s1282, 1761
  %v1495 = vld [vmem:[%s1494] ss:$2 sm:$0xff]
  %s1496 = scalar_lea.vmem %s1282, 1777
  %v1497 = vld [vmem:[%s1496] ss:$2 sm:$0xff]
  %s1498 = scalar_lea.vmem %s1282, 1841
  %v1499 = vld [vmem:[%s1498] ss:$2 sm:$0xff]
  %s1500 = scalar_lea.vmem %s1282, 1857
  %v1501 = vld [vmem:[%s1500] ss:$2 sm:$0xff]
  %s1502 = scalar_lea.vmem %s1282, 1921
  %v1503 = vld [vmem:[%s1502] ss:$2 sm:$0xff]
  %s1504 = scalar_lea.vmem %s1282, 1937
  %v1505 = vld [vmem:[%s1504] ss:$2 sm:$0xff]
  %s1506 = scalar_lea.vmem %s1282, 2001
  %v1507 = vld [vmem:[%s1506] ss:$2 sm:$0xff]
  %s1508 = scalar_lea.vmem %s1282, 2017
  %v1509 = vld [vmem:[%s1508] ss:$2 sm:$0xff]
  %s1510 = scalar_lea.vmem %s1282, 2081
  %v1511 = vld [vmem:[%s1510] ss:$2 sm:$0xff]
  %s1512 = scalar_lea.vmem %s1282, 2097
  %v1513 = vld [vmem:[%s1512] ss:$2 sm:$0xff]
  %s1514 = scalar_lea.vmem %s1282, 2161
  %v1515 = vld [vmem:[%s1514] ss:$2 sm:$0xff]
  %s1516 = scalar_lea.vmem %s1282, 2177
  %v1517 = vld [vmem:[%s1516] ss:$2 sm:$0xff]
  %s1518 = scalar_lea.vmem %s1282, 2241
  %v1519 = vld [vmem:[%s1518] ss:$2 sm:$0xff]
  %s1520 = scalar_lea.vmem %s1282, 2257
  %v1521 = vld [vmem:[%s1520] ss:$2 sm:$0xff]
  %s1522 = scalar_lea.vmem %s1282, 2321
  %v1523 = vld [vmem:[%s1522] ss:$2 sm:$0xff]
  %s1524 = scalar_lea.vmem %s1282, 2337
  %v1525 = vld [vmem:[%s1524] ss:$2 sm:$0xff]
  %s1526 = scalar_lea.vmem %s1282, 2401
  %v1527 = vld [vmem:[%s1526] ss:$2 sm:$0xff]
  %s1528 = scalar_lea.vmem %s1282, 2417
  %v1529 = vld [vmem:[%s1528] ss:$2 sm:$0xff]
  %s1530 = scalar_lea.vmem %s1282, 2481
  %v1531 = vld [vmem:[%s1530] ss:$2 sm:$0xff]
  %s1532 = scalar_lea.vmem %s1282, 2497
  %v1533 = vld [vmem:[%s1532] ss:$2 sm:$0xff]
  %s1534 = scalar_lea.vmem %s1282, 2561
  %v1535 = vld [vmem:[%s1534] ss:$2 sm:$0xff]
  %s1536 = scalar_lea.vmem %s1282, 2577
  %v1537 = vld [vmem:[%s1536] ss:$2 sm:$0xff]
  %s1538 = scalar_lea.vmem %s1282, 2
  %v1539 = vld [vmem:[%s1538] ss:$2 sm:$0xff]
  %s1540 = scalar_lea.vmem %s1282, 18
  %v1541 = vld [vmem:[%s1540] ss:$2 sm:$0xff]
  %s1542 = scalar_lea.vmem %s1282, 82
  %v1543 = vld [vmem:[%s1542] ss:$2 sm:$0xff]
  %s1544 = scalar_lea.vmem %s1282, 98
  %v1545 = vld [vmem:[%s1544] ss:$2 sm:$0xff]
  %s1546 = scalar_lea.vmem %s1282, 162
  %v1547 = vld [vmem:[%s1546] ss:$2 sm:$0xff]
  %s1548 = scalar_lea.vmem %s1282, 178
  %v1549 = vld [vmem:[%s1548] ss:$2 sm:$0xff]
  %s1550 = scalar_lea.vmem %s1282, 242
  %v1551 = vld [vmem:[%s1550] ss:$2 sm:$0xff]
  %s1552 = scalar_lea.vmem %s1282, 258
  %v1553 = vld [vmem:[%s1552] ss:$2 sm:$0xff]
  %s1554 = scalar_lea.vmem %s1282, 322
  %v1555 = vld [vmem:[%s1554] ss:$2 sm:$0xff]
  %s1556 = scalar_lea.vmem %s1282, 338
  %v1557 = vld [vmem:[%s1556] ss:$2 sm:$0xff]
  %s1558 = scalar_lea.vmem %s1282, 402
  %v1559 = vld [vmem:[%s1558] ss:$2 sm:$0xff]
  %s1560 = scalar_lea.vmem %s1282, 418
  %v1561 = vld [vmem:[%s1560] ss:$2 sm:$0xff]
  %s1562 = scalar_lea.vmem %s1282, 482
  %v1563 = vld [vmem:[%s1562] ss:$2 sm:$0xff]
  %s1564 = scalar_lea.vmem %s1282, 498
  %v1565 = vld [vmem:[%s1564] ss:$2 sm:$0xff]
  %s1566 = scalar_lea.vmem %s1282, 562
  %v1567 = vld [vmem:[%s1566] ss:$2 sm:$0xff]
  %s1568 = scalar_lea.vmem %s1282, 578
  %v1569 = vld [vmem:[%s1568] ss:$2 sm:$0xff]
  %s1570 = scalar_lea.vmem %s1282, 642
  %v1571 = vld [vmem:[%s1570] ss:$2 sm:$0xff]
  %s1572 = scalar_lea.vmem %s1282, 658
  %v1573 = vld [vmem:[%s1572] ss:$2 sm:$0xff]
  %s1574 = scalar_lea.vmem %s1282, 722
  %v1575 = vld [vmem:[%s1574] ss:$2 sm:$0xff]
  %s1576 = scalar_lea.vmem %s1282, 738
  %v1577 = vld [vmem:[%s1576] ss:$2 sm:$0xff]
  %s1578 = scalar_lea.vmem %s1282, 802
  %v1579 = vld [vmem:[%s1578] ss:$2 sm:$0xff]
  %s1580 = scalar_lea.vmem %s1282, 818
  %v1581 = vld [vmem:[%s1580] ss:$2 sm:$0xff]
  %s1582 = scalar_lea.vmem %s1282, 882
  %v1583 = vld [vmem:[%s1582] ss:$2 sm:$0xff]
  %s1584 = scalar_lea.vmem %s1282, 898
  %v1585 = vld [vmem:[%s1584] ss:$2 sm:$0xff]
  %s1586 = scalar_lea.vmem %s1282, 962
  %v1587 = vld [vmem:[%s1586] ss:$2 sm:$0xff]
  %s1588 = scalar_lea.vmem %s1282, 978
  %v1589 = vld [vmem:[%s1588] ss:$2 sm:$0xff]
  %s1590 = scalar_lea.vmem %s1282, 1042
  %v1591 = vld [vmem:[%s1590] ss:$2 sm:$0xff]
  %s1592 = scalar_lea.vmem %s1282, 1058
  %v1593 = vld [vmem:[%s1592] ss:$2 sm:$0xff]
  %s1594 = scalar_lea.vmem %s1282, 1122
  %v1595 = vld [vmem:[%s1594] ss:$2 sm:$0xff]
  %s1596 = scalar_lea.vmem %s1282, 1138
  %v1597 = vld [vmem:[%s1596] ss:$2 sm:$0xff]
  %s1598 = scalar_lea.vmem %s1282, 1202
  %v1599 = vld [vmem:[%s1598] ss:$2 sm:$0xff]
  %s1600 = scalar_lea.vmem %s1282, 1218
  %v1601 = vld [vmem:[%s1600] ss:$2 sm:$0xff]
  %s1602 = scalar_lea.vmem %s1282, 1362
  %v1603 = vld [vmem:[%s1602] ss:$2 sm:$0xff]
  %s1604 = scalar_lea.vmem %s1282, 1378
  %v1605 = vld [vmem:[%s1604] ss:$2 sm:$0xff]
  %s1606 = scalar_lea.vmem %s1282, 1442
  %v1607 = vld [vmem:[%s1606] ss:$2 sm:$0xff]
  %s1608 = scalar_lea.vmem %s1282, 1458
  %v1609 = vld [vmem:[%s1608] ss:$2 sm:$0xff]
  %s1610 = scalar_lea.vmem %s1282, 1522
  %v1611 = vld [vmem:[%s1610] ss:$2 sm:$0xff]
  %s1612 = scalar_lea.vmem %s1282, 1538
  %v1613 = vld [vmem:[%s1612] ss:$2 sm:$0xff]
  %s1614 = scalar_lea.vmem %s1282, 1602
  %v1615 = vld [vmem:[%s1614] ss:$2 sm:$0xff]
  %s1616 = scalar_lea.vmem %s1282, 1618
  %v1617 = vld [vmem:[%s1616] ss:$2 sm:$0xff]
  %s1618 = scalar_lea.vmem %s1282, 1682
  %v1619 = vld [vmem:[%s1618] ss:$2 sm:$0xff]
  %s1620 = scalar_lea.vmem %s1282, 1698
  %v1621 = vld [vmem:[%s1620] ss:$2 sm:$0xff]
  %s1622 = scalar_lea.vmem %s1282, 1762
  %v1623 = vld [vmem:[%s1622] ss:$2 sm:$0xff]
  %s1624 = scalar_lea.vmem %s1282, 1778
  %v1625 = vld [vmem:[%s1624] ss:$2 sm:$0xff]
  %s1626 = scalar_lea.vmem %s1282, 1842
  %v1627 = vld [vmem:[%s1626] ss:$2 sm:$0xff]
  %s1628 = scalar_lea.vmem %s1282, 1858
  %v1629 = vld [vmem:[%s1628] ss:$2 sm:$0xff]
  %s1630 = scalar_lea.vmem %s1282, 1922
  %v1631 = vld [vmem:[%s1630] ss:$2 sm:$0xff]
  %s1632 = scalar_lea.vmem %s1282, 1938
  %v1633 = vld [vmem:[%s1632] ss:$2 sm:$0xff]
  %s1634 = scalar_lea.vmem %s1282, 2002
  %v1635 = vld [vmem:[%s1634] ss:$2 sm:$0xff]
  %s1636 = scalar_lea.vmem %s1282, 2018
  %v1637 = vld [vmem:[%s1636] ss:$2 sm:$0xff]
  %s1638 = scalar_lea.vmem %s1282, 2082
  %v1639 = vld [vmem:[%s1638] ss:$2 sm:$0xff]
  %s1640 = scalar_lea.vmem %s1282, 2098
  %v1641 = vld [vmem:[%s1640] ss:$2 sm:$0xff]
  %s1642 = scalar_lea.vmem %s1282, 2162
  %v1643 = vld [vmem:[%s1642] ss:$2 sm:$0xff]
  %s1644 = scalar_lea.vmem %s1282, 2178
  %v1645 = vld [vmem:[%s1644] ss:$2 sm:$0xff]
  %s1646 = scalar_lea.vmem %s1282, 2242
  %v1647 = vld [vmem:[%s1646] ss:$2 sm:$0xff]
  %s1648 = scalar_lea.vmem %s1282, 2258
  %v1649 = vld [vmem:[%s1648] ss:$2 sm:$0xff]
  %s1650 = scalar_lea.vmem %s1282, 2322
  %v1651 = vld [vmem:[%s1650] ss:$2 sm:$0xff]
  %s1652 = scalar_lea.vmem %s1282, 2338
  %v1653 = vld [vmem:[%s1652] ss:$2 sm:$0xff]
  %s1654 = scalar_lea.vmem %s1282, 2402
  %v1655 = vld [vmem:[%s1654] ss:$2 sm:$0xff]
  %s1656 = scalar_lea.vmem %s1282, 2418
  %v1657 = vld [vmem:[%s1656] ss:$2 sm:$0xff]
  %s1658 = scalar_lea.vmem %s1282, 2482
  %v1659 = vld [vmem:[%s1658] ss:$2 sm:$0xff]
  %s1660 = scalar_lea.vmem %s1282, 2498
  %v1661 = vld [vmem:[%s1660] ss:$2 sm:$0xff]
  %s1662 = scalar_lea.vmem %s1282, 2562
  %v1663 = vld [vmem:[%s1662] ss:$2 sm:$0xff]
  %s1664 = scalar_lea.vmem %s1282, 2578
  %v1665 = vld [vmem:[%s1664] ss:$2 sm:$0xff]
  %s1666 = scalar_lea.vmem %s1282, 3
  %v1667 = vld [vmem:[%s1666] ss:$2 sm:$0xff]
  %s1668 = scalar_lea.vmem %s1282, 19
  %v1669 = vld [vmem:[%s1668] ss:$2 sm:$0xff]
  %s1670 = scalar_lea.vmem %s1282, 83
  %v1671 = vld [vmem:[%s1670] ss:$2 sm:$0xff]
  %s1672 = scalar_lea.vmem %s1282, 99
  %v1673 = vld [vmem:[%s1672] ss:$2 sm:$0xff]
  %s1674 = scalar_lea.vmem %s1282, 163
  %v1675 = vld [vmem:[%s1674] ss:$2 sm:$0xff]
  %s1676 = scalar_lea.vmem %s1282, 179
  %v1677 = vld [vmem:[%s1676] ss:$2 sm:$0xff]
  %s1678 = scalar_lea.vmem %s1282, 243
  %v1679 = vld [vmem:[%s1678] ss:$2 sm:$0xff]
  %s1680 = scalar_lea.vmem %s1282, 259
  %v1681 = vld [vmem:[%s1680] ss:$2 sm:$0xff]
  %s1682 = scalar_lea.vmem %s1282, 323
  %v1683 = vld [vmem:[%s1682] ss:$2 sm:$0xff]
  %s1684 = scalar_lea.vmem %s1282, 339
  %v1685 = vld [vmem:[%s1684] ss:$2 sm:$0xff]
  %s1686 = scalar_lea.vmem %s1282, 403
  %v1687 = vld [vmem:[%s1686] ss:$2 sm:$0xff]
  %s1688 = scalar_lea.vmem %s1282, 419
  %v1689 = vld [vmem:[%s1688] ss:$2 sm:$0xff]
  %s1690 = scalar_lea.vmem %s1282, 483
  %v1691 = vld [vmem:[%s1690] ss:$2 sm:$0xff]
  %s1692 = scalar_lea.vmem %s1282, 499
  %v1693 = vld [vmem:[%s1692] ss:$2 sm:$0xff]
  %s1694 = scalar_lea.vmem %s1282, 563
  %v1695 = vld [vmem:[%s1694] ss:$2 sm:$0xff]
  %s1696 = scalar_lea.vmem %s1282, 579
  %v1697 = vld [vmem:[%s1696] ss:$2 sm:$0xff]
  %s1698 = scalar_lea.vmem %s1282, 643
  %v1699 = vld [vmem:[%s1698] ss:$2 sm:$0xff]
  %s1700 = scalar_lea.vmem %s1282, 659
  %v1701 = vld [vmem:[%s1700] ss:$2 sm:$0xff]
  %s1702 = scalar_lea.vmem %s1282, 723
  %v1703 = vld [vmem:[%s1702] ss:$2 sm:$0xff]
  %s1704 = scalar_lea.vmem %s1282, 739
  %v1705 = vld [vmem:[%s1704] ss:$2 sm:$0xff]
  %s1706 = scalar_lea.vmem %s1282, 803
  %v1707 = vld [vmem:[%s1706] ss:$2 sm:$0xff]
  %s1708 = scalar_lea.vmem %s1282, 819
  %v1709 = vld [vmem:[%s1708] ss:$2 sm:$0xff]
  %s1710 = scalar_lea.vmem %s1282, 883
  %v1711 = vld [vmem:[%s1710] ss:$2 sm:$0xff]
  %s1712 = scalar_lea.vmem %s1282, 899
  %v1713 = vld [vmem:[%s1712] ss:$2 sm:$0xff]
  %s1714 = scalar_lea.vmem %s1282, 963
  %v1715 = vld [vmem:[%s1714] ss:$2 sm:$0xff]
  %s1716 = scalar_lea.vmem %s1282, 979
  %v1717 = vld [vmem:[%s1716] ss:$2 sm:$0xff]
  %s1718 = scalar_lea.vmem %s1282, 1043
  %v1719 = vld [vmem:[%s1718] ss:$2 sm:$0xff]
  %s1720 = scalar_lea.vmem %s1282, 1059
  %v1721 = vld [vmem:[%s1720] ss:$2 sm:$0xff]
  %s1722 = scalar_lea.vmem %s1282, 1123
  %v1723 = vld [vmem:[%s1722] ss:$2 sm:$0xff]
  %s1724 = scalar_lea.vmem %s1282, 1139
  %v1725 = vld [vmem:[%s1724] ss:$2 sm:$0xff]
  %s1726 = scalar_lea.vmem %s1282, 1203
  %v1727 = vld [vmem:[%s1726] ss:$2 sm:$0xff]
  %s1728 = scalar_lea.vmem %s1282, 1219
  %v1729 = vld [vmem:[%s1728] ss:$2 sm:$0xff]
  %s1730 = scalar_lea.vmem %s1282, 1363
  %v1731 = vld [vmem:[%s1730] ss:$2 sm:$0xff]
  %s1732 = scalar_lea.vmem %s1282, 1379
  %v1733 = vld [vmem:[%s1732] ss:$2 sm:$0xff]
  %s1734 = scalar_lea.vmem %s1282, 1443
  %v1735 = vld [vmem:[%s1734] ss:$2 sm:$0xff]
  %s1736 = scalar_lea.vmem %s1282, 1459
  %v1737 = vld [vmem:[%s1736] ss:$2 sm:$0xff]
  %s1738 = scalar_lea.vmem %s1282, 1523
  %v1739 = vld [vmem:[%s1738] ss:$2 sm:$0xff]
  %s1740 = scalar_lea.vmem %s1282, 1539
  %v1741 = vld [vmem:[%s1740] ss:$2 sm:$0xff]
  %s1742 = scalar_lea.vmem %s1282, 1603
  %v1743 = vld [vmem:[%s1742] ss:$2 sm:$0xff]
  %s1744 = scalar_lea.vmem %s1282, 1619
  %v1745 = vld [vmem:[%s1744] ss:$2 sm:$0xff]
  %s1746 = scalar_lea.vmem %s1282, 1683
  %v1747 = vld [vmem:[%s1746] ss:$2 sm:$0xff]
  %s1748 = scalar_lea.vmem %s1282, 1699
  %v1749 = vld [vmem:[%s1748] ss:$2 sm:$0xff]
  %s1750 = scalar_lea.vmem %s1282, 1763
  %v1751 = vld [vmem:[%s1750] ss:$2 sm:$0xff]
  %s1752 = scalar_lea.vmem %s1282, 1779
  %v1753 = vld [vmem:[%s1752] ss:$2 sm:$0xff]
  %s1754 = scalar_lea.vmem %s1282, 1843
  %v1755 = vld [vmem:[%s1754] ss:$2 sm:$0xff]
  %s1756 = scalar_lea.vmem %s1282, 1859
  %v1757 = vld [vmem:[%s1756] ss:$2 sm:$0xff]
  %s1758 = scalar_lea.vmem %s1282, 1923
  %v1759 = vld [vmem:[%s1758] ss:$2 sm:$0xff]
  %s1760 = scalar_lea.vmem %s1282, 1939
  %v1761 = vld [vmem:[%s1760] ss:$2 sm:$0xff]
  %s1762 = scalar_lea.vmem %s1282, 2003
  %v1763 = vld [vmem:[%s1762] ss:$2 sm:$0xff]
  %s1764 = scalar_lea.vmem %s1282, 2019
  %v1765 = vld [vmem:[%s1764] ss:$2 sm:$0xff]
  %s1766 = scalar_lea.vmem %s1282, 2083
  %v1767 = vld [vmem:[%s1766] ss:$2 sm:$0xff]
  %s1768 = scalar_lea.vmem %s1282, 2099
  %v1769 = vld [vmem:[%s1768] ss:$2 sm:$0xff]
  %s1770 = scalar_lea.vmem %s1282, 2163
  %v1771 = vld [vmem:[%s1770] ss:$2 sm:$0xff]
  %s1772 = scalar_lea.vmem %s1282, 2179
  %v1773 = vld [vmem:[%s1772] ss:$2 sm:$0xff]
  %s1774 = scalar_lea.vmem %s1282, 2243
  %v1775 = vld [vmem:[%s1774] ss:$2 sm:$0xff]
  %s1776 = scalar_lea.vmem %s1282, 2259
  %v1777 = vld [vmem:[%s1776] ss:$2 sm:$0xff]
  %s1778 = scalar_lea.vmem %s1282, 2323
  %v1779 = vld [vmem:[%s1778] ss:$2 sm:$0xff]
  %s1780 = scalar_lea.vmem %s1282, 2339
  %v1781 = vld [vmem:[%s1780] ss:$2 sm:$0xff]
  %s1782 = scalar_lea.vmem %s1282, 2403
  %v1783 = vld [vmem:[%s1782] ss:$2 sm:$0xff]
  %s1784 = scalar_lea.vmem %s1282, 2419
  %v1785 = vld [vmem:[%s1784] ss:$2 sm:$0xff]
  %s1786 = scalar_lea.vmem %s1282, 2483
  %v1787 = vld [vmem:[%s1786] ss:$2 sm:$0xff]
  %s1788 = scalar_lea.vmem %s1282, 2499
  %v1789 = vld [vmem:[%s1788] ss:$2 sm:$0xff]
  %s1790 = scalar_lea.vmem %s1282, 2563
  %v1791 = vld [vmem:[%s1790] ss:$2 sm:$0xff]
  %s1792 = scalar_lea.vmem %s1282, 2579
  %v1793 = vld [vmem:[%s1792] ss:$2 sm:$0xff]
  %s1794 = scalar_lea.vmem %s0, 120
  %v1795 = vld [vmem:[%s1794] ss:$2 sm:$0xff]
  %s1796 = scalar_lea.vmem %s1794, 16
  %v1797 = vld [vmem:[%s1796] ss:$2 sm:$0xff]
  %s1798 = scalar_lea.vmem %s1794, 80
  %v1799 = vld [vmem:[%s1798] ss:$2 sm:$0xff]
  %s1800 = scalar_lea.vmem %s1794, 96
  %v1801 = vld [vmem:[%s1800] ss:$2 sm:$0xff]
  %s1802 = scalar_lea.vmem %s1794, 160
  %v1803 = vld [vmem:[%s1802] ss:$2 sm:$0xff]
  %s1804 = scalar_lea.vmem %s1794, 176
  %v1805 = vld [vmem:[%s1804] ss:$2 sm:$0xff]
  %s1806 = scalar_lea.vmem %s1794, 240
  %v1807 = vld [vmem:[%s1806] ss:$2 sm:$0xff]
  %s1808 = scalar_lea.vmem %s1794, 256
  %v1809 = vld [vmem:[%s1808] ss:$2 sm:$0xff]
  %s1810 = scalar_lea.vmem %s1794, 320
  %v1811 = vld [vmem:[%s1810] ss:$2 sm:$0xff]
  %s1812 = scalar_lea.vmem %s1794, 336
  %v1813 = vld [vmem:[%s1812] ss:$2 sm:$0xff]
  %s1814 = scalar_lea.vmem %s1794, 400
  %v1815 = vld [vmem:[%s1814] ss:$2 sm:$0xff]
  %s1816 = scalar_lea.vmem %s1794, 416
  %v1817 = vld [vmem:[%s1816] ss:$2 sm:$0xff]
  %s1818 = scalar_lea.vmem %s1794, 480
  %v1819 = vld [vmem:[%s1818] ss:$2 sm:$0xff]
  %s1820 = scalar_lea.vmem %s1794, 496
  %v1821 = vld [vmem:[%s1820] ss:$2 sm:$0xff]
  %s1822 = scalar_lea.vmem %s1794, 560
  %v1823 = vld [vmem:[%s1822] ss:$2 sm:$0xff]
  %s1824 = scalar_lea.vmem %s1794, 576
  %v1825 = vld [vmem:[%s1824] ss:$2 sm:$0xff]
  %s1826 = scalar_lea.vmem %s1794, 640
  %v1827 = vld [vmem:[%s1826] ss:$2 sm:$0xff]
  %s1828 = scalar_lea.vmem %s1794, 656
  %v1829 = vld [vmem:[%s1828] ss:$2 sm:$0xff]
  %s1830 = scalar_lea.vmem %s1794, 720
  %v1831 = vld [vmem:[%s1830] ss:$2 sm:$0xff]
  %s1832 = scalar_lea.vmem %s1794, 736
  %v1833 = vld [vmem:[%s1832] ss:$2 sm:$0xff]
  %s1834 = scalar_lea.vmem %s1794, 800
  %v1835 = vld [vmem:[%s1834] ss:$2 sm:$0xff]
  %s1836 = scalar_lea.vmem %s1794, 816
  %v1837 = vld [vmem:[%s1836] ss:$2 sm:$0xff]
  %s1838 = scalar_lea.vmem %s1794, 880
  %v1839 = vld [vmem:[%s1838] ss:$2 sm:$0xff]
  %s1840 = scalar_lea.vmem %s1794, 896
  %v1841 = vld [vmem:[%s1840] ss:$2 sm:$0xff]
  %s1842 = scalar_lea.vmem %s1794, 960
  %v1843 = vld [vmem:[%s1842] ss:$2 sm:$0xff]
  %s1844 = scalar_lea.vmem %s1794, 976
  %v1845 = vld [vmem:[%s1844] ss:$2 sm:$0xff]
  %s1846 = scalar_lea.vmem %s1794, 1040
  %v1847 = vld [vmem:[%s1846] ss:$2 sm:$0xff]
  %s1848 = scalar_lea.vmem %s1794, 1056
  %v1849 = vld [vmem:[%s1848] ss:$2 sm:$0xff]
  %s1850 = scalar_lea.vmem %s1794, 1120
  %v1851 = vld [vmem:[%s1850] ss:$2 sm:$0xff]
  %s1852 = scalar_lea.vmem %s1794, 1136
  %v1853 = vld [vmem:[%s1852] ss:$2 sm:$0xff]
  %s1854 = scalar_lea.vmem %s1794, 1200
  %v1855 = vld [vmem:[%s1854] ss:$2 sm:$0xff]
  %s1856 = scalar_lea.vmem %s1794, 1216
  %v1857 = vld [vmem:[%s1856] ss:$2 sm:$0xff]
  %s1858 = scalar_lea.vmem %s1794, 1360
  %v1859 = vld [vmem:[%s1858] ss:$2 sm:$0xff]
  %s1860 = scalar_lea.vmem %s1794, 1376
  %v1861 = vld [vmem:[%s1860] ss:$2 sm:$0xff]
  %s1862 = scalar_lea.vmem %s1794, 1440
  %v1863 = vld [vmem:[%s1862] ss:$2 sm:$0xff]
  %s1864 = scalar_lea.vmem %s1794, 1456
  %v1865 = vld [vmem:[%s1864] ss:$2 sm:$0xff]
  %s1866 = scalar_lea.vmem %s1794, 1520
  %v1867 = vld [vmem:[%s1866] ss:$2 sm:$0xff]
  %s1868 = scalar_lea.vmem %s1794, 1536
  %v1869 = vld [vmem:[%s1868] ss:$2 sm:$0xff]
  %s1870 = scalar_lea.vmem %s1794, 1600
  %v1871 = vld [vmem:[%s1870] ss:$2 sm:$0xff]
  %s1872 = scalar_lea.vmem %s1794, 1616
  %v1873 = vld [vmem:[%s1872] ss:$2 sm:$0xff]
  %s1874 = scalar_lea.vmem %s1794, 1680
  %v1875 = vld [vmem:[%s1874] ss:$2 sm:$0xff]
  %s1876 = scalar_lea.vmem %s1794, 1696
  %v1877 = vld [vmem:[%s1876] ss:$2 sm:$0xff]
  %s1878 = scalar_lea.vmem %s1794, 1760
  %v1879 = vld [vmem:[%s1878] ss:$2 sm:$0xff]
  %s1880 = scalar_lea.vmem %s1794, 1776
  %v1881 = vld [vmem:[%s1880] ss:$2 sm:$0xff]
  %s1882 = scalar_lea.vmem %s1794, 1840
  %v1883 = vld [vmem:[%s1882] ss:$2 sm:$0xff]
  %s1884 = scalar_lea.vmem %s1794, 1856
  %v1885 = vld [vmem:[%s1884] ss:$2 sm:$0xff]
  %s1886 = scalar_lea.vmem %s1794, 1920
  %v1887 = vld [vmem:[%s1886] ss:$2 sm:$0xff]
  %s1888 = scalar_lea.vmem %s1794, 1936
  %v1889 = vld [vmem:[%s1888] ss:$2 sm:$0xff]
  %s1890 = scalar_lea.vmem %s1794, 2000
  %v1891 = vld [vmem:[%s1890] ss:$2 sm:$0xff]
  %s1892 = scalar_lea.vmem %s1794, 2016
  %v1893 = vld [vmem:[%s1892] ss:$2 sm:$0xff]
  %s1894 = scalar_lea.vmem %s1794, 2080
  %v1895 = vld [vmem:[%s1894] ss:$2 sm:$0xff]
  %s1896 = scalar_lea.vmem %s1794, 2096
  %v1897 = vld [vmem:[%s1896] ss:$2 sm:$0xff]
  %s1898 = scalar_lea.vmem %s1794, 2160
  %v1899 = vld [vmem:[%s1898] ss:$2 sm:$0xff]
  %s1900 = scalar_lea.vmem %s1794, 2176
  %v1901 = vld [vmem:[%s1900] ss:$2 sm:$0xff]
  %s1902 = scalar_lea.vmem %s1794, 2240
  %v1903 = vld [vmem:[%s1902] ss:$2 sm:$0xff]
  %s1904 = scalar_lea.vmem %s1794, 2256
  %v1905 = vld [vmem:[%s1904] ss:$2 sm:$0xff]
  %s1906 = scalar_lea.vmem %s1794, 2320
  %v1907 = vld [vmem:[%s1906] ss:$2 sm:$0xff]
  %s1908 = scalar_lea.vmem %s1794, 2336
  %v1909 = vld [vmem:[%s1908] ss:$2 sm:$0xff]
  %s1910 = scalar_lea.vmem %s1794, 2400
  %v1911 = vld [vmem:[%s1910] ss:$2 sm:$0xff]
  %s1912 = scalar_lea.vmem %s1794, 2416
  %v1913 = vld [vmem:[%s1912] ss:$2 sm:$0xff]
  %s1914 = scalar_lea.vmem %s1794, 2480
  %v1915 = vld [vmem:[%s1914] ss:$2 sm:$0xff]
  %s1916 = scalar_lea.vmem %s1794, 2496
  %v1917 = vld [vmem:[%s1916] ss:$2 sm:$0xff]
  %s1918 = scalar_lea.vmem %s1794, 2560
  %v1919 = vld [vmem:[%s1918] ss:$2 sm:$0xff]
  %s1920 = scalar_lea.vmem %s1794, 2576
  %v1921 = vld [vmem:[%s1920] ss:$2 sm:$0xff]
  %s1922 = scalar_lea.vmem %s1794, 1
  %v1923 = vld [vmem:[%s1922] ss:$2 sm:$0xff]
  %s1924 = scalar_lea.vmem %s1794, 17
  %v1925 = vld [vmem:[%s1924] ss:$2 sm:$0xff]
  %s1926 = scalar_lea.vmem %s1794, 81
  %v1927 = vld [vmem:[%s1926] ss:$2 sm:$0xff]
  %s1928 = scalar_lea.vmem %s1794, 97
  %v1929 = vld [vmem:[%s1928] ss:$2 sm:$0xff]
  %s1930 = scalar_lea.vmem %s1794, 161
  %v1931 = vld [vmem:[%s1930] ss:$2 sm:$0xff]
  %s1932 = scalar_lea.vmem %s1794, 177
  %v1933 = vld [vmem:[%s1932] ss:$2 sm:$0xff]
  %s1934 = scalar_lea.vmem %s1794, 241
  %v1935 = vld [vmem:[%s1934] ss:$2 sm:$0xff]
  %s1936 = scalar_lea.vmem %s1794, 257
  %v1937 = vld [vmem:[%s1936] ss:$2 sm:$0xff]
  %s1938 = scalar_lea.vmem %s1794, 321
  %v1939 = vld [vmem:[%s1938] ss:$2 sm:$0xff]
  %s1940 = scalar_lea.vmem %s1794, 337
  %v1941 = vld [vmem:[%s1940] ss:$2 sm:$0xff]
  %s1942 = scalar_lea.vmem %s1794, 401
  %v1943 = vld [vmem:[%s1942] ss:$2 sm:$0xff]
  %s1944 = scalar_lea.vmem %s1794, 417
  %v1945 = vld [vmem:[%s1944] ss:$2 sm:$0xff]
  %s1946 = scalar_lea.vmem %s1794, 481
  %v1947 = vld [vmem:[%s1946] ss:$2 sm:$0xff]
  %s1948 = scalar_lea.vmem %s1794, 497
  %v1949 = vld [vmem:[%s1948] ss:$2 sm:$0xff]
  %s1950 = scalar_lea.vmem %s1794, 561
  %v1951 = vld [vmem:[%s1950] ss:$2 sm:$0xff]
  %s1952 = scalar_lea.vmem %s1794, 577
  %v1953 = vld [vmem:[%s1952] ss:$2 sm:$0xff]
  %s1954 = scalar_lea.vmem %s1794, 641
  %v1955 = vld [vmem:[%s1954] ss:$2 sm:$0xff]
  %s1956 = scalar_lea.vmem %s1794, 657
  %v1957 = vld [vmem:[%s1956] ss:$2 sm:$0xff]
  %s1958 = scalar_lea.vmem %s1794, 721
  %v1959 = vld [vmem:[%s1958] ss:$2 sm:$0xff]
  %s1960 = scalar_lea.vmem %s1794, 737
  %v1961 = vld [vmem:[%s1960] ss:$2 sm:$0xff]
  %s1962 = scalar_lea.vmem %s1794, 801
  %v1963 = vld [vmem:[%s1962] ss:$2 sm:$0xff]
  %s1964 = scalar_lea.vmem %s1794, 817
  %v1965 = vld [vmem:[%s1964] ss:$2 sm:$0xff]
  %s1966 = scalar_lea.vmem %s1794, 881
  %v1967 = vld [vmem:[%s1966] ss:$2 sm:$0xff]
  %s1968 = scalar_lea.vmem %s1794, 897
  %v1969 = vld [vmem:[%s1968] ss:$2 sm:$0xff]
  %s1970 = scalar_lea.vmem %s1794, 961
  %v1971 = vld [vmem:[%s1970] ss:$2 sm:$0xff]
  %s1972 = scalar_lea.vmem %s1794, 977
  %v1973 = vld [vmem:[%s1972] ss:$2 sm:$0xff]
  %s1974 = scalar_lea.vmem %s1794, 1041
  %v1975 = vld [vmem:[%s1974] ss:$2 sm:$0xff]
  %s1976 = scalar_lea.vmem %s1794, 1057
  %v1977 = vld [vmem:[%s1976] ss:$2 sm:$0xff]
  %s1978 = scalar_lea.vmem %s1794, 1121
  %v1979 = vld [vmem:[%s1978] ss:$2 sm:$0xff]
  %s1980 = scalar_lea.vmem %s1794, 1137
  %v1981 = vld [vmem:[%s1980] ss:$2 sm:$0xff]
  %s1982 = scalar_lea.vmem %s1794, 1201
  %v1983 = vld [vmem:[%s1982] ss:$2 sm:$0xff]
  %s1984 = scalar_lea.vmem %s1794, 1217
  %v1985 = vld [vmem:[%s1984] ss:$2 sm:$0xff]
  %s1986 = scalar_lea.vmem %s1794, 1361
  %v1987 = vld [vmem:[%s1986] ss:$2 sm:$0xff]
  %s1988 = scalar_lea.vmem %s1794, 1377
  %v1989 = vld [vmem:[%s1988] ss:$2 sm:$0xff]
  %s1990 = scalar_lea.vmem %s1794, 1441
  %v1991 = vld [vmem:[%s1990] ss:$2 sm:$0xff]
  %s1992 = scalar_lea.vmem %s1794, 1457
  %v1993 = vld [vmem:[%s1992] ss:$2 sm:$0xff]
  %s1994 = scalar_lea.vmem %s1794, 1521
  %v1995 = vld [vmem:[%s1994] ss:$2 sm:$0xff]
  %s1996 = scalar_lea.vmem %s1794, 1537
  %v1997 = vld [vmem:[%s1996] ss:$2 sm:$0xff]
  %s1998 = scalar_lea.vmem %s1794, 1601
  %v1999 = vld [vmem:[%s1998] ss:$2 sm:$0xff]
  %s2000 = scalar_lea.vmem %s1794, 1617
  %v2001 = vld [vmem:[%s2000] ss:$2 sm:$0xff]
  %s2002 = scalar_lea.vmem %s1794, 1681
  %v2003 = vld [vmem:[%s2002] ss:$2 sm:$0xff]
  %s2004 = scalar_lea.vmem %s1794, 1697
  %v2005 = vld [vmem:[%s2004] ss:$2 sm:$0xff]
  %s2006 = scalar_lea.vmem %s1794, 1761
  %v2007 = vld [vmem:[%s2006] ss:$2 sm:$0xff]
  %s2008 = scalar_lea.vmem %s1794, 1777
  %v2009 = vld [vmem:[%s2008] ss:$2 sm:$0xff]
  %s2010 = scalar_lea.vmem %s1794, 1841
  %v2011 = vld [vmem:[%s2010] ss:$2 sm:$0xff]
  %s2012 = scalar_lea.vmem %s1794, 1857
  %v2013 = vld [vmem:[%s2012] ss:$2 sm:$0xff]
  %s2014 = scalar_lea.vmem %s1794, 1921
  %v2015 = vld [vmem:[%s2014] ss:$2 sm:$0xff]
  %s2016 = scalar_lea.vmem %s1794, 1937
  %v2017 = vld [vmem:[%s2016] ss:$2 sm:$0xff]
  %s2018 = scalar_lea.vmem %s1794, 2001
  %v2019 = vld [vmem:[%s2018] ss:$2 sm:$0xff]
  %s2020 = scalar_lea.vmem %s1794, 2017
  %v2021 = vld [vmem:[%s2020] ss:$2 sm:$0xff]
  %s2022 = scalar_lea.vmem %s1794, 2081
  %v2023 = vld [vmem:[%s2022] ss:$2 sm:$0xff]
  %s2024 = scalar_lea.vmem %s1794, 2097
  %v2025 = vld [vmem:[%s2024] ss:$2 sm:$0xff]
  %s2026 = scalar_lea.vmem %s1794, 2161
  %v2027 = vld [vmem:[%s2026] ss:$2 sm:$0xff]
  %s2028 = scalar_lea.vmem %s1794, 2177
  %v2029 = vld [vmem:[%s2028] ss:$2 sm:$0xff]
  %s2030 = scalar_lea.vmem %s1794, 2241
  %v2031 = vld [vmem:[%s2030] ss:$2 sm:$0xff]
  %s2032 = scalar_lea.vmem %s1794, 2257
  %v2033 = vld [vmem:[%s2032] ss:$2 sm:$0xff]
  %s2034 = scalar_lea.vmem %s1794, 2321
  %v2035 = vld [vmem:[%s2034] ss:$2 sm:$0xff]
  %s2036 = scalar_lea.vmem %s1794, 2337
  %v2037 = vld [vmem:[%s2036] ss:$2 sm:$0xff]
  %s2038 = scalar_lea.vmem %s1794, 2401
  %v2039 = vld [vmem:[%s2038] ss:$2 sm:$0xff]
  %s2040 = scalar_lea.vmem %s1794, 2417
  %v2041 = vld [vmem:[%s2040] ss:$2 sm:$0xff]
  %s2042 = scalar_lea.vmem %s1794, 2481
  %v2043 = vld [vmem:[%s2042] ss:$2 sm:$0xff]
  %s2044 = scalar_lea.vmem %s1794, 2497
  %v2045 = vld [vmem:[%s2044] ss:$2 sm:$0xff]
  %s2046 = scalar_lea.vmem %s1794, 2561
  %v2047 = vld [vmem:[%s2046] ss:$2 sm:$0xff]
  %s2048 = scalar_lea.vmem %s1794, 2577
  %v2049 = vld [vmem:[%s2048] ss:$2 sm:$0xff]
  %s2050 = scalar_lea.vmem %s1794, 2
  %v2051 = vld [vmem:[%s2050] ss:$2 sm:$0xff]
  %s2052 = scalar_lea.vmem %s1794, 18
  %v2053 = vld [vmem:[%s2052] ss:$2 sm:$0xff]
  %s2054 = scalar_lea.vmem %s1794, 82
  %v2055 = vld [vmem:[%s2054] ss:$2 sm:$0xff]
  %s2056 = scalar_lea.vmem %s1794, 98
  %v2057 = vld [vmem:[%s2056] ss:$2 sm:$0xff]
  %s2058 = scalar_lea.vmem %s1794, 162
  %v2059 = vld [vmem:[%s2058] ss:$2 sm:$0xff]
  %s2060 = scalar_lea.vmem %s1794, 178
  %v2061 = vld [vmem:[%s2060] ss:$2 sm:$0xff]
  %s2062 = scalar_lea.vmem %s1794, 242
  %v2063 = vld [vmem:[%s2062] ss:$2 sm:$0xff]
  %s2064 = scalar_lea.vmem %s1794, 258
  %v2065 = vld [vmem:[%s2064] ss:$2 sm:$0xff]
  %s2066 = scalar_lea.vmem %s1794, 322
  %v2067 = vld [vmem:[%s2066] ss:$2 sm:$0xff]
  %s2068 = scalar_lea.vmem %s1794, 338
  %v2069 = vld [vmem:[%s2068] ss:$2 sm:$0xff]
  %s2070 = scalar_lea.vmem %s1794, 402
  %v2071 = vld [vmem:[%s2070] ss:$2 sm:$0xff]
  %s2072 = scalar_lea.vmem %s1794, 418
  %v2073 = vld [vmem:[%s2072] ss:$2 sm:$0xff]
  %s2074 = scalar_lea.vmem %s1794, 482
  %v2075 = vld [vmem:[%s2074] ss:$2 sm:$0xff]
  %s2076 = scalar_lea.vmem %s1794, 498
  %v2077 = vld [vmem:[%s2076] ss:$2 sm:$0xff]
  %s2078 = scalar_lea.vmem %s1794, 562
  %v2079 = vld [vmem:[%s2078] ss:$2 sm:$0xff]
  %s2080 = scalar_lea.vmem %s1794, 578
  %v2081 = vld [vmem:[%s2080] ss:$2 sm:$0xff]
  %s2082 = scalar_lea.vmem %s1794, 642
  %v2083 = vld [vmem:[%s2082] ss:$2 sm:$0xff]
  %s2084 = scalar_lea.vmem %s1794, 658
  %v2085 = vld [vmem:[%s2084] ss:$2 sm:$0xff]
  %s2086 = scalar_lea.vmem %s1794, 722
  %v2087 = vld [vmem:[%s2086] ss:$2 sm:$0xff]
  %s2088 = scalar_lea.vmem %s1794, 738
  %v2089 = vld [vmem:[%s2088] ss:$2 sm:$0xff]
  %s2090 = scalar_lea.vmem %s1794, 802
  %v2091 = vld [vmem:[%s2090] ss:$2 sm:$0xff]
  %s2092 = scalar_lea.vmem %s1794, 818
  %v2093 = vld [vmem:[%s2092] ss:$2 sm:$0xff]
  %s2094 = scalar_lea.vmem %s1794, 882
  %v2095 = vld [vmem:[%s2094] ss:$2 sm:$0xff]
  %s2096 = scalar_lea.vmem %s1794, 898
  %v2097 = vld [vmem:[%s2096] ss:$2 sm:$0xff]
  %s2098 = scalar_lea.vmem %s1794, 962
  %v2099 = vld [vmem:[%s2098] ss:$2 sm:$0xff]
  %s2100 = scalar_lea.vmem %s1794, 978
  %v2101 = vld [vmem:[%s2100] ss:$2 sm:$0xff]
  %s2102 = scalar_lea.vmem %s1794, 1042
  %v2103 = vld [vmem:[%s2102] ss:$2 sm:$0xff]
  %s2104 = scalar_lea.vmem %s1794, 1058
  %v2105 = vld [vmem:[%s2104] ss:$2 sm:$0xff]
  %s2106 = scalar_lea.vmem %s1794, 1122
  %v2107 = vld [vmem:[%s2106] ss:$2 sm:$0xff]
  %s2108 = scalar_lea.vmem %s1794, 1138
  %v2109 = vld [vmem:[%s2108] ss:$2 sm:$0xff]
  %s2110 = scalar_lea.vmem %s1794, 1202
  %v2111 = vld [vmem:[%s2110] ss:$2 sm:$0xff]
  %s2112 = scalar_lea.vmem %s1794, 1218
  %v2113 = vld [vmem:[%s2112] ss:$2 sm:$0xff]
  %s2114 = scalar_lea.vmem %s1794, 1362
  %v2115 = vld [vmem:[%s2114] ss:$2 sm:$0xff]
  %s2116 = scalar_lea.vmem %s1794, 1378
  %v2117 = vld [vmem:[%s2116] ss:$2 sm:$0xff]
  %s2118 = scalar_lea.vmem %s1794, 1442
  %v2119 = vld [vmem:[%s2118] ss:$2 sm:$0xff]
  %s2120 = scalar_lea.vmem %s1794, 1458
  %v2121 = vld [vmem:[%s2120] ss:$2 sm:$0xff]
  %s2122 = scalar_lea.vmem %s1794, 1522
  %v2123 = vld [vmem:[%s2122] ss:$2 sm:$0xff]
  %s2124 = scalar_lea.vmem %s1794, 1538
  %v2125 = vld [vmem:[%s2124] ss:$2 sm:$0xff]
  %s2126 = scalar_lea.vmem %s1794, 1602
  %v2127 = vld [vmem:[%s2126] ss:$2 sm:$0xff]
  %s2128 = scalar_lea.vmem %s1794, 1618
  %v2129 = vld [vmem:[%s2128] ss:$2 sm:$0xff]
  %s2130 = scalar_lea.vmem %s1794, 1682
  %v2131 = vld [vmem:[%s2130] ss:$2 sm:$0xff]
  %s2132 = scalar_lea.vmem %s1794, 1698
  %v2133 = vld [vmem:[%s2132] ss:$2 sm:$0xff]
  %s2134 = scalar_lea.vmem %s1794, 1762
  %v2135 = vld [vmem:[%s2134] ss:$2 sm:$0xff]
  %s2136 = scalar_lea.vmem %s1794, 1778
  %v2137 = vld [vmem:[%s2136] ss:$2 sm:$0xff]
  %s2138 = scalar_lea.vmem %s1794, 1842
  %v2139 = vld [vmem:[%s2138] ss:$2 sm:$0xff]
  %s2140 = scalar_lea.vmem %s1794, 1858
  %v2141 = vld [vmem:[%s2140] ss:$2 sm:$0xff]
  %s2142 = scalar_lea.vmem %s1794, 1922
  %v2143 = vld [vmem:[%s2142] ss:$2 sm:$0xff]
  %s2144 = scalar_lea.vmem %s1794, 1938
  %v2145 = vld [vmem:[%s2144] ss:$2 sm:$0xff]
  %s2146 = scalar_lea.vmem %s1794, 2002
  %v2147 = vld [vmem:[%s2146] ss:$2 sm:$0xff]
  %s2148 = scalar_lea.vmem %s1794, 2018
  %v2149 = vld [vmem:[%s2148] ss:$2 sm:$0xff]
  %s2150 = scalar_lea.vmem %s1794, 2082
  %v2151 = vld [vmem:[%s2150] ss:$2 sm:$0xff]
  %s2152 = scalar_lea.vmem %s1794, 2098
  %v2153 = vld [vmem:[%s2152] ss:$2 sm:$0xff]
  %s2154 = scalar_lea.vmem %s1794, 2162
  %v2155 = vld [vmem:[%s2154] ss:$2 sm:$0xff]
  %s2156 = scalar_lea.vmem %s1794, 2178
  %v2157 = vld [vmem:[%s2156] ss:$2 sm:$0xff]
  %s2158 = scalar_lea.vmem %s1794, 2242
  %v2159 = vld [vmem:[%s2158] ss:$2 sm:$0xff]
  %s2160 = scalar_lea.vmem %s1794, 2258
  %v2161 = vld [vmem:[%s2160] ss:$2 sm:$0xff]
  %s2162 = scalar_lea.vmem %s1794, 2322
  %v2163 = vld [vmem:[%s2162] ss:$2 sm:$0xff]
  %s2164 = scalar_lea.vmem %s1794, 2338
  %v2165 = vld [vmem:[%s2164] ss:$2 sm:$0xff]
  %s2166 = scalar_lea.vmem %s1794, 2402
  %v2167 = vld [vmem:[%s2166] ss:$2 sm:$0xff]
  %s2168 = scalar_lea.vmem %s1794, 2418
  %v2169 = vld [vmem:[%s2168] ss:$2 sm:$0xff]
  %s2170 = scalar_lea.vmem %s1794, 2482
  %v2171 = vld [vmem:[%s2170] ss:$2 sm:$0xff]
  %s2172 = scalar_lea.vmem %s1794, 2498
  %v2173 = vld [vmem:[%s2172] ss:$2 sm:$0xff]
  %s2174 = scalar_lea.vmem %s1794, 2562
  %v2175 = vld [vmem:[%s2174] ss:$2 sm:$0xff]
  %s2176 = scalar_lea.vmem %s1794, 2578
  %v2177 = vld [vmem:[%s2176] ss:$2 sm:$0xff]
  %s2178 = scalar_lea.vmem %s1794, 3
  %v2179 = vld [vmem:[%s2178] ss:$2 sm:$0xff]
  %s2180 = scalar_lea.vmem %s1794, 19
  %v2181 = vld [vmem:[%s2180] ss:$2 sm:$0xff]
  %s2182 = scalar_lea.vmem %s1794, 83
  %v2183 = vld [vmem:[%s2182] ss:$2 sm:$0xff]
  %s2184 = scalar_lea.vmem %s1794, 99
  %v2185 = vld [vmem:[%s2184] ss:$2 sm:$0xff]
  %s2186 = scalar_lea.vmem %s1794, 163
  %v2187 = vld [vmem:[%s2186] ss:$2 sm:$0xff]
  %s2188 = scalar_lea.vmem %s1794, 179
  %v2189 = vld [vmem:[%s2188] ss:$2 sm:$0xff]
  %s2190 = scalar_lea.vmem %s1794, 243
  %v2191 = vld [vmem:[%s2190] ss:$2 sm:$0xff]
  %s2192 = scalar_lea.vmem %s1794, 259
  %v2193 = vld [vmem:[%s2192] ss:$2 sm:$0xff]
  %s2194 = scalar_lea.vmem %s1794, 323
  %v2195 = vld [vmem:[%s2194] ss:$2 sm:$0xff]
  %s2196 = scalar_lea.vmem %s1794, 339
  %v2197 = vld [vmem:[%s2196] ss:$2 sm:$0xff]
  %s2198 = scalar_lea.vmem %s1794, 403
  %v2199 = vld [vmem:[%s2198] ss:$2 sm:$0xff]
  %s2200 = scalar_lea.vmem %s1794, 419
  %v2201 = vld [vmem:[%s2200] ss:$2 sm:$0xff]
  %s2202 = scalar_lea.vmem %s1794, 483
  %v2203 = vld [vmem:[%s2202] ss:$2 sm:$0xff]
  %s2204 = scalar_lea.vmem %s1794, 499
  %v2205 = vld [vmem:[%s2204] ss:$2 sm:$0xff]
  %s2206 = scalar_lea.vmem %s1794, 563
  %v2207 = vld [vmem:[%s2206] ss:$2 sm:$0xff]
  %s2208 = scalar_lea.vmem %s1794, 579
  %v2209 = vld [vmem:[%s2208] ss:$2 sm:$0xff]
  %s2210 = scalar_lea.vmem %s1794, 643
  %v2211 = vld [vmem:[%s2210] ss:$2 sm:$0xff]
  %s2212 = scalar_lea.vmem %s1794, 659
  %v2213 = vld [vmem:[%s2212] ss:$2 sm:$0xff]
  %s2214 = scalar_lea.vmem %s1794, 723
  %v2215 = vld [vmem:[%s2214] ss:$2 sm:$0xff]
  %s2216 = scalar_lea.vmem %s1794, 739
  %v2217 = vld [vmem:[%s2216] ss:$2 sm:$0xff]
  %s2218 = scalar_lea.vmem %s1794, 803
  %v2219 = vld [vmem:[%s2218] ss:$2 sm:$0xff]
  %s2220 = scalar_lea.vmem %s1794, 819
  %v2221 = vld [vmem:[%s2220] ss:$2 sm:$0xff]
  %s2222 = scalar_lea.vmem %s1794, 883
  %v2223 = vld [vmem:[%s2222] ss:$2 sm:$0xff]
  %s2224 = scalar_lea.vmem %s1794, 899
  %v2225 = vld [vmem:[%s2224] ss:$2 sm:$0xff]
  %s2226 = scalar_lea.vmem %s1794, 963
  %v2227 = vld [vmem:[%s2226] ss:$2 sm:$0xff]
  %s2228 = scalar_lea.vmem %s1794, 979
  %v2229 = vld [vmem:[%s2228] ss:$2 sm:$0xff]
  %s2230 = scalar_lea.vmem %s1794, 1043
  %v2231 = vld [vmem:[%s2230] ss:$2 sm:$0xff]
  %s2232 = scalar_lea.vmem %s1794, 1059
  %v2233 = vld [vmem:[%s2232] ss:$2 sm:$0xff]
  %s2234 = scalar_lea.vmem %s1794, 1123
  %v2235 = vld [vmem:[%s2234] ss:$2 sm:$0xff]
  %s2236 = scalar_lea.vmem %s1794, 1139
  %v2237 = vld [vmem:[%s2236] ss:$2 sm:$0xff]
  %s2238 = scalar_lea.vmem %s1794, 1203
  %v2239 = vld [vmem:[%s2238] ss:$2 sm:$0xff]
  %s2240 = scalar_lea.vmem %s1794, 1219
  %v2241 = vld [vmem:[%s2240] ss:$2 sm:$0xff]
  %s2242 = scalar_lea.vmem %s1794, 1363
  %v2243 = vld [vmem:[%s2242] ss:$2 sm:$0xff]
  %s2244 = scalar_lea.vmem %s1794, 1379
  %v2245 = vld [vmem:[%s2244] ss:$2 sm:$0xff]
  %s2246 = scalar_lea.vmem %s1794, 1443
  %v2247 = vld [vmem:[%s2246] ss:$2 sm:$0xff]
  %s2248 = scalar_lea.vmem %s1794, 1459
  %v2249 = vld [vmem:[%s2248] ss:$2 sm:$0xff]
  %s2250 = scalar_lea.vmem %s1794, 1523
  %v2251 = vld [vmem:[%s2250] ss:$2 sm:$0xff]
  %s2252 = scalar_lea.vmem %s1794, 1539
  %v2253 = vld [vmem:[%s2252] ss:$2 sm:$0xff]
  %s2254 = scalar_lea.vmem %s1794, 1603
  %v2255 = vld [vmem:[%s2254] ss:$2 sm:$0xff]
  %s2256 = scalar_lea.vmem %s1794, 1619
  %v2257 = vld [vmem:[%s2256] ss:$2 sm:$0xff]
  %s2258 = scalar_lea.vmem %s1794, 1683
  %v2259 = vld [vmem:[%s2258] ss:$2 sm:$0xff]
  %s2260 = scalar_lea.vmem %s1794, 1699
  %v2261 = vld [vmem:[%s2260] ss:$2 sm:$0xff]
  %s2262 = scalar_lea.vmem %s1794, 1763
  %v2263 = vld [vmem:[%s2262] ss:$2 sm:$0xff]
  %s2264 = scalar_lea.vmem %s1794, 1779
  %v2265 = vld [vmem:[%s2264] ss:$2 sm:$0xff]
  %s2266 = scalar_lea.vmem %s1794, 1843
  %v2267 = vld [vmem:[%s2266] ss:$2 sm:$0xff]
  %s2268 = scalar_lea.vmem %s1794, 1859
  %v2269 = vld [vmem:[%s2268] ss:$2 sm:$0xff]
  %s2270 = scalar_lea.vmem %s1794, 1923
  %v2271 = vld [vmem:[%s2270] ss:$2 sm:$0xff]
  %s2272 = scalar_lea.vmem %s1794, 1939
  %v2273 = vld [vmem:[%s2272] ss:$2 sm:$0xff]
  %s2274 = scalar_lea.vmem %s1794, 2003
  %v2275 = vld [vmem:[%s2274] ss:$2 sm:$0xff]
  %s2276 = scalar_lea.vmem %s1794, 2019
  %v2277 = vld [vmem:[%s2276] ss:$2 sm:$0xff]
  %s2278 = scalar_lea.vmem %s1794, 2083
  %v2279 = vld [vmem:[%s2278] ss:$2 sm:$0xff]
  %s2280 = scalar_lea.vmem %s1794, 2099
  %v2281 = vld [vmem:[%s2280] ss:$2 sm:$0xff]
  %s2282 = scalar_lea.vmem %s1794, 2163
  %v2283 = vld [vmem:[%s2282] ss:$2 sm:$0xff]
  %s2284 = scalar_lea.vmem %s1794, 2179
  %v2285 = vld [vmem:[%s2284] ss:$2 sm:$0xff]
  %s2286 = scalar_lea.vmem %s1794, 2243
  %v2287 = vld [vmem:[%s2286] ss:$2 sm:$0xff]
  %s2288 = scalar_lea.vmem %s1794, 2259
  %v2289 = vld [vmem:[%s2288] ss:$2 sm:$0xff]
  %s2290 = scalar_lea.vmem %s1794, 2323
  %v2291 = vld [vmem:[%s2290] ss:$2 sm:$0xff]
  %s2292 = scalar_lea.vmem %s1794, 2339
  %v2293 = vld [vmem:[%s2292] ss:$2 sm:$0xff]
  %s2294 = scalar_lea.vmem %s1794, 2403
  %v2295 = vld [vmem:[%s2294] ss:$2 sm:$0xff]
  %s2296 = scalar_lea.vmem %s1794, 2419
  %v2297 = vld [vmem:[%s2296] ss:$2 sm:$0xff]
  %s2298 = scalar_lea.vmem %s1794, 2483
  %v2299 = vld [vmem:[%s2298] ss:$2 sm:$0xff]
  %s2300 = scalar_lea.vmem %s1794, 2499
  %v2301 = vld [vmem:[%s2300] ss:$2 sm:$0xff]
  %s2302 = scalar_lea.vmem %s1794, 2563
  %v2303 = vld [vmem:[%s2302] ss:$2 sm:$0xff]
  %s2304 = scalar_lea.vmem %s1794, 2579
  %v2305 = vld [vmem:[%s2304] ss:$2 sm:$0xff]
  %2370 = vrot.lane.b32.xlu0 %v387, 3
  %v2371 = vpop.permute.xlu0 %2370
  %2372 = vrot.lane.b32.xlu0 %v389, 3
  %v2373 = vpop.permute.xlu0 %2372
  %2374 = vrot.lane.b32.xlu0 %v391, 3
  %v2375 = vpop.permute.xlu0 %2374
  %2376 = vrot.lane.b32.xlu0 %v393, 3
  %v2377 = vpop.permute.xlu0 %2376
  %2378 = vrot.lane.b32.xlu0 %v395, 3
  %v2379 = vpop.permute.xlu0 %2378
  %2380 = vrot.lane.b32.xlu0 %v397, 3
  %v2381 = vpop.permute.xlu0 %2380
  %2382 = vrot.lane.b32.xlu0 %v399, 3
  %v2383 = vpop.permute.xlu0 %2382
  %2384 = vrot.lane.b32.xlu0 %v401, 3
  %v2385 = vpop.permute.xlu0 %2384
  %2386 = vrot.lane.b32.xlu0 %v403, 3
  %v2387 = vpop.permute.xlu0 %2386
  %2388 = vrot.lane.b32.xlu0 %v405, 3
  %v2389 = vpop.permute.xlu0 %2388
  %2390 = vrot.lane.b32.xlu0 %v407, 3
  %v2391 = vpop.permute.xlu0 %2390
  %2392 = vrot.lane.b32.xlu0 %v409, 3
  %v2393 = vpop.permute.xlu0 %2392
  %2394 = vrot.lane.b32.xlu0 %v411, 3
  %v2395 = vpop.permute.xlu0 %2394
  %2396 = vrot.lane.b32.xlu0 %v413, 3
  %v2397 = vpop.permute.xlu0 %2396
  %2398 = vrot.lane.b32.xlu0 %v415, 3
  %v2399 = vpop.permute.xlu0 %2398
  %2400 = vrot.lane.b32.xlu0 %v417, 3
  %v2401 = vpop.permute.xlu0 %2400
  %2402 = vrot.lane.b32.xlu0 %v419, 3
  %v2403 = vpop.permute.xlu0 %2402
  %2404 = vrot.lane.b32.xlu0 %v421, 3
  %v2405 = vpop.permute.xlu0 %2404
  %2406 = vrot.lane.b32.xlu0 %v423, 3
  %v2407 = vpop.permute.xlu0 %2406
  %2408 = vrot.lane.b32.xlu0 %v425, 3
  %v2409 = vpop.permute.xlu0 %2408
  %2410 = vrot.lane.b32.xlu0 %v427, 3
  %v2411 = vpop.permute.xlu0 %2410
  %2412 = vrot.lane.b32.xlu0 %v429, 3
  %v2413 = vpop.permute.xlu0 %2412
  %2414 = vrot.lane.b32.xlu0 %v431, 3
  %v2415 = vpop.permute.xlu0 %2414
  %2416 = vrot.lane.b32.xlu0 %v433, 3
  %v2417 = vpop.permute.xlu0 %2416
  %2418 = vrot.lane.b32.xlu0 %v435, 3
  %v2419 = vpop.permute.xlu0 %2418
  %2420 = vrot.lane.b32.xlu0 %v437, 3
  %v2421 = vpop.permute.xlu0 %2420
  %2422 = vrot.lane.b32.xlu0 %v439, 3
  %v2423 = vpop.permute.xlu0 %2422
  %2424 = vrot.lane.b32.xlu0 %v441, 3
  %v2425 = vpop.permute.xlu0 %2424
  %2426 = vrot.lane.b32.xlu0 %v443, 3
  %v2427 = vpop.permute.xlu0 %2426
  %2428 = vrot.lane.b32.xlu0 %v445, 3
  %v2429 = vpop.permute.xlu0 %2428
  %2430 = vrot.lane.b32.xlu0 %v447, 3
  %v2431 = vpop.permute.xlu0 %2430
  %2432 = vrot.lane.b32.xlu0 %v449, 3
  %v2433 = vpop.permute.xlu0 %2432
  %2434 = vrot.lane.b32.xlu0 %v451, 3
  %v2435 = vpop.permute.xlu0 %2434
  %2436 = vrot.lane.b32.xlu0 %v453, 3
  %v2437 = vpop.permute.xlu0 %2436
  %2438 = vrot.lane.b32.xlu0 %v455, 3
  %v2439 = vpop.permute.xlu0 %2438
  %2440 = vrot.lane.b32.xlu0 %v457, 3
  %v2441 = vpop.permute.xlu0 %2440
  %2442 = vrot.lane.b32.xlu0 %v459, 3
  %v2443 = vpop.permute.xlu0 %2442
  %2444 = vrot.lane.b32.xlu0 %v461, 3
  %v2445 = vpop.permute.xlu0 %2444
  %2446 = vrot.lane.b32.xlu0 %v463, 3
  %v2447 = vpop.permute.xlu0 %2446
  %2448 = vrot.lane.b32.xlu0 %v465, 3
  %v2449 = vpop.permute.xlu0 %2448
  %2450 = vrot.lane.b32.xlu0 %v467, 3
  %v2451 = vpop.permute.xlu0 %2450
  %2452 = vrot.lane.b32.xlu0 %v469, 3
  %v2453 = vpop.permute.xlu0 %2452
  %2454 = vrot.lane.b32.xlu0 %v471, 3
  %v2455 = vpop.permute.xlu0 %2454
  %2456 = vrot.lane.b32.xlu0 %v473, 3
  %v2457 = vpop.permute.xlu0 %2456
  %2458 = vrot.lane.b32.xlu0 %v475, 3
  %v2459 = vpop.permute.xlu0 %2458
  %2460 = vrot.lane.b32.xlu0 %v477, 3
  %v2461 = vpop.permute.xlu0 %2460
  %2462 = vrot.lane.b32.xlu0 %v479, 3
  %v2463 = vpop.permute.xlu0 %2462
  %2464 = vrot.lane.b32.xlu0 %v481, 3
  %v2465 = vpop.permute.xlu0 %2464
  %2466 = vrot.lane.b32.xlu0 %v483, 3
  %v2467 = vpop.permute.xlu0 %2466
  %2468 = vrot.lane.b32.xlu0 %v485, 3
  %v2469 = vpop.permute.xlu0 %2468
  %2470 = vrot.lane.b32.xlu0 %v487, 3
  %v2471 = vpop.permute.xlu0 %2470
  %2472 = vrot.lane.b32.xlu0 %v489, 3
  %v2473 = vpop.permute.xlu0 %2472
  %2474 = vrot.lane.b32.xlu0 %v491, 3
  %v2475 = vpop.permute.xlu0 %2474
  %2476 = vrot.lane.b32.xlu0 %v493, 3
  %v2477 = vpop.permute.xlu0 %2476
  %2478 = vrot.lane.b32.xlu0 %v495, 3
  %v2479 = vpop.permute.xlu0 %2478
  %2480 = vrot.lane.b32.xlu0 %v497, 3
  %v2481 = vpop.permute.xlu0 %2480
  %2482 = vrot.lane.b32.xlu0 %v499, 3
  %v2483 = vpop.permute.xlu0 %2482
  %2484 = vrot.lane.b32.xlu0 %v501, 3
  %v2485 = vpop.permute.xlu0 %2484
  %2486 = vrot.lane.b32.xlu0 %v503, 3
  %v2487 = vpop.permute.xlu0 %2486
  %2488 = vrot.lane.b32.xlu0 %v505, 3
  %v2489 = vpop.permute.xlu0 %2488
  %2490 = vrot.lane.b32.xlu0 %v507, 3
  %v2491 = vpop.permute.xlu0 %2490
  %2492 = vrot.lane.b32.xlu0 %v509, 3
  %v2493 = vpop.permute.xlu0 %2492
  %2494 = vrot.lane.b32.xlu0 %v511, 3
  %v2495 = vpop.permute.xlu0 %2494
  %2496 = vrot.lane.b32.xlu0 %v513, 3
  %v2497 = vpop.permute.xlu0 %2496
  %2626 = vrot.lane.b32.xlu0 %v515, 6
  %v2627 = vpop.permute.xlu0 %2626
  %2628 = vrot.lane.b32.xlu0 %v517, 6
  %v2629 = vpop.permute.xlu0 %2628
  %2630 = vrot.lane.b32.xlu0 %v519, 6
  %v2631 = vpop.permute.xlu0 %2630
  %2632 = vrot.lane.b32.xlu0 %v521, 6
  %v2633 = vpop.permute.xlu0 %2632
  %2634 = vrot.lane.b32.xlu0 %v523, 6
  %v2635 = vpop.permute.xlu0 %2634
  %2636 = vrot.lane.b32.xlu0 %v525, 6
  %v2637 = vpop.permute.xlu0 %2636
  %2638 = vrot.lane.b32.xlu0 %v527, 6
  %v2639 = vpop.permute.xlu0 %2638
  %2640 = vrot.lane.b32.xlu0 %v529, 6
  %v2641 = vpop.permute.xlu0 %2640
  %2642 = vrot.lane.b32.xlu0 %v531, 6
  %v2643 = vpop.permute.xlu0 %2642
  %2644 = vrot.lane.b32.xlu0 %v533, 6
  %v2645 = vpop.permute.xlu0 %2644
  %2646 = vrot.lane.b32.xlu0 %v535, 6
  %v2647 = vpop.permute.xlu0 %2646
  %2648 = vrot.lane.b32.xlu0 %v537, 6
  %v2649 = vpop.permute.xlu0 %2648
  %2650 = vrot.lane.b32.xlu0 %v539, 6
  %v2651 = vpop.permute.xlu0 %2650
  %2652 = vrot.lane.b32.xlu0 %v541, 6
  %v2653 = vpop.permute.xlu0 %2652
  %2654 = vrot.lane.b32.xlu0 %v543, 6
  %v2655 = vpop.permute.xlu0 %2654
  %2656 = vrot.lane.b32.xlu0 %v545, 6
  %v2657 = vpop.permute.xlu0 %2656
  %2658 = vrot.lane.b32.xlu0 %v547, 6
  %v2659 = vpop.permute.xlu0 %2658
  %2660 = vrot.lane.b32.xlu0 %v549, 6
  %v2661 = vpop.permute.xlu0 %2660
  %2662 = vrot.lane.b32.xlu0 %v551, 6
  %v2663 = vpop.permute.xlu0 %2662
  %2664 = vrot.lane.b32.xlu0 %v553, 6
  %v2665 = vpop.permute.xlu0 %2664
  %2666 = vrot.lane.b32.xlu0 %v555, 6
  %v2667 = vpop.permute.xlu0 %2666
  %2668 = vrot.lane.b32.xlu0 %v557, 6
  %v2669 = vpop.permute.xlu0 %2668
  %2670 = vrot.lane.b32.xlu0 %v559, 6
  %v2671 = vpop.permute.xlu0 %2670
  %2672 = vrot.lane.b32.xlu0 %v561, 6
  %v2673 = vpop.permute.xlu0 %2672
  %2674 = vrot.lane.b32.xlu0 %v563, 6
  %v2675 = vpop.permute.xlu0 %2674
  %2676 = vrot.lane.b32.xlu0 %v565, 6
  %v2677 = vpop.permute.xlu0 %2676
  %2678 = vrot.lane.b32.xlu0 %v567, 6
  %v2679 = vpop.permute.xlu0 %2678
  %2680 = vrot.lane.b32.xlu0 %v569, 6
  %v2681 = vpop.permute.xlu0 %2680
  %2682 = vrot.lane.b32.xlu0 %v571, 6
  %v2683 = vpop.permute.xlu0 %2682
  %2684 = vrot.lane.b32.xlu0 %v573, 6
  %v2685 = vpop.permute.xlu0 %2684
  %2686 = vrot.lane.b32.xlu0 %v575, 6
  %v2687 = vpop.permute.xlu0 %2686
  %2688 = vrot.lane.b32.xlu0 %v577, 6
  %v2689 = vpop.permute.xlu0 %2688
  %2690 = vrot.lane.b32.xlu0 %v579, 6
  %v2691 = vpop.permute.xlu0 %2690
  %2692 = vrot.lane.b32.xlu0 %v581, 6
  %v2693 = vpop.permute.xlu0 %2692
  %2694 = vrot.lane.b32.xlu0 %v583, 6
  %v2695 = vpop.permute.xlu0 %2694
  %2696 = vrot.lane.b32.xlu0 %v585, 6
  %v2697 = vpop.permute.xlu0 %2696
  %2698 = vrot.lane.b32.xlu0 %v587, 6
  %v2699 = vpop.permute.xlu0 %2698
  %2700 = vrot.lane.b32.xlu0 %v589, 6
  %v2701 = vpop.permute.xlu0 %2700
  %2702 = vrot.lane.b32.xlu0 %v591, 6
  %v2703 = vpop.permute.xlu0 %2702
  %2704 = vrot.lane.b32.xlu0 %v593, 6
  %v2705 = vpop.permute.xlu0 %2704
  %2706 = vrot.lane.b32.xlu0 %v595, 6
  %v2707 = vpop.permute.xlu0 %2706
  %2708 = vrot.lane.b32.xlu0 %v597, 6
  %v2709 = vpop.permute.xlu0 %2708
  %2710 = vrot.lane.b32.xlu0 %v599, 6
  %v2711 = vpop.permute.xlu0 %2710
  %2712 = vrot.lane.b32.xlu0 %v601, 6
  %v2713 = vpop.permute.xlu0 %2712
  %2714 = vrot.lane.b32.xlu0 %v603, 6
  %v2715 = vpop.permute.xlu0 %2714
  %2716 = vrot.lane.b32.xlu0 %v605, 6
  %v2717 = vpop.permute.xlu0 %2716
  %2718 = vrot.lane.b32.xlu0 %v607, 6
  %v2719 = vpop.permute.xlu0 %2718
  %2720 = vrot.lane.b32.xlu0 %v609, 6
  %v2721 = vpop.permute.xlu0 %2720
  %2722 = vrot.lane.b32.xlu0 %v611, 6
  %v2723 = vpop.permute.xlu0 %2722
  %2724 = vrot.lane.b32.xlu0 %v613, 6
  %v2725 = vpop.permute.xlu0 %2724
  %2726 = vrot.lane.b32.xlu0 %v615, 6
  %v2727 = vpop.permute.xlu0 %2726
  %2728 = vrot.lane.b32.xlu0 %v617, 6
  %v2729 = vpop.permute.xlu0 %2728
  %2730 = vrot.lane.b32.xlu0 %v619, 6
  %v2731 = vpop.permute.xlu0 %2730
  %2732 = vrot.lane.b32.xlu0 %v621, 6
  %v2733 = vpop.permute.xlu0 %2732
  %2734 = vrot.lane.b32.xlu0 %v623, 6
  %v2735 = vpop.permute.xlu0 %2734
  %2736 = vrot.lane.b32.xlu0 %v625, 6
  %v2737 = vpop.permute.xlu0 %2736
  %2738 = vrot.lane.b32.xlu0 %v627, 6
  %v2739 = vpop.permute.xlu0 %2738
  %2740 = vrot.lane.b32.xlu0 %v629, 6
  %v2741 = vpop.permute.xlu0 %2740
  %2742 = vrot.lane.b32.xlu0 %v631, 6
  %v2743 = vpop.permute.xlu0 %2742
  %2744 = vrot.lane.b32.xlu0 %v633, 6
  %v2745 = vpop.permute.xlu0 %2744
  %2746 = vrot.lane.b32.xlu0 %v635, 6
  %v2747 = vpop.permute.xlu0 %2746
  %2748 = vrot.lane.b32.xlu0 %v637, 6
  %v2749 = vpop.permute.xlu0 %2748
  %2750 = vrot.lane.b32.xlu0 %v639, 6
  %v2751 = vpop.permute.xlu0 %2750
  %2752 = vrot.lane.b32.xlu0 %v641, 6
  %v2753 = vpop.permute.xlu0 %2752
  %2882 = vrot.lane.b32.xlu0 %v643, 9
  %v2883 = vpop.permute.xlu0 %2882
  %2884 = vrot.lane.b32.xlu0 %v645, 9
  %v2885 = vpop.permute.xlu0 %2884
  %2886 = vrot.lane.b32.xlu0 %v647, 9
  %v2887 = vpop.permute.xlu0 %2886
  %2888 = vrot.lane.b32.xlu0 %v649, 9
  %v2889 = vpop.permute.xlu0 %2888
  %2890 = vrot.lane.b32.xlu0 %v651, 9
  %v2891 = vpop.permute.xlu0 %2890
  %2892 = vrot.lane.b32.xlu0 %v653, 9
  %v2893 = vpop.permute.xlu0 %2892
  %2894 = vrot.lane.b32.xlu0 %v655, 9
  %v2895 = vpop.permute.xlu0 %2894
  %2896 = vrot.lane.b32.xlu0 %v657, 9
  %v2897 = vpop.permute.xlu0 %2896
  %2898 = vrot.lane.b32.xlu0 %v659, 9
  %v2899 = vpop.permute.xlu0 %2898
  %2900 = vrot.lane.b32.xlu0 %v661, 9
  %v2901 = vpop.permute.xlu0 %2900
  %2902 = vrot.lane.b32.xlu0 %v663, 9
  %v2903 = vpop.permute.xlu0 %2902
  %2904 = vrot.lane.b32.xlu0 %v665, 9
  %v2905 = vpop.permute.xlu0 %2904
  %2906 = vrot.lane.b32.xlu0 %v667, 9
  %v2907 = vpop.permute.xlu0 %2906
  %2908 = vrot.lane.b32.xlu0 %v669, 9
  %v2909 = vpop.permute.xlu0 %2908
  %2910 = vrot.lane.b32.xlu0 %v671, 9
  %v2911 = vpop.permute.xlu0 %2910
  %2912 = vrot.lane.b32.xlu0 %v673, 9
  %v2913 = vpop.permute.xlu0 %2912
  %2914 = vrot.lane.b32.xlu0 %v675, 9
  %v2915 = vpop.permute.xlu0 %2914
  %2916 = vrot.lane.b32.xlu0 %v677, 9
  %v2917 = vpop.permute.xlu0 %2916
  %2918 = vrot.lane.b32.xlu0 %v679, 9
  %v2919 = vpop.permute.xlu0 %2918
  %2920 = vrot.lane.b32.xlu0 %v681, 9
  %v2921 = vpop.permute.xlu0 %2920
  %2922 = vrot.lane.b32.xlu0 %v683, 9
  %v2923 = vpop.permute.xlu0 %2922
  %2924 = vrot.lane.b32.xlu0 %v685, 9
  %v2925 = vpop.permute.xlu0 %2924
  %2926 = vrot.lane.b32.xlu0 %v687, 9
  %v2927 = vpop.permute.xlu0 %2926
  %2928 = vrot.lane.b32.xlu0 %v689, 9
  %v2929 = vpop.permute.xlu0 %2928
  %2930 = vrot.lane.b32.xlu0 %v691, 9
  %v2931 = vpop.permute.xlu0 %2930
  %2932 = vrot.lane.b32.xlu0 %v693, 9
  %v2933 = vpop.permute.xlu0 %2932
  %2934 = vrot.lane.b32.xlu0 %v695, 9
  %v2935 = vpop.permute.xlu0 %2934
  %2936 = vrot.lane.b32.xlu0 %v697, 9
  %v2937 = vpop.permute.xlu0 %2936
  %2938 = vrot.lane.b32.xlu0 %v699, 9
  %v2939 = vpop.permute.xlu0 %2938
  %2940 = vrot.lane.b32.xlu0 %v701, 9
  %v2941 = vpop.permute.xlu0 %2940
  %2942 = vrot.lane.b32.xlu0 %v703, 9
  %v2943 = vpop.permute.xlu0 %2942
  %2944 = vrot.lane.b32.xlu0 %v705, 9
  %v2945 = vpop.permute.xlu0 %2944
  %2946 = vrot.lane.b32.xlu0 %v707, 9
  %v2947 = vpop.permute.xlu0 %2946
  %2948 = vrot.lane.b32.xlu0 %v709, 9
  %v2949 = vpop.permute.xlu0 %2948
  %2950 = vrot.lane.b32.xlu0 %v711, 9
  %v2951 = vpop.permute.xlu0 %2950
  %2952 = vrot.lane.b32.xlu0 %v713, 9
  %v2953 = vpop.permute.xlu0 %2952
  %2954 = vrot.lane.b32.xlu0 %v715, 9
  %v2955 = vpop.permute.xlu0 %2954
  %2956 = vrot.lane.b32.xlu0 %v717, 9
  %v2957 = vpop.permute.xlu0 %2956
  %2958 = vrot.lane.b32.xlu0 %v719, 9
  %v2959 = vpop.permute.xlu0 %2958
  %2960 = vrot.lane.b32.xlu0 %v721, 9
  %v2961 = vpop.permute.xlu0 %2960
  %2962 = vrot.lane.b32.xlu0 %v723, 9
  %v2963 = vpop.permute.xlu0 %2962
  %2964 = vrot.lane.b32.xlu0 %v725, 9
  %v2965 = vpop.permute.xlu0 %2964
  %2966 = vrot.lane.b32.xlu0 %v727, 9
  %v2967 = vpop.permute.xlu0 %2966
  %2968 = vrot.lane.b32.xlu0 %v729, 9
  %v2969 = vpop.permute.xlu0 %2968
  %2970 = vrot.lane.b32.xlu0 %v731, 9
  %v2971 = vpop.permute.xlu0 %2970
  %2972 = vrot.lane.b32.xlu0 %v733, 9
  %v2973 = vpop.permute.xlu0 %2972
  %2974 = vrot.lane.b32.xlu0 %v735, 9
  %v2975 = vpop.permute.xlu0 %2974
  %2976 = vrot.lane.b32.xlu0 %v737, 9
  %v2977 = vpop.permute.xlu0 %2976
  %2978 = vrot.lane.b32.xlu0 %v739, 9
  %v2979 = vpop.permute.xlu0 %2978
  %2980 = vrot.lane.b32.xlu0 %v741, 9
  %v2981 = vpop.permute.xlu0 %2980
  %2982 = vrot.lane.b32.xlu0 %v743, 9
  %v2983 = vpop.permute.xlu0 %2982
  %2984 = vrot.lane.b32.xlu0 %v745, 9
  %v2985 = vpop.permute.xlu0 %2984
  %2986 = vrot.lane.b32.xlu0 %v747, 9
  %v2987 = vpop.permute.xlu0 %2986
  %2988 = vrot.lane.b32.xlu0 %v749, 9
  %v2989 = vpop.permute.xlu0 %2988
  %2990 = vrot.lane.b32.xlu0 %v751, 9
  %v2991 = vpop.permute.xlu0 %2990
  %2992 = vrot.lane.b32.xlu0 %v753, 9
  %v2993 = vpop.permute.xlu0 %2992
  %2994 = vrot.lane.b32.xlu0 %v755, 9
  %v2995 = vpop.permute.xlu0 %2994
  %2996 = vrot.lane.b32.xlu0 %v757, 9
  %v2997 = vpop.permute.xlu0 %2996
  %2998 = vrot.lane.b32.xlu0 %v759, 9
  %v2999 = vpop.permute.xlu0 %2998
  %3000 = vrot.lane.b32.xlu0 %v761, 9
  %v3001 = vpop.permute.xlu0 %3000
  %3002 = vrot.lane.b32.xlu0 %v763, 9
  %v3003 = vpop.permute.xlu0 %3002
  %3004 = vrot.lane.b32.xlu0 %v765, 9
  %v3005 = vpop.permute.xlu0 %3004
  %3006 = vrot.lane.b32.xlu0 %v767, 9
  %v3007 = vpop.permute.xlu0 %3006
  %3008 = vrot.lane.b32.xlu0 %v769, 9
  %v3009 = vpop.permute.xlu0 %3008
  %3138 = vrot.lane.b32.xlu0 %v771, 12
  %v3139 = vpop.permute.xlu0 %3138
  %3140 = vrot.lane.b32.xlu0 %v773, 12
  %v3141 = vpop.permute.xlu0 %3140
  %3142 = vrot.lane.b32.xlu0 %v775, 12
  %v3143 = vpop.permute.xlu0 %3142
  %3144 = vrot.lane.b32.xlu0 %v777, 12
  %v3145 = vpop.permute.xlu0 %3144
  %3146 = vrot.lane.b32.xlu0 %v779, 12
  %v3147 = vpop.permute.xlu0 %3146
  %3148 = vrot.lane.b32.xlu0 %v781, 12
  %v3149 = vpop.permute.xlu0 %3148
  %3150 = vrot.lane.b32.xlu0 %v783, 12
  %v3151 = vpop.permute.xlu0 %3150
  %3152 = vrot.lane.b32.xlu0 %v785, 12
  %v3153 = vpop.permute.xlu0 %3152
  %3154 = vrot.lane.b32.xlu0 %v787, 12
  %v3155 = vpop.permute.xlu0 %3154
  %3156 = vrot.lane.b32.xlu0 %v789, 12
  %v3157 = vpop.permute.xlu0 %3156
  %3158 = vrot.lane.b32.xlu0 %v791, 12
  %v3159 = vpop.permute.xlu0 %3158
  %3160 = vrot.lane.b32.xlu0 %v793, 12
  %v3161 = vpop.permute.xlu0 %3160
  %3162 = vrot.lane.b32.xlu0 %v795, 12
  %v3163 = vpop.permute.xlu0 %3162
  %3164 = vrot.lane.b32.xlu0 %v797, 12
  %v3165 = vpop.permute.xlu0 %3164
  %3166 = vrot.lane.b32.xlu0 %v799, 12
  %v3167 = vpop.permute.xlu0 %3166
  %3168 = vrot.lane.b32.xlu0 %v801, 12
  %v3169 = vpop.permute.xlu0 %3168
  %3170 = vrot.lane.b32.xlu0 %v803, 12
  %v3171 = vpop.permute.xlu0 %3170
  %3172 = vrot.lane.b32.xlu0 %v805, 12
  %v3173 = vpop.permute.xlu0 %3172
  %3174 = vrot.lane.b32.xlu0 %v807, 12
  %v3175 = vpop.permute.xlu0 %3174
  %3176 = vrot.lane.b32.xlu0 %v809, 12
  %v3177 = vpop.permute.xlu0 %3176
  %3178 = vrot.lane.b32.xlu0 %v811, 12
  %v3179 = vpop.permute.xlu0 %3178
  %3180 = vrot.lane.b32.xlu0 %v813, 12
  %v3181 = vpop.permute.xlu0 %3180
  %3182 = vrot.lane.b32.xlu0 %v815, 12
  %v3183 = vpop.permute.xlu0 %3182
  %3184 = vrot.lane.b32.xlu0 %v817, 12
  %v3185 = vpop.permute.xlu0 %3184
  %3186 = vrot.lane.b32.xlu0 %v819, 12
  %v3187 = vpop.permute.xlu0 %3186
  %3188 = vrot.lane.b32.xlu0 %v821, 12
  %v3189 = vpop.permute.xlu0 %3188
  %3190 = vrot.lane.b32.xlu0 %v823, 12
  %v3191 = vpop.permute.xlu0 %3190
  %3192 = vrot.lane.b32.xlu0 %v825, 12
  %v3193 = vpop.permute.xlu0 %3192
  %3194 = vrot.lane.b32.xlu0 %v827, 12
  %v3195 = vpop.permute.xlu0 %3194
  %3196 = vrot.lane.b32.xlu0 %v829, 12
  %v3197 = vpop.permute.xlu0 %3196
  %3198 = vrot.lane.b32.xlu0 %v831, 12
  %v3199 = vpop.permute.xlu0 %3198
  %3200 = vrot.lane.b32.xlu0 %v833, 12
  %v3201 = vpop.permute.xlu0 %3200
  %3202 = vrot.lane.b32.xlu0 %v835, 12
  %v3203 = vpop.permute.xlu0 %3202
  %3204 = vrot.lane.b32.xlu0 %v837, 12
  %v3205 = vpop.permute.xlu0 %3204
  %3206 = vrot.lane.b32.xlu0 %v839, 12
  %v3207 = vpop.permute.xlu0 %3206
  %3208 = vrot.lane.b32.xlu0 %v841, 12
  %v3209 = vpop.permute.xlu0 %3208
  %3210 = vrot.lane.b32.xlu0 %v843, 12
  %v3211 = vpop.permute.xlu0 %3210
  %3212 = vrot.lane.b32.xlu0 %v845, 12
  %v3213 = vpop.permute.xlu0 %3212
  %3214 = vrot.lane.b32.xlu0 %v847, 12
  %v3215 = vpop.permute.xlu0 %3214
  %3216 = vrot.lane.b32.xlu0 %v849, 12
  %v3217 = vpop.permute.xlu0 %3216
  %3218 = vrot.lane.b32.xlu0 %v851, 12
  %v3219 = vpop.permute.xlu0 %3218
  %3220 = vrot.lane.b32.xlu0 %v853, 12
  %v3221 = vpop.permute.xlu0 %3220
  %3222 = vrot.lane.b32.xlu0 %v855, 12
  %v3223 = vpop.permute.xlu0 %3222
  %3224 = vrot.lane.b32.xlu0 %v857, 12
  %v3225 = vpop.permute.xlu0 %3224
  %3226 = vrot.lane.b32.xlu0 %v859, 12
  %v3227 = vpop.permute.xlu0 %3226
  %3228 = vrot.lane.b32.xlu0 %v861, 12
  %v3229 = vpop.permute.xlu0 %3228
  %3230 = vrot.lane.b32.xlu0 %v863, 12
  %v3231 = vpop.permute.xlu0 %3230
  %3232 = vrot.lane.b32.xlu0 %v865, 12
  %v3233 = vpop.permute.xlu0 %3232
  %3234 = vrot.lane.b32.xlu0 %v867, 12
  %v3235 = vpop.permute.xlu0 %3234
  %3236 = vrot.lane.b32.xlu0 %v869, 12
  %v3237 = vpop.permute.xlu0 %3236
  %3238 = vrot.lane.b32.xlu0 %v871, 12
  %v3239 = vpop.permute.xlu0 %3238
  %3240 = vrot.lane.b32.xlu0 %v873, 12
  %v3241 = vpop.permute.xlu0 %3240
  %3242 = vrot.lane.b32.xlu0 %v875, 12
  %v3243 = vpop.permute.xlu0 %3242
  %3244 = vrot.lane.b32.xlu0 %v877, 12
  %v3245 = vpop.permute.xlu0 %3244
  %3246 = vrot.lane.b32.xlu0 %v879, 12
  %v3247 = vpop.permute.xlu0 %3246
  %3248 = vrot.lane.b32.xlu0 %v881, 12
  %v3249 = vpop.permute.xlu0 %3248
  %3250 = vrot.lane.b32.xlu0 %v883, 12
  %v3251 = vpop.permute.xlu0 %3250
  %3252 = vrot.lane.b32.xlu0 %v885, 12
  %v3253 = vpop.permute.xlu0 %3252
  %3254 = vrot.lane.b32.xlu0 %v887, 12
  %v3255 = vpop.permute.xlu0 %3254
  %3256 = vrot.lane.b32.xlu0 %v889, 12
  %v3257 = vpop.permute.xlu0 %3256
  %3258 = vrot.lane.b32.xlu0 %v891, 12
  %v3259 = vpop.permute.xlu0 %3258
  %3260 = vrot.lane.b32.xlu0 %v893, 12
  %v3261 = vpop.permute.xlu0 %3260
  %3262 = vrot.lane.b32.xlu0 %v895, 12
  %v3263 = vpop.permute.xlu0 %3262
  %3264 = vrot.lane.b32.xlu0 %v897, 12
  %v3265 = vpop.permute.xlu0 %3264
  %3394 = vrot.lane.b32.xlu0 %v899, 15
  %v3395 = vpop.permute.xlu0 %3394
  %3396 = vrot.lane.b32.xlu0 %v901, 15
  %v3397 = vpop.permute.xlu0 %3396
  %3398 = vrot.lane.b32.xlu0 %v903, 15
  %v3399 = vpop.permute.xlu0 %3398
  %3400 = vrot.lane.b32.xlu0 %v905, 15
  %v3401 = vpop.permute.xlu0 %3400
  %3402 = vrot.lane.b32.xlu0 %v907, 15
  %v3403 = vpop.permute.xlu0 %3402
  %3404 = vrot.lane.b32.xlu0 %v909, 15
  %v3405 = vpop.permute.xlu0 %3404
  %3406 = vrot.lane.b32.xlu0 %v911, 15
  %v3407 = vpop.permute.xlu0 %3406
  %3408 = vrot.lane.b32.xlu0 %v913, 15
  %v3409 = vpop.permute.xlu0 %3408
  %3410 = vrot.lane.b32.xlu0 %v915, 15
  %v3411 = vpop.permute.xlu0 %3410
  %3412 = vrot.lane.b32.xlu0 %v917, 15
  %v3413 = vpop.permute.xlu0 %3412
  %3414 = vrot.lane.b32.xlu0 %v919, 15
  %v3415 = vpop.permute.xlu0 %3414
  %3416 = vrot.lane.b32.xlu0 %v921, 15
  %v3417 = vpop.permute.xlu0 %3416
  %3418 = vrot.lane.b32.xlu0 %v923, 15
  %v3419 = vpop.permute.xlu0 %3418
  %3420 = vrot.lane.b32.xlu0 %v925, 15
  %v3421 = vpop.permute.xlu0 %3420
  %3422 = vrot.lane.b32.xlu0 %v927, 15
  %v3423 = vpop.permute.xlu0 %3422
  %3424 = vrot.lane.b32.xlu0 %v929, 15
  %v3425 = vpop.permute.xlu0 %3424
  %3426 = vrot.lane.b32.xlu0 %v931, 15
  %v3427 = vpop.permute.xlu0 %3426
  %3428 = vrot.lane.b32.xlu0 %v933, 15
  %v3429 = vpop.permute.xlu0 %3428
  %3430 = vrot.lane.b32.xlu0 %v935, 15
  %v3431 = vpop.permute.xlu0 %3430
  %3432 = vrot.lane.b32.xlu0 %v937, 15
  %v3433 = vpop.permute.xlu0 %3432
  %3434 = vrot.lane.b32.xlu0 %v939, 15
  %v3435 = vpop.permute.xlu0 %3434
  %3436 = vrot.lane.b32.xlu0 %v941, 15
  %v3437 = vpop.permute.xlu0 %3436
  %3438 = vrot.lane.b32.xlu0 %v943, 15
  %v3439 = vpop.permute.xlu0 %3438
  %3440 = vrot.lane.b32.xlu0 %v945, 15
  %v3441 = vpop.permute.xlu0 %3440
  %3442 = vrot.lane.b32.xlu0 %v947, 15
  %v3443 = vpop.permute.xlu0 %3442
  %3444 = vrot.lane.b32.xlu0 %v949, 15
  %v3445 = vpop.permute.xlu0 %3444
  %3446 = vrot.lane.b32.xlu0 %v951, 15
  %v3447 = vpop.permute.xlu0 %3446
  %3448 = vrot.lane.b32.xlu0 %v953, 15
  %v3449 = vpop.permute.xlu0 %3448
  %3450 = vrot.lane.b32.xlu0 %v955, 15
  %v3451 = vpop.permute.xlu0 %3450
  %3452 = vrot.lane.b32.xlu0 %v957, 15
  %v3453 = vpop.permute.xlu0 %3452
  %3454 = vrot.lane.b32.xlu0 %v959, 15
  %v3455 = vpop.permute.xlu0 %3454
  %3456 = vrot.lane.b32.xlu0 %v961, 15
  %v3457 = vpop.permute.xlu0 %3456
  %3458 = vrot.lane.b32.xlu0 %v963, 15
  %v3459 = vpop.permute.xlu0 %3458
  %3460 = vrot.lane.b32.xlu0 %v965, 15
  %v3461 = vpop.permute.xlu0 %3460
  %3462 = vrot.lane.b32.xlu0 %v967, 15
  %v3463 = vpop.permute.xlu0 %3462
  %3464 = vrot.lane.b32.xlu0 %v969, 15
  %v3465 = vpop.permute.xlu0 %3464
  %3466 = vrot.lane.b32.xlu0 %v971, 15
  %v3467 = vpop.permute.xlu0 %3466
  %3468 = vrot.lane.b32.xlu0 %v973, 15
  %v3469 = vpop.permute.xlu0 %3468
  %3470 = vrot.lane.b32.xlu0 %v975, 15
  %v3471 = vpop.permute.xlu0 %3470
  %3472 = vrot.lane.b32.xlu0 %v977, 15
  %v3473 = vpop.permute.xlu0 %3472
  %3474 = vrot.lane.b32.xlu0 %v979, 15
  %v3475 = vpop.permute.xlu0 %3474
  %3476 = vrot.lane.b32.xlu0 %v981, 15
  %v3477 = vpop.permute.xlu0 %3476
  %3478 = vrot.lane.b32.xlu0 %v983, 15
  %v3479 = vpop.permute.xlu0 %3478
  %3480 = vrot.lane.b32.xlu0 %v985, 15
  %v3481 = vpop.permute.xlu0 %3480
  %3482 = vrot.lane.b32.xlu0 %v987, 15
  %v3483 = vpop.permute.xlu0 %3482
  %3484 = vrot.lane.b32.xlu0 %v989, 15
  %v3485 = vpop.permute.xlu0 %3484
  %3486 = vrot.lane.b32.xlu0 %v991, 15
  %v3487 = vpop.permute.xlu0 %3486
  %3488 = vrot.lane.b32.xlu0 %v993, 15
  %v3489 = vpop.permute.xlu0 %3488
  %3490 = vrot.lane.b32.xlu0 %v995, 15
  %v3491 = vpop.permute.xlu0 %3490
  %3492 = vrot.lane.b32.xlu0 %v997, 15
  %v3493 = vpop.permute.xlu0 %3492
  %3494 = vrot.lane.b32.xlu0 %v999, 15
  %v3495 = vpop.permute.xlu0 %3494
  %3496 = vrot.lane.b32.xlu0 %v1001, 15
  %v3497 = vpop.permute.xlu0 %3496
  %3498 = vrot.lane.b32.xlu0 %v1003, 15
  %v3499 = vpop.permute.xlu0 %3498
  %3500 = vrot.lane.b32.xlu0 %v1005, 15
  %v3501 = vpop.permute.xlu0 %3500
  %3502 = vrot.lane.b32.xlu0 %v1007, 15
  %v3503 = vpop.permute.xlu0 %3502
  %3504 = vrot.lane.b32.xlu0 %v1009, 15
  %v3505 = vpop.permute.xlu0 %3504
  %3506 = vrot.lane.b32.xlu0 %v1011, 15
  %v3507 = vpop.permute.xlu0 %3506
  %3508 = vrot.lane.b32.xlu0 %v1013, 15
  %v3509 = vpop.permute.xlu0 %3508
  %3510 = vrot.lane.b32.xlu0 %v1015, 15
  %v3511 = vpop.permute.xlu0 %3510
  %3512 = vrot.lane.b32.xlu0 %v1017, 15
  %v3513 = vpop.permute.xlu0 %3512
  %3514 = vrot.lane.b32.xlu0 %v1019, 15
  %v3515 = vpop.permute.xlu0 %3514
  %3516 = vrot.lane.b32.xlu0 %v1021, 15
  %v3517 = vpop.permute.xlu0 %3516
  %3518 = vrot.lane.b32.xlu0 %v1023, 15
  %v3519 = vpop.permute.xlu0 %3518
  %3520 = vrot.lane.b32.xlu0 %v1025, 15
  %v3521 = vpop.permute.xlu0 %3520
  %3650 = vrot.lane.b32.xlu0 %v1027, 18
  %v3651 = vpop.permute.xlu0 %3650
  %3652 = vrot.lane.b32.xlu0 %v1029, 18
  %v3653 = vpop.permute.xlu0 %3652
  %3654 = vrot.lane.b32.xlu0 %v1031, 18
  %v3655 = vpop.permute.xlu0 %3654
  %3656 = vrot.lane.b32.xlu0 %v1033, 18
  %v3657 = vpop.permute.xlu0 %3656
  %3658 = vrot.lane.b32.xlu0 %v1035, 18
  %v3659 = vpop.permute.xlu0 %3658
  %3660 = vrot.lane.b32.xlu0 %v1037, 18
  %v3661 = vpop.permute.xlu0 %3660
  %3662 = vrot.lane.b32.xlu0 %v1039, 18
  %v3663 = vpop.permute.xlu0 %3662
  %3664 = vrot.lane.b32.xlu0 %v1041, 18
  %v3665 = vpop.permute.xlu0 %3664
  %3666 = vrot.lane.b32.xlu0 %v1043, 18
  %v3667 = vpop.permute.xlu0 %3666
  %3668 = vrot.lane.b32.xlu0 %v1045, 18
  %v3669 = vpop.permute.xlu0 %3668
  %3670 = vrot.lane.b32.xlu0 %v1047, 18
  %v3671 = vpop.permute.xlu0 %3670
  %3672 = vrot.lane.b32.xlu0 %v1049, 18
  %v3673 = vpop.permute.xlu0 %3672
  %3674 = vrot.lane.b32.xlu0 %v1051, 18
  %v3675 = vpop.permute.xlu0 %3674
  %3676 = vrot.lane.b32.xlu0 %v1053, 18
  %v3677 = vpop.permute.xlu0 %3676
  %3678 = vrot.lane.b32.xlu0 %v1055, 18
  %v3679 = vpop.permute.xlu0 %3678
  %3680 = vrot.lane.b32.xlu0 %v1057, 18
  %v3681 = vpop.permute.xlu0 %3680
  %3682 = vrot.lane.b32.xlu0 %v1059, 18
  %v3683 = vpop.permute.xlu0 %3682
  %3684 = vrot.lane.b32.xlu0 %v1061, 18
  %v3685 = vpop.permute.xlu0 %3684
  %3686 = vrot.lane.b32.xlu0 %v1063, 18
  %v3687 = vpop.permute.xlu0 %3686
  %3688 = vrot.lane.b32.xlu0 %v1065, 18
  %v3689 = vpop.permute.xlu0 %3688
  %3690 = vrot.lane.b32.xlu0 %v1067, 18
  %v3691 = vpop.permute.xlu0 %3690
  %3692 = vrot.lane.b32.xlu0 %v1069, 18
  %v3693 = vpop.permute.xlu0 %3692
  %3694 = vrot.lane.b32.xlu0 %v1071, 18
  %v3695 = vpop.permute.xlu0 %3694
  %3696 = vrot.lane.b32.xlu0 %v1073, 18
  %v3697 = vpop.permute.xlu0 %3696
  %3698 = vrot.lane.b32.xlu0 %v1075, 18
  %v3699 = vpop.permute.xlu0 %3698
  %3700 = vrot.lane.b32.xlu0 %v1077, 18
  %v3701 = vpop.permute.xlu0 %3700
  %3702 = vrot.lane.b32.xlu0 %v1079, 18
  %v3703 = vpop.permute.xlu0 %3702
  %3704 = vrot.lane.b32.xlu0 %v1081, 18
  %v3705 = vpop.permute.xlu0 %3704
  %3706 = vrot.lane.b32.xlu0 %v1083, 18
  %v3707 = vpop.permute.xlu0 %3706
  %3708 = vrot.lane.b32.xlu0 %v1085, 18
  %v3709 = vpop.permute.xlu0 %3708
  %3710 = vrot.lane.b32.xlu0 %v1087, 18
  %v3711 = vpop.permute.xlu0 %3710
  %3712 = vrot.lane.b32.xlu0 %v1089, 18
  %v3713 = vpop.permute.xlu0 %3712
  %3714 = vrot.lane.b32.xlu0 %v1091, 18
  %v3715 = vpop.permute.xlu0 %3714
  %3716 = vrot.lane.b32.xlu0 %v1093, 18
  %v3717 = vpop.permute.xlu0 %3716
  %3718 = vrot.lane.b32.xlu0 %v1095, 18
  %v3719 = vpop.permute.xlu0 %3718
  %3720 = vrot.lane.b32.xlu0 %v1097, 18
  %v3721 = vpop.permute.xlu0 %3720
  %3722 = vrot.lane.b32.xlu0 %v1099, 18
  %v3723 = vpop.permute.xlu0 %3722
  %3724 = vrot.lane.b32.xlu0 %v1101, 18
  %v3725 = vpop.permute.xlu0 %3724
  %3726 = vrot.lane.b32.xlu0 %v1103, 18
  %v3727 = vpop.permute.xlu0 %3726
  %3728 = vrot.lane.b32.xlu0 %v1105, 18
  %v3729 = vpop.permute.xlu0 %3728
  %3730 = vrot.lane.b32.xlu0 %v1107, 18
  %v3731 = vpop.permute.xlu0 %3730
  %3732 = vrot.lane.b32.xlu0 %v1109, 18
  %v3733 = vpop.permute.xlu0 %3732
  %3734 = vrot.lane.b32.xlu0 %v1111, 18
  %v3735 = vpop.permute.xlu0 %3734
  %3736 = vrot.lane.b32.xlu0 %v1113, 18
  %v3737 = vpop.permute.xlu0 %3736
  %3738 = vrot.lane.b32.xlu0 %v1115, 18
  %v3739 = vpop.permute.xlu0 %3738
  %3740 = vrot.lane.b32.xlu0 %v1117, 18
  %v3741 = vpop.permute.xlu0 %3740
  %3742 = vrot.lane.b32.xlu0 %v1119, 18
  %v3743 = vpop.permute.xlu0 %3742
  %3744 = vrot.lane.b32.xlu0 %v1121, 18
  %v3745 = vpop.permute.xlu0 %3744
  %3746 = vrot.lane.b32.xlu0 %v1123, 18
  %v3747 = vpop.permute.xlu0 %3746
  %3748 = vrot.lane.b32.xlu0 %v1125, 18
  %v3749 = vpop.permute.xlu0 %3748
  %3750 = vrot.lane.b32.xlu0 %v1127, 18
  %v3751 = vpop.permute.xlu0 %3750
  %3752 = vrot.lane.b32.xlu0 %v1129, 18
  %v3753 = vpop.permute.xlu0 %3752
  %3754 = vrot.lane.b32.xlu0 %v1131, 18
  %v3755 = vpop.permute.xlu0 %3754
  %3756 = vrot.lane.b32.xlu0 %v1133, 18
  %v3757 = vpop.permute.xlu0 %3756
  %3758 = vrot.lane.b32.xlu0 %v1135, 18
  %v3759 = vpop.permute.xlu0 %3758
  %3760 = vrot.lane.b32.xlu0 %v1137, 18
  %v3761 = vpop.permute.xlu0 %3760
  %3762 = vrot.lane.b32.xlu0 %v1139, 18
  %v3763 = vpop.permute.xlu0 %3762
  %3764 = vrot.lane.b32.xlu0 %v1141, 18
  %v3765 = vpop.permute.xlu0 %3764
  %3766 = vrot.lane.b32.xlu0 %v1143, 18
  %v3767 = vpop.permute.xlu0 %3766
  %3768 = vrot.lane.b32.xlu0 %v1145, 18
  %v3769 = vpop.permute.xlu0 %3768
  %3770 = vrot.lane.b32.xlu0 %v1147, 18
  %v3771 = vpop.permute.xlu0 %3770
  %3772 = vrot.lane.b32.xlu0 %v1149, 18
  %v3773 = vpop.permute.xlu0 %3772
  %3774 = vrot.lane.b32.xlu0 %v1151, 18
  %v3775 = vpop.permute.xlu0 %3774
  %3776 = vrot.lane.b32.xlu0 %v1153, 18
  %v3777 = vpop.permute.xlu0 %3776
  %3906 = vrot.lane.b32.xlu0 %v1155, 21
  %v3907 = vpop.permute.xlu0 %3906
  %3908 = vrot.lane.b32.xlu0 %v1157, 21
  %v3909 = vpop.permute.xlu0 %3908
  %3910 = vrot.lane.b32.xlu0 %v1159, 21
  %v3911 = vpop.permute.xlu0 %3910
  %3912 = vrot.lane.b32.xlu0 %v1161, 21
  %v3913 = vpop.permute.xlu0 %3912
  %3914 = vrot.lane.b32.xlu0 %v1163, 21
  %v3915 = vpop.permute.xlu0 %3914
  %3916 = vrot.lane.b32.xlu0 %v1165, 21
  %v3917 = vpop.permute.xlu0 %3916
  %3918 = vrot.lane.b32.xlu0 %v1167, 21
  %v3919 = vpop.permute.xlu0 %3918
  %3920 = vrot.lane.b32.xlu0 %v1169, 21
  %v3921 = vpop.permute.xlu0 %3920
  %3922 = vrot.lane.b32.xlu0 %v1171, 21
  %v3923 = vpop.permute.xlu0 %3922
  %3924 = vrot.lane.b32.xlu0 %v1173, 21
  %v3925 = vpop.permute.xlu0 %3924
  %3926 = vrot.lane.b32.xlu0 %v1175, 21
  %v3927 = vpop.permute.xlu0 %3926
  %3928 = vrot.lane.b32.xlu0 %v1177, 21
  %v3929 = vpop.permute.xlu0 %3928
  %3930 = vrot.lane.b32.xlu0 %v1179, 21
  %v3931 = vpop.permute.xlu0 %3930
  %3932 = vrot.lane.b32.xlu0 %v1181, 21
  %v3933 = vpop.permute.xlu0 %3932
  %3934 = vrot.lane.b32.xlu0 %v1183, 21
  %v3935 = vpop.permute.xlu0 %3934
  %3936 = vrot.lane.b32.xlu0 %v1185, 21
  %v3937 = vpop.permute.xlu0 %3936
  %3938 = vrot.lane.b32.xlu0 %v1187, 21
  %v3939 = vpop.permute.xlu0 %3938
  %3940 = vrot.lane.b32.xlu0 %v1189, 21
  %v3941 = vpop.permute.xlu0 %3940
  %3942 = vrot.lane.b32.xlu0 %v1191, 21
  %v3943 = vpop.permute.xlu0 %3942
  %3944 = vrot.lane.b32.xlu0 %v1193, 21
  %v3945 = vpop.permute.xlu0 %3944
  %3946 = vrot.lane.b32.xlu0 %v1195, 21
  %v3947 = vpop.permute.xlu0 %3946
  %3948 = vrot.lane.b32.xlu0 %v1197, 21
  %v3949 = vpop.permute.xlu0 %3948
  %3950 = vrot.lane.b32.xlu0 %v1199, 21
  %v3951 = vpop.permute.xlu0 %3950
  %3952 = vrot.lane.b32.xlu0 %v1201, 21
  %v3953 = vpop.permute.xlu0 %3952
  %3954 = vrot.lane.b32.xlu0 %v1203, 21
  %v3955 = vpop.permute.xlu0 %3954
  %3956 = vrot.lane.b32.xlu0 %v1205, 21
  %v3957 = vpop.permute.xlu0 %3956
  %3958 = vrot.lane.b32.xlu0 %v1207, 21
  %v3959 = vpop.permute.xlu0 %3958
  %3960 = vrot.lane.b32.xlu0 %v1209, 21
  %v3961 = vpop.permute.xlu0 %3960
  %3962 = vrot.lane.b32.xlu0 %v1211, 21
  %v3963 = vpop.permute.xlu0 %3962
  %3964 = vrot.lane.b32.xlu0 %v1213, 21
  %v3965 = vpop.permute.xlu0 %3964
  %3966 = vrot.lane.b32.xlu0 %v1215, 21
  %v3967 = vpop.permute.xlu0 %3966
  %3968 = vrot.lane.b32.xlu0 %v1217, 21
  %v3969 = vpop.permute.xlu0 %3968
  %3970 = vrot.lane.b32.xlu0 %v1219, 21
  %v3971 = vpop.permute.xlu0 %3970
  %3972 = vrot.lane.b32.xlu0 %v1221, 21
  %v3973 = vpop.permute.xlu0 %3972
  %3974 = vrot.lane.b32.xlu0 %v1223, 21
  %v3975 = vpop.permute.xlu0 %3974
  %3976 = vrot.lane.b32.xlu0 %v1225, 21
  %v3977 = vpop.permute.xlu0 %3976
  %3978 = vrot.lane.b32.xlu0 %v1227, 21
  %v3979 = vpop.permute.xlu0 %3978
  %3980 = vrot.lane.b32.xlu0 %v1229, 21
  %v3981 = vpop.permute.xlu0 %3980
  %3982 = vrot.lane.b32.xlu0 %v1231, 21
  %v3983 = vpop.permute.xlu0 %3982
  %3984 = vrot.lane.b32.xlu0 %v1233, 21
  %v3985 = vpop.permute.xlu0 %3984
  %3986 = vrot.lane.b32.xlu0 %v1235, 21
  %v3987 = vpop.permute.xlu0 %3986
  %3988 = vrot.lane.b32.xlu0 %v1237, 21
  %v3989 = vpop.permute.xlu0 %3988
  %3990 = vrot.lane.b32.xlu0 %v1239, 21
  %v3991 = vpop.permute.xlu0 %3990
  %3992 = vrot.lane.b32.xlu0 %v1241, 21
  %v3993 = vpop.permute.xlu0 %3992
  %3994 = vrot.lane.b32.xlu0 %v1243, 21
  %v3995 = vpop.permute.xlu0 %3994
  %3996 = vrot.lane.b32.xlu0 %v1245, 21
  %v3997 = vpop.permute.xlu0 %3996
  %3998 = vrot.lane.b32.xlu0 %v1247, 21
  %v3999 = vpop.permute.xlu0 %3998
  %4000 = vrot.lane.b32.xlu0 %v1249, 21
  %v4001 = vpop.permute.xlu0 %4000
  %4002 = vrot.lane.b32.xlu0 %v1251, 21
  %v4003 = vpop.permute.xlu0 %4002
  %4004 = vrot.lane.b32.xlu0 %v1253, 21
  %v4005 = vpop.permute.xlu0 %4004
  %4006 = vrot.lane.b32.xlu0 %v1255, 21
  %v4007 = vpop.permute.xlu0 %4006
  %4008 = vrot.lane.b32.xlu0 %v1257, 21
  %v4009 = vpop.permute.xlu0 %4008
  %4010 = vrot.lane.b32.xlu0 %v1259, 21
  %v4011 = vpop.permute.xlu0 %4010
  %4012 = vrot.lane.b32.xlu0 %v1261, 21
  %v4013 = vpop.permute.xlu0 %4012
  %4014 = vrot.lane.b32.xlu0 %v1263, 21
  %v4015 = vpop.permute.xlu0 %4014
  %4016 = vrot.lane.b32.xlu0 %v1265, 21
  %v4017 = vpop.permute.xlu0 %4016
  %4018 = vrot.lane.b32.xlu0 %v1267, 21
  %v4019 = vpop.permute.xlu0 %4018
  %4020 = vrot.lane.b32.xlu0 %v1269, 21
  %v4021 = vpop.permute.xlu0 %4020
  %4022 = vrot.lane.b32.xlu0 %v1271, 21
  %v4023 = vpop.permute.xlu0 %4022
  %4024 = vrot.lane.b32.xlu0 %v1273, 21
  %v4025 = vpop.permute.xlu0 %4024
  %4026 = vrot.lane.b32.xlu0 %v1275, 21
  %v4027 = vpop.permute.xlu0 %4026
  %4028 = vrot.lane.b32.xlu0 %v1277, 21
  %v4029 = vpop.permute.xlu0 %4028
  %4030 = vrot.lane.b32.xlu0 %v1279, 21
  %v4031 = vpop.permute.xlu0 %4030
  %4032 = vrot.lane.b32.xlu0 %v1281, 21
  %v4033 = vpop.permute.xlu0 %4032
  %4162 = vrot.lane.b32.xlu0 %v1283, 24
  %v4163 = vpop.permute.xlu0 %4162
  %4164 = vrot.lane.b32.xlu0 %v1285, 24
  %v4165 = vpop.permute.xlu0 %4164
  %4166 = vrot.lane.b32.xlu0 %v1287, 24
  %v4167 = vpop.permute.xlu0 %4166
  %4168 = vrot.lane.b32.xlu0 %v1289, 24
  %v4169 = vpop.permute.xlu0 %4168
  %4170 = vrot.lane.b32.xlu0 %v1291, 24
  %v4171 = vpop.permute.xlu0 %4170
  %4172 = vrot.lane.b32.xlu0 %v1293, 24
  %v4173 = vpop.permute.xlu0 %4172
  %4174 = vrot.lane.b32.xlu0 %v1295, 24
  %v4175 = vpop.permute.xlu0 %4174
  %4176 = vrot.lane.b32.xlu0 %v1297, 24
  %v4177 = vpop.permute.xlu0 %4176
  %4178 = vrot.lane.b32.xlu0 %v1299, 24
  %v4179 = vpop.permute.xlu0 %4178
  %4180 = vrot.lane.b32.xlu0 %v1301, 24
  %v4181 = vpop.permute.xlu0 %4180
  %4182 = vrot.lane.b32.xlu0 %v1303, 24
  %v4183 = vpop.permute.xlu0 %4182
  %4184 = vrot.lane.b32.xlu0 %v1305, 24
  %v4185 = vpop.permute.xlu0 %4184
  %4186 = vrot.lane.b32.xlu0 %v1307, 24
  %v4187 = vpop.permute.xlu0 %4186
  %4188 = vrot.lane.b32.xlu0 %v1309, 24
  %v4189 = vpop.permute.xlu0 %4188
  %4190 = vrot.lane.b32.xlu0 %v1311, 24
  %v4191 = vpop.permute.xlu0 %4190
  %4192 = vrot.lane.b32.xlu0 %v1313, 24
  %v4193 = vpop.permute.xlu0 %4192
  %4194 = vrot.lane.b32.xlu0 %v1315, 24
  %v4195 = vpop.permute.xlu0 %4194
  %4196 = vrot.lane.b32.xlu0 %v1317, 24
  %v4197 = vpop.permute.xlu0 %4196
  %4198 = vrot.lane.b32.xlu0 %v1319, 24
  %v4199 = vpop.permute.xlu0 %4198
  %4200 = vrot.lane.b32.xlu0 %v1321, 24
  %v4201 = vpop.permute.xlu0 %4200
  %4202 = vrot.lane.b32.xlu0 %v1323, 24
  %v4203 = vpop.permute.xlu0 %4202
  %4204 = vrot.lane.b32.xlu0 %v1325, 24
  %v4205 = vpop.permute.xlu0 %4204
  %4206 = vrot.lane.b32.xlu0 %v1327, 24
  %v4207 = vpop.permute.xlu0 %4206
  %4208 = vrot.lane.b32.xlu0 %v1329, 24
  %v4209 = vpop.permute.xlu0 %4208
  %4210 = vrot.lane.b32.xlu0 %v1331, 24
  %v4211 = vpop.permute.xlu0 %4210
  %4212 = vrot.lane.b32.xlu0 %v1333, 24
  %v4213 = vpop.permute.xlu0 %4212
  %4214 = vrot.lane.b32.xlu0 %v1335, 24
  %v4215 = vpop.permute.xlu0 %4214
  %4216 = vrot.lane.b32.xlu0 %v1337, 24
  %v4217 = vpop.permute.xlu0 %4216
  %4218 = vrot.lane.b32.xlu0 %v1339, 24
  %v4219 = vpop.permute.xlu0 %4218
  %4220 = vrot.lane.b32.xlu0 %v1341, 24
  %v4221 = vpop.permute.xlu0 %4220
  %4222 = vrot.lane.b32.xlu0 %v1343, 24
  %v4223 = vpop.permute.xlu0 %4222
  %4224 = vrot.lane.b32.xlu0 %v1345, 24
  %v4225 = vpop.permute.xlu0 %4224
  %4226 = vrot.lane.b32.xlu0 %v1347, 24
  %v4227 = vpop.permute.xlu0 %4226
  %4228 = vrot.lane.b32.xlu0 %v1349, 24
  %v4229 = vpop.permute.xlu0 %4228
  %4230 = vrot.lane.b32.xlu0 %v1351, 24
  %v4231 = vpop.permute.xlu0 %4230
  %4232 = vrot.lane.b32.xlu0 %v1353, 24
  %v4233 = vpop.permute.xlu0 %4232
  %4234 = vrot.lane.b32.xlu0 %v1355, 24
  %v4235 = vpop.permute.xlu0 %4234
  %4236 = vrot.lane.b32.xlu0 %v1357, 24
  %v4237 = vpop.permute.xlu0 %4236
  %4238 = vrot.lane.b32.xlu0 %v1359, 24
  %v4239 = vpop.permute.xlu0 %4238
  %4240 = vrot.lane.b32.xlu0 %v1361, 24
  %v4241 = vpop.permute.xlu0 %4240
  %4242 = vrot.lane.b32.xlu0 %v1363, 24
  %v4243 = vpop.permute.xlu0 %4242
  %4244 = vrot.lane.b32.xlu0 %v1365, 24
  %v4245 = vpop.permute.xlu0 %4244
  %4246 = vrot.lane.b32.xlu0 %v1367, 24
  %v4247 = vpop.permute.xlu0 %4246
  %4248 = vrot.lane.b32.xlu0 %v1369, 24
  %v4249 = vpop.permute.xlu0 %4248
  %4250 = vrot.lane.b32.xlu0 %v1371, 24
  %v4251 = vpop.permute.xlu0 %4250
  %4252 = vrot.lane.b32.xlu0 %v1373, 24
  %v4253 = vpop.permute.xlu0 %4252
  %4254 = vrot.lane.b32.xlu0 %v1375, 24
  %v4255 = vpop.permute.xlu0 %4254
  %4256 = vrot.lane.b32.xlu0 %v1377, 24
  %v4257 = vpop.permute.xlu0 %4256
  %4258 = vrot.lane.b32.xlu0 %v1379, 24
  %v4259 = vpop.permute.xlu0 %4258
  %4260 = vrot.lane.b32.xlu0 %v1381, 24
  %v4261 = vpop.permute.xlu0 %4260
  %4262 = vrot.lane.b32.xlu0 %v1383, 24
  %v4263 = vpop.permute.xlu0 %4262
  %4264 = vrot.lane.b32.xlu0 %v1385, 24
  %v4265 = vpop.permute.xlu0 %4264
  %4266 = vrot.lane.b32.xlu0 %v1387, 24
  %v4267 = vpop.permute.xlu0 %4266
  %4268 = vrot.lane.b32.xlu0 %v1389, 24
  %v4269 = vpop.permute.xlu0 %4268
  %4270 = vrot.lane.b32.xlu0 %v1391, 24
  %v4271 = vpop.permute.xlu0 %4270
  %4272 = vrot.lane.b32.xlu0 %v1393, 24
  %v4273 = vpop.permute.xlu0 %4272
  %4274 = vrot.lane.b32.xlu0 %v1395, 24
  %v4275 = vpop.permute.xlu0 %4274
  %4276 = vrot.lane.b32.xlu0 %v1397, 24
  %v4277 = vpop.permute.xlu0 %4276
  %4278 = vrot.lane.b32.xlu0 %v1399, 24
  %v4279 = vpop.permute.xlu0 %4278
  %4280 = vrot.lane.b32.xlu0 %v1401, 24
  %v4281 = vpop.permute.xlu0 %4280
  %4282 = vrot.lane.b32.xlu0 %v1403, 24
  %v4283 = vpop.permute.xlu0 %4282
  %4284 = vrot.lane.b32.xlu0 %v1405, 24
  %v4285 = vpop.permute.xlu0 %4284
  %4286 = vrot.lane.b32.xlu0 %v1407, 24
  %v4287 = vpop.permute.xlu0 %4286
  %4288 = vrot.lane.b32.xlu0 %v1409, 24
  %v4289 = vpop.permute.xlu0 %4288
  %4418 = vrot.lane.b32.xlu0 %v1411, 27
  %v4419 = vpop.permute.xlu0 %4418
  %4420 = vrot.lane.b32.xlu0 %v1413, 27
  %v4421 = vpop.permute.xlu0 %4420
  %4422 = vrot.lane.b32.xlu0 %v1415, 27
  %v4423 = vpop.permute.xlu0 %4422
  %4424 = vrot.lane.b32.xlu0 %v1417, 27
  %v4425 = vpop.permute.xlu0 %4424
  %4426 = vrot.lane.b32.xlu0 %v1419, 27
  %v4427 = vpop.permute.xlu0 %4426
  %4428 = vrot.lane.b32.xlu0 %v1421, 27
  %v4429 = vpop.permute.xlu0 %4428
  %4430 = vrot.lane.b32.xlu0 %v1423, 27
  %v4431 = vpop.permute.xlu0 %4430
  %4432 = vrot.lane.b32.xlu0 %v1425, 27
  %v4433 = vpop.permute.xlu0 %4432
  %4434 = vrot.lane.b32.xlu0 %v1427, 27
  %v4435 = vpop.permute.xlu0 %4434
  %4436 = vrot.lane.b32.xlu0 %v1429, 27
  %v4437 = vpop.permute.xlu0 %4436
  %4438 = vrot.lane.b32.xlu0 %v1431, 27
  %v4439 = vpop.permute.xlu0 %4438
  %4440 = vrot.lane.b32.xlu0 %v1433, 27
  %v4441 = vpop.permute.xlu0 %4440
  %4442 = vrot.lane.b32.xlu0 %v1435, 27
  %v4443 = vpop.permute.xlu0 %4442
  %4444 = vrot.lane.b32.xlu0 %v1437, 27
  %v4445 = vpop.permute.xlu0 %4444
  %4446 = vrot.lane.b32.xlu0 %v1439, 27
  %v4447 = vpop.permute.xlu0 %4446
  %4448 = vrot.lane.b32.xlu0 %v1441, 27
  %v4449 = vpop.permute.xlu0 %4448
  %4450 = vrot.lane.b32.xlu0 %v1443, 27
  %v4451 = vpop.permute.xlu0 %4450
  %4452 = vrot.lane.b32.xlu0 %v1445, 27
  %v4453 = vpop.permute.xlu0 %4452
  %4454 = vrot.lane.b32.xlu0 %v1447, 27
  %v4455 = vpop.permute.xlu0 %4454
  %4456 = vrot.lane.b32.xlu0 %v1449, 27
  %v4457 = vpop.permute.xlu0 %4456
  %4458 = vrot.lane.b32.xlu0 %v1451, 27
  %v4459 = vpop.permute.xlu0 %4458
  %4460 = vrot.lane.b32.xlu0 %v1453, 27
  %v4461 = vpop.permute.xlu0 %4460
  %4462 = vrot.lane.b32.xlu0 %v1455, 27
  %v4463 = vpop.permute.xlu0 %4462
  %4464 = vrot.lane.b32.xlu0 %v1457, 27
  %v4465 = vpop.permute.xlu0 %4464
  %4466 = vrot.lane.b32.xlu0 %v1459, 27
  %v4467 = vpop.permute.xlu0 %4466
  %4468 = vrot.lane.b32.xlu0 %v1461, 27
  %v4469 = vpop.permute.xlu0 %4468
  %4470 = vrot.lane.b32.xlu0 %v1463, 27
  %v4471 = vpop.permute.xlu0 %4470
  %4472 = vrot.lane.b32.xlu0 %v1465, 27
  %v4473 = vpop.permute.xlu0 %4472
  %4474 = vrot.lane.b32.xlu0 %v1467, 27
  %v4475 = vpop.permute.xlu0 %4474
  %4476 = vrot.lane.b32.xlu0 %v1469, 27
  %v4477 = vpop.permute.xlu0 %4476
  %4478 = vrot.lane.b32.xlu0 %v1471, 27
  %v4479 = vpop.permute.xlu0 %4478
  %4480 = vrot.lane.b32.xlu0 %v1473, 27
  %v4481 = vpop.permute.xlu0 %4480
  %4482 = vrot.lane.b32.xlu0 %v1475, 27
  %v4483 = vpop.permute.xlu0 %4482
  %4484 = vrot.lane.b32.xlu0 %v1477, 27
  %v4485 = vpop.permute.xlu0 %4484
  %4486 = vrot.lane.b32.xlu0 %v1479, 27
  %v4487 = vpop.permute.xlu0 %4486
  %4488 = vrot.lane.b32.xlu0 %v1481, 27
  %v4489 = vpop.permute.xlu0 %4488
  %4490 = vrot.lane.b32.xlu0 %v1483, 27
  %v4491 = vpop.permute.xlu0 %4490
  %4492 = vrot.lane.b32.xlu0 %v1485, 27
  %v4493 = vpop.permute.xlu0 %4492
  %4494 = vrot.lane.b32.xlu0 %v1487, 27
  %v4495 = vpop.permute.xlu0 %4494
  %4496 = vrot.lane.b32.xlu0 %v1489, 27
  %v4497 = vpop.permute.xlu0 %4496
  %4498 = vrot.lane.b32.xlu0 %v1491, 27
  %v4499 = vpop.permute.xlu0 %4498
  %4500 = vrot.lane.b32.xlu0 %v1493, 27
  %v4501 = vpop.permute.xlu0 %4500
  %4502 = vrot.lane.b32.xlu0 %v1495, 27
  %v4503 = vpop.permute.xlu0 %4502
  %4504 = vrot.lane.b32.xlu0 %v1497, 27
  %v4505 = vpop.permute.xlu0 %4504
  %4506 = vrot.lane.b32.xlu0 %v1499, 27
  %v4507 = vpop.permute.xlu0 %4506
  %4508 = vrot.lane.b32.xlu0 %v1501, 27
  %v4509 = vpop.permute.xlu0 %4508
  %4510 = vrot.lane.b32.xlu0 %v1503, 27
  %v4511 = vpop.permute.xlu0 %4510
  %4512 = vrot.lane.b32.xlu0 %v1505, 27
  %v4513 = vpop.permute.xlu0 %4512
  %4514 = vrot.lane.b32.xlu0 %v1507, 27
  %v4515 = vpop.permute.xlu0 %4514
  %4516 = vrot.lane.b32.xlu0 %v1509, 27
  %v4517 = vpop.permute.xlu0 %4516
  %4518 = vrot.lane.b32.xlu0 %v1511, 27
  %v4519 = vpop.permute.xlu0 %4518
  %4520 = vrot.lane.b32.xlu0 %v1513, 27
  %v4521 = vpop.permute.xlu0 %4520
  %4522 = vrot.lane.b32.xlu0 %v1515, 27
  %v4523 = vpop.permute.xlu0 %4522
  %4524 = vrot.lane.b32.xlu0 %v1517, 27
  %v4525 = vpop.permute.xlu0 %4524
  %4526 = vrot.lane.b32.xlu0 %v1519, 27
  %v4527 = vpop.permute.xlu0 %4526
  %4528 = vrot.lane.b32.xlu0 %v1521, 27
  %v4529 = vpop.permute.xlu0 %4528
  %4530 = vrot.lane.b32.xlu0 %v1523, 27
  %v4531 = vpop.permute.xlu0 %4530
  %4532 = vrot.lane.b32.xlu0 %v1525, 27
  %v4533 = vpop.permute.xlu0 %4532
  %4534 = vrot.lane.b32.xlu0 %v1527, 27
  %v4535 = vpop.permute.xlu0 %4534
  %4536 = vrot.lane.b32.xlu0 %v1529, 27
  %v4537 = vpop.permute.xlu0 %4536
  %4538 = vrot.lane.b32.xlu0 %v1531, 27
  %v4539 = vpop.permute.xlu0 %4538
  %4540 = vrot.lane.b32.xlu0 %v1533, 27
  %v4541 = vpop.permute.xlu0 %4540
  %4542 = vrot.lane.b32.xlu0 %v1535, 27
  %v4543 = vpop.permute.xlu0 %4542
  %4544 = vrot.lane.b32.xlu0 %v1537, 27
  %v4545 = vpop.permute.xlu0 %4544
  %4674 = vrot.lane.b32.xlu0 %v1539, 30
  %v4675 = vpop.permute.xlu0 %4674
  %4676 = vrot.lane.b32.xlu0 %v1541, 30
  %v4677 = vpop.permute.xlu0 %4676
  %4678 = vrot.lane.b32.xlu0 %v1543, 30
  %v4679 = vpop.permute.xlu0 %4678
  %4680 = vrot.lane.b32.xlu0 %v1545, 30
  %v4681 = vpop.permute.xlu0 %4680
  %4682 = vrot.lane.b32.xlu0 %v1547, 30
  %v4683 = vpop.permute.xlu0 %4682
  %4684 = vrot.lane.b32.xlu0 %v1549, 30
  %v4685 = vpop.permute.xlu0 %4684
  %4686 = vrot.lane.b32.xlu0 %v1551, 30
  %v4687 = vpop.permute.xlu0 %4686
  %4688 = vrot.lane.b32.xlu0 %v1553, 30
  %v4689 = vpop.permute.xlu0 %4688
  %4690 = vrot.lane.b32.xlu0 %v1555, 30
  %v4691 = vpop.permute.xlu0 %4690
  %4692 = vrot.lane.b32.xlu0 %v1557, 30
  %v4693 = vpop.permute.xlu0 %4692
  %4694 = vrot.lane.b32.xlu0 %v1559, 30
  %v4695 = vpop.permute.xlu0 %4694
  %4696 = vrot.lane.b32.xlu0 %v1561, 30
  %v4697 = vpop.permute.xlu0 %4696
  %4698 = vrot.lane.b32.xlu0 %v1563, 30
  %v4699 = vpop.permute.xlu0 %4698
  %4700 = vrot.lane.b32.xlu0 %v1565, 30
  %v4701 = vpop.permute.xlu0 %4700
  %4702 = vrot.lane.b32.xlu0 %v1567, 30
  %v4703 = vpop.permute.xlu0 %4702
  %4704 = vrot.lane.b32.xlu0 %v1569, 30
  %v4705 = vpop.permute.xlu0 %4704
  %4706 = vrot.lane.b32.xlu0 %v1571, 30
  %v4707 = vpop.permute.xlu0 %4706
  %4708 = vrot.lane.b32.xlu0 %v1573, 30
  %v4709 = vpop.permute.xlu0 %4708
  %4710 = vrot.lane.b32.xlu0 %v1575, 30
  %v4711 = vpop.permute.xlu0 %4710
  %4712 = vrot.lane.b32.xlu0 %v1577, 30
  %v4713 = vpop.permute.xlu0 %4712
  %4714 = vrot.lane.b32.xlu0 %v1579, 30
  %v4715 = vpop.permute.xlu0 %4714
  %4716 = vrot.lane.b32.xlu0 %v1581, 30
  %v4717 = vpop.permute.xlu0 %4716
  %4718 = vrot.lane.b32.xlu0 %v1583, 30
  %v4719 = vpop.permute.xlu0 %4718
  %4720 = vrot.lane.b32.xlu0 %v1585, 30
  %v4721 = vpop.permute.xlu0 %4720
  %4722 = vrot.lane.b32.xlu0 %v1587, 30
  %v4723 = vpop.permute.xlu0 %4722
  %4724 = vrot.lane.b32.xlu0 %v1589, 30
  %v4725 = vpop.permute.xlu0 %4724
  %4726 = vrot.lane.b32.xlu0 %v1591, 30
  %v4727 = vpop.permute.xlu0 %4726
  %4728 = vrot.lane.b32.xlu0 %v1593, 30
  %v4729 = vpop.permute.xlu0 %4728
  %4730 = vrot.lane.b32.xlu0 %v1595, 30
  %v4731 = vpop.permute.xlu0 %4730
  %4732 = vrot.lane.b32.xlu0 %v1597, 30
  %v4733 = vpop.permute.xlu0 %4732
  %4734 = vrot.lane.b32.xlu0 %v1599, 30
  %v4735 = vpop.permute.xlu0 %4734
  %4736 = vrot.lane.b32.xlu0 %v1601, 30
  %v4737 = vpop.permute.xlu0 %4736
  %4738 = vrot.lane.b32.xlu0 %v1603, 30
  %v4739 = vpop.permute.xlu0 %4738
  %4740 = vrot.lane.b32.xlu0 %v1605, 30
  %v4741 = vpop.permute.xlu0 %4740
  %4742 = vrot.lane.b32.xlu0 %v1607, 30
  %v4743 = vpop.permute.xlu0 %4742
  %4744 = vrot.lane.b32.xlu0 %v1609, 30
  %v4745 = vpop.permute.xlu0 %4744
  %4746 = vrot.lane.b32.xlu0 %v1611, 30
  %v4747 = vpop.permute.xlu0 %4746
  %4748 = vrot.lane.b32.xlu0 %v1613, 30
  %v4749 = vpop.permute.xlu0 %4748
  %4750 = vrot.lane.b32.xlu0 %v1615, 30
  %v4751 = vpop.permute.xlu0 %4750
  %4752 = vrot.lane.b32.xlu0 %v1617, 30
  %v4753 = vpop.permute.xlu0 %4752
  %4754 = vrot.lane.b32.xlu0 %v1619, 30
  %v4755 = vpop.permute.xlu0 %4754
  %4756 = vrot.lane.b32.xlu0 %v1621, 30
  %v4757 = vpop.permute.xlu0 %4756
  %4758 = vrot.lane.b32.xlu0 %v1623, 30
  %v4759 = vpop.permute.xlu0 %4758
  %4760 = vrot.lane.b32.xlu0 %v1625, 30
  %v4761 = vpop.permute.xlu0 %4760
  %4762 = vrot.lane.b32.xlu0 %v1627, 30
  %v4763 = vpop.permute.xlu0 %4762
  %4764 = vrot.lane.b32.xlu0 %v1629, 30
  %v4765 = vpop.permute.xlu0 %4764
  %4766 = vrot.lane.b32.xlu0 %v1631, 30
  %v4767 = vpop.permute.xlu0 %4766
  %4768 = vrot.lane.b32.xlu0 %v1633, 30
  %v4769 = vpop.permute.xlu0 %4768
  %4770 = vrot.lane.b32.xlu0 %v1635, 30
  %v4771 = vpop.permute.xlu0 %4770
  %4772 = vrot.lane.b32.xlu0 %v1637, 30
  %v4773 = vpop.permute.xlu0 %4772
  %4774 = vrot.lane.b32.xlu0 %v1639, 30
  %v4775 = vpop.permute.xlu0 %4774
  %4776 = vrot.lane.b32.xlu0 %v1641, 30
  %v4777 = vpop.permute.xlu0 %4776
  %4778 = vrot.lane.b32.xlu0 %v1643, 30
  %v4779 = vpop.permute.xlu0 %4778
  %4780 = vrot.lane.b32.xlu0 %v1645, 30
  %v4781 = vpop.permute.xlu0 %4780
  %4782 = vrot.lane.b32.xlu0 %v1647, 30
  %v4783 = vpop.permute.xlu0 %4782
  %4784 = vrot.lane.b32.xlu0 %v1649, 30
  %v4785 = vpop.permute.xlu0 %4784
  %4786 = vrot.lane.b32.xlu0 %v1651, 30
  %v4787 = vpop.permute.xlu0 %4786
  %4788 = vrot.lane.b32.xlu0 %v1653, 30
  %v4789 = vpop.permute.xlu0 %4788
  %4790 = vrot.lane.b32.xlu0 %v1655, 30
  %v4791 = vpop.permute.xlu0 %4790
  %4792 = vrot.lane.b32.xlu0 %v1657, 30
  %v4793 = vpop.permute.xlu0 %4792
  %4794 = vrot.lane.b32.xlu0 %v1659, 30
  %v4795 = vpop.permute.xlu0 %4794
  %4796 = vrot.lane.b32.xlu0 %v1661, 30
  %v4797 = vpop.permute.xlu0 %4796
  %4798 = vrot.lane.b32.xlu0 %v1663, 30
  %v4799 = vpop.permute.xlu0 %4798
  %4800 = vrot.lane.b32.xlu0 %v1665, 30
  %v4801 = vpop.permute.xlu0 %4800
  %4930 = vrot.lane.b32.xlu0 %v1667, 33
  %v4931 = vpop.permute.xlu0 %4930
  %4932 = vrot.lane.b32.xlu0 %v1669, 33
  %v4933 = vpop.permute.xlu0 %4932
  %4934 = vrot.lane.b32.xlu0 %v1671, 33
  %v4935 = vpop.permute.xlu0 %4934
  %4936 = vrot.lane.b32.xlu0 %v1673, 33
  %v4937 = vpop.permute.xlu0 %4936
  %4938 = vrot.lane.b32.xlu0 %v1675, 33
  %v4939 = vpop.permute.xlu0 %4938
  %4940 = vrot.lane.b32.xlu0 %v1677, 33
  %v4941 = vpop.permute.xlu0 %4940
  %4942 = vrot.lane.b32.xlu0 %v1679, 33
  %v4943 = vpop.permute.xlu0 %4942
  %4944 = vrot.lane.b32.xlu0 %v1681, 33
  %v4945 = vpop.permute.xlu0 %4944
  %4946 = vrot.lane.b32.xlu0 %v1683, 33
  %v4947 = vpop.permute.xlu0 %4946
  %4948 = vrot.lane.b32.xlu0 %v1685, 33
  %v4949 = vpop.permute.xlu0 %4948
  %4950 = vrot.lane.b32.xlu0 %v1687, 33
  %v4951 = vpop.permute.xlu0 %4950
  %4952 = vrot.lane.b32.xlu0 %v1689, 33
  %v4953 = vpop.permute.xlu0 %4952
  %4954 = vrot.lane.b32.xlu0 %v1691, 33
  %v4955 = vpop.permute.xlu0 %4954
  %4956 = vrot.lane.b32.xlu0 %v1693, 33
  %v4957 = vpop.permute.xlu0 %4956
  %4958 = vrot.lane.b32.xlu0 %v1695, 33
  %v4959 = vpop.permute.xlu0 %4958
  %4960 = vrot.lane.b32.xlu0 %v1697, 33
  %v4961 = vpop.permute.xlu0 %4960
  %4962 = vrot.lane.b32.xlu0 %v1699, 33
  %v4963 = vpop.permute.xlu0 %4962
  %4964 = vrot.lane.b32.xlu0 %v1701, 33
  %v4965 = vpop.permute.xlu0 %4964
  %4966 = vrot.lane.b32.xlu0 %v1703, 33
  %v4967 = vpop.permute.xlu0 %4966
  %4968 = vrot.lane.b32.xlu0 %v1705, 33
  %v4969 = vpop.permute.xlu0 %4968
  %4970 = vrot.lane.b32.xlu0 %v1707, 33
  %v4971 = vpop.permute.xlu0 %4970
  %4972 = vrot.lane.b32.xlu0 %v1709, 33
  %v4973 = vpop.permute.xlu0 %4972
  %4974 = vrot.lane.b32.xlu0 %v1711, 33
  %v4975 = vpop.permute.xlu0 %4974
  %4976 = vrot.lane.b32.xlu0 %v1713, 33
  %v4977 = vpop.permute.xlu0 %4976
  %4978 = vrot.lane.b32.xlu0 %v1715, 33
  %v4979 = vpop.permute.xlu0 %4978
  %4980 = vrot.lane.b32.xlu0 %v1717, 33
  %v4981 = vpop.permute.xlu0 %4980
  %4982 = vrot.lane.b32.xlu0 %v1719, 33
  %v4983 = vpop.permute.xlu0 %4982
  %4984 = vrot.lane.b32.xlu0 %v1721, 33
  %v4985 = vpop.permute.xlu0 %4984
  %4986 = vrot.lane.b32.xlu0 %v1723, 33
  %v4987 = vpop.permute.xlu0 %4986
  %4988 = vrot.lane.b32.xlu0 %v1725, 33
  %v4989 = vpop.permute.xlu0 %4988
  %4990 = vrot.lane.b32.xlu0 %v1727, 33
  %v4991 = vpop.permute.xlu0 %4990
  %4992 = vrot.lane.b32.xlu0 %v1729, 33
  %v4993 = vpop.permute.xlu0 %4992
  %4994 = vrot.lane.b32.xlu0 %v1731, 33
  %v4995 = vpop.permute.xlu0 %4994
  %4996 = vrot.lane.b32.xlu0 %v1733, 33
  %v4997 = vpop.permute.xlu0 %4996
  %4998 = vrot.lane.b32.xlu0 %v1735, 33
  %v4999 = vpop.permute.xlu0 %4998
  %5000 = vrot.lane.b32.xlu0 %v1737, 33
  %v5001 = vpop.permute.xlu0 %5000
  %5002 = vrot.lane.b32.xlu0 %v1739, 33
  %v5003 = vpop.permute.xlu0 %5002
  %5004 = vrot.lane.b32.xlu0 %v1741, 33
  %v5005 = vpop.permute.xlu0 %5004
  %5006 = vrot.lane.b32.xlu0 %v1743, 33
  %v5007 = vpop.permute.xlu0 %5006
  %5008 = vrot.lane.b32.xlu0 %v1745, 33
  %v5009 = vpop.permute.xlu0 %5008
  %5010 = vrot.lane.b32.xlu0 %v1747, 33
  %v5011 = vpop.permute.xlu0 %5010
  %5012 = vrot.lane.b32.xlu0 %v1749, 33
  %v5013 = vpop.permute.xlu0 %5012
  %5014 = vrot.lane.b32.xlu0 %v1751, 33
  %v5015 = vpop.permute.xlu0 %5014
  %5016 = vrot.lane.b32.xlu0 %v1753, 33
  %v5017 = vpop.permute.xlu0 %5016
  %5018 = vrot.lane.b32.xlu0 %v1755, 33
  %v5019 = vpop.permute.xlu0 %5018
  %5020 = vrot.lane.b32.xlu0 %v1757, 33
  %v5021 = vpop.permute.xlu0 %5020
  %5022 = vrot.lane.b32.xlu0 %v1759, 33
  %v5023 = vpop.permute.xlu0 %5022
  %5024 = vrot.lane.b32.xlu0 %v1761, 33
  %v5025 = vpop.permute.xlu0 %5024
  %5026 = vrot.lane.b32.xlu0 %v1763, 33
  %v5027 = vpop.permute.xlu0 %5026
  %5028 = vrot.lane.b32.xlu0 %v1765, 33
  %v5029 = vpop.permute.xlu0 %5028
  %5030 = vrot.lane.b32.xlu0 %v1767, 33
  %v5031 = vpop.permute.xlu0 %5030
  %5032 = vrot.lane.b32.xlu0 %v1769, 33
  %v5033 = vpop.permute.xlu0 %5032
  %5034 = vrot.lane.b32.xlu0 %v1771, 33
  %v5035 = vpop.permute.xlu0 %5034
  %5036 = vrot.lane.b32.xlu0 %v1773, 33
  %v5037 = vpop.permute.xlu0 %5036
  %5038 = vrot.lane.b32.xlu0 %v1775, 33
  %v5039 = vpop.permute.xlu0 %5038
  %5040 = vrot.lane.b32.xlu0 %v1777, 33
  %v5041 = vpop.permute.xlu0 %5040
  %5042 = vrot.lane.b32.xlu0 %v1779, 33
  %v5043 = vpop.permute.xlu0 %5042
  %5044 = vrot.lane.b32.xlu0 %v1781, 33
  %v5045 = vpop.permute.xlu0 %5044
  %5046 = vrot.lane.b32.xlu0 %v1783, 33
  %v5047 = vpop.permute.xlu0 %5046
  %5048 = vrot.lane.b32.xlu0 %v1785, 33
  %v5049 = vpop.permute.xlu0 %5048
  %5050 = vrot.lane.b32.xlu0 %v1787, 33
  %v5051 = vpop.permute.xlu0 %5050
  %5052 = vrot.lane.b32.xlu0 %v1789, 33
  %v5053 = vpop.permute.xlu0 %5052
  %5054 = vrot.lane.b32.xlu0 %v1791, 33
  %v5055 = vpop.permute.xlu0 %5054
  %5056 = vrot.lane.b32.xlu0 %v1793, 33
  %v5057 = vpop.permute.xlu0 %5056
  %5186 = vrot.lane.b32.xlu0 %v1795, 36
  %v5187 = vpop.permute.xlu0 %5186
  %5188 = vrot.lane.b32.xlu0 %v1797, 36
  %v5189 = vpop.permute.xlu0 %5188
  %5190 = vrot.lane.b32.xlu0 %v1799, 36
  %v5191 = vpop.permute.xlu0 %5190
  %5192 = vrot.lane.b32.xlu0 %v1801, 36
  %v5193 = vpop.permute.xlu0 %5192
  %5194 = vrot.lane.b32.xlu0 %v1803, 36
  %v5195 = vpop.permute.xlu0 %5194
  %5196 = vrot.lane.b32.xlu0 %v1805, 36
  %v5197 = vpop.permute.xlu0 %5196
  %5198 = vrot.lane.b32.xlu0 %v1807, 36
  %v5199 = vpop.permute.xlu0 %5198
  %5200 = vrot.lane.b32.xlu0 %v1809, 36
  %v5201 = vpop.permute.xlu0 %5200
  %5202 = vrot.lane.b32.xlu0 %v1811, 36
  %v5203 = vpop.permute.xlu0 %5202
  %5204 = vrot.lane.b32.xlu0 %v1813, 36
  %v5205 = vpop.permute.xlu0 %5204
  %5206 = vrot.lane.b32.xlu0 %v1815, 36
  %v5207 = vpop.permute.xlu0 %5206
  %5208 = vrot.lane.b32.xlu0 %v1817, 36
  %v5209 = vpop.permute.xlu0 %5208
  %5210 = vrot.lane.b32.xlu0 %v1819, 36
  %v5211 = vpop.permute.xlu0 %5210
  %5212 = vrot.lane.b32.xlu0 %v1821, 36
  %v5213 = vpop.permute.xlu0 %5212
  %5214 = vrot.lane.b32.xlu0 %v1823, 36
  %v5215 = vpop.permute.xlu0 %5214
  %5216 = vrot.lane.b32.xlu0 %v1825, 36
  %v5217 = vpop.permute.xlu0 %5216
  %5218 = vrot.lane.b32.xlu0 %v1827, 36
  %v5219 = vpop.permute.xlu0 %5218
  %5220 = vrot.lane.b32.xlu0 %v1829, 36
  %v5221 = vpop.permute.xlu0 %5220
  %5222 = vrot.lane.b32.xlu0 %v1831, 36
  %v5223 = vpop.permute.xlu0 %5222
  %5224 = vrot.lane.b32.xlu0 %v1833, 36
  %v5225 = vpop.permute.xlu0 %5224
  %5226 = vrot.lane.b32.xlu0 %v1835, 36
  %v5227 = vpop.permute.xlu0 %5226
  %5228 = vrot.lane.b32.xlu0 %v1837, 36
  %v5229 = vpop.permute.xlu0 %5228
  %5230 = vrot.lane.b32.xlu0 %v1839, 36
  %v5231 = vpop.permute.xlu0 %5230
  %5232 = vrot.lane.b32.xlu0 %v1841, 36
  %v5233 = vpop.permute.xlu0 %5232
  %5234 = vrot.lane.b32.xlu0 %v1843, 36
  %v5235 = vpop.permute.xlu0 %5234
  %5236 = vrot.lane.b32.xlu0 %v1845, 36
  %v5237 = vpop.permute.xlu0 %5236
  %5238 = vrot.lane.b32.xlu0 %v1847, 36
  %v5239 = vpop.permute.xlu0 %5238
  %5240 = vrot.lane.b32.xlu0 %v1849, 36
  %v5241 = vpop.permute.xlu0 %5240
  %5242 = vrot.lane.b32.xlu0 %v1851, 36
  %v5243 = vpop.permute.xlu0 %5242
  %5244 = vrot.lane.b32.xlu0 %v1853, 36
  %v5245 = vpop.permute.xlu0 %5244
  %5246 = vrot.lane.b32.xlu0 %v1855, 36
  %v5247 = vpop.permute.xlu0 %5246
  %5248 = vrot.lane.b32.xlu0 %v1857, 36
  %v5249 = vpop.permute.xlu0 %5248
  %5250 = vrot.lane.b32.xlu0 %v1859, 36
  %v5251 = vpop.permute.xlu0 %5250
  %5252 = vrot.lane.b32.xlu0 %v1861, 36
  %v5253 = vpop.permute.xlu0 %5252
  %5254 = vrot.lane.b32.xlu0 %v1863, 36
  %v5255 = vpop.permute.xlu0 %5254
  %5256 = vrot.lane.b32.xlu0 %v1865, 36
  %v5257 = vpop.permute.xlu0 %5256
  %5258 = vrot.lane.b32.xlu0 %v1867, 36
  %v5259 = vpop.permute.xlu0 %5258
  %5260 = vrot.lane.b32.xlu0 %v1869, 36
  %v5261 = vpop.permute.xlu0 %5260
  %5262 = vrot.lane.b32.xlu0 %v1871, 36
  %v5263 = vpop.permute.xlu0 %5262
  %5264 = vrot.lane.b32.xlu0 %v1873, 36
  %v5265 = vpop.permute.xlu0 %5264
  %5266 = vrot.lane.b32.xlu0 %v1875, 36
  %v5267 = vpop.permute.xlu0 %5266
  %5268 = vrot.lane.b32.xlu0 %v1877, 36
  %v5269 = vpop.permute.xlu0 %5268
  %5270 = vrot.lane.b32.xlu0 %v1879, 36
  %v5271 = vpop.permute.xlu0 %5270
  %5272 = vrot.lane.b32.xlu0 %v1881, 36
  %v5273 = vpop.permute.xlu0 %5272
  %5274 = vrot.lane.b32.xlu0 %v1883, 36
  %v5275 = vpop.permute.xlu0 %5274
  %5276 = vrot.lane.b32.xlu0 %v1885, 36
  %v5277 = vpop.permute.xlu0 %5276
  %5278 = vrot.lane.b32.xlu0 %v1887, 36
  %v5279 = vpop.permute.xlu0 %5278
  %5280 = vrot.lane.b32.xlu0 %v1889, 36
  %v5281 = vpop.permute.xlu0 %5280
  %5282 = vrot.lane.b32.xlu0 %v1891, 36
  %v5283 = vpop.permute.xlu0 %5282
  %5284 = vrot.lane.b32.xlu0 %v1893, 36
  %v5285 = vpop.permute.xlu0 %5284
  %5286 = vrot.lane.b32.xlu0 %v1895, 36
  %v5287 = vpop.permute.xlu0 %5286
  %5288 = vrot.lane.b32.xlu0 %v1897, 36
  %v5289 = vpop.permute.xlu0 %5288
  %5290 = vrot.lane.b32.xlu0 %v1899, 36
  %v5291 = vpop.permute.xlu0 %5290
  %5292 = vrot.lane.b32.xlu0 %v1901, 36
  %v5293 = vpop.permute.xlu0 %5292
  %5294 = vrot.lane.b32.xlu0 %v1903, 36
  %v5295 = vpop.permute.xlu0 %5294
  %5296 = vrot.lane.b32.xlu0 %v1905, 36
  %v5297 = vpop.permute.xlu0 %5296
  %5298 = vrot.lane.b32.xlu0 %v1907, 36
  %v5299 = vpop.permute.xlu0 %5298
  %5300 = vrot.lane.b32.xlu0 %v1909, 36
  %v5301 = vpop.permute.xlu0 %5300
  %5302 = vrot.lane.b32.xlu0 %v1911, 36
  %v5303 = vpop.permute.xlu0 %5302
  %5304 = vrot.lane.b32.xlu0 %v1913, 36
  %v5305 = vpop.permute.xlu0 %5304
  %5306 = vrot.lane.b32.xlu0 %v1915, 36
  %v5307 = vpop.permute.xlu0 %5306
  %5308 = vrot.lane.b32.xlu0 %v1917, 36
  %v5309 = vpop.permute.xlu0 %5308
  %5310 = vrot.lane.b32.xlu0 %v1919, 36
  %v5311 = vpop.permute.xlu0 %5310
  %5312 = vrot.lane.b32.xlu0 %v1921, 36
  %v5313 = vpop.permute.xlu0 %5312
  %5442 = vrot.lane.b32.xlu0 %v1923, 39
  %v5443 = vpop.permute.xlu0 %5442
  %5444 = vrot.lane.b32.xlu0 %v1925, 39
  %v5445 = vpop.permute.xlu0 %5444
  %5446 = vrot.lane.b32.xlu0 %v1927, 39
  %v5447 = vpop.permute.xlu0 %5446
  %5448 = vrot.lane.b32.xlu0 %v1929, 39
  %v5449 = vpop.permute.xlu0 %5448
  %5450 = vrot.lane.b32.xlu0 %v1931, 39
  %v5451 = vpop.permute.xlu0 %5450
  %5452 = vrot.lane.b32.xlu0 %v1933, 39
  %v5453 = vpop.permute.xlu0 %5452
  %5454 = vrot.lane.b32.xlu0 %v1935, 39
  %v5455 = vpop.permute.xlu0 %5454
  %5456 = vrot.lane.b32.xlu0 %v1937, 39
  %v5457 = vpop.permute.xlu0 %5456
  %5458 = vrot.lane.b32.xlu0 %v1939, 39
  %v5459 = vpop.permute.xlu0 %5458
  %5460 = vrot.lane.b32.xlu0 %v1941, 39
  %v5461 = vpop.permute.xlu0 %5460
  %5462 = vrot.lane.b32.xlu0 %v1943, 39
  %v5463 = vpop.permute.xlu0 %5462
  %5464 = vrot.lane.b32.xlu0 %v1945, 39
  %v5465 = vpop.permute.xlu0 %5464
  %5466 = vrot.lane.b32.xlu0 %v1947, 39
  %v5467 = vpop.permute.xlu0 %5466
  %5468 = vrot.lane.b32.xlu0 %v1949, 39
  %v5469 = vpop.permute.xlu0 %5468
  %5470 = vrot.lane.b32.xlu0 %v1951, 39
  %v5471 = vpop.permute.xlu0 %5470
  %5472 = vrot.lane.b32.xlu0 %v1953, 39
  %v5473 = vpop.permute.xlu0 %5472
  %5474 = vrot.lane.b32.xlu0 %v1955, 39
  %v5475 = vpop.permute.xlu0 %5474
  %5476 = vrot.lane.b32.xlu0 %v1957, 39
  %v5477 = vpop.permute.xlu0 %5476
  %5478 = vrot.lane.b32.xlu0 %v1959, 39
  %v5479 = vpop.permute.xlu0 %5478
  %5480 = vrot.lane.b32.xlu0 %v1961, 39
  %v5481 = vpop.permute.xlu0 %5480
  %5482 = vrot.lane.b32.xlu0 %v1963, 39
  %v5483 = vpop.permute.xlu0 %5482
  %5484 = vrot.lane.b32.xlu0 %v1965, 39
  %v5485 = vpop.permute.xlu0 %5484
  %5486 = vrot.lane.b32.xlu0 %v1967, 39
  %v5487 = vpop.permute.xlu0 %5486
  %5488 = vrot.lane.b32.xlu0 %v1969, 39
  %v5489 = vpop.permute.xlu0 %5488
  %5490 = vrot.lane.b32.xlu0 %v1971, 39
  %v5491 = vpop.permute.xlu0 %5490
  %5492 = vrot.lane.b32.xlu0 %v1973, 39
  %v5493 = vpop.permute.xlu0 %5492
  %5494 = vrot.lane.b32.xlu0 %v1975, 39
  %v5495 = vpop.permute.xlu0 %5494
  %5496 = vrot.lane.b32.xlu0 %v1977, 39
  %v5497 = vpop.permute.xlu0 %5496
  %5498 = vrot.lane.b32.xlu0 %v1979, 39
  %v5499 = vpop.permute.xlu0 %5498
  %5500 = vrot.lane.b32.xlu0 %v1981, 39
  %v5501 = vpop.permute.xlu0 %5500
  %5502 = vrot.lane.b32.xlu0 %v1983, 39
  %v5503 = vpop.permute.xlu0 %5502
  %5504 = vrot.lane.b32.xlu0 %v1985, 39
  %v5505 = vpop.permute.xlu0 %5504
  %5506 = vrot.lane.b32.xlu0 %v1987, 39
  %v5507 = vpop.permute.xlu0 %5506
  %5508 = vrot.lane.b32.xlu0 %v1989, 39
  %v5509 = vpop.permute.xlu0 %5508
  %5510 = vrot.lane.b32.xlu0 %v1991, 39
  %v5511 = vpop.permute.xlu0 %5510
  %5512 = vrot.lane.b32.xlu0 %v1993, 39
  %v5513 = vpop.permute.xlu0 %5512
  %5514 = vrot.lane.b32.xlu0 %v1995, 39
  %v5515 = vpop.permute.xlu0 %5514
  %5516 = vrot.lane.b32.xlu0 %v1997, 39
  %v5517 = vpop.permute.xlu0 %5516
  %5518 = vrot.lane.b32.xlu0 %v1999, 39
  %v5519 = vpop.permute.xlu0 %5518
  %5520 = vrot.lane.b32.xlu0 %v2001, 39
  %v5521 = vpop.permute.xlu0 %5520
  %5522 = vrot.lane.b32.xlu0 %v2003, 39
  %v5523 = vpop.permute.xlu0 %5522
  %5524 = vrot.lane.b32.xlu0 %v2005, 39
  %v5525 = vpop.permute.xlu0 %5524
  %5526 = vrot.lane.b32.xlu0 %v2007, 39
  %v5527 = vpop.permute.xlu0 %5526
  %5528 = vrot.lane.b32.xlu0 %v2009, 39
  %v5529 = vpop.permute.xlu0 %5528
  %5530 = vrot.lane.b32.xlu0 %v2011, 39
  %v5531 = vpop.permute.xlu0 %5530
  %5532 = vrot.lane.b32.xlu0 %v2013, 39
  %v5533 = vpop.permute.xlu0 %5532
  %5534 = vrot.lane.b32.xlu0 %v2015, 39
  %v5535 = vpop.permute.xlu0 %5534
  %5536 = vrot.lane.b32.xlu0 %v2017, 39
  %v5537 = vpop.permute.xlu0 %5536
  %5538 = vrot.lane.b32.xlu0 %v2019, 39
  %v5539 = vpop.permute.xlu0 %5538
  %5540 = vrot.lane.b32.xlu0 %v2021, 39
  %v5541 = vpop.permute.xlu0 %5540
  %5542 = vrot.lane.b32.xlu0 %v2023, 39
  %v5543 = vpop.permute.xlu0 %5542
  %5544 = vrot.lane.b32.xlu0 %v2025, 39
  %v5545 = vpop.permute.xlu0 %5544
  %5546 = vrot.lane.b32.xlu0 %v2027, 39
  %v5547 = vpop.permute.xlu0 %5546
  %5548 = vrot.lane.b32.xlu0 %v2029, 39
  %v5549 = vpop.permute.xlu0 %5548
  %5550 = vrot.lane.b32.xlu0 %v2031, 39
  %v5551 = vpop.permute.xlu0 %5550
  %5552 = vrot.lane.b32.xlu0 %v2033, 39
  %v5553 = vpop.permute.xlu0 %5552
  %5554 = vrot.lane.b32.xlu0 %v2035, 39
  %v5555 = vpop.permute.xlu0 %5554
  %5556 = vrot.lane.b32.xlu0 %v2037, 39
  %v5557 = vpop.permute.xlu0 %5556
  %5558 = vrot.lane.b32.xlu0 %v2039, 39
  %v5559 = vpop.permute.xlu0 %5558
  %5560 = vrot.lane.b32.xlu0 %v2041, 39
  %v5561 = vpop.permute.xlu0 %5560
  %5562 = vrot.lane.b32.xlu0 %v2043, 39
  %v5563 = vpop.permute.xlu0 %5562
  %5564 = vrot.lane.b32.xlu0 %v2045, 39
  %v5565 = vpop.permute.xlu0 %5564
  %5566 = vrot.lane.b32.xlu0 %v2047, 39
  %v5567 = vpop.permute.xlu0 %5566
  %5568 = vrot.lane.b32.xlu0 %v2049, 39
  %v5569 = vpop.permute.xlu0 %5568
  %5698 = vrot.lane.b32.xlu0 %v2051, 42
  %v5699 = vpop.permute.xlu0 %5698
  %5700 = vrot.lane.b32.xlu0 %v2053, 42
  %v5701 = vpop.permute.xlu0 %5700
  %5702 = vrot.lane.b32.xlu0 %v2055, 42
  %v5703 = vpop.permute.xlu0 %5702
  %5704 = vrot.lane.b32.xlu0 %v2057, 42
  %v5705 = vpop.permute.xlu0 %5704
  %5706 = vrot.lane.b32.xlu0 %v2059, 42
  %v5707 = vpop.permute.xlu0 %5706
  %5708 = vrot.lane.b32.xlu0 %v2061, 42
  %v5709 = vpop.permute.xlu0 %5708
  %5710 = vrot.lane.b32.xlu0 %v2063, 42
  %v5711 = vpop.permute.xlu0 %5710
  %5712 = vrot.lane.b32.xlu0 %v2065, 42
  %v5713 = vpop.permute.xlu0 %5712
  %5714 = vrot.lane.b32.xlu0 %v2067, 42
  %v5715 = vpop.permute.xlu0 %5714
  %5716 = vrot.lane.b32.xlu0 %v2069, 42
  %v5717 = vpop.permute.xlu0 %5716
  %5718 = vrot.lane.b32.xlu0 %v2071, 42
  %v5719 = vpop.permute.xlu0 %5718
  %5720 = vrot.lane.b32.xlu0 %v2073, 42
  %v5721 = vpop.permute.xlu0 %5720
  %5722 = vrot.lane.b32.xlu0 %v2075, 42
  %v5723 = vpop.permute.xlu0 %5722
  %5724 = vrot.lane.b32.xlu0 %v2077, 42
  %v5725 = vpop.permute.xlu0 %5724
  %5726 = vrot.lane.b32.xlu0 %v2079, 42
  %v5727 = vpop.permute.xlu0 %5726
  %5728 = vrot.lane.b32.xlu0 %v2081, 42
  %v5729 = vpop.permute.xlu0 %5728
  %5730 = vrot.lane.b32.xlu0 %v2083, 42
  %v5731 = vpop.permute.xlu0 %5730
  %5732 = vrot.lane.b32.xlu0 %v2085, 42
  %v5733 = vpop.permute.xlu0 %5732
  %5734 = vrot.lane.b32.xlu0 %v2087, 42
  %v5735 = vpop.permute.xlu0 %5734
  %5736 = vrot.lane.b32.xlu0 %v2089, 42
  %v5737 = vpop.permute.xlu0 %5736
  %5738 = vrot.lane.b32.xlu0 %v2091, 42
  %v5739 = vpop.permute.xlu0 %5738
  %5740 = vrot.lane.b32.xlu0 %v2093, 42
  %v5741 = vpop.permute.xlu0 %5740
  %5742 = vrot.lane.b32.xlu0 %v2095, 42
  %v5743 = vpop.permute.xlu0 %5742
  %5744 = vrot.lane.b32.xlu0 %v2097, 42
  %v5745 = vpop.permute.xlu0 %5744
  %5746 = vrot.lane.b32.xlu0 %v2099, 42
  %v5747 = vpop.permute.xlu0 %5746
  %5748 = vrot.lane.b32.xlu0 %v2101, 42
  %v5749 = vpop.permute.xlu0 %5748
  %5750 = vrot.lane.b32.xlu0 %v2103, 42
  %v5751 = vpop.permute.xlu0 %5750
  %5752 = vrot.lane.b32.xlu0 %v2105, 42
  %v5753 = vpop.permute.xlu0 %5752
  %5754 = vrot.lane.b32.xlu0 %v2107, 42
  %v5755 = vpop.permute.xlu0 %5754
  %5756 = vrot.lane.b32.xlu0 %v2109, 42
  %v5757 = vpop.permute.xlu0 %5756
  %5758 = vrot.lane.b32.xlu0 %v2111, 42
  %v5759 = vpop.permute.xlu0 %5758
  %5760 = vrot.lane.b32.xlu0 %v2113, 42
  %v5761 = vpop.permute.xlu0 %5760
  %5762 = vrot.lane.b32.xlu0 %v2115, 42
  %v5763 = vpop.permute.xlu0 %5762
  %5764 = vrot.lane.b32.xlu0 %v2117, 42
  %v5765 = vpop.permute.xlu0 %5764
  %5766 = vrot.lane.b32.xlu0 %v2119, 42
  %v5767 = vpop.permute.xlu0 %5766
  %5768 = vrot.lane.b32.xlu0 %v2121, 42
  %v5769 = vpop.permute.xlu0 %5768
  %5770 = vrot.lane.b32.xlu0 %v2123, 42
  %v5771 = vpop.permute.xlu0 %5770
  %5772 = vrot.lane.b32.xlu0 %v2125, 42
  %v5773 = vpop.permute.xlu0 %5772
  %5774 = vrot.lane.b32.xlu0 %v2127, 42
  %v5775 = vpop.permute.xlu0 %5774
  %5776 = vrot.lane.b32.xlu0 %v2129, 42
  %v5777 = vpop.permute.xlu0 %5776
  %5778 = vrot.lane.b32.xlu0 %v2131, 42
  %v5779 = vpop.permute.xlu0 %5778
  %5780 = vrot.lane.b32.xlu0 %v2133, 42
  %v5781 = vpop.permute.xlu0 %5780
  %5782 = vrot.lane.b32.xlu0 %v2135, 42
  %v5783 = vpop.permute.xlu0 %5782
  %5784 = vrot.lane.b32.xlu0 %v2137, 42
  %v5785 = vpop.permute.xlu0 %5784
  %5786 = vrot.lane.b32.xlu0 %v2139, 42
  %v5787 = vpop.permute.xlu0 %5786
  %5788 = vrot.lane.b32.xlu0 %v2141, 42
  %v5789 = vpop.permute.xlu0 %5788
  %5790 = vrot.lane.b32.xlu0 %v2143, 42
  %v5791 = vpop.permute.xlu0 %5790
  %5792 = vrot.lane.b32.xlu0 %v2145, 42
  %v5793 = vpop.permute.xlu0 %5792
  %5794 = vrot.lane.b32.xlu0 %v2147, 42
  %v5795 = vpop.permute.xlu0 %5794
  %5796 = vrot.lane.b32.xlu0 %v2149, 42
  %v5797 = vpop.permute.xlu0 %5796
  %5798 = vrot.lane.b32.xlu0 %v2151, 42
  %v5799 = vpop.permute.xlu0 %5798
  %5800 = vrot.lane.b32.xlu0 %v2153, 42
  %v5801 = vpop.permute.xlu0 %5800
  %5802 = vrot.lane.b32.xlu0 %v2155, 42
  %v5803 = vpop.permute.xlu0 %5802
  %5804 = vrot.lane.b32.xlu0 %v2157, 42
  %v5805 = vpop.permute.xlu0 %5804
  %5806 = vrot.lane.b32.xlu0 %v2159, 42
  %v5807 = vpop.permute.xlu0 %5806
  %5808 = vrot.lane.b32.xlu0 %v2161, 42
  %v5809 = vpop.permute.xlu0 %5808
  %5810 = vrot.lane.b32.xlu0 %v2163, 42
  %v5811 = vpop.permute.xlu0 %5810
  %5812 = vrot.lane.b32.xlu0 %v2165, 42
  %v5813 = vpop.permute.xlu0 %5812
  %5814 = vrot.lane.b32.xlu0 %v2167, 42
  %v5815 = vpop.permute.xlu0 %5814
  %5816 = vrot.lane.b32.xlu0 %v2169, 42
  %v5817 = vpop.permute.xlu0 %5816
  %5818 = vrot.lane.b32.xlu0 %v2171, 42
  %v5819 = vpop.permute.xlu0 %5818
  %5820 = vrot.lane.b32.xlu0 %v2173, 42
  %v5821 = vpop.permute.xlu0 %5820
  %5822 = vrot.lane.b32.xlu0 %v2175, 42
  %v5823 = vpop.permute.xlu0 %5822
  %5824 = vrot.lane.b32.xlu0 %v2177, 42
  %v5825 = vpop.permute.xlu0 %5824
  %5954 = vrot.lane.b32.xlu0 %v2179, 45
  %v5955 = vpop.permute.xlu0 %5954
  %5956 = vrot.lane.b32.xlu0 %v2181, 45
  %v5957 = vpop.permute.xlu0 %5956
  %5958 = vrot.lane.b32.xlu0 %v2183, 45
  %v5959 = vpop.permute.xlu0 %5958
  %5960 = vrot.lane.b32.xlu0 %v2185, 45
  %v5961 = vpop.permute.xlu0 %5960
  %5962 = vrot.lane.b32.xlu0 %v2187, 45
  %v5963 = vpop.permute.xlu0 %5962
  %5964 = vrot.lane.b32.xlu0 %v2189, 45
  %v5965 = vpop.permute.xlu0 %5964
  %5966 = vrot.lane.b32.xlu0 %v2191, 45
  %v5967 = vpop.permute.xlu0 %5966
  %5968 = vrot.lane.b32.xlu0 %v2193, 45
  %v5969 = vpop.permute.xlu0 %5968
  %5970 = vrot.lane.b32.xlu0 %v2195, 45
  %v5971 = vpop.permute.xlu0 %5970
  %5972 = vrot.lane.b32.xlu0 %v2197, 45
  %v5973 = vpop.permute.xlu0 %5972
  %5974 = vrot.lane.b32.xlu0 %v2199, 45
  %v5975 = vpop.permute.xlu0 %5974
  %5976 = vrot.lane.b32.xlu0 %v2201, 45
  %v5977 = vpop.permute.xlu0 %5976
  %5978 = vrot.lane.b32.xlu0 %v2203, 45
  %v5979 = vpop.permute.xlu0 %5978
  %5980 = vrot.lane.b32.xlu0 %v2205, 45
  %v5981 = vpop.permute.xlu0 %5980
  %5982 = vrot.lane.b32.xlu0 %v2207, 45
  %v5983 = vpop.permute.xlu0 %5982
  %5984 = vrot.lane.b32.xlu0 %v2209, 45
  %v5985 = vpop.permute.xlu0 %5984
  %5986 = vrot.lane.b32.xlu0 %v2211, 45
  %v5987 = vpop.permute.xlu0 %5986
  %5988 = vrot.lane.b32.xlu0 %v2213, 45
  %v5989 = vpop.permute.xlu0 %5988
  %5990 = vrot.lane.b32.xlu0 %v2215, 45
  %v5991 = vpop.permute.xlu0 %5990
  %5992 = vrot.lane.b32.xlu0 %v2217, 45
  %v5993 = vpop.permute.xlu0 %5992
  %5994 = vrot.lane.b32.xlu0 %v2219, 45
  %v5995 = vpop.permute.xlu0 %5994
  %5996 = vrot.lane.b32.xlu0 %v2221, 45
  %v5997 = vpop.permute.xlu0 %5996
  %5998 = vrot.lane.b32.xlu0 %v2223, 45
  %v5999 = vpop.permute.xlu0 %5998
  %6000 = vrot.lane.b32.xlu0 %v2225, 45
  %v6001 = vpop.permute.xlu0 %6000
  %6002 = vrot.lane.b32.xlu0 %v2227, 45
  %v6003 = vpop.permute.xlu0 %6002
  %6004 = vrot.lane.b32.xlu0 %v2229, 45
  %v6005 = vpop.permute.xlu0 %6004
  %6006 = vrot.lane.b32.xlu0 %v2231, 45
  %v6007 = vpop.permute.xlu0 %6006
  %6008 = vrot.lane.b32.xlu0 %v2233, 45
  %v6009 = vpop.permute.xlu0 %6008
  %6010 = vrot.lane.b32.xlu0 %v2235, 45
  %v6011 = vpop.permute.xlu0 %6010
  %6012 = vrot.lane.b32.xlu0 %v2237, 45
  %v6013 = vpop.permute.xlu0 %6012
  %6014 = vrot.lane.b32.xlu0 %v2239, 45
  %v6015 = vpop.permute.xlu0 %6014
  %6016 = vrot.lane.b32.xlu0 %v2241, 45
  %v6017 = vpop.permute.xlu0 %6016
  %6018 = vrot.lane.b32.xlu0 %v2243, 45
  %v6019 = vpop.permute.xlu0 %6018
  %6020 = vrot.lane.b32.xlu0 %v2245, 45
  %v6021 = vpop.permute.xlu0 %6020
  %6022 = vrot.lane.b32.xlu0 %v2247, 45
  %v6023 = vpop.permute.xlu0 %6022
  %6024 = vrot.lane.b32.xlu0 %v2249, 45
  %v6025 = vpop.permute.xlu0 %6024
  %6026 = vrot.lane.b32.xlu0 %v2251, 45
  %v6027 = vpop.permute.xlu0 %6026
  %6028 = vrot.lane.b32.xlu0 %v2253, 45
  %v6029 = vpop.permute.xlu0 %6028
  %6030 = vrot.lane.b32.xlu0 %v2255, 45
  %v6031 = vpop.permute.xlu0 %6030
  %6032 = vrot.lane.b32.xlu0 %v2257, 45
  %v6033 = vpop.permute.xlu0 %6032
  %6034 = vrot.lane.b32.xlu0 %v2259, 45
  %v6035 = vpop.permute.xlu0 %6034
  %6036 = vrot.lane.b32.xlu0 %v2261, 45
  %v6037 = vpop.permute.xlu0 %6036
  %6038 = vrot.lane.b32.xlu0 %v2263, 45
  %v6039 = vpop.permute.xlu0 %6038
  %6040 = vrot.lane.b32.xlu0 %v2265, 45
  %v6041 = vpop.permute.xlu0 %6040
  %6042 = vrot.lane.b32.xlu0 %v2267, 45
  %v6043 = vpop.permute.xlu0 %6042
  %6044 = vrot.lane.b32.xlu0 %v2269, 45
  %v6045 = vpop.permute.xlu0 %6044
  %6046 = vrot.lane.b32.xlu0 %v2271, 45
  %v6047 = vpop.permute.xlu0 %6046
  %6048 = vrot.lane.b32.xlu0 %v2273, 45
  %v6049 = vpop.permute.xlu0 %6048
  %6050 = vrot.lane.b32.xlu0 %v2275, 45
  %v6051 = vpop.permute.xlu0 %6050
  %6052 = vrot.lane.b32.xlu0 %v2277, 45
  %v6053 = vpop.permute.xlu0 %6052
  %6054 = vrot.lane.b32.xlu0 %v2279, 45
  %v6055 = vpop.permute.xlu0 %6054
  %6056 = vrot.lane.b32.xlu0 %v2281, 45
  %v6057 = vpop.permute.xlu0 %6056
  %6058 = vrot.lane.b32.xlu0 %v2283, 45
  %v6059 = vpop.permute.xlu0 %6058
  %6060 = vrot.lane.b32.xlu0 %v2285, 45
  %v6061 = vpop.permute.xlu0 %6060
  %6062 = vrot.lane.b32.xlu0 %v2287, 45
  %v6063 = vpop.permute.xlu0 %6062
  %6064 = vrot.lane.b32.xlu0 %v2289, 45
  %v6065 = vpop.permute.xlu0 %6064
  %6066 = vrot.lane.b32.xlu0 %v2291, 45
  %v6067 = vpop.permute.xlu0 %6066
  %6068 = vrot.lane.b32.xlu0 %v2293, 45
  %v6069 = vpop.permute.xlu0 %6068
  %6070 = vrot.lane.b32.xlu0 %v2295, 45
  %v6071 = vpop.permute.xlu0 %6070
  %6072 = vrot.lane.b32.xlu0 %v2297, 45
  %v6073 = vpop.permute.xlu0 %6072
  %6074 = vrot.lane.b32.xlu0 %v2299, 45
  %v6075 = vpop.permute.xlu0 %6074
  %6076 = vrot.lane.b32.xlu0 %v2301, 45
  %v6077 = vpop.permute.xlu0 %6076
  %6078 = vrot.lane.b32.xlu0 %v2303, 45
  %v6079 = vpop.permute.xlu0 %6078
  %6080 = vrot.lane.b32.xlu0 %v2305, 45
  %v6081 = vpop.permute.xlu0 %6080
  %vm6146 = vcmask 23552
  %v6147 = vsel %vm6146, %v259, %v2371
  %v6148 = vsel %vm6146, %v261, %v2373
  %v6149 = vsel %vm6146, %v263, %v2375
  %v6150 = vsel %vm6146, %v265, %v2377
  %v6151 = vsel %vm6146, %v267, %v2379
  %v6152 = vsel %vm6146, %v269, %v2381
  %v6153 = vsel %vm6146, %v271, %v2383
  %v6154 = vsel %vm6146, %v273, %v2385
  %v6155 = vsel %vm6146, %v275, %v2387
  %v6156 = vsel %vm6146, %v277, %v2389
  %v6157 = vsel %vm6146, %v279, %v2391
  %v6158 = vsel %vm6146, %v281, %v2393
  %v6159 = vsel %vm6146, %v283, %v2395
  %v6160 = vsel %vm6146, %v285, %v2397
  %v6161 = vsel %vm6146, %v287, %v2399
  %v6162 = vsel %vm6146, %v289, %v2401
  %v6163 = vsel %vm6146, %v291, %v2403
  %v6164 = vsel %vm6146, %v293, %v2405
  %v6165 = vsel %vm6146, %v295, %v2407
  %v6166 = vsel %vm6146, %v297, %v2409
  %v6167 = vsel %vm6146, %v299, %v2411
  %v6168 = vsel %vm6146, %v301, %v2413
  %v6169 = vsel %vm6146, %v303, %v2415
  %v6170 = vsel %vm6146, %v305, %v2417
  %v6171 = vsel %vm6146, %v307, %v2419
  %v6172 = vsel %vm6146, %v309, %v2421
  %v6173 = vsel %vm6146, %v311, %v2423
  %v6174 = vsel %vm6146, %v313, %v2425
  %v6175 = vsel %vm6146, %v315, %v2427
  %v6176 = vsel %vm6146, %v317, %v2429
  %v6177 = vsel %vm6146, %v319, %v2431
  %v6178 = vsel %vm6146, %v321, %v2433
  %v6179 = vsel %vm6146, %v323, %v2435
  %v6180 = vsel %vm6146, %v325, %v2437
  %v6181 = vsel %vm6146, %v327, %v2439
  %v6182 = vsel %vm6146, %v329, %v2441
  %v6183 = vsel %vm6146, %v331, %v2443
  %v6184 = vsel %vm6146, %v333, %v2445
  %v6185 = vsel %vm6146, %v335, %v2447
  %v6186 = vsel %vm6146, %v337, %v2449
  %v6187 = vsel %vm6146, %v339, %v2451
  %v6188 = vsel %vm6146, %v341, %v2453
  %v6189 = vsel %vm6146, %v343, %v2455
  %v6190 = vsel %vm6146, %v345, %v2457
  %v6191 = vsel %vm6146, %v347, %v2459
  %v6192 = vsel %vm6146, %v349, %v2461
  %v6193 = vsel %vm6146, %v351, %v2463
  %v6194 = vsel %vm6146, %v353, %v2465
  %v6195 = vsel %vm6146, %v355, %v2467
  %v6196 = vsel %vm6146, %v357, %v2469
  %v6197 = vsel %vm6146, %v359, %v2471
  %v6198 = vsel %vm6146, %v361, %v2473
  %v6199 = vsel %vm6146, %v363, %v2475
  %v6200 = vsel %vm6146, %v365, %v2477
  %v6201 = vsel %vm6146, %v367, %v2479
  %v6202 = vsel %vm6146, %v369, %v2481
  %v6203 = vsel %vm6146, %v371, %v2483
  %v6204 = vsel %vm6146, %v373, %v2485
  %v6205 = vsel %vm6146, %v375, %v2487
  %v6206 = vsel %vm6146, %v377, %v2489
  %v6207 = vsel %vm6146, %v379, %v2491
  %v6208 = vsel %vm6146, %v381, %v2493
  %v6209 = vsel %vm6146, %v383, %v2495
  %v6210 = vsel %vm6146, %v385, %v2497
  %vm6211 = vcmask 48128
  %v6212 = vsel %vm6211, %v6147, %v2627
  %v6213 = vsel %vm6211, %v6148, %v2629
  %v6214 = vsel %vm6211, %v6149, %v2631
  %v6215 = vsel %vm6211, %v6150, %v2633
  %v6216 = vsel %vm6211, %v6151, %v2635
  %v6217 = vsel %vm6211, %v6152, %v2637
  %v6218 = vsel %vm6211, %v6153, %v2639
  %v6219 = vsel %vm6211, %v6154, %v2641
  %v6220 = vsel %vm6211, %v6155, %v2643
  %v6221 = vsel %vm6211, %v6156, %v2645
  %v6222 = vsel %vm6211, %v6157, %v2647
  %v6223 = vsel %vm6211, %v6158, %v2649
  %v6224 = vsel %vm6211, %v6159, %v2651
  %v6225 = vsel %vm6211, %v6160, %v2653
  %v6226 = vsel %vm6211, %v6161, %v2655
  %v6227 = vsel %vm6211, %v6162, %v2657
  %v6228 = vsel %vm6211, %v6163, %v2659
  %v6229 = vsel %vm6211, %v6164, %v2661
  %v6230 = vsel %vm6211, %v6165, %v2663
  %v6231 = vsel %vm6211, %v6166, %v2665
  %v6232 = vsel %vm6211, %v6167, %v2667
  %v6233 = vsel %vm6211, %v6168, %v2669
  %v6234 = vsel %vm6211, %v6169, %v2671
  %v6235 = vsel %vm6211, %v6170, %v2673
  %v6236 = vsel %vm6211, %v6171, %v2675
  %v6237 = vsel %vm6211, %v6172, %v2677
  %v6238 = vsel %vm6211, %v6173, %v2679
  %v6239 = vsel %vm6211, %v6174, %v2681
  %v6240 = vsel %vm6211, %v6175, %v2683
  %v6241 = vsel %vm6211, %v6176, %v2685
  %v6242 = vsel %vm6211, %v6177, %v2687
  %v6243 = vsel %vm6211, %v6178, %v2689
  %v6244 = vsel %vm6211, %v6179, %v2691
  %v6245 = vsel %vm6211, %v6180, %v2693
  %v6246 = vsel %vm6211, %v6181, %v2695
  %v6247 = vsel %vm6211, %v6182, %v2697
  %v6248 = vsel %vm6211, %v6183, %v2699
  %v6249 = vsel %vm6211, %v6184, %v2701
  %v6250 = vsel %vm6211, %v6185, %v2703
  %v6251 = vsel %vm6211, %v6186, %v2705
  %v6252 = vsel %vm6211, %v6187, %v2707
  %v6253 = vsel %vm6211, %v6188, %v2709
  %v6254 = vsel %vm6211, %v6189, %v2711
  %v6255 = vsel %vm6211, %v6190, %v2713
  %v6256 = vsel %vm6211, %v6191, %v2715
  %v6257 = vsel %vm6211, %v6192, %v2717
  %v6258 = vsel %vm6211, %v6193, %v2719
  %v6259 = vsel %vm6211, %v6194, %v2721
  %v6260 = vsel %vm6211, %v6195, %v2723
  %v6261 = vsel %vm6211, %v6196, %v2725
  %v6262 = vsel %vm6211, %v6197, %v2727
  %v6263 = vsel %vm6211, %v6198, %v2729
  %v6264 = vsel %vm6211, %v6199, %v2731
  %v6265 = vsel %vm6211, %v6200, %v2733
  %v6266 = vsel %vm6211, %v6201, %v2735
  %v6267 = vsel %vm6211, %v6202, %v2737
  %v6268 = vsel %vm6211, %v6203, %v2739
  %v6269 = vsel %vm6211, %v6204, %v2741
  %v6270 = vsel %vm6211, %v6205, %v2743
  %v6271 = vsel %vm6211, %v6206, %v2745
  %v6272 = vsel %vm6211, %v6207, %v2747
  %v6273 = vsel %vm6211, %v6208, %v2749
  %v6274 = vsel %vm6211, %v6209, %v2751
  %v6275 = vsel %vm6211, %v6210, %v2753
  %vm6276 = vcmask 72704
  %v6277 = vsel %vm6276, %v6212, %v2883
  %v6278 = vsel %vm6276, %v6213, %v2885
  %v6279 = vsel %vm6276, %v6214, %v2887
  %v6280 = vsel %vm6276, %v6215, %v2889
  %v6281 = vsel %vm6276, %v6216, %v2891
  %v6282 = vsel %vm6276, %v6217, %v2893
  %v6283 = vsel %vm6276, %v6218, %v2895
  %v6284 = vsel %vm6276, %v6219, %v2897
  %v6285 = vsel %vm6276, %v6220, %v2899
  %v6286 = vsel %vm6276, %v6221, %v2901
  %v6287 = vsel %vm6276, %v6222, %v2903
  %v6288 = vsel %vm6276, %v6223, %v2905
  %v6289 = vsel %vm6276, %v6224, %v2907
  %v6290 = vsel %vm6276, %v6225, %v2909
  %v6291 = vsel %vm6276, %v6226, %v2911
  %v6292 = vsel %vm6276, %v6227, %v2913
  %v6293 = vsel %vm6276, %v6228, %v2915
  %v6294 = vsel %vm6276, %v6229, %v2917
  %v6295 = vsel %vm6276, %v6230, %v2919
  %v6296 = vsel %vm6276, %v6231, %v2921
  %v6297 = vsel %vm6276, %v6232, %v2923
  %v6298 = vsel %vm6276, %v6233, %v2925
  %v6299 = vsel %vm6276, %v6234, %v2927
  %v6300 = vsel %vm6276, %v6235, %v2929
  %v6301 = vsel %vm6276, %v6236, %v2931
  %v6302 = vsel %vm6276, %v6237, %v2933
  %v6303 = vsel %vm6276, %v6238, %v2935
  %v6304 = vsel %vm6276, %v6239, %v2937
  %v6305 = vsel %vm6276, %v6240, %v2939
  %v6306 = vsel %vm6276, %v6241, %v2941
  %v6307 = vsel %vm6276, %v6242, %v2943
  %v6308 = vsel %vm6276, %v6243, %v2945
  %v6309 = vsel %vm6276, %v6244, %v2947
  %v6310 = vsel %vm6276, %v6245, %v2949
  %v6311 = vsel %vm6276, %v6246, %v2951
  %v6312 = vsel %vm6276, %v6247, %v2953
  %v6313 = vsel %vm6276, %v6248, %v2955
  %v6314 = vsel %vm6276, %v6249, %v2957
  %v6315 = vsel %vm6276, %v6250, %v2959
  %v6316 = vsel %vm6276, %v6251, %v2961
  %v6317 = vsel %vm6276, %v6252, %v2963
  %v6318 = vsel %vm6276, %v6253, %v2965
  %v6319 = vsel %vm6276, %v6254, %v2967
  %v6320 = vsel %vm6276, %v6255, %v2969
  %v6321 = vsel %vm6276, %v6256, %v2971
  %v6322 = vsel %vm6276, %v6257, %v2973
  %v6323 = vsel %vm6276, %v6258, %v2975
  %v6324 = vsel %vm6276, %v6259, %v2977
  %v6325 = vsel %vm6276, %v6260, %v2979
  %v6326 = vsel %vm6276, %v6261, %v2981
  %v6327 = vsel %vm6276, %v6262, %v2983
  %v6328 = vsel %vm6276, %v6263, %v2985
  %v6329 = vsel %vm6276, %v6264, %v2987
  %v6330 = vsel %vm6276, %v6265, %v2989
  %v6331 = vsel %vm6276, %v6266, %v2991
  %v6332 = vsel %vm6276, %v6267, %v2993
  %v6333 = vsel %vm6276, %v6268, %v2995
  %v6334 = vsel %vm6276, %v6269, %v2997
  %v6335 = vsel %vm6276, %v6270, %v2999
  %v6336 = vsel %vm6276, %v6271, %v3001
  %v6337 = vsel %vm6276, %v6272, %v3003
  %v6338 = vsel %vm6276, %v6273, %v3005
  %v6339 = vsel %vm6276, %v6274, %v3007
  %v6340 = vsel %vm6276, %v6275, %v3009
  %vm6341 = vcmask 97280
  %v6342 = vsel %vm6341, %v6277, %v3139
  %v6343 = vsel %vm6341, %v6278, %v3141
  %v6344 = vsel %vm6341, %v6279, %v3143
  %v6345 = vsel %vm6341, %v6280, %v3145
  %v6346 = vsel %vm6341, %v6281, %v3147
  %v6347 = vsel %vm6341, %v6282, %v3149
  %v6348 = vsel %vm6341, %v6283, %v3151
  %v6349 = vsel %vm6341, %v6284, %v3153
  %v6350 = vsel %vm6341, %v6285, %v3155
  %v6351 = vsel %vm6341, %v6286, %v3157
  %v6352 = vsel %vm6341, %v6287, %v3159
  %v6353 = vsel %vm6341, %v6288, %v3161
  %v6354 = vsel %vm6341, %v6289, %v3163
  %v6355 = vsel %vm6341, %v6290, %v3165
  %v6356 = vsel %vm6341, %v6291, %v3167
  %v6357 = vsel %vm6341, %v6292, %v3169
  %v6358 = vsel %vm6341, %v6293, %v3171
  %v6359 = vsel %vm6341, %v6294, %v3173
  %v6360 = vsel %vm6341, %v6295, %v3175
  %v6361 = vsel %vm6341, %v6296, %v3177
  %v6362 = vsel %vm6341, %v6297, %v3179
  %v6363 = vsel %vm6341, %v6298, %v3181
  %v6364 = vsel %vm6341, %v6299, %v3183
  %v6365 = vsel %vm6341, %v6300, %v3185
  %v6366 = vsel %vm6341, %v6301, %v3187
  %v6367 = vsel %vm6341, %v6302, %v3189
  %v6368 = vsel %vm6341, %v6303, %v3191
  %v6369 = vsel %vm6341, %v6304, %v3193
  %v6370 = vsel %vm6341, %v6305, %v3195
  %v6371 = vsel %vm6341, %v6306, %v3197
  %v6372 = vsel %vm6341, %v6307, %v3199
  %v6373 = vsel %vm6341, %v6308, %v3201
  %v6374 = vsel %vm6341, %v6309, %v3203
  %v6375 = vsel %vm6341, %v6310, %v3205
  %v6376 = vsel %vm6341, %v6311, %v3207
  %v6377 = vsel %vm6341, %v6312, %v3209
  %v6378 = vsel %vm6341, %v6313, %v3211
  %v6379 = vsel %vm6341, %v6314, %v3213
  %v6380 = vsel %vm6341, %v6315, %v3215
  %v6381 = vsel %vm6341, %v6316, %v3217
  %v6382 = vsel %vm6341, %v6317, %v3219
  %v6383 = vsel %vm6341, %v6318, %v3221
  %v6384 = vsel %vm6341, %v6319, %v3223
  %v6385 = vsel %vm6341, %v6320, %v3225
  %v6386 = vsel %vm6341, %v6321, %v3227
  %v6387 = vsel %vm6341, %v6322, %v3229
  %v6388 = vsel %vm6341, %v6323, %v3231
  %v6389 = vsel %vm6341, %v6324, %v3233
  %v6390 = vsel %vm6341, %v6325, %v3235
  %v6391 = vsel %vm6341, %v6326, %v3237
  %v6392 = vsel %vm6341, %v6327, %v3239
  %v6393 = vsel %vm6341, %v6328, %v3241
  %v6394 = vsel %vm6341, %v6329, %v3243
  %v6395 = vsel %vm6341, %v6330, %v3245
  %v6396 = vsel %vm6341, %v6331, %v3247
  %v6397 = vsel %vm6341, %v6332, %v3249
  %v6398 = vsel %vm6341, %v6333, %v3251
  %v6399 = vsel %vm6341, %v6334, %v3253
  %v6400 = vsel %vm6341, %v6335, %v3255
  %v6401 = vsel %vm6341, %v6336, %v3257
  %v6402 = vsel %vm6341, %v6337, %v3259
  %v6403 = vsel %vm6341, %v6338, %v3261
  %v6404 = vsel %vm6341, %v6339, %v3263
  %v6405 = vsel %vm6341, %v6340, %v3265
  %vm6406 = vcmask 121856
  %v6407 = vsel %vm6406, %v6342, %v3395
  %v6408 = vsel %vm6406, %v6343, %v3397
  %v6409 = vsel %vm6406, %v6344, %v3399
  %v6410 = vsel %vm6406, %v6345, %v3401
  %v6411 = vsel %vm6406, %v6346, %v3403
  %v6412 = vsel %vm6406, %v6347, %v3405
  %v6413 = vsel %vm6406, %v6348, %v3407
  %v6414 = vsel %vm6406, %v6349, %v3409
  %v6415 = vsel %vm6406, %v6350, %v3411
  %v6416 = vsel %vm6406, %v6351, %v3413
  %v6417 = vsel %vm6406, %v6352, %v3415
  %v6418 = vsel %vm6406, %v6353, %v3417
  %v6419 = vsel %vm6406, %v6354, %v3419
  %v6420 = vsel %vm6406, %v6355, %v3421
  %v6421 = vsel %vm6406, %v6356, %v3423
  %v6422 = vsel %vm6406, %v6357, %v3425
  %v6423 = vsel %vm6406, %v6358, %v3427
  %v6424 = vsel %vm6406, %v6359, %v3429
  %v6425 = vsel %vm6406, %v6360, %v3431
  %v6426 = vsel %vm6406, %v6361, %v3433
  %v6427 = vsel %vm6406, %v6362, %v3435
  %v6428 = vsel %vm6406, %v6363, %v3437
  %v6429 = vsel %vm6406, %v6364, %v3439
  %v6430 = vsel %vm6406, %v6365, %v3441
  %v6431 = vsel %vm6406, %v6366, %v3443
  %v6432 = vsel %vm6406, %v6367, %v3445
  %v6433 = vsel %vm6406, %v6368, %v3447
  %v6434 = vsel %vm6406, %v6369, %v3449
  %v6435 = vsel %vm6406, %v6370, %v3451
  %v6436 = vsel %vm6406, %v6371, %v3453
  %v6437 = vsel %vm6406, %v6372, %v3455
  %v6438 = vsel %vm6406, %v6373, %v3457
  %v6439 = vsel %vm6406, %v6374, %v3459
  %v6440 = vsel %vm6406, %v6375, %v3461
  %v6441 = vsel %vm6406, %v6376, %v3463
  %v6442 = vsel %vm6406, %v6377, %v3465
  %v6443 = vsel %vm6406, %v6378, %v3467
  %v6444 = vsel %vm6406, %v6379, %v3469
  %v6445 = vsel %vm6406, %v6380, %v3471
  %v6446 = vsel %vm6406, %v6381, %v3473
  %v6447 = vsel %vm6406, %v6382, %v3475
  %v6448 = vsel %vm6406, %v6383, %v3477
  %v6449 = vsel %vm6406, %v6384, %v3479
  %v6450 = vsel %vm6406, %v6385, %v3481
  %v6451 = vsel %vm6406, %v6386, %v3483
  %v6452 = vsel %vm6406, %v6387, %v3485
  %v6453 = vsel %vm6406, %v6388, %v3487
  %v6454 = vsel %vm6406, %v6389, %v3489
  %v6455 = vsel %vm6406, %v6390, %v3491
  %v6456 = vsel %vm6406, %v6391, %v3493
  %v6457 = vsel %vm6406, %v6392, %v3495
  %v6458 = vsel %vm6406, %v6393, %v3497
  %v6459 = vsel %vm6406, %v6394, %v3499
  %v6460 = vsel %vm6406, %v6395, %v3501
  %v6461 = vsel %vm6406, %v6396, %v3503
  %v6462 = vsel %vm6406, %v6397, %v3505
  %v6463 = vsel %vm6406, %v6398, %v3507
  %v6464 = vsel %vm6406, %v6399, %v3509
  %v6465 = vsel %vm6406, %v6400, %v3511
  %v6466 = vsel %vm6406, %v6401, %v3513
  %v6467 = vsel %vm6406, %v6402, %v3515
  %v6468 = vsel %vm6406, %v6403, %v3517
  %v6469 = vsel %vm6406, %v6404, %v3519
  %v6470 = vsel %vm6406, %v6405, %v3521
  %vm6471 = vcmask 146432
  %v6472 = vsel %vm6471, %v6407, %v3651
  %v6473 = vsel %vm6471, %v6408, %v3653
  %v6474 = vsel %vm6471, %v6409, %v3655
  %v6475 = vsel %vm6471, %v6410, %v3657
  %v6476 = vsel %vm6471, %v6411, %v3659
  %v6477 = vsel %vm6471, %v6412, %v3661
  %v6478 = vsel %vm6471, %v6413, %v3663
  %v6479 = vsel %vm6471, %v6414, %v3665
  %v6480 = vsel %vm6471, %v6415, %v3667
  %v6481 = vsel %vm6471, %v6416, %v3669
  %v6482 = vsel %vm6471, %v6417, %v3671
  %v6483 = vsel %vm6471, %v6418, %v3673
  %v6484 = vsel %vm6471, %v6419, %v3675
  %v6485 = vsel %vm6471, %v6420, %v3677
  %v6486 = vsel %vm6471, %v6421, %v3679
  %v6487 = vsel %vm6471, %v6422, %v3681
  %v6488 = vsel %vm6471, %v6423, %v3683
  %v6489 = vsel %vm6471, %v6424, %v3685
  %v6490 = vsel %vm6471, %v6425, %v3687
  %v6491 = vsel %vm6471, %v6426, %v3689
  %v6492 = vsel %vm6471, %v6427, %v3691
  %v6493 = vsel %vm6471, %v6428, %v3693
  %v6494 = vsel %vm6471, %v6429, %v3695
  %v6495 = vsel %vm6471, %v6430, %v3697
  %v6496 = vsel %vm6471, %v6431, %v3699
  %v6497 = vsel %vm6471, %v6432, %v3701
  %v6498 = vsel %vm6471, %v6433, %v3703
  %v6499 = vsel %vm6471, %v6434, %v3705
  %v6500 = vsel %vm6471, %v6435, %v3707
  %v6501 = vsel %vm6471, %v6436, %v3709
  %v6502 = vsel %vm6471, %v6437, %v3711
  %v6503 = vsel %vm6471, %v6438, %v3713
  %v6504 = vsel %vm6471, %v6439, %v3715
  %v6505 = vsel %vm6471, %v6440, %v3717
  %v6506 = vsel %vm6471, %v6441, %v3719
  %v6507 = vsel %vm6471, %v6442, %v3721
  %v6508 = vsel %vm6471, %v6443, %v3723
  %v6509 = vsel %vm6471, %v6444, %v3725
  %v6510 = vsel %vm6471, %v6445, %v3727
  %v6511 = vsel %vm6471, %v6446, %v3729
  %v6512 = vsel %vm6471, %v6447, %v3731
  %v6513 = vsel %vm6471, %v6448, %v3733
  %v6514 = vsel %vm6471, %v6449, %v3735
  %v6515 = vsel %vm6471, %v6450, %v3737
  %v6516 = vsel %vm6471, %v6451, %v3739
  %v6517 = vsel %vm6471, %v6452, %v3741
  %v6518 = vsel %vm6471, %v6453, %v3743
  %v6519 = vsel %vm6471, %v6454, %v3745
  %v6520 = vsel %vm6471, %v6455, %v3747
  %v6521 = vsel %vm6471, %v6456, %v3749
  %v6522 = vsel %vm6471, %v6457, %v3751
  %v6523 = vsel %vm6471, %v6458, %v3753
  %v6524 = vsel %vm6471, %v6459, %v3755
  %v6525 = vsel %vm6471, %v6460, %v3757
  %v6526 = vsel %vm6471, %v6461, %v3759
  %v6527 = vsel %vm6471, %v6462, %v3761
  %v6528 = vsel %vm6471, %v6463, %v3763
  %v6529 = vsel %vm6471, %v6464, %v3765
  %v6530 = vsel %vm6471, %v6465, %v3767
  %v6531 = vsel %vm6471, %v6466, %v3769
  %v6532 = vsel %vm6471, %v6467, %v3771
  %v6533 = vsel %vm6471, %v6468, %v3773
  %v6534 = vsel %vm6471, %v6469, %v3775
  %v6535 = vsel %vm6471, %v6470, %v3777
  %vm6536 = vcmask 171008
  %v6537 = vsel %vm6536, %v6472, %v3907
  %v6538 = vsel %vm6536, %v6473, %v3909
  %v6539 = vsel %vm6536, %v6474, %v3911
  %v6540 = vsel %vm6536, %v6475, %v3913
  %v6541 = vsel %vm6536, %v6476, %v3915
  %v6542 = vsel %vm6536, %v6477, %v3917
  %v6543 = vsel %vm6536, %v6478, %v3919
  %v6544 = vsel %vm6536, %v6479, %v3921
  %v6545 = vsel %vm6536, %v6480, %v3923
  %v6546 = vsel %vm6536, %v6481, %v3925
  %v6547 = vsel %vm6536, %v6482, %v3927
  %v6548 = vsel %vm6536, %v6483, %v3929
  %v6549 = vsel %vm6536, %v6484, %v3931
  %v6550 = vsel %vm6536, %v6485, %v3933
  %v6551 = vsel %vm6536, %v6486, %v3935
  %v6552 = vsel %vm6536, %v6487, %v3937
  %v6553 = vsel %vm6536, %v6488, %v3939
  %v6554 = vsel %vm6536, %v6489, %v3941
  %v6555 = vsel %vm6536, %v6490, %v3943
  %v6556 = vsel %vm6536, %v6491, %v3945
  %v6557 = vsel %vm6536, %v6492, %v3947
  %v6558 = vsel %vm6536, %v6493, %v3949
  %v6559 = vsel %vm6536, %v6494, %v3951
  %v6560 = vsel %vm6536, %v6495, %v3953
  %v6561 = vsel %vm6536, %v6496, %v3955
  %v6562 = vsel %vm6536, %v6497, %v3957
  %v6563 = vsel %vm6536, %v6498, %v3959
  %v6564 = vsel %vm6536, %v6499, %v3961
  %v6565 = vsel %vm6536, %v6500, %v3963
  %v6566 = vsel %vm6536, %v6501, %v3965
  %v6567 = vsel %vm6536, %v6502, %v3967
  %v6568 = vsel %vm6536, %v6503, %v3969
  %v6569 = vsel %vm6536, %v6504, %v3971
  %v6570 = vsel %vm6536, %v6505, %v3973
  %v6571 = vsel %vm6536, %v6506, %v3975
  %v6572 = vsel %vm6536, %v6507, %v3977
  %v6573 = vsel %vm6536, %v6508, %v3979
  %v6574 = vsel %vm6536, %v6509, %v3981
  %v6575 = vsel %vm6536, %v6510, %v3983
  %v6576 = vsel %vm6536, %v6511, %v3985
  %v6577 = vsel %vm6536, %v6512, %v3987
  %v6578 = vsel %vm6536, %v6513, %v3989
  %v6579 = vsel %vm6536, %v6514, %v3991
  %v6580 = vsel %vm6536, %v6515, %v3993
  %v6581 = vsel %vm6536, %v6516, %v3995
  %v6582 = vsel %vm6536, %v6517, %v3997
  %v6583 = vsel %vm6536, %v6518, %v3999
  %v6584 = vsel %vm6536, %v6519, %v4001
  %v6585 = vsel %vm6536, %v6520, %v4003
  %v6586 = vsel %vm6536, %v6521, %v4005
  %v6587 = vsel %vm6536, %v6522, %v4007
  %v6588 = vsel %vm6536, %v6523, %v4009
  %v6589 = vsel %vm6536, %v6524, %v4011
  %v6590 = vsel %vm6536, %v6525, %v4013
  %v6591 = vsel %vm6536, %v6526, %v4015
  %v6592 = vsel %vm6536, %v6527, %v4017
  %v6593 = vsel %vm6536, %v6528, %v4019
  %v6594 = vsel %vm6536, %v6529, %v4021
  %v6595 = vsel %vm6536, %v6530, %v4023
  %v6596 = vsel %vm6536, %v6531, %v4025
  %v6597 = vsel %vm6536, %v6532, %v4027
  %v6598 = vsel %vm6536, %v6533, %v4029
  %v6599 = vsel %vm6536, %v6534, %v4031
  %v6600 = vsel %vm6536, %v6535, %v4033
  %vm6601 = vcmask 195584
  %v6602 = vsel %vm6601, %v6537, %v4163
  %v6603 = vsel %vm6601, %v6538, %v4165
  %v6604 = vsel %vm6601, %v6539, %v4167
  %v6605 = vsel %vm6601, %v6540, %v4169
  %v6606 = vsel %vm6601, %v6541, %v4171
  %v6607 = vsel %vm6601, %v6542, %v4173
  %v6608 = vsel %vm6601, %v6543, %v4175
  %v6609 = vsel %vm6601, %v6544, %v4177
  %v6610 = vsel %vm6601, %v6545, %v4179
  %v6611 = vsel %vm6601, %v6546, %v4181
  %v6612 = vsel %vm6601, %v6547, %v4183
  %v6613 = vsel %vm6601, %v6548, %v4185
  %v6614 = vsel %vm6601, %v6549, %v4187
  %v6615 = vsel %vm6601, %v6550, %v4189
  %v6616 = vsel %vm6601, %v6551, %v4191
  %v6617 = vsel %vm6601, %v6552, %v4193
  %v6618 = vsel %vm6601, %v6553, %v4195
  %v6619 = vsel %vm6601, %v6554, %v4197
  %v6620 = vsel %vm6601, %v6555, %v4199
  %v6621 = vsel %vm6601, %v6556, %v4201
  %v6622 = vsel %vm6601, %v6557, %v4203
  %v6623 = vsel %vm6601, %v6558, %v4205
  %v6624 = vsel %vm6601, %v6559, %v4207
  %v6625 = vsel %vm6601, %v6560, %v4209
  %v6626 = vsel %vm6601, %v6561, %v4211
  %v6627 = vsel %vm6601, %v6562, %v4213
  %v6628 = vsel %vm6601, %v6563, %v4215
  %v6629 = vsel %vm6601, %v6564, %v4217
  %v6630 = vsel %vm6601, %v6565, %v4219
  %v6631 = vsel %vm6601, %v6566, %v4221
  %v6632 = vsel %vm6601, %v6567, %v4223
  %v6633 = vsel %vm6601, %v6568, %v4225
  %v6634 = vsel %vm6601, %v6569, %v4227
  %v6635 = vsel %vm6601, %v6570, %v4229
  %v6636 = vsel %vm6601, %v6571, %v4231
  %v6637 = vsel %vm6601, %v6572, %v4233
  %v6638 = vsel %vm6601, %v6573, %v4235
  %v6639 = vsel %vm6601, %v6574, %v4237
  %v6640 = vsel %vm6601, %v6575, %v4239
  %v6641 = vsel %vm6601, %v6576, %v4241
  %v6642 = vsel %vm6601, %v6577, %v4243
  %v6643 = vsel %vm6601, %v6578, %v4245
  %v6644 = vsel %vm6601, %v6579, %v4247
  %v6645 = vsel %vm6601, %v6580, %v4249
  %v6646 = vsel %vm6601, %v6581, %v4251
  %v6647 = vsel %vm6601, %v6582, %v4253
  %v6648 = vsel %vm6601, %v6583, %v4255
  %v6649 = vsel %vm6601, %v6584, %v4257
  %v6650 = vsel %vm6601, %v6585, %v4259
  %v6651 = vsel %vm6601, %v6586, %v4261
  %v6652 = vsel %vm6601, %v6587, %v4263
  %v6653 = vsel %vm6601, %v6588, %v4265
  %v6654 = vsel %vm6601, %v6589, %v4267
  %v6655 = vsel %vm6601, %v6590, %v4269
  %v6656 = vsel %vm6601, %v6591, %v4271
  %v6657 = vsel %vm6601, %v6592, %v4273
  %v6658 = vsel %vm6601, %v6593, %v4275
  %v6659 = vsel %vm6601, %v6594, %v4277
  %v6660 = vsel %vm6601, %v6595, %v4279
  %v6661 = vsel %vm6601, %v6596, %v4281
  %v6662 = vsel %vm6601, %v6597, %v4283
  %v6663 = vsel %vm6601, %v6598, %v4285
  %v6664 = vsel %vm6601, %v6599, %v4287
  %v6665 = vsel %vm6601, %v6600, %v4289
  %vm6666 = vcmask 220160
  %v6667 = vsel %vm6666, %v6602, %v4419
  %v6668 = vsel %vm6666, %v6603, %v4421
  %v6669 = vsel %vm6666, %v6604, %v4423
  %v6670 = vsel %vm6666, %v6605, %v4425
  %v6671 = vsel %vm6666, %v6606, %v4427
  %v6672 = vsel %vm6666, %v6607, %v4429
  %v6673 = vsel %vm6666, %v6608, %v4431
  %v6674 = vsel %vm6666, %v6609, %v4433
  %v6675 = vsel %vm6666, %v6610, %v4435
  %v6676 = vsel %vm6666, %v6611, %v4437
  %v6677 = vsel %vm6666, %v6612, %v4439
  %v6678 = vsel %vm6666, %v6613, %v4441
  %v6679 = vsel %vm6666, %v6614, %v4443
  %v6680 = vsel %vm6666, %v6615, %v4445
  %v6681 = vsel %vm6666, %v6616, %v4447
  %v6682 = vsel %vm6666, %v6617, %v4449
  %v6683 = vsel %vm6666, %v6618, %v4451
  %v6684 = vsel %vm6666, %v6619, %v4453
  %v6685 = vsel %vm6666, %v6620, %v4455
  %v6686 = vsel %vm6666, %v6621, %v4457
  %v6687 = vsel %vm6666, %v6622, %v4459
  %v6688 = vsel %vm6666, %v6623, %v4461
  %v6689 = vsel %vm6666, %v6624, %v4463
  %v6690 = vsel %vm6666, %v6625, %v4465
  %v6691 = vsel %vm6666, %v6626, %v4467
  %v6692 = vsel %vm6666, %v6627, %v4469
  %v6693 = vsel %vm6666, %v6628, %v4471
  %v6694 = vsel %vm6666, %v6629, %v4473
  %v6695 = vsel %vm6666, %v6630, %v4475
  %v6696 = vsel %vm6666, %v6631, %v4477
  %v6697 = vsel %vm6666, %v6632, %v4479
  %v6698 = vsel %vm6666, %v6633, %v4481
  %v6699 = vsel %vm6666, %v6634, %v4483
  %v6700 = vsel %vm6666, %v6635, %v4485
  %v6701 = vsel %vm6666, %v6636, %v4487
  %v6702 = vsel %vm6666, %v6637, %v4489
  %v6703 = vsel %vm6666, %v6638, %v4491
  %v6704 = vsel %vm6666, %v6639, %v4493
  %v6705 = vsel %vm6666, %v6640, %v4495
  %v6706 = vsel %vm6666, %v6641, %v4497
  %v6707 = vsel %vm6666, %v6642, %v4499
  %v6708 = vsel %vm6666, %v6643, %v4501
  %v6709 = vsel %vm6666, %v6644, %v4503
  %v6710 = vsel %vm6666, %v6645, %v4505
  %v6711 = vsel %vm6666, %v6646, %v4507
  %v6712 = vsel %vm6666, %v6647, %v4509
  %v6713 = vsel %vm6666, %v6648, %v4511
  %v6714 = vsel %vm6666, %v6649, %v4513
  %v6715 = vsel %vm6666, %v6650, %v4515
  %v6716 = vsel %vm6666, %v6651, %v4517
  %v6717 = vsel %vm6666, %v6652, %v4519
  %v6718 = vsel %vm6666, %v6653, %v4521
  %v6719 = vsel %vm6666, %v6654, %v4523
  %v6720 = vsel %vm6666, %v6655, %v4525
  %v6721 = vsel %vm6666, %v6656, %v4527
  %v6722 = vsel %vm6666, %v6657, %v4529
  %v6723 = vsel %vm6666, %v6658, %v4531
  %v6724 = vsel %vm6666, %v6659, %v4533
  %v6725 = vsel %vm6666, %v6660, %v4535
  %v6726 = vsel %vm6666, %v6661, %v4537
  %v6727 = vsel %vm6666, %v6662, %v4539
  %v6728 = vsel %vm6666, %v6663, %v4541
  %v6729 = vsel %vm6666, %v6664, %v4543
  %v6730 = vsel %vm6666, %v6665, %v4545
  %vm6731 = vcmask 244736
  %v6732 = vsel %vm6731, %v6667, %v4675
  %v6733 = vsel %vm6731, %v6668, %v4677
  %v6734 = vsel %vm6731, %v6669, %v4679
  %v6735 = vsel %vm6731, %v6670, %v4681
  %v6736 = vsel %vm6731, %v6671, %v4683
  %v6737 = vsel %vm6731, %v6672, %v4685
  %v6738 = vsel %vm6731, %v6673, %v4687
  %v6739 = vsel %vm6731, %v6674, %v4689
  %v6740 = vsel %vm6731, %v6675, %v4691
  %v6741 = vsel %vm6731, %v6676, %v4693
  %v6742 = vsel %vm6731, %v6677, %v4695
  %v6743 = vsel %vm6731, %v6678, %v4697
  %v6744 = vsel %vm6731, %v6679, %v4699
  %v6745 = vsel %vm6731, %v6680, %v4701
  %v6746 = vsel %vm6731, %v6681, %v4703
  %v6747 = vsel %vm6731, %v6682, %v4705
  %v6748 = vsel %vm6731, %v6683, %v4707
  %v6749 = vsel %vm6731, %v6684, %v4709
  %v6750 = vsel %vm6731, %v6685, %v4711
  %v6751 = vsel %vm6731, %v6686, %v4713
  %v6752 = vsel %vm6731, %v6687, %v4715
  %v6753 = vsel %vm6731, %v6688, %v4717
  %v6754 = vsel %vm6731, %v6689, %v4719
  %v6755 = vsel %vm6731, %v6690, %v4721
  %v6756 = vsel %vm6731, %v6691, %v4723
  %v6757 = vsel %vm6731, %v6692, %v4725
  %v6758 = vsel %vm6731, %v6693, %v4727
  %v6759 = vsel %vm6731, %v6694, %v4729
  %v6760 = vsel %vm6731, %v6695, %v4731
  %v6761 = vsel %vm6731, %v6696, %v4733
  %v6762 = vsel %vm6731, %v6697, %v4735
  %v6763 = vsel %vm6731, %v6698, %v4737
  %v6764 = vsel %vm6731, %v6699, %v4739
  %v6765 = vsel %vm6731, %v6700, %v4741
  %v6766 = vsel %vm6731, %v6701, %v4743
  %v6767 = vsel %vm6731, %v6702, %v4745
  %v6768 = vsel %vm6731, %v6703, %v4747
  %v6769 = vsel %vm6731, %v6704, %v4749
  %v6770 = vsel %vm6731, %v6705, %v4751
  %v6771 = vsel %vm6731, %v6706, %v4753
  %v6772 = vsel %vm6731, %v6707, %v4755
  %v6773 = vsel %vm6731, %v6708, %v4757
  %v6774 = vsel %vm6731, %v6709, %v4759
  %v6775 = vsel %vm6731, %v6710, %v4761
  %v6776 = vsel %vm6731, %v6711, %v4763
  %v6777 = vsel %vm6731, %v6712, %v4765
  %v6778 = vsel %vm6731, %v6713, %v4767
  %v6779 = vsel %vm6731, %v6714, %v4769
  %v6780 = vsel %vm6731, %v6715, %v4771
  %v6781 = vsel %vm6731, %v6716, %v4773
  %v6782 = vsel %vm6731, %v6717, %v4775
  %v6783 = vsel %vm6731, %v6718, %v4777
  %v6784 = vsel %vm6731, %v6719, %v4779
  %v6785 = vsel %vm6731, %v6720, %v4781
  %v6786 = vsel %vm6731, %v6721, %v4783
  %v6787 = vsel %vm6731, %v6722, %v4785
  %v6788 = vsel %vm6731, %v6723, %v4787
  %v6789 = vsel %vm6731, %v6724, %v4789
  %v6790 = vsel %vm6731, %v6725, %v4791
  %v6791 = vsel %vm6731, %v6726, %v4793
  %v6792 = vsel %vm6731, %v6727, %v4795
  %v6793 = vsel %vm6731, %v6728, %v4797
  %v6794 = vsel %vm6731, %v6729, %v4799
  %v6795 = vsel %vm6731, %v6730, %v4801
  %vm6796 = vcmask 269312
  %v6797 = vsel %vm6796, %v6732, %v4931
  %v6798 = vsel %vm6796, %v6733, %v4933
  %v6799 = vsel %vm6796, %v6734, %v4935
  %v6800 = vsel %vm6796, %v6735, %v4937
  %v6801 = vsel %vm6796, %v6736, %v4939
  %v6802 = vsel %vm6796, %v6737, %v4941
  %v6803 = vsel %vm6796, %v6738, %v4943
  %v6804 = vsel %vm6796, %v6739, %v4945
  %v6805 = vsel %vm6796, %v6740, %v4947
  %v6806 = vsel %vm6796, %v6741, %v4949
  %v6807 = vsel %vm6796, %v6742, %v4951
  %v6808 = vsel %vm6796, %v6743, %v4953
  %v6809 = vsel %vm6796, %v6744, %v4955
  %v6810 = vsel %vm6796, %v6745, %v4957
  %v6811 = vsel %vm6796, %v6746, %v4959
  %v6812 = vsel %vm6796, %v6747, %v4961
  %v6813 = vsel %vm6796, %v6748, %v4963
  %v6814 = vsel %vm6796, %v6749, %v4965
  %v6815 = vsel %vm6796, %v6750, %v4967
  %v6816 = vsel %vm6796, %v6751, %v4969
  %v6817 = vsel %vm6796, %v6752, %v4971
  %v6818 = vsel %vm6796, %v6753, %v4973
  %v6819 = vsel %vm6796, %v6754, %v4975
  %v6820 = vsel %vm6796, %v6755, %v4977
  %v6821 = vsel %vm6796, %v6756, %v4979
  %v6822 = vsel %vm6796, %v6757, %v4981
  %v6823 = vsel %vm6796, %v6758, %v4983
  %v6824 = vsel %vm6796, %v6759, %v4985
  %v6825 = vsel %vm6796, %v6760, %v4987
  %v6826 = vsel %vm6796, %v6761, %v4989
  %v6827 = vsel %vm6796, %v6762, %v4991
  %v6828 = vsel %vm6796, %v6763, %v4993
  %v6829 = vsel %vm6796, %v6764, %v4995
  %v6830 = vsel %vm6796, %v6765, %v4997
  %v6831 = vsel %vm6796, %v6766, %v4999
  %v6832 = vsel %vm6796, %v6767, %v5001
  %v6833 = vsel %vm6796, %v6768, %v5003
  %v6834 = vsel %vm6796, %v6769, %v5005
  %v6835 = vsel %vm6796, %v6770, %v5007
  %v6836 = vsel %vm6796, %v6771, %v5009
  %v6837 = vsel %vm6796, %v6772, %v5011
  %v6838 = vsel %vm6796, %v6773, %v5013
  %v6839 = vsel %vm6796, %v6774, %v5015
  %v6840 = vsel %vm6796, %v6775, %v5017
  %v6841 = vsel %vm6796, %v6776, %v5019
  %v6842 = vsel %vm6796, %v6777, %v5021
  %v6843 = vsel %vm6796, %v6778, %v5023
  %v6844 = vsel %vm6796, %v6779, %v5025
  %v6845 = vsel %vm6796, %v6780, %v5027
  %v6846 = vsel %vm6796, %v6781, %v5029
  %v6847 = vsel %vm6796, %v6782, %v5031
  %v6848 = vsel %vm6796, %v6783, %v5033
  %v6849 = vsel %vm6796, %v6784, %v5035
  %v6850 = vsel %vm6796, %v6785, %v5037
  %v6851 = vsel %vm6796, %v6786, %v5039
  %v6852 = vsel %vm6796, %v6787, %v5041
  %v6853 = vsel %vm6796, %v6788, %v5043
  %v6854 = vsel %vm6796, %v6789, %v5045
  %v6855 = vsel %vm6796, %v6790, %v5047
  %v6856 = vsel %vm6796, %v6791, %v5049
  %v6857 = vsel %vm6796, %v6792, %v5051
  %v6858 = vsel %vm6796, %v6793, %v5053
  %v6859 = vsel %vm6796, %v6794, %v5055
  %v6860 = vsel %vm6796, %v6795, %v5057
  %vm6861 = vcmask 293888
  %v6862 = vsel %vm6861, %v6797, %v5187
  %v6863 = vsel %vm6861, %v6798, %v5189
  %v6864 = vsel %vm6861, %v6799, %v5191
  %v6865 = vsel %vm6861, %v6800, %v5193
  %v6866 = vsel %vm6861, %v6801, %v5195
  %v6867 = vsel %vm6861, %v6802, %v5197
  %v6868 = vsel %vm6861, %v6803, %v5199
  %v6869 = vsel %vm6861, %v6804, %v5201
  %v6870 = vsel %vm6861, %v6805, %v5203
  %v6871 = vsel %vm6861, %v6806, %v5205
  %v6872 = vsel %vm6861, %v6807, %v5207
  %v6873 = vsel %vm6861, %v6808, %v5209
  %v6874 = vsel %vm6861, %v6809, %v5211
  %v6875 = vsel %vm6861, %v6810, %v5213
  %v6876 = vsel %vm6861, %v6811, %v5215
  %v6877 = vsel %vm6861, %v6812, %v5217
  %v6878 = vsel %vm6861, %v6813, %v5219
  %v6879 = vsel %vm6861, %v6814, %v5221
  %v6880 = vsel %vm6861, %v6815, %v5223
  %v6881 = vsel %vm6861, %v6816, %v5225
  %v6882 = vsel %vm6861, %v6817, %v5227
  %v6883 = vsel %vm6861, %v6818, %v5229
  %v6884 = vsel %vm6861, %v6819, %v5231
  %v6885 = vsel %vm6861, %v6820, %v5233
  %v6886 = vsel %vm6861, %v6821, %v5235
  %v6887 = vsel %vm6861, %v6822, %v5237
  %v6888 = vsel %vm6861, %v6823, %v5239
  %v6889 = vsel %vm6861, %v6824, %v5241
  %v6890 = vsel %vm6861, %v6825, %v5243
  %v6891 = vsel %vm6861, %v6826, %v5245
  %v6892 = vsel %vm6861, %v6827, %v5247
  %v6893 = vsel %vm6861, %v6828, %v5249
  %v6894 = vsel %vm6861, %v6829, %v5251
  %v6895 = vsel %vm6861, %v6830, %v5253
  %v6896 = vsel %vm6861, %v6831, %v5255
  %v6897 = vsel %vm6861, %v6832, %v5257
  %v6898 = vsel %vm6861, %v6833, %v5259
  %v6899 = vsel %vm6861, %v6834, %v5261
  %v6900 = vsel %vm6861, %v6835, %v5263
  %v6901 = vsel %vm6861, %v6836, %v5265
  %v6902 = vsel %vm6861, %v6837, %v5267
  %v6903 = vsel %vm6861, %v6838, %v5269
  %v6904 = vsel %vm6861, %v6839, %v5271
  %v6905 = vsel %vm6861, %v6840, %v5273
  %v6906 = vsel %vm6861, %v6841, %v5275
  %v6907 = vsel %vm6861, %v6842, %v5277
  %v6908 = vsel %vm6861, %v6843, %v5279
  %v6909 = vsel %vm6861, %v6844, %v5281
  %v6910 = vsel %vm6861, %v6845, %v5283
  %v6911 = vsel %vm6861, %v6846, %v5285
  %v6912 = vsel %vm6861, %v6847, %v5287
  %v6913 = vsel %vm6861, %v6848, %v5289
  %v6914 = vsel %vm6861, %v6849, %v5291
  %v6915 = vsel %vm6861, %v6850, %v5293
  %v6916 = vsel %vm6861, %v6851, %v5295
  %v6917 = vsel %vm6861, %v6852, %v5297
  %v6918 = vsel %vm6861, %v6853, %v5299
  %v6919 = vsel %vm6861, %v6854, %v5301
  %v6920 = vsel %vm6861, %v6855, %v5303
  %v6921 = vsel %vm6861, %v6856, %v5305
  %v6922 = vsel %vm6861, %v6857, %v5307
  %v6923 = vsel %vm6861, %v6858, %v5309
  %v6924 = vsel %vm6861, %v6859, %v5311
  %v6925 = vsel %vm6861, %v6860, %v5313
  %vm6926 = vcmask 318464
  %v6927 = vsel %vm6926, %v6862, %v5443
  %v6928 = vsel %vm6926, %v6863, %v5445
  %v6929 = vsel %vm6926, %v6864, %v5447
  %v6930 = vsel %vm6926, %v6865, %v5449
  %v6931 = vsel %vm6926, %v6866, %v5451
  %v6932 = vsel %vm6926, %v6867, %v5453
  %v6933 = vsel %vm6926, %v6868, %v5455
  %v6934 = vsel %vm6926, %v6869, %v5457
  %v6935 = vsel %vm6926, %v6870, %v5459
  %v6936 = vsel %vm6926, %v6871, %v5461
  %v6937 = vsel %vm6926, %v6872, %v5463
  %v6938 = vsel %vm6926, %v6873, %v5465
  %v6939 = vsel %vm6926, %v6874, %v5467
  %v6940 = vsel %vm6926, %v6875, %v5469
  %v6941 = vsel %vm6926, %v6876, %v5471
  %v6942 = vsel %vm6926, %v6877, %v5473
  %v6943 = vsel %vm6926, %v6878, %v5475
  %v6944 = vsel %vm6926, %v6879, %v5477
  %v6945 = vsel %vm6926, %v6880, %v5479
  %v6946 = vsel %vm6926, %v6881, %v5481
  %v6947 = vsel %vm6926, %v6882, %v5483
  %v6948 = vsel %vm6926, %v6883, %v5485
  %v6949 = vsel %vm6926, %v6884, %v5487
  %v6950 = vsel %vm6926, %v6885, %v5489
  %v6951 = vsel %vm6926, %v6886, %v5491
  %v6952 = vsel %vm6926, %v6887, %v5493
  %v6953 = vsel %vm6926, %v6888, %v5495
  %v6954 = vsel %vm6926, %v6889, %v5497
  %v6955 = vsel %vm6926, %v6890, %v5499
  %v6956 = vsel %vm6926, %v6891, %v5501
  %v6957 = vsel %vm6926, %v6892, %v5503
  %v6958 = vsel %vm6926, %v6893, %v5505
  %v6959 = vsel %vm6926, %v6894, %v5507
  %v6960 = vsel %vm6926, %v6895, %v5509
  %v6961 = vsel %vm6926, %v6896, %v5511
  %v6962 = vsel %vm6926, %v6897, %v5513
  %v6963 = vsel %vm6926, %v6898, %v5515
  %v6964 = vsel %vm6926, %v6899, %v5517
  %v6965 = vsel %vm6926, %v6900, %v5519
  %v6966 = vsel %vm6926, %v6901, %v5521
  %v6967 = vsel %vm6926, %v6902, %v5523
  %v6968 = vsel %vm6926, %v6903, %v5525
  %v6969 = vsel %vm6926, %v6904, %v5527
  %v6970 = vsel %vm6926, %v6905, %v5529
  %v6971 = vsel %vm6926, %v6906, %v5531
  %v6972 = vsel %vm6926, %v6907, %v5533
  %v6973 = vsel %vm6926, %v6908, %v5535
  %v6974 = vsel %vm6926, %v6909, %v5537
  %v6975 = vsel %vm6926, %v6910, %v5539
  %v6976 = vsel %vm6926, %v6911, %v5541
  %v6977 = vsel %vm6926, %v6912, %v5543
  %v6978 = vsel %vm6926, %v6913, %v5545
  %v6979 = vsel %vm6926, %v6914, %v5547
  %v6980 = vsel %vm6926, %v6915, %v5549
  %v6981 = vsel %vm6926, %v6916, %v5551
  %v6982 = vsel %vm6926, %v6917, %v5553
  %v6983 = vsel %vm6926, %v6918, %v5555
  %v6984 = vsel %vm6926, %v6919, %v5557
  %v6985 = vsel %vm6926, %v6920, %v5559
  %v6986 = vsel %vm6926, %v6921, %v5561
  %v6987 = vsel %vm6926, %v6922, %v5563
  %v6988 = vsel %vm6926, %v6923, %v5565
  %v6989 = vsel %vm6926, %v6924, %v5567
  %v6990 = vsel %vm6926, %v6925, %v5569
  %vm6991 = vcmask 343040
  %v6992 = vsel %vm6991, %v6927, %v5699
  %v6993 = vsel %vm6991, %v6928, %v5701
  %v6994 = vsel %vm6991, %v6929, %v5703
  %v6995 = vsel %vm6991, %v6930, %v5705
  %v6996 = vsel %vm6991, %v6931, %v5707
  %v6997 = vsel %vm6991, %v6932, %v5709
  %v6998 = vsel %vm6991, %v6933, %v5711
  %v6999 = vsel %vm6991, %v6934, %v5713
  %v7000 = vsel %vm6991, %v6935, %v5715
  %v7001 = vsel %vm6991, %v6936, %v5717
  %v7002 = vsel %vm6991, %v6937, %v5719
  %v7003 = vsel %vm6991, %v6938, %v5721
  %v7004 = vsel %vm6991, %v6939, %v5723
  %v7005 = vsel %vm6991, %v6940, %v5725
  %v7006 = vsel %vm6991, %v6941, %v5727
  %v7007 = vsel %vm6991, %v6942, %v5729
  %v7008 = vsel %vm6991, %v6943, %v5731
  %v7009 = vsel %vm6991, %v6944, %v5733
  %v7010 = vsel %vm6991, %v6945, %v5735
  %v7011 = vsel %vm6991, %v6946, %v5737
  %v7012 = vsel %vm6991, %v6947, %v5739
  %v7013 = vsel %vm6991, %v6948, %v5741
  %v7014 = vsel %vm6991, %v6949, %v5743
  %v7015 = vsel %vm6991, %v6950, %v5745
  %v7016 = vsel %vm6991, %v6951, %v5747
  %v7017 = vsel %vm6991, %v6952, %v5749
  %v7018 = vsel %vm6991, %v6953, %v5751
  %v7019 = vsel %vm6991, %v6954, %v5753
  %v7020 = vsel %vm6991, %v6955, %v5755
  %v7021 = vsel %vm6991, %v6956, %v5757
  %v7022 = vsel %vm6991, %v6957, %v5759
  %v7023 = vsel %vm6991, %v6958, %v5761
  %v7024 = vsel %vm6991, %v6959, %v5763
  %v7025 = vsel %vm6991, %v6960, %v5765
  %v7026 = vsel %vm6991, %v6961, %v5767
  %v7027 = vsel %vm6991, %v6962, %v5769
  %v7028 = vsel %vm6991, %v6963, %v5771
  %v7029 = vsel %vm6991, %v6964, %v5773
  %v7030 = vsel %vm6991, %v6965, %v5775
  %v7031 = vsel %vm6991, %v6966, %v5777
  %v7032 = vsel %vm6991, %v6967, %v5779
  %v7033 = vsel %vm6991, %v6968, %v5781
  %v7034 = vsel %vm6991, %v6969, %v5783
  %v7035 = vsel %vm6991, %v6970, %v5785
  %v7036 = vsel %vm6991, %v6971, %v5787
  %v7037 = vsel %vm6991, %v6972, %v5789
  %v7038 = vsel %vm6991, %v6973, %v5791
  %v7039 = vsel %vm6991, %v6974, %v5793
  %v7040 = vsel %vm6991, %v6975, %v5795
  %v7041 = vsel %vm6991, %v6976, %v5797
  %v7042 = vsel %vm6991, %v6977, %v5799
  %v7043 = vsel %vm6991, %v6978, %v5801
  %v7044 = vsel %vm6991, %v6979, %v5803
  %v7045 = vsel %vm6991, %v6980, %v5805
  %v7046 = vsel %vm6991, %v6981, %v5807
  %v7047 = vsel %vm6991, %v6982, %v5809
  %v7048 = vsel %vm6991, %v6983, %v5811
  %v7049 = vsel %vm6991, %v6984, %v5813
  %v7050 = vsel %vm6991, %v6985, %v5815
  %v7051 = vsel %vm6991, %v6986, %v5817
  %v7052 = vsel %vm6991, %v6987, %v5819
  %v7053 = vsel %vm6991, %v6988, %v5821
  %v7054 = vsel %vm6991, %v6989, %v5823
  %v7055 = vsel %vm6991, %v6990, %v5825
  %vm7056 = vcmask 367616
  %v7057 = vsel %vm7056, %v6992, %v5955
  %v7058 = vsel %vm7056, %v6993, %v5957
  %v7059 = vsel %vm7056, %v6994, %v5959
  %v7060 = vsel %vm7056, %v6995, %v5961
  %v7061 = vsel %vm7056, %v6996, %v5963
  %v7062 = vsel %vm7056, %v6997, %v5965
  %v7063 = vsel %vm7056, %v6998, %v5967
  %v7064 = vsel %vm7056, %v6999, %v5969
  %v7065 = vsel %vm7056, %v7000, %v5971
  %v7066 = vsel %vm7056, %v7001, %v5973
  %v7067 = vsel %vm7056, %v7002, %v5975
  %v7068 = vsel %vm7056, %v7003, %v5977
  %v7069 = vsel %vm7056, %v7004, %v5979
  %v7070 = vsel %vm7056, %v7005, %v5981
  %v7071 = vsel %vm7056, %v7006, %v5983
  %v7072 = vsel %vm7056, %v7007, %v5985
  %v7073 = vsel %vm7056, %v7008, %v5987
  %v7074 = vsel %vm7056, %v7009, %v5989
  %v7075 = vsel %vm7056, %v7010, %v5991
  %v7076 = vsel %vm7056, %v7011, %v5993
  %v7077 = vsel %vm7056, %v7012, %v5995
  %v7078 = vsel %vm7056, %v7013, %v5997
  %v7079 = vsel %vm7056, %v7014, %v5999
  %v7080 = vsel %vm7056, %v7015, %v6001
  %v7081 = vsel %vm7056, %v7016, %v6003
  %v7082 = vsel %vm7056, %v7017, %v6005
  %v7083 = vsel %vm7056, %v7018, %v6007
  %v7084 = vsel %vm7056, %v7019, %v6009
  %v7085 = vsel %vm7056, %v7020, %v6011
  %v7086 = vsel %vm7056, %v7021, %v6013
  %v7087 = vsel %vm7056, %v7022, %v6015
  %v7088 = vsel %vm7056, %v7023, %v6017
  %v7089 = vsel %vm7056, %v7024, %v6019
  %v7090 = vsel %vm7056, %v7025, %v6021
  %v7091 = vsel %vm7056, %v7026, %v6023
  %v7092 = vsel %vm7056, %v7027, %v6025
  %v7093 = vsel %vm7056, %v7028, %v6027
  %v7094 = vsel %vm7056, %v7029, %v6029
  %v7095 = vsel %vm7056, %v7030, %v6031
  %v7096 = vsel %vm7056, %v7031, %v6033
  %v7097 = vsel %vm7056, %v7032, %v6035
  %v7098 = vsel %vm7056, %v7033, %v6037
  %v7099 = vsel %vm7056, %v7034, %v6039
  %v7100 = vsel %vm7056, %v7035, %v6041
  %v7101 = vsel %vm7056, %v7036, %v6043
  %v7102 = vsel %vm7056, %v7037, %v6045
  %v7103 = vsel %vm7056, %v7038, %v6047
  %v7104 = vsel %vm7056, %v7039, %v6049
  %v7105 = vsel %vm7056, %v7040, %v6051
  %v7106 = vsel %vm7056, %v7041, %v6053
  %v7107 = vsel %vm7056, %v7042, %v6055
  %v7108 = vsel %vm7056, %v7043, %v6057
  %v7109 = vsel %vm7056, %v7044, %v6059
  %v7110 = vsel %vm7056, %v7045, %v6061
  %v7111 = vsel %vm7056, %v7046, %v6063
  %v7112 = vsel %vm7056, %v7047, %v6065
  %v7113 = vsel %vm7056, %v7048, %v6067
  %v7114 = vsel %vm7056, %v7049, %v6069
  %v7115 = vsel %vm7056, %v7050, %v6071
  %v7116 = vsel %vm7056, %v7051, %v6073
  %v7117 = vsel %vm7056, %v7052, %v6075
  %v7118 = vsel %vm7056, %v7053, %v6077
  %v7119 = vsel %vm7056, %v7054, %v6079
  %v7120 = vsel %vm7056, %v7055, %v6081
  %v7121 = vpack.c.bf16 %v7058, %v7057
  %v7122 = vpack.c.bf16 %v7060, %v7059
  %v7123 = vpack.c.bf16 %v7062, %v7061
  %v7124 = vpack.c.bf16 %v7064, %v7063
  %v7125 = vpack.c.bf16 %v7066, %v7065
  %v7126 = vpack.c.bf16 %v7068, %v7067
  %v7127 = vpack.c.bf16 %v7070, %v7069
  %v7128 = vpack.c.bf16 %v7072, %v7071
  %v7129 = vpack.c.bf16 %v7074, %v7073
  %v7130 = vpack.c.bf16 %v7076, %v7075
  %v7131 = vpack.c.bf16 %v7078, %v7077
  %v7132 = vpack.c.bf16 %v7080, %v7079
  %v7133 = vpack.c.bf16 %v7082, %v7081
  %v7134 = vpack.c.bf16 %v7084, %v7083
  %v7135 = vpack.c.bf16 %v7086, %v7085
  %v7136 = vpack.c.bf16 %v7088, %v7087
  %v7137 = vpack.c.bf16 %v7090, %v7089
  %v7138 = vpack.c.bf16 %v7092, %v7091
  %v7139 = vpack.c.bf16 %v7094, %v7093
  %v7140 = vpack.c.bf16 %v7096, %v7095
  %v7141 = vpack.c.bf16 %v7098, %v7097
  %v7142 = vpack.c.bf16 %v7100, %v7099
  %v7143 = vpack.c.bf16 %v7102, %v7101
  %v7144 = vpack.c.bf16 %v7104, %v7103
  %v7145 = vpack.c.bf16 %v7106, %v7105
  %v7146 = vpack.c.bf16 %v7108, %v7107
  %v7147 = vpack.c.bf16 %v7110, %v7109
  %v7148 = vpack.c.bf16 %v7112, %v7111
  %v7149 = vpack.c.bf16 %v7114, %v7113
  %v7150 = vpack.c.bf16 %v7116, %v7115
  %v7151 = vpack.c.bf16 %v7118, %v7117
  %v7152 = vpack.c.bf16 %v7120, %v7119
  %v7153 = vld [vmem:[%s1] sm:$0xf]
  %v7154 = vld [vmem:[%s1 + $0x4] sm:$0xf]
  %v7155 = vld [vmem:[%s1 + $0x8] sm:$0xf]
  %v7156 = vld [vmem:[%s1 + $0xc] sm:$0xf]
  %v7157 = vld [vmem:[%s1 + $0x10] sm:$0xf]
  %v7158 = vld [vmem:[%s1 + $0x14] sm:$0xf]
  %v7165 = vunpack.c.l.b16 %v7153
  %v7166 = vunpack.c.l.b16 %v7154
  %v7167 = vunpack.c.l.b16 %v7155
  %v7168 = vunpack.c.l.b16 %v7156
  %v7169 = vunpack.c.l.b16 %v7157
  %v7170 = vunpack.c.l.b16 %v7158
  %v7171 = vpack.c.b16 %v7166, %v7165
  %v7172 = vpack.c.b16 %v7168, %v7167
  %v7173 = vpack.c.b16 %v7170, %v7169
  %vm7177 = vcmask 392192
  %v7179 = vsel %vm7177, %v7121, 0
  %v7182 = vsel %vm7177, %v7122, 0
  %v7185 = vsel %vm7177, %v7123, 0
  %v7188 = vsel %vm7177, %v7124, 0
  %v7191 = vsel %vm7177, %v7125, 0
  %v7194 = vsel %vm7177, %v7126, 0
  %v7197 = vsel %vm7177, %v7127, 0
  %v7200 = vsel %vm7177, %v7128, 0
  %v7203 = vsel %vm7177, %v7129, 0
  %v7206 = vsel %vm7177, %v7130, 0
  %v7209 = vsel %vm7177, %v7131, 0
  %v7212 = vsel %vm7177, %v7132, 0
  %v7215 = vsel %vm7177, %v7133, 0
  %v7218 = vsel %vm7177, %v7134, 0
  %v7221 = vsel %vm7177, %v7135, 0
  %v7224 = vsel %vm7177, %v7136, 0
  %v7227 = vsel %vm7177, %v7137, 0
  %v7230 = vsel %vm7177, %v7138, 0
  %v7233 = vsel %vm7177, %v7139, 0
  %v7236 = vsel %vm7177, %v7140, 0
  %v7239 = vsel %vm7177, %v7141, 0
  %v7242 = vsel %vm7177, %v7142, 0
  %v7245 = vsel %vm7177, %v7143, 0
  %v7248 = vsel %vm7177, %v7144, 0
  %v7251 = vsel %vm7177, %v7145, 0
  %v7254 = vsel %vm7177, %v7146, 0
  %v7257 = vsel %vm7177, %v7147, 0
  %v7260 = vsel %vm7177, %v7148, 0
  %v7263 = vsel %vm7177, %v7149, 0
  %v7266 = vsel %vm7177, %v7150, 0
  %v7269 = vsel %vm7177, %v7151, 0
  %v7272 = vsel %vm7177, %v7152, 0
  %7274 = vmatprep.subr.bf16.mxu0 0
  %7275 = vmatpush1.bf16.msra.mxu0 %v7171
  %7276 = vmatprep.subr.bf16.mxu0 0
  %7277 = vmatpush1.bf16.msra.mxu0 %v7172
  %7278 = vmatprep.subr.bf16.mxu0 0
  %7279 = vmatpush1.bf16.msra.mxu0 %v7173
  %7280 = vmatprep.subr.bf16.mxu0 0
  %7281 = vmatpush1.bf16.msra.mxu0 0
  %7282 = vmatprep.subr.bf16.mxu0 0
  %7283 = vmatpush1.bf16.msra.mxu0 0
  %7284 = vmatprep.subr.bf16.mxu0 0
  %7285 = vmatpush1.bf16.msra.mxu0 0
  %7286 = vmatprep.subr.bf16.mxu0 0
  %7287 = vmatpush1.bf16.msra.mxu0 0
  %7288 = vmatprep.subr.bf16.mxu0 0
  %7289 = vmatpush1.bf16.msra.mxu0 0
  %7290 = vmatprep.subr.bf16.mxu0 0
  %7291 = vmatpush1.bf16.msra.mxu0 0
  %7292 = vmatprep.subr.bf16.mxu0 0
  %7293 = vmatpush1.bf16.msra.mxu0 0
  %7294 = vmatprep.subr.bf16.mxu0 0
  %7295 = vmatpush1.bf16.msra.mxu0 0
  %7296 = vmatprep.subr.bf16.mxu0 0
  %7297 = vmatpush1.bf16.msra.mxu0 0
  %7298 = vmatprep.subr.bf16.mxu0 0
  %7299 = vmatpush1.bf16.msra.mxu0 0
  %7300 = vmatprep.subr.bf16.mxu0 0
  %7301 = vmatpush1.bf16.msra.mxu0 0
  %7302 = vmatprep.subr.bf16.mxu0 0
  %7303 = vmatpush1.bf16.msra.mxu0 0
  %7304 = vmatprep.subr.bf16.mxu0 0
  %7305 = vmatpush1.bf16.msra.mxu0 0
  %7306 = vmatprep.mubr.bf16.mxu0 0
  %7307 = vmatmul.mubr.bf16.gmra.mrb[0].mxu0 %v7179
  %v7308 = vpop.f32.mrb[0].mxu0
  %v7309 = vadd.f32 0.0, %v7308
  %v7310 = vpop.f32.mrb[0].mxu0
  %v7311 = vpop.f32.mrb[0].mxu0
  %v7312 = vadd.f32 0.0, %v7311
  %v7313 = vpop.f32.mrb[0].mxu0
  %7314 = vmatprep.mubr.bf16.mxu0 0
  %7315 = vmatmul.mubr.bf16.gmra.mrb[0].mxu0 %v7182
  %v7316 = vpop.f32.mrb[0].mxu0
  %v7317 = vadd.f32 0.0, %v7316
  %v7318 = vpop.f32.mrb[0].mxu0
  %v7319 = vpop.f32.mrb[0].mxu0
  %v7320 = vadd.f32 0.0, %v7319
  %v7321 = vpop.f32.mrb[0].mxu0
  %7322 = vmatprep.mubr.bf16.mxu0 0
  %7323 = vmatmul.mubr.bf16.gmra.mrb[0].mxu0 %v7185
  %v7324 = vpop.f32.mrb[0].mxu0
  %v7325 = vadd.f32 0.0, %v7324
  %v7326 = vpop.f32.mrb[0].mxu0
  %v7327 = vpop.f32.mrb[0].mxu0
  %v7328 = vadd.f32 0.0, %v7327
  %v7329 = vpop.f32.mrb[0].mxu0
  %7330 = vmatprep.mubr.bf16.mxu0 0
  %7331 = vmatmul.mubr.bf16.gmra.mrb[0].mxu0 %v7188
  %v7332 = vpop.f32.mrb[0].mxu0
  %v7333 = vadd.f32 0.0, %v7332
  %v7334 = vpop.f32.mrb[0].mxu0
  %v7335 = vpop.f32.mrb[0].mxu0
  %v7336 = vadd.f32 0.0, %v7335
  %v7337 = vpop.f32.mrb[0].mxu0
  %7338 = vmatprep.mubr.bf16.mxu0 0
  %7339 = vmatmul.mubr.bf16.gmra.mrb[0].mxu0 %v7191
  %v7340 = vpop.f32.mrb[0].mxu0
  %v7341 = vadd.f32 0.0, %v7340
  %v7342 = vpop.f32.mrb[0].mxu0
  %v7343 = vpop.f32.mrb[0].mxu0
  %v7344 = vadd.f32 0.0, %v7343
  %v7345 = vpop.f32.mrb[0].mxu0
  %7346 = vmatprep.mubr.bf16.mxu0 0
  %7347 = vmatmul.mubr.bf16.gmra.mrb[0].mxu0 %v7194
  %v7348 = vpop.f32.mrb[0].mxu0
  %v7349 = vadd.f32 0.0, %v7348
  %v7350 = vpop.f32.mrb[0].mxu0
  %v7351 = vpop.f32.mrb[0].mxu0
  %v7352 = vadd.f32 0.0, %v7351
  %v7353 = vpop.f32.mrb[0].mxu0
  %7354 = vmatprep.mubr.bf16.mxu0 0
  %7355 = vmatmul.mubr.bf16.gmra.mrb[0].mxu0 %v7197
  %v7356 = vpop.f32.mrb[0].mxu0
  %v7357 = vadd.f32 0.0, %v7356
  %v7358 = vpop.f32.mrb[0].mxu0
  %v7359 = vpop.f32.mrb[0].mxu0
  %v7360 = vadd.f32 0.0, %v7359
  %v7361 = vpop.f32.mrb[0].mxu0
  %7362 = vmatprep.mubr.bf16.mxu0 0
  %7363 = vmatmul.mubr.bf16.gmra.mrb[0].mxu0 %v7200
  %v7364 = vpop.f32.mrb[0].mxu0
  %v7365 = vadd.f32 0.0, %v7364
  %v7366 = vpop.f32.mrb[0].mxu0
  %v7367 = vpop.f32.mrb[0].mxu0
  %v7368 = vadd.f32 0.0, %v7367
  %v7369 = vpop.f32.mrb[0].mxu0
  %7370 = vmatprep.mubr.bf16.mxu0 0
  %7371 = vmatmul.mubr.bf16.gmra.mrb[0].mxu0 %v7203
  %v7372 = vpop.f32.mrb[0].mxu0
  %v7373 = vadd.f32 0.0, %v7372
  %v7374 = vpop.f32.mrb[0].mxu0
  %v7375 = vpop.f32.mrb[0].mxu0
  %v7376 = vadd.f32 0.0, %v7375
  %v7377 = vpop.f32.mrb[0].mxu0
  %7378 = vmatprep.mubr.bf16.mxu0 0
  %7379 = vmatmul.mubr.bf16.gmra.mrb[0].mxu0 %v7206
  %v7380 = vpop.f32.mrb[0].mxu0
  %v7381 = vadd.f32 0.0, %v7380
  %v7382 = vpop.f32.mrb[0].mxu0
  %v7383 = vpop.f32.mrb[0].mxu0
  %v7384 = vadd.f32 0.0, %v7383
  %v7385 = vpop.f32.mrb[0].mxu0
  %7386 = vmatprep.mubr.bf16.mxu0 0
  %7387 = vmatmul.mubr.bf16.gmra.mrb[0].mxu0 %v7209
  %v7388 = vpop.f32.mrb[0].mxu0
  %v7389 = vadd.f32 0.0, %v7388
  %v7390 = vpop.f32.mrb[0].mxu0
  %v7391 = vpop.f32.mrb[0].mxu0
  %v7392 = vadd.f32 0.0, %v7391
  %v7393 = vpop.f32.mrb[0].mxu0
  %7394 = vmatprep.mubr.bf16.mxu0 0
  %7395 = vmatmul.mubr.bf16.gmra.mrb[0].mxu0 %v7212
  %v7396 = vpop.f32.mrb[0].mxu0
  %v7397 = vadd.f32 0.0, %v7396
  %v7398 = vpop.f32.mrb[0].mxu0
  %v7399 = vpop.f32.mrb[0].mxu0
  %v7400 = vadd.f32 0.0, %v7399
  %v7401 = vpop.f32.mrb[0].mxu0
  %7402 = vmatprep.mubr.bf16.mxu0 0
  %7403 = vmatmul.mubr.bf16.gmra.mrb[0].mxu0 %v7215
  %v7404 = vpop.f32.mrb[0].mxu0
  %v7405 = vadd.f32 0.0, %v7404
  %v7406 = vpop.f32.mrb[0].mxu0
  %v7407 = vpop.f32.mrb[0].mxu0
  %v7408 = vadd.f32 0.0, %v7407
  %v7409 = vpop.f32.mrb[0].mxu0
  %7410 = vmatprep.mubr.bf16.mxu0 0
  %7411 = vmatmul.mubr.bf16.gmra.mrb[0].mxu0 %v7218
  %v7412 = vpop.f32.mrb[0].mxu0
  %v7413 = vadd.f32 0.0, %v7412
  %v7414 = vpop.f32.mrb[0].mxu0
  %v7415 = vpop.f32.mrb[0].mxu0
  %v7416 = vadd.f32 0.0, %v7415
  %v7417 = vpop.f32.mrb[0].mxu0
  %7418 = vmatprep.mubr.bf16.mxu0 0
  %7419 = vmatmul.mubr.bf16.gmra.mrb[0].mxu0 %v7221
  %v7420 = vpop.f32.mrb[0].mxu0
  %v7421 = vadd.f32 0.0, %v7420
  %v7422 = vpop.f32.mrb[0].mxu0
  %v7423 = vpop.f32.mrb[0].mxu0
  %v7424 = vadd.f32 0.0, %v7423
  %v7425 = vpop.f32.mrb[0].mxu0
  %7426 = vmatprep.mubr.bf16.mxu0 0
  %7427 = vmatmul.mubr.bf16.gmra.mrb[0].mxu0 %v7224
  %v7428 = vpop.f32.mrb[0].mxu0
  %v7429 = vadd.f32 0.0, %v7428
  %v7430 = vpop.f32.mrb[0].mxu0
  %v7431 = vpop.f32.mrb[0].mxu0
  %v7432 = vadd.f32 0.0, %v7431
  %v7433 = vpop.f32.mrb[0].mxu0
  %7434 = vmatprep.mubr.bf16.mxu0 0
  %7435 = vmatmul.mubr.bf16.gmra.mrb[0].mxu0 %v7227
  %v7436 = vpop.f32.mrb[0].mxu0
  %v7437 = vadd.f32 0.0, %v7436
  %v7438 = vpop.f32.mrb[0].mxu0
  %v7439 = vpop.f32.mrb[0].mxu0
  %v7440 = vadd.f32 0.0, %v7439
  %v7441 = vpop.f32.mrb[0].mxu0
  %7442 = vmatprep.mubr.bf16.mxu0 0
  %7443 = vmatmul.mubr.bf16.gmra.mrb[0].mxu0 %v7230
  %v7444 = vpop.f32.mrb[0].mxu0
  %v7445 = vadd.f32 0.0, %v7444
  %v7446 = vpop.f32.mrb[0].mxu0
  %v7447 = vpop.f32.mrb[0].mxu0
  %v7448 = vadd.f32 0.0, %v7447
  %v7449 = vpop.f32.mrb[0].mxu0
  %7450 = vmatprep.mubr.bf16.mxu0 0
  %7451 = vmatmul.mubr.bf16.gmra.mrb[0].mxu0 %v7233
  %v7452 = vpop.f32.mrb[0].mxu0
  %v7453 = vadd.f32 0.0, %v7452
  %v7454 = vpop.f32.mrb[0].mxu0
  %v7455 = vpop.f32.mrb[0].mxu0
  %v7456 = vadd.f32 0.0, %v7455
  %v7457 = vpop.f32.mrb[0].mxu0
  %7458 = vmatprep.mubr.bf16.mxu0 0
  %7459 = vmatmul.mubr.bf16.gmra.mrb[0].mxu0 %v7236
  %v7460 = vpop.f32.mrb[0].mxu0
  %v7461 = vadd.f32 0.0, %v7460
  %v7462 = vpop.f32.mrb[0].mxu0
  %v7463 = vpop.f32.mrb[0].mxu0
  %v7464 = vadd.f32 0.0, %v7463
  %v7465 = vpop.f32.mrb[0].mxu0
  %7466 = vmatprep.mubr.bf16.mxu0 0
  %7467 = vmatmul.mubr.bf16.gmra.mrb[0].mxu0 %v7239
  %v7468 = vpop.f32.mrb[0].mxu0
  %v7469 = vadd.f32 0.0, %v7468
  %v7470 = vpop.f32.mrb[0].mxu0
  %v7471 = vpop.f32.mrb[0].mxu0
  %v7472 = vadd.f32 0.0, %v7471
  %v7473 = vpop.f32.mrb[0].mxu0
  %7474 = vmatprep.mubr.bf16.mxu0 0
  %7475 = vmatmul.mubr.bf16.gmra.mrb[0].mxu0 %v7242
  %v7476 = vpop.f32.mrb[0].mxu0
  %v7477 = vadd.f32 0.0, %v7476
  %v7478 = vpop.f32.mrb[0].mxu0
  %v7479 = vpop.f32.mrb[0].mxu0
  %v7480 = vadd.f32 0.0, %v7479
  %v7481 = vpop.f32.mrb[0].mxu0
  %7482 = vmatprep.mubr.bf16.mxu0 0
  %7483 = vmatmul.mubr.bf16.gmra.mrb[0].mxu0 %v7245
  %v7484 = vpop.f32.mrb[0].mxu0
  %v7485 = vadd.f32 0.0, %v7484
  %v7486 = vpop.f32.mrb[0].mxu0
  %v7487 = vpop.f32.mrb[0].mxu0
  %v7488 = vadd.f32 0.0, %v7487
  %v7489 = vpop.f32.mrb[0].mxu0
  %7490 = vmatprep.mubr.bf16.mxu0 0
  %7491 = vmatmul.mubr.bf16.gmra.mrb[0].mxu0 %v7248
  %v7492 = vpop.f32.mrb[0].mxu0
  %v7493 = vadd.f32 0.0, %v7492
  %v7494 = vpop.f32.mrb[0].mxu0
  %v7495 = vpop.f32.mrb[0].mxu0
  %v7496 = vadd.f32 0.0, %v7495
  %v7497 = vpop.f32.mrb[0].mxu0
  %7498 = vmatprep.mubr.bf16.mxu0 0
  %7499 = vmatmul.mubr.bf16.gmra.mrb[0].mxu0 %v7251
  %v7500 = vpop.f32.mrb[0].mxu0
  %v7501 = vadd.f32 0.0, %v7500
  %v7502 = vpop.f32.mrb[0].mxu0
  %v7503 = vpop.f32.mrb[0].mxu0
  %v7504 = vadd.f32 0.0, %v7503
  %v7505 = vpop.f32.mrb[0].mxu0
  %7506 = vmatprep.mubr.bf16.mxu0 0
  %7507 = vmatmul.mubr.bf16.gmra.mrb[0].mxu0 %v7254
  %v7508 = vpop.f32.mrb[0].mxu0
  %v7509 = vadd.f32 0.0, %v7508
  %v7510 = vpop.f32.mrb[0].mxu0
  %v7511 = vpop.f32.mrb[0].mxu0
  %v7512 = vadd.f32 0.0, %v7511
  %v7513 = vpop.f32.mrb[0].mxu0
  %7514 = vmatprep.mubr.bf16.mxu0 0
  %7515 = vmatmul.mubr.bf16.gmra.mrb[0].mxu0 %v7257
  %v7516 = vpop.f32.mrb[0].mxu0
  %v7517 = vadd.f32 0.0, %v7516
  %v7518 = vpop.f32.mrb[0].mxu0
  %v7519 = vpop.f32.mrb[0].mxu0
  %v7520 = vadd.f32 0.0, %v7519
  %v7521 = vpop.f32.mrb[0].mxu0
  %7522 = vmatprep.mubr.bf16.mxu0 0
  %7523 = vmatmul.mubr.bf16.gmra.mrb[0].mxu0 %v7260
  %v7524 = vpop.f32.mrb[0].mxu0
  %v7525 = vadd.f32 0.0, %v7524
  %v7526 = vpop.f32.mrb[0].mxu0
  %v7527 = vpop.f32.mrb[0].mxu0
  %v7528 = vadd.f32 0.0, %v7527
  %v7529 = vpop.f32.mrb[0].mxu0
  %7530 = vmatprep.mubr.bf16.mxu0 0
  %7531 = vmatmul.mubr.bf16.gmra.mrb[0].mxu0 %v7263
  %v7532 = vpop.f32.mrb[0].mxu0
  %v7533 = vadd.f32 0.0, %v7532
  %v7534 = vpop.f32.mrb[0].mxu0
  %v7535 = vpop.f32.mrb[0].mxu0
  %v7536 = vadd.f32 0.0, %v7535
  %v7537 = vpop.f32.mrb[0].mxu0
  %7538 = vmatprep.mubr.bf16.mxu0 0
  %7539 = vmatmul.mubr.bf16.gmra.mrb[0].mxu0 %v7266
  %v7540 = vpop.f32.mrb[0].mxu0
  %v7541 = vadd.f32 0.0, %v7540
  %v7542 = vpop.f32.mrb[0].mxu0
  %v7543 = vpop.f32.mrb[0].mxu0
  %v7544 = vadd.f32 0.0, %v7543
  %v7545 = vpop.f32.mrb[0].mxu0
  %7546 = vmatprep.mubr.bf16.mxu0 0
  %7547 = vmatmul.mubr.bf16.gmra.mrb[0].mxu0 %v7269
  %v7548 = vpop.f32.mrb[0].mxu0
  %v7549 = vadd.f32 0.0, %v7548
  %v7550 = vpop.f32.mrb[0].mxu0
  %v7551 = vpop.f32.mrb[0].mxu0
  %v7552 = vadd.f32 0.0, %v7551
  %v7553 = vpop.f32.mrb[0].mxu0
  %7554 = vmatprep.mubr.bf16.mxu0 0
  %7555 = vmatmul.mubr.bf16.gmra.mrb[0].mxu0 %v7272
  %v7556 = vpop.f32.mrb[0].mxu0
  %v7557 = vadd.f32 0.0, %v7556
  %v7558 = vpop.f32.mrb[0].mxu0
  %v7559 = vpop.f32.mrb[0].mxu0
  %v7560 = vadd.f32 0.0, %v7559
  %v7561 = vpop.f32.mrb[0].mxu0
  %7562 = vdwg.mxu0
  %v7563 = vmul.f32 %v7309, 0.2
  %v7564 = vmul.f32 %v7312, 0.2
  %v7565 = vmul.f32 %v7317, 0.2
  %v7566 = vmul.f32 %v7320, 0.2
  %v7567 = vmul.f32 %v7325, 0.2
  %v7568 = vmul.f32 %v7328, 0.2
  %v7569 = vmul.f32 %v7333, 0.2
  %v7570 = vmul.f32 %v7336, 0.2
  %v7571 = vmul.f32 %v7341, 0.2
  %v7572 = vmul.f32 %v7344, 0.2
  %v7573 = vmul.f32 %v7349, 0.2
  %v7574 = vmul.f32 %v7352, 0.2
  %v7575 = vmul.f32 %v7357, 0.2
  %v7576 = vmul.f32 %v7360, 0.2
  %v7577 = vmul.f32 %v7365, 0.2
  %v7578 = vmul.f32 %v7368, 0.2
  %v7579 = vmul.f32 %v7373, 0.2
  %v7580 = vmul.f32 %v7376, 0.2
  %v7581 = vmul.f32 %v7381, 0.2
  %v7582 = vmul.f32 %v7384, 0.2
  %v7583 = vmul.f32 %v7389, 0.2
  %v7584 = vmul.f32 %v7392, 0.2
  %v7585 = vmul.f32 %v7397, 0.2
  %v7586 = vmul.f32 %v7400, 0.2
  %v7587 = vmul.f32 %v7405, 0.2
  %v7588 = vmul.f32 %v7408, 0.2
  %v7589 = vmul.f32 %v7413, 0.2
  %v7590 = vmul.f32 %v7416, 0.2
  %v7591 = vmul.f32 %v7421, 0.2
  %v7592 = vmul.f32 %v7424, 0.2
  %v7593 = vmul.f32 %v7429, 0.2
  %v7594 = vmul.f32 %v7432, 0.2
  %v7595 = vmul.f32 %v7437, 0.2
  %v7596 = vmul.f32 %v7440, 0.2
  %v7597 = vmul.f32 %v7445, 0.2
  %v7598 = vmul.f32 %v7448, 0.2
  %v7599 = vmul.f32 %v7453, 0.2
  %v7600 = vmul.f32 %v7456, 0.2
  %v7601 = vmul.f32 %v7461, 0.2
  %v7602 = vmul.f32 %v7464, 0.2
  %v7603 = vmul.f32 %v7469, 0.2
  %v7604 = vmul.f32 %v7472, 0.2
  %v7605 = vmul.f32 %v7477, 0.2
  %v7606 = vmul.f32 %v7480, 0.2
  %v7607 = vmul.f32 %v7485, 0.2
  %v7608 = vmul.f32 %v7488, 0.2
  %v7609 = vmul.f32 %v7493, 0.2
  %v7610 = vmul.f32 %v7496, 0.2
  %v7611 = vmul.f32 %v7501, 0.2
  %v7612 = vmul.f32 %v7504, 0.2
  %v7613 = vmul.f32 %v7509, 0.2
  %v7614 = vmul.f32 %v7512, 0.2
  %v7615 = vmul.f32 %v7517, 0.2
  %v7616 = vmul.f32 %v7520, 0.2
  %v7617 = vmul.f32 %v7525, 0.2
  %v7618 = vmul.f32 %v7528, 0.2
  %v7619 = vmul.f32 %v7533, 0.2
  %v7620 = vmul.f32 %v7536, 0.2
  %v7621 = vmul.f32 %v7541, 0.2
  %v7622 = vmul.f32 %v7544, 0.2
  %v7623 = vmul.f32 %v7549, 0.2
  %v7624 = vmul.f32 %v7552, 0.2
  %v7625 = vmul.f32 %v7557, 0.2
  %v7626 = vmul.f32 %v7560, 0.2
  %v7627 = vmax.f32 %v7309, %v7563
  %v7628 = vmax.f32 %v7312, %v7564
  %v7629 = vmax.f32 %v7317, %v7565
  %v7630 = vmax.f32 %v7320, %v7566
  %v7631 = vmax.f32 %v7325, %v7567
  %v7632 = vmax.f32 %v7328, %v7568
  %v7633 = vmax.f32 %v7333, %v7569
  %v7634 = vmax.f32 %v7336, %v7570
  %v7635 = vmax.f32 %v7341, %v7571
  %v7636 = vmax.f32 %v7344, %v7572
  %v7637 = vmax.f32 %v7349, %v7573
  %v7638 = vmax.f32 %v7352, %v7574
  %v7639 = vmax.f32 %v7357, %v7575
  %v7640 = vmax.f32 %v7360, %v7576
  %v7641 = vmax.f32 %v7365, %v7577
  %v7642 = vmax.f32 %v7368, %v7578
  %v7643 = vmax.f32 %v7373, %v7579
  %v7644 = vmax.f32 %v7376, %v7580
  %v7645 = vmax.f32 %v7381, %v7581
  %v7646 = vmax.f32 %v7384, %v7582
  %v7647 = vmax.f32 %v7389, %v7583
  %v7648 = vmax.f32 %v7392, %v7584
  %v7649 = vmax.f32 %v7397, %v7585
  %v7650 = vmax.f32 %v7400, %v7586
  %v7651 = vmax.f32 %v7405, %v7587
  %v7652 = vmax.f32 %v7408, %v7588
  %v7653 = vmax.f32 %v7413, %v7589
  %v7654 = vmax.f32 %v7416, %v7590
  %v7655 = vmax.f32 %v7421, %v7591
  %v7656 = vmax.f32 %v7424, %v7592
  %v7657 = vmax.f32 %v7429, %v7593
  %v7658 = vmax.f32 %v7432, %v7594
  %v7659 = vmax.f32 %v7437, %v7595
  %v7660 = vmax.f32 %v7440, %v7596
  %v7661 = vmax.f32 %v7445, %v7597
  %v7662 = vmax.f32 %v7448, %v7598
  %v7663 = vmax.f32 %v7453, %v7599
  %v7664 = vmax.f32 %v7456, %v7600
  %v7665 = vmax.f32 %v7461, %v7601
  %v7666 = vmax.f32 %v7464, %v7602
  %v7667 = vmax.f32 %v7469, %v7603
  %v7668 = vmax.f32 %v7472, %v7604
  %v7669 = vmax.f32 %v7477, %v7605
  %v7670 = vmax.f32 %v7480, %v7606
  %v7671 = vmax.f32 %v7485, %v7607
  %v7672 = vmax.f32 %v7488, %v7608
  %v7673 = vmax.f32 %v7493, %v7609
  %v7674 = vmax.f32 %v7496, %v7610
  %v7675 = vmax.f32 %v7501, %v7611
  %v7676 = vmax.f32 %v7504, %v7612
  %v7677 = vmax.f32 %v7509, %v7613
  %v7678 = vmax.f32 %v7512, %v7614
  %v7679 = vmax.f32 %v7517, %v7615
  %v7680 = vmax.f32 %v7520, %v7616
  %v7681 = vmax.f32 %v7525, %v7617
  %v7682 = vmax.f32 %v7528, %v7618
  %v7683 = vmax.f32 %v7533, %v7619
  %v7684 = vmax.f32 %v7536, %v7620
  %v7685 = vmax.f32 %v7541, %v7621
  %v7686 = vmax.f32 %v7544, %v7622
  %v7687 = vmax.f32 %v7549, %v7623
  %v7688 = vmax.f32 %v7552, %v7624
  %v7689 = vmax.f32 %v7557, %v7625
  %v7690 = vmax.f32 %v7560, %v7626
  %s7691 = scalar_lea.vmem [#allocation2], 24
  %7692 = vst.msk [vmem:[%s7691 + $0x1] sm:$0xff] %vm42, %v7627
  %7693 = vst.msk [vmem:[%s7691 + $0x9] sm:$0xff] %vm42, %v7628
  %7694 = vst.msk [vmem:[%s7691 + $0x19] sm:$0xff] %vm42, %v7629
  %7695 = vst.msk [vmem:[%s7691 + $0x21] sm:$0xff] %vm42, %v7630
  %7696 = vst.msk [vmem:[%s7691 + $0x31] sm:$0xff] %vm42, %v7631
  %7697 = vst.msk [vmem:[%s7691 + $0x39] sm:$0xff] %vm42, %v7632
  %7698 = vst.msk [vmem:[%s7691 + $0x49] sm:$0xff] %vm42, %v7633
  %7699 = vst.msk [vmem:[%s7691 + $0x51] sm:$0xff] %vm42, %v7634
  %7700 = vst.msk [vmem:[%s7691 + $0x61] sm:$0xff] %vm42, %v7635
  %7701 = vst.msk [vmem:[%s7691 + $0x69] sm:$0xff] %vm42, %v7636
  %7702 = vst.msk [vmem:[%s7691 + $0x79] sm:$0xff] %vm42, %v7637
  %7703 = vst.msk [vmem:[%s7691 + $0x81] sm:$0xff] %vm42, %v7638
  %7704 = vst.msk [vmem:[%s7691 + $0x91] sm:$0xff] %vm42, %v7639
  %7705 = vst.msk [vmem:[%s7691 + $0x99] sm:$0xff] %vm42, %v7640
  %7706 = vst.msk [vmem:[%s7691 + $0xa9] sm:$0xff] %vm42, %v7641
  %7707 = vst.msk [vmem:[%s7691 + $0xb1] sm:$0xff] %vm42, %v7642
  %7708 = vst.msk [vmem:[%s7691 + $0xc1] sm:$0xff] %vm42, %v7643
  %7709 = vst.msk [vmem:[%s7691 + $0xc9] sm:$0xff] %vm42, %v7644
  %7710 = vst.msk [vmem:[%s7691 + $0xd9] sm:$0xff] %vm42, %v7645
  %7711 = vst.msk [vmem:[%s7691 + $0xe1] sm:$0xff] %vm42, %v7646
  %7712 = vst.msk [vmem:[%s7691 + $0xf1] sm:$0xff] %vm42, %v7647
  %7713 = vst.msk [vmem:[%s7691 + $0xf9] sm:$0xff] %vm42, %v7648
  %7714 = vst.msk [vmem:[%s7691 + $0x109] sm:$0xff] %vm42, %v7649
  %7715 = vst.msk [vmem:[%s7691 + $0x111] sm:$0xff] %vm42, %v7650
  %7716 = vst.msk [vmem:[%s7691 + $0x121] sm:$0xff] %vm42, %v7651
  %7717 = vst.msk [vmem:[%s7691 + $0x129] sm:$0xff] %vm42, %v7652
  %7718 = vst.msk [vmem:[%s7691 + $0x139] sm:$0xff] %vm42, %v7653
  %7719 = vst.msk [vmem:[%s7691 + $0x141] sm:$0xff] %vm42, %v7654
  %7720 = vst.msk [vmem:[%s7691 + $0x151] sm:$0xff] %vm42, %v7655
  %7721 = vst.msk [vmem:[%s7691 + $0x159] sm:$0xff] %vm42, %v7656
  %7722 = vst.msk [vmem:[%s7691 + $0x169] sm:$0xff] %vm42, %v7657
  %7723 = vst.msk [vmem:[%s7691 + $0x171] sm:$0xff] %vm42, %v7658
  %7724 = vst.msk [vmem:[%s7691 + $0x1b1] sm:$0xff] %vm42, %v7659
  %7725 = vst.msk [vmem:[%s7691 + $0x1b9] sm:$0xff] %vm42, %v7660
  %7726 = vst.msk [vmem:[%s7691 + $0x1c9] sm:$0xff] %vm42, %v7661
  %7727 = vst.msk [vmem:[%s7691 + $0x1d1] sm:$0xff] %vm42, %v7662
  %7728 = vst.msk [vmem:[%s7691 + $0x1e1] sm:$0xff] %vm42, %v7663
  %7729 = vst.msk [vmem:[%s7691 + $0x1e9] sm:$0xff] %vm42, %v7664
  %7730 = vst.msk [vmem:[%s7691 + $0x1f9] sm:$0xff] %vm42, %v7665
  %7731 = vst.msk [vmem:[%s7691 + $0x201] sm:$0xff] %vm42, %v7666
  %7732 = vst.msk [vmem:[%s7691 + $0x211] sm:$0xff] %vm42, %v7667
  %7733 = vst.msk [vmem:[%s7691 + $0x219] sm:$0xff] %vm42, %v7668
  %7734 = vst.msk [vmem:[%s7691 + $0x229] sm:$0xff] %vm42, %v7669
  %7735 = vst.msk [vmem:[%s7691 + $0x231] sm:$0xff] %vm42, %v7670
  %7736 = vst.msk [vmem:[%s7691 + $0x241] sm:$0xff] %vm42, %v7671
  %7737 = vst.msk [vmem:[%s7691 + $0x249] sm:$0xff] %vm42, %v7672
  %7738 = vst.msk [vmem:[%s7691 + $0x259] sm:$0xff] %vm42, %v7673
  %7739 = vst.msk [vmem:[%s7691 + $0x261] sm:$0xff] %vm42, %v7674
  %7740 = vst.msk [vmem:[%s7691 + $0x271] sm:$0xff] %vm42, %v7675
  %7741 = vst.msk [vmem:[%s7691 + $0x279] sm:$0xff] %vm42, %v7676
  %7742 = vst.msk [vmem:[%s7691 + $0x289] sm:$0xff] %vm42, %v7677
  %7743 = vst.msk [vmem:[%s7691 + $0x291] sm:$0xff] %vm42, %v7678
  %7744 = vst.msk [vmem:[%s7691 + $0x2a1] sm:$0xff] %vm42, %v7679
  %7745 = vst.msk [vmem:[%s7691 + $0x2a9] sm:$0xff] %vm42, %v7680
  %7746 = vst.msk [vmem:[%s7691 + $0x2b9] sm:$0xff] %vm42, %v7681
  %7747 = vst.msk [vmem:[%s7691 + $0x2c1] sm:$0xff] %vm42, %v7682
  %7748 = vst.msk [vmem:[%s7691 + $0x2d1] sm:$0xff] %vm42, %v7683
  %7749 = vst.msk [vmem:[%s7691 + $0x2d9] sm:$0xff] %vm42, %v7684
  %7750 = vst.msk [vmem:[%s7691 + $0x2e9] sm:$0xff] %vm42, %v7685
  %7751 = vst.msk [vmem:[%s7691 + $0x2f1] sm:$0xff] %vm42, %v7686
  %7752 = vst.msk [vmem:[%s7691 + $0x301] sm:$0xff] %vm42, %v7687
  %7753 = vst.msk [vmem:[%s7691 + $0x309] sm:$0xff] %vm42, %v7688
  %7754 = vst.msk [vmem:[%s7691 + $0x319] sm:$0xff] %vm42, %v7689
  %7755 = vst.msk [vmem:[%s7691 + $0x321] sm:$0xff] %vm42, %v7690
  %v7756 = vld [vmem:[#allocation2] ss:$2 sm:$0xff]
  %s7757 = scalar_lea.vmem [#allocation2], 48
  %v7758 = vld [vmem:[%s7757] ss:$2 sm:$0xff]
  %s7759 = scalar_lea.vmem [#allocation2], 96
  %v7760 = vld [vmem:[%s7759] ss:$2 sm:$0xff]
  %s7761 = scalar_lea.vmem [#allocation2], 144
  %v7762 = vld [vmem:[%s7761] ss:$2 sm:$0xff]
  %s7763 = scalar_lea.vmem [#allocation2], 192
  %v7764 = vld [vmem:[%s7763] ss:$2 sm:$0xff]
  %s7765 = scalar_lea.vmem [#allocation2], 240
  %v7766 = vld [vmem:[%s7765] ss:$2 sm:$0xff]
  %s7767 = scalar_lea.vmem [#allocation2], 288
  %v7768 = vld [vmem:[%s7767] ss:$2 sm:$0xff]
  %s7769 = scalar_lea.vmem [#allocation2], 336
  %v7770 = vld [vmem:[%s7769] ss:$2 sm:$0xff]
  %s7771 = scalar_lea.vmem [#allocation2], 432
  %v7772 = vld [vmem:[%s7771] ss:$2 sm:$0xff]
  %s7773 = scalar_lea.vmem [#allocation2], 480
  %v7774 = vld [vmem:[%s7773] ss:$2 sm:$0xff]
  %s7775 = scalar_lea.vmem [#allocation2], 528
  %v7776 = vld [vmem:[%s7775] ss:$2 sm:$0xff]
  %s7777 = scalar_lea.vmem [#allocation2], 576
  %v7778 = vld [vmem:[%s7777] ss:$2 sm:$0xff]
  %s7779 = scalar_lea.vmem [#allocation2], 624
  %v7780 = vld [vmem:[%s7779] ss:$2 sm:$0xff]
  %s7781 = scalar_lea.vmem [#allocation2], 672
  %v7782 = vld [vmem:[%s7781] ss:$2 sm:$0xff]
  %s7783 = scalar_lea.vmem [#allocation2], 720
  %v7784 = vld [vmem:[%s7783] ss:$2 sm:$0xff]
  %s7785 = scalar_lea.vmem [#allocation2], 768
  %v7786 = vld [vmem:[%s7785] ss:$2 sm:$0xff]
  %s7787 = scalar_lea.vmem [#allocation2], 1
  %v7788 = vld [vmem:[%s7787] ss:$2 sm:$0xff]
  %s7789 = scalar_lea.vmem [#allocation2], 49
  %v7790 = vld [vmem:[%s7789] ss:$2 sm:$0xff]
  %s7791 = scalar_lea.vmem [#allocation2], 97
  %v7792 = vld [vmem:[%s7791] ss:$2 sm:$0xff]
  %s7793 = scalar_lea.vmem [#allocation2], 145
  %v7794 = vld [vmem:[%s7793] ss:$2 sm:$0xff]
  %s7795 = scalar_lea.vmem [#allocation2], 193
  %v7796 = vld [vmem:[%s7795] ss:$2 sm:$0xff]
  %s7797 = scalar_lea.vmem [#allocation2], 241
  %v7798 = vld [vmem:[%s7797] ss:$2 sm:$0xff]
  %s7799 = scalar_lea.vmem [#allocation2], 289
  %v7800 = vld [vmem:[%s7799] ss:$2 sm:$0xff]
  %s7801 = scalar_lea.vmem [#allocation2], 337
  %v7802 = vld [vmem:[%s7801] ss:$2 sm:$0xff]
  %s7803 = scalar_lea.vmem [#allocation2], 433
  %v7804 = vld [vmem:[%s7803] ss:$2 sm:$0xff]
  %s7805 = scalar_lea.vmem [#allocation2], 481
  %v7806 = vld [vmem:[%s7805] ss:$2 sm:$0xff]
  %s7807 = scalar_lea.vmem [#allocation2], 529
  %v7808 = vld [vmem:[%s7807] ss:$2 sm:$0xff]
  %s7809 = scalar_lea.vmem [#allocation2], 577
  %v7810 = vld [vmem:[%s7809] ss:$2 sm:$0xff]
  %s7811 = scalar_lea.vmem [#allocation2], 625
  %v7812 = vld [vmem:[%s7811] ss:$2 sm:$0xff]
  %s7813 = scalar_lea.vmem [#allocation2], 673
  %v7814 = vld [vmem:[%s7813] ss:$2 sm:$0xff]
  %s7815 = scalar_lea.vmem [#allocation2], 721
  %v7816 = vld [vmem:[%s7815] ss:$2 sm:$0xff]
  %s7817 = scalar_lea.vmem [#allocation2], 769
  %v7818 = vld [vmem:[%s7817] ss:$2 sm:$0xff]
  %s7819 = scalar_lea.vmem [#allocation2], 2
  %v7820 = vld [vmem:[%s7819] ss:$2 sm:$0xff]
  %s7821 = scalar_lea.vmem [#allocation2], 50
  %v7822 = vld [vmem:[%s7821] ss:$2 sm:$0xff]
  %s7823 = scalar_lea.vmem [#allocation2], 98
  %v7824 = vld [vmem:[%s7823] ss:$2 sm:$0xff]
  %s7825 = scalar_lea.vmem [#allocation2], 146
  %v7826 = vld [vmem:[%s7825] ss:$2 sm:$0xff]
  %s7827 = scalar_lea.vmem [#allocation2], 194
  %v7828 = vld [vmem:[%s7827] ss:$2 sm:$0xff]
  %s7829 = scalar_lea.vmem [#allocation2], 242
  %v7830 = vld [vmem:[%s7829] ss:$2 sm:$0xff]
  %s7831 = scalar_lea.vmem [#allocation2], 290
  %v7832 = vld [vmem:[%s7831] ss:$2 sm:$0xff]
  %s7833 = scalar_lea.vmem [#allocation2], 338
  %v7834 = vld [vmem:[%s7833] ss:$2 sm:$0xff]
  %s7835 = scalar_lea.vmem [#allocation2], 434
  %v7836 = vld [vmem:[%s7835] ss:$2 sm:$0xff]
  %s7837 = scalar_lea.vmem [#allocation2], 482
  %v7838 = vld [vmem:[%s7837] ss:$2 sm:$0xff]
  %s7839 = scalar_lea.vmem [#allocation2], 530
  %v7840 = vld [vmem:[%s7839] ss:$2 sm:$0xff]
  %s7841 = scalar_lea.vmem [#allocation2], 578
  %v7842 = vld [vmem:[%s7841] ss:$2 sm:$0xff]
  %s7843 = scalar_lea.vmem [#allocation2], 626
  %v7844 = vld [vmem:[%s7843] ss:$2 sm:$0xff]
  %s7845 = scalar_lea.vmem [#allocation2], 674
  %v7846 = vld [vmem:[%s7845] ss:$2 sm:$0xff]
  %s7847 = scalar_lea.vmem [#allocation2], 722
  %v7848 = vld [vmem:[%s7847] ss:$2 sm:$0xff]
  %s7849 = scalar_lea.vmem [#allocation2], 770
  %v7850 = vld [vmem:[%s7849] ss:$2 sm:$0xff]
  %s7851 = scalar_lea.vmem [#allocation2], 3
  %v7852 = vld [vmem:[%s7851] ss:$2 sm:$0xff]
  %s7853 = scalar_lea.vmem [#allocation2], 51
  %v7854 = vld [vmem:[%s7853] ss:$2 sm:$0xff]
  %s7855 = scalar_lea.vmem [#allocation2], 99
  %v7856 = vld [vmem:[%s7855] ss:$2 sm:$0xff]
  %s7857 = scalar_lea.vmem [#allocation2], 147
  %v7858 = vld [vmem:[%s7857] ss:$2 sm:$0xff]
  %s7859 = scalar_lea.vmem [#allocation2], 195
  %v7860 = vld [vmem:[%s7859] ss:$2 sm:$0xff]
  %s7861 = scalar_lea.vmem [#allocation2], 243
  %v7862 = vld [vmem:[%s7861] ss:$2 sm:$0xff]
  %s7863 = scalar_lea.vmem [#allocation2], 291
  %v7864 = vld [vmem:[%s7863] ss:$2 sm:$0xff]
  %s7865 = scalar_lea.vmem [#allocation2], 339
  %v7866 = vld [vmem:[%s7865] ss:$2 sm:$0xff]
  %s7867 = scalar_lea.vmem [#allocation2], 435
  %v7868 = vld [vmem:[%s7867] ss:$2 sm:$0xff]
  %s7869 = scalar_lea.vmem [#allocation2], 483
  %v7870 = vld [vmem:[%s7869] ss:$2 sm:$0xff]
  %s7871 = scalar_lea.vmem [#allocation2], 531
  %v7872 = vld [vmem:[%s7871] ss:$2 sm:$0xff]
  %s7873 = scalar_lea.vmem [#allocation2], 579
  %v7874 = vld [vmem:[%s7873] ss:$2 sm:$0xff]
  %s7875 = scalar_lea.vmem [#allocation2], 627
  %v7876 = vld [vmem:[%s7875] ss:$2 sm:$0xff]
  %s7877 = scalar_lea.vmem [#allocation2], 675
  %v7878 = vld [vmem:[%s7877] ss:$2 sm:$0xff]
  %s7879 = scalar_lea.vmem [#allocation2], 723
  %v7880 = vld [vmem:[%s7879] ss:$2 sm:$0xff]
  %s7881 = scalar_lea.vmem [#allocation2], 771
  %v7882 = vld [vmem:[%s7881] ss:$2 sm:$0xff]
  %v7883 = vld [vmem:[%s7691] ss:$2 sm:$0xff]
  %s7884 = scalar_lea.vmem %s7691, 48 [#allocation2]
  %v7885 = vld [vmem:[%s7884] ss:$2 sm:$0xff]
  %s7886 = scalar_lea.vmem %s7691, 96 [#allocation2]
  %v7887 = vld [vmem:[%s7886] ss:$2 sm:$0xff]
  %s7888 = scalar_lea.vmem %s7691, 144 [#allocation2]
  %v7889 = vld [vmem:[%s7888] ss:$2 sm:$0xff]
  %s7890 = scalar_lea.vmem %s7691, 192 [#allocation2]
  %v7891 = vld [vmem:[%s7890] ss:$2 sm:$0xff]
  %s7892 = scalar_lea.vmem %s7691, 240 [#allocation2]
  %v7893 = vld [vmem:[%s7892] ss:$2 sm:$0xff]
  %s7894 = scalar_lea.vmem %s7691, 288 [#allocation2]
  %v7895 = vld [vmem:[%s7894] ss:$2 sm:$0xff]
  %s7896 = scalar_lea.vmem %s7691, 336 [#allocation2]
  %v7897 = vld [vmem:[%s7896] ss:$2 sm:$0xff]
  %s7898 = scalar_lea.vmem %s7691, 432 [#allocation2]
  %v7899 = vld [vmem:[%s7898] ss:$2 sm:$0xff]
  %s7900 = scalar_lea.vmem %s7691, 480 [#allocation2]
  %v7901 = vld [vmem:[%s7900] ss:$2 sm:$0xff]
  %s7902 = scalar_lea.vmem %s7691, 528 [#allocation2]
  %v7903 = vld [vmem:[%s7902] ss:$2 sm:$0xff]
  %s7904 = scalar_lea.vmem %s7691, 576 [#allocation2]
  %v7905 = vld [vmem:[%s7904] ss:$2 sm:$0xff]
  %s7906 = scalar_lea.vmem %s7691, 624 [#allocation2]
  %v7907 = vld [vmem:[%s7906] ss:$2 sm:$0xff]
  %s7908 = scalar_lea.vmem %s7691, 672 [#allocation2]
  %v7909 = vld [vmem:[%s7908] ss:$2 sm:$0xff]
  %s7910 = scalar_lea.vmem %s7691, 720 [#allocation2]
  %v7911 = vld [vmem:[%s7910] ss:$2 sm:$0xff]
  %s7912 = scalar_lea.vmem %s7691, 768 [#allocation2]
  %v7913 = vld [vmem:[%s7912] ss:$2 sm:$0xff]
  %s7914 = scalar_lea.vmem %s7691, 1 [#allocation2]
  %v7915 = vld [vmem:[%s7914] ss:$2 sm:$0xff]
  %s7916 = scalar_lea.vmem %s7691, 49 [#allocation2]
  %v7917 = vld [vmem:[%s7916] ss:$2 sm:$0xff]
  %s7918 = scalar_lea.vmem %s7691, 97 [#allocation2]
  %v7919 = vld [vmem:[%s7918] ss:$2 sm:$0xff]
  %s7920 = scalar_lea.vmem %s7691, 145 [#allocation2]
  %v7921 = vld [vmem:[%s7920] ss:$2 sm:$0xff]
  %s7922 = scalar_lea.vmem %s7691, 193 [#allocation2]
  %v7923 = vld [vmem:[%s7922] ss:$2 sm:$0xff]
  %s7924 = scalar_lea.vmem %s7691, 241 [#allocation2]
  %v7925 = vld [vmem:[%s7924] ss:$2 sm:$0xff]
  %s7926 = scalar_lea.vmem %s7691, 289 [#allocation2]
  %v7927 = vld [vmem:[%s7926] ss:$2 sm:$0xff]
  %s7928 = scalar_lea.vmem %s7691, 337 [#allocation2]
  %v7929 = vld [vmem:[%s7928] ss:$2 sm:$0xff]
  %s7930 = scalar_lea.vmem %s7691, 433 [#allocation2]
  %v7931 = vld [vmem:[%s7930] ss:$2 sm:$0xff]
  %s7932 = scalar_lea.vmem %s7691, 481 [#allocation2]
  %v7933 = vld [vmem:[%s7932] ss:$2 sm:$0xff]
  %s7934 = scalar_lea.vmem %s7691, 529 [#allocation2]
  %v7935 = vld [vmem:[%s7934] ss:$2 sm:$0xff]
  %s7936 = scalar_lea.vmem %s7691, 577 [#allocation2]
  %v7937 = vld [vmem:[%s7936] ss:$2 sm:$0xff]
  %s7938 = scalar_lea.vmem %s7691, 625 [#allocation2]
  %v7939 = vld [vmem:[%s7938] ss:$2 sm:$0xff]
  %s7940 = scalar_lea.vmem %s7691, 673 [#allocation2]
  %v7941 = vld [vmem:[%s7940] ss:$2 sm:$0xff]
  %s7942 = scalar_lea.vmem %s7691, 721 [#allocation2]
  %v7943 = vld [vmem:[%s7942] ss:$2 sm:$0xff]
  %s7944 = scalar_lea.vmem %s7691, 769 [#allocation2]
  %v7945 = vld [vmem:[%s7944] ss:$2 sm:$0xff]
  %s7946 = scalar_lea.vmem %s7691, 2 [#allocation2]
  %v7947 = vld [vmem:[%s7946] ss:$2 sm:$0xff]
  %s7948 = scalar_lea.vmem %s7691, 50 [#allocation2]
  %v7949 = vld [vmem:[%s7948] ss:$2 sm:$0xff]
  %s7950 = scalar_lea.vmem %s7691, 98 [#allocation2]
  %v7951 = vld [vmem:[%s7950] ss:$2 sm:$0xff]
  %s7952 = scalar_lea.vmem %s7691, 146 [#allocation2]
  %v7953 = vld [vmem:[%s7952] ss:$2 sm:$0xff]
  %s7954 = scalar_lea.vmem %s7691, 194 [#allocation2]
  %v7955 = vld [vmem:[%s7954] ss:$2 sm:$0xff]
  %s7956 = scalar_lea.vmem %s7691, 242 [#allocation2]
  %v7957 = vld [vmem:[%s7956] ss:$2 sm:$0xff]
  %s7958 = scalar_lea.vmem %s7691, 290 [#allocation2]
  %v7959 = vld [vmem:[%s7958] ss:$2 sm:$0xff]
  %s7960 = scalar_lea.vmem %s7691, 338 [#allocation2]
  %v7961 = vld [vmem:[%s7960] ss:$2 sm:$0xff]
  %s7962 = scalar_lea.vmem %s7691, 434 [#allocation2]
  %v7963 = vld [vmem:[%s7962] ss:$2 sm:$0xff]
  %s7964 = scalar_lea.vmem %s7691, 482 [#allocation2]
  %v7965 = vld [vmem:[%s7964] ss:$2 sm:$0xff]
  %s7966 = scalar_lea.vmem %s7691, 530 [#allocation2]
  %v7967 = vld [vmem:[%s7966] ss:$2 sm:$0xff]
  %s7968 = scalar_lea.vmem %s7691, 578 [#allocation2]
  %v7969 = vld [vmem:[%s7968] ss:$2 sm:$0xff]
  %s7970 = scalar_lea.vmem %s7691, 626 [#allocation2]
  %v7971 = vld [vmem:[%s7970] ss:$2 sm:$0xff]
  %s7972 = scalar_lea.vmem %s7691, 674 [#allocation2]
  %v7973 = vld [vmem:[%s7972] ss:$2 sm:$0xff]
  %s7974 = scalar_lea.vmem %s7691, 722 [#allocation2]
  %v7975 = vld [vmem:[%s7974] ss:$2 sm:$0xff]
  %s7976 = scalar_lea.vmem %s7691, 770 [#allocation2]
  %v7977 = vld [vmem:[%s7976] ss:$2 sm:$0xff]
  %s7978 = scalar_lea.vmem %s7691, 3 [#allocation2]
  %v7979 = vld [vmem:[%s7978] ss:$2 sm:$0xff]
  %s7980 = scalar_lea.vmem %s7691, 51 [#allocation2]
  %v7981 = vld [vmem:[%s7980] ss:$2 sm:$0xff]
  %s7982 = scalar_lea.vmem %s7691, 99 [#allocation2]
  %v7983 = vld [vmem:[%s7982] ss:$2 sm:$0xff]
  %s7984 = scalar_lea.vmem %s7691, 147 [#allocation2]
  %v7985 = vld [vmem:[%s7984] ss:$2 sm:$0xff]
  %s7986 = scalar_lea.vmem %s7691, 195 [#allocation2]
  %v7987 = vld [vmem:[%s7986] ss:$2 sm:$0xff]
  %s7988 = scalar_lea.vmem %s7691, 243 [#allocation2]
  %v7989 = vld [vmem:[%s7988] ss:$2 sm:$0xff]
  %s7990 = scalar_lea.vmem %s7691, 291 [#allocation2]
  %v7991 = vld [vmem:[%s7990] ss:$2 sm:$0xff]
  %s7992 = scalar_lea.vmem %s7691, 339 [#allocation2]
  %v7993 = vld [vmem:[%s7992] ss:$2 sm:$0xff]
  %s7994 = scalar_lea.vmem %s7691, 435 [#allocation2]
  %v7995 = vld [vmem:[%s7994] ss:$2 sm:$0xff]
  %s7996 = scalar_lea.vmem %s7691, 483 [#allocation2]
  %v7997 = vld [vmem:[%s7996] ss:$2 sm:$0xff]
  %s7998 = scalar_lea.vmem %s7691, 531 [#allocation2]
  %v7999 = vld [vmem:[%s7998] ss:$2 sm:$0xff]
  %s8000 = scalar_lea.vmem %s7691, 579 [#allocation2]
  %v8001 = vld [vmem:[%s8000] ss:$2 sm:$0xff]
  %s8002 = scalar_lea.vmem %s7691, 627 [#allocation2]
  %v8003 = vld [vmem:[%s8002] ss:$2 sm:$0xff]
  %s8004 = scalar_lea.vmem %s7691, 675 [#allocation2]
  %v8005 = vld [vmem:[%s8004] ss:$2 sm:$0xff]
  %s8006 = scalar_lea.vmem %s7691, 723 [#allocation2]
  %v8007 = vld [vmem:[%s8006] ss:$2 sm:$0xff]
  %s8008 = scalar_lea.vmem %s7691, 771 [#allocation2]
  %v8009 = vld [vmem:[%s8008] ss:$2 sm:$0xff]
  %s8010 = scalar_lea.vmem [#allocation2], 48
  %v8011 = vld [vmem:[%s8010] ss:$2 sm:$0xff]
  %s8012 = scalar_lea.vmem %s8010, 48 [#allocation2]
  %v8013 = vld [vmem:[%s8012] ss:$2 sm:$0xff]
  %s8014 = scalar_lea.vmem %s8010, 96 [#allocation2]
  %v8015 = vld [vmem:[%s8014] ss:$2 sm:$0xff]
  %s8016 = scalar_lea.vmem %s8010, 144 [#allocation2]
  %v8017 = vld [vmem:[%s8016] ss:$2 sm:$0xff]
  %s8018 = scalar_lea.vmem %s8010, 192 [#allocation2]
  %v8019 = vld [vmem:[%s8018] ss:$2 sm:$0xff]
  %s8020 = scalar_lea.vmem %s8010, 240 [#allocation2]
  %v8021 = vld [vmem:[%s8020] ss:$2 sm:$0xff]
  %s8022 = scalar_lea.vmem %s8010, 288 [#allocation2]
  %v8023 = vld [vmem:[%s8022] ss:$2 sm:$0xff]
  %s8024 = scalar_lea.vmem %s8010, 336 [#allocation2]
  %v8025 = vld [vmem:[%s8024] ss:$2 sm:$0xff]
  %s8026 = scalar_lea.vmem %s8010, 432 [#allocation2]
  %v8027 = vld [vmem:[%s8026] ss:$2 sm:$0xff]
  %s8028 = scalar_lea.vmem %s8010, 480 [#allocation2]
  %v8029 = vld [vmem:[%s8028] ss:$2 sm:$0xff]
  %s8030 = scalar_lea.vmem %s8010, 528 [#allocation2]
  %v8031 = vld [vmem:[%s8030] ss:$2 sm:$0xff]
  %s8032 = scalar_lea.vmem %s8010, 576 [#allocation2]
  %v8033 = vld [vmem:[%s8032] ss:$2 sm:$0xff]
  %s8034 = scalar_lea.vmem %s8010, 624 [#allocation2]
  %v8035 = vld [vmem:[%s8034] ss:$2 sm:$0xff]
  %s8036 = scalar_lea.vmem %s8010, 672 [#allocation2]
  %v8037 = vld [vmem:[%s8036] ss:$2 sm:$0xff]
  %s8038 = scalar_lea.vmem %s8010, 720 [#allocation2]
  %v8039 = vld [vmem:[%s8038] ss:$2 sm:$0xff]
  %s8040 = scalar_lea.vmem %s8010, 768 [#allocation2]
  %v8041 = vld [vmem:[%s8040] ss:$2 sm:$0xff]
  %s8042 = scalar_lea.vmem %s8010, 1 [#allocation2]
  %v8043 = vld [vmem:[%s8042] ss:$2 sm:$0xff]
  %s8044 = scalar_lea.vmem %s8010, 49 [#allocation2]
  %v8045 = vld [vmem:[%s8044] ss:$2 sm:$0xff]
  %s8046 = scalar_lea.vmem %s8010, 97 [#allocation2]
  %v8047 = vld [vmem:[%s8046] ss:$2 sm:$0xff]
  %s8048 = scalar_lea.vmem %s8010, 145 [#allocation2]
  %v8049 = vld [vmem:[%s8048] ss:$2 sm:$0xff]
  %s8050 = scalar_lea.vmem %s8010, 193 [#allocation2]
  %v8051 = vld [vmem:[%s8050] ss:$2 sm:$0xff]
  %s8052 = scalar_lea.vmem %s8010, 241 [#allocation2]
  %v8053 = vld [vmem:[%s8052] ss:$2 sm:$0xff]
  %s8054 = scalar_lea.vmem %s8010, 289 [#allocation2]
  %v8055 = vld [vmem:[%s8054] ss:$2 sm:$0xff]
  %s8056 = scalar_lea.vmem %s8010, 337 [#allocation2]
  %v8057 = vld [vmem:[%s8056] ss:$2 sm:$0xff]
  %s8058 = scalar_lea.vmem %s8010, 433 [#allocation2]
  %v8059 = vld [vmem:[%s8058] ss:$2 sm:$0xff]
  %s8060 = scalar_lea.vmem %s8010, 481 [#allocation2]
  %v8061 = vld [vmem:[%s8060] ss:$2 sm:$0xff]
  %s8062 = scalar_lea.vmem %s8010, 529 [#allocation2]
  %v8063 = vld [vmem:[%s8062] ss:$2 sm:$0xff]
  %s8064 = scalar_lea.vmem %s8010, 577 [#allocation2]
  %v8065 = vld [vmem:[%s8064] ss:$2 sm:$0xff]
  %s8066 = scalar_lea.vmem %s8010, 625 [#allocation2]
  %v8067 = vld [vmem:[%s8066] ss:$2 sm:$0xff]
  %s8068 = scalar_lea.vmem %s8010, 673 [#allocation2]
  %v8069 = vld [vmem:[%s8068] ss:$2 sm:$0xff]
  %s8070 = scalar_lea.vmem %s8010, 721 [#allocation2]
  %v8071 = vld [vmem:[%s8070] ss:$2 sm:$0xff]
  %s8072 = scalar_lea.vmem %s8010, 769 [#allocation2]
  %v8073 = vld [vmem:[%s8072] ss:$2 sm:$0xff]
  %s8074 = scalar_lea.vmem %s8010, 2 [#allocation2]
  %v8075 = vld [vmem:[%s8074] ss:$2 sm:$0xff]
  %s8076 = scalar_lea.vmem %s8010, 50 [#allocation2]
  %v8077 = vld [vmem:[%s8076] ss:$2 sm:$0xff]
  %s8078 = scalar_lea.vmem %s8010, 98 [#allocation2]
  %v8079 = vld [vmem:[%s8078] ss:$2 sm:$0xff]
  %s8080 = scalar_lea.vmem %s8010, 146 [#allocation2]
  %v8081 = vld [vmem:[%s8080] ss:$2 sm:$0xff]
  %s8082 = scalar_lea.vmem %s8010, 194 [#allocation2]
  %v8083 = vld [vmem:[%s8082] ss:$2 sm:$0xff]
  %s8084 = scalar_lea.vmem %s8010, 242 [#allocation2]
  %v8085 = vld [vmem:[%s8084] ss:$2 sm:$0xff]
  %s8086 = scalar_lea.vmem %s8010, 290 [#allocation2]
  %v8087 = vld [vmem:[%s8086] ss:$2 sm:$0xff]
  %s8088 = scalar_lea.vmem %s8010, 338 [#allocation2]
  %v8089 = vld [vmem:[%s8088] ss:$2 sm:$0xff]
  %s8090 = scalar_lea.vmem %s8010, 434 [#allocation2]
  %v8091 = vld [vmem:[%s8090] ss:$2 sm:$0xff]
  %s8092 = scalar_lea.vmem %s8010, 482 [#allocation2]
  %v8093 = vld [vmem:[%s8092] ss:$2 sm:$0xff]
  %s8094 = scalar_lea.vmem %s8010, 530 [#allocation2]
  %v8095 = vld [vmem:[%s8094] ss:$2 sm:$0xff]
  %s8096 = scalar_lea.vmem %s8010, 578 [#allocation2]
  %v8097 = vld [vmem:[%s8096] ss:$2 sm:$0xff]
  %s8098 = scalar_lea.vmem %s8010, 626 [#allocation2]
  %v8099 = vld [vmem:[%s8098] ss:$2 sm:$0xff]
  %s8100 = scalar_lea.vmem %s8010, 674 [#allocation2]
  %v8101 = vld [vmem:[%s8100] ss:$2 sm:$0xff]
  %s8102 = scalar_lea.vmem %s8010, 722 [#allocation2]
  %v8103 = vld [vmem:[%s8102] ss:$2 sm:$0xff]
  %s8104 = scalar_lea.vmem %s8010, 770 [#allocation2]
  %v8105 = vld [vmem:[%s8104] ss:$2 sm:$0xff]
  %s8106 = scalar_lea.vmem %s8010, 3 [#allocation2]
  %v8107 = vld [vmem:[%s8106] ss:$2 sm:$0xff]
  %s8108 = scalar_lea.vmem %s8010, 51 [#allocation2]
  %v8109 = vld [vmem:[%s8108] ss:$2 sm:$0xff]
  %s8110 = scalar_lea.vmem %s8010, 99 [#allocation2]
  %v8111 = vld [vmem:[%s8110] ss:$2 sm:$0xff]
  %s8112 = scalar_lea.vmem %s8010, 147 [#allocation2]
  %v8113 = vld [vmem:[%s8112] ss:$2 sm:$0xff]
  %s8114 = scalar_lea.vmem %s8010, 195 [#allocation2]
  %v8115 = vld [vmem:[%s8114] ss:$2 sm:$0xff]
  %s8116 = scalar_lea.vmem %s8010, 243 [#allocation2]
  %v8117 = vld [vmem:[%s8116] ss:$2 sm:$0xff]
  %s8118 = scalar_lea.vmem %s8010, 291 [#allocation2]
  %v8119 = vld [vmem:[%s8118] ss:$2 sm:$0xff]
  %s8120 = scalar_lea.vmem %s8010, 339 [#allocation2]
  %v8121 = vld [vmem:[%s8120] ss:$2 sm:$0xff]
  %s8122 = scalar_lea.vmem %s8010, 435 [#allocation2]
  %v8123 = vld [vmem:[%s8122] ss:$2 sm:$0xff]
  %s8124 = scalar_lea.vmem %s8010, 483 [#allocation2]
  %v8125 = vld [vmem:[%s8124] ss:$2 sm:$0xff]
  %s8126 = scalar_lea.vmem %s8010, 531 [#allocation2]
  %v8127 = vld [vmem:[%s8126] ss:$2 sm:$0xff]
  %s8128 = scalar_lea.vmem %s8010, 579 [#allocation2]
  %v8129 = vld [vmem:[%s8128] ss:$2 sm:$0xff]
  %s8130 = scalar_lea.vmem %s8010, 627 [#allocation2]
  %v8131 = vld [vmem:[%s8130] ss:$2 sm:$0xff]
  %s8132 = scalar_lea.vmem %s8010, 675 [#allocation2]
  %v8133 = vld [vmem:[%s8132] ss:$2 sm:$0xff]
  %s8134 = scalar_lea.vmem %s8010, 723 [#allocation2]
  %v8135 = vld [vmem:[%s8134] ss:$2 sm:$0xff]
  %s8136 = scalar_lea.vmem %s8010, 771 [#allocation2]
  %v8137 = vld [vmem:[%s8136] ss:$2 sm:$0xff]
  %s8138 = scalar_lea.vmem [#allocation2], 72
  %v8139 = vld [vmem:[%s8138] ss:$2 sm:$0xff]
  %s8140 = scalar_lea.vmem %s8138, 48 [#allocation2]
  %v8141 = vld [vmem:[%s8140] ss:$2 sm:$0xff]
  %s8142 = scalar_lea.vmem %s8138, 96 [#allocation2]
  %v8143 = vld [vmem:[%s8142] ss:$2 sm:$0xff]
  %s8144 = scalar_lea.vmem %s8138, 144 [#allocation2]
  %v8145 = vld [vmem:[%s8144] ss:$2 sm:$0xff]
  %s8146 = scalar_lea.vmem %s8138, 192 [#allocation2]
  %v8147 = vld [vmem:[%s8146] ss:$2 sm:$0xff]
  %s8148 = scalar_lea.vmem %s8138, 240 [#allocation2]
  %v8149 = vld [vmem:[%s8148] ss:$2 sm:$0xff]
  %s8150 = scalar_lea.vmem %s8138, 288 [#allocation2]
  %v8151 = vld [vmem:[%s8150] ss:$2 sm:$0xff]
  %s8152 = scalar_lea.vmem %s8138, 336 [#allocation2]
  %v8153 = vld [vmem:[%s8152] ss:$2 sm:$0xff]
  %s8154 = scalar_lea.vmem %s8138, 432 [#allocation2]
  %v8155 = vld [vmem:[%s8154] ss:$2 sm:$0xff]
  %s8156 = scalar_lea.vmem %s8138, 480 [#allocation2]
  %v8157 = vld [vmem:[%s8156] ss:$2 sm:$0xff]
  %s8158 = scalar_lea.vmem %s8138, 528 [#allocation2]
  %v8159 = vld [vmem:[%s8158] ss:$2 sm:$0xff]
  %s8160 = scalar_lea.vmem %s8138, 576 [#allocation2]
  %v8161 = vld [vmem:[%s8160] ss:$2 sm:$0xff]
  %s8162 = scalar_lea.vmem %s8138, 624 [#allocation2]
  %v8163 = vld [vmem:[%s8162] ss:$2 sm:$0xff]
  %s8164 = scalar_lea.vmem %s8138, 672 [#allocation2]
  %v8165 = vld [vmem:[%s8164] ss:$2 sm:$0xff]
  %s8166 = scalar_lea.vmem %s8138, 720 [#allocation2]
  %v8167 = vld [vmem:[%s8166] ss:$2 sm:$0xff]
  %s8168 = scalar_lea.vmem %s8138, 768 [#allocation2]
  %v8169 = vld [vmem:[%s8168] ss:$2 sm:$0xff]
  %s8170 = scalar_lea.vmem %s8138, 1 [#allocation2]
  %v8171 = vld [vmem:[%s8170] ss:$2 sm:$0xff]
  %s8172 = scalar_lea.vmem %s8138, 49 [#allocation2]
  %v8173 = vld [vmem:[%s8172] ss:$2 sm:$0xff]
  %s8174 = scalar_lea.vmem %s8138, 97 [#allocation2]
  %v8175 = vld [vmem:[%s8174] ss:$2 sm:$0xff]
  %s8176 = scalar_lea.vmem %s8138, 145 [#allocation2]
  %v8177 = vld [vmem:[%s8176] ss:$2 sm:$0xff]
  %s8178 = scalar_lea.vmem %s8138, 193 [#allocation2]
  %v8179 = vld [vmem:[%s8178] ss:$2 sm:$0xff]
  %s8180 = scalar_lea.vmem %s8138, 241 [#allocation2]
  %v8181 = vld [vmem:[%s8180] ss:$2 sm:$0xff]
  %s8182 = scalar_lea.vmem %s8138, 289 [#allocation2]
  %v8183 = vld [vmem:[%s8182] ss:$2 sm:$0xff]
  %s8184 = scalar_lea.vmem %s8138, 337 [#allocation2]
  %v8185 = vld [vmem:[%s8184] ss:$2 sm:$0xff]
  %s8186 = scalar_lea.vmem %s8138, 433 [#allocation2]
  %v8187 = vld [vmem:[%s8186] ss:$2 sm:$0xff]
  %s8188 = scalar_lea.vmem %s8138, 481 [#allocation2]
  %v8189 = vld [vmem:[%s8188] ss:$2 sm:$0xff]
  %s8190 = scalar_lea.vmem %s8138, 529 [#allocation2]
  %v8191 = vld [vmem:[%s8190] ss:$2 sm:$0xff]
  %s8192 = scalar_lea.vmem %s8138, 577 [#allocation2]
  %v8193 = vld [vmem:[%s8192] ss:$2 sm:$0xff]
  %s8194 = scalar_lea.vmem %s8138, 625 [#allocation2]
  %v8195 = vld [vmem:[%s8194] ss:$2 sm:$0xff]
  %s8196 = scalar_lea.vmem %s8138, 673 [#allocation2]
  %v8197 = vld [vmem:[%s8196] ss:$2 sm:$0xff]
  %s8198 = scalar_lea.vmem %s8138, 721 [#allocation2]
  %v8199 = vld [vmem:[%s8198] ss:$2 sm:$0xff]
  %s8200 = scalar_lea.vmem %s8138, 769 [#allocation2]
  %v8201 = vld [vmem:[%s8200] ss:$2 sm:$0xff]
  %s8202 = scalar_lea.vmem %s8138, 2 [#allocation2]
  %v8203 = vld [vmem:[%s8202] ss:$2 sm:$0xff]
  %s8204 = scalar_lea.vmem %s8138, 50 [#allocation2]
  %v8205 = vld [vmem:[%s8204] ss:$2 sm:$0xff]
  %s8206 = scalar_lea.vmem %s8138, 98 [#allocation2]
  %v8207 = vld [vmem:[%s8206] ss:$2 sm:$0xff]
  %s8208 = scalar_lea.vmem %s8138, 146 [#allocation2]
  %v8209 = vld [vmem:[%s8208] ss:$2 sm:$0xff]
  %s8210 = scalar_lea.vmem %s8138, 194 [#allocation2]
  %v8211 = vld [vmem:[%s8210] ss:$2 sm:$0xff]
  %s8212 = scalar_lea.vmem %s8138, 242 [#allocation2]
  %v8213 = vld [vmem:[%s8212] ss:$2 sm:$0xff]
  %s8214 = scalar_lea.vmem %s8138, 290 [#allocation2]
  %v8215 = vld [vmem:[%s8214] ss:$2 sm:$0xff]
  %s8216 = scalar_lea.vmem %s8138, 338 [#allocation2]
  %v8217 = vld [vmem:[%s8216] ss:$2 sm:$0xff]
  %s8218 = scalar_lea.vmem %s8138, 434 [#allocation2]
  %v8219 = vld [vmem:[%s8218] ss:$2 sm:$0xff]
  %s8220 = scalar_lea.vmem %s8138, 482 [#allocation2]
  %v8221 = vld [vmem:[%s8220] ss:$2 sm:$0xff]
  %s8222 = scalar_lea.vmem %s8138, 530 [#allocation2]
  %v8223 = vld [vmem:[%s8222] ss:$2 sm:$0xff]
  %s8224 = scalar_lea.vmem %s8138, 578 [#allocation2]
  %v8225 = vld [vmem:[%s8224] ss:$2 sm:$0xff]
  %s8226 = scalar_lea.vmem %s8138, 626 [#allocation2]
  %v8227 = vld [vmem:[%s8226] ss:$2 sm:$0xff]
  %s8228 = scalar_lea.vmem %s8138, 674 [#allocation2]
  %v8229 = vld [vmem:[%s8228] ss:$2 sm:$0xff]
  %s8230 = scalar_lea.vmem %s8138, 722 [#allocation2]
  %v8231 = vld [vmem:[%s8230] ss:$2 sm:$0xff]
  %s8232 = scalar_lea.vmem %s8138, 770 [#allocation2]
  %v8233 = vld [vmem:[%s8232] ss:$2 sm:$0xff]
  %s8234 = scalar_lea.vmem %s8138, 3 [#allocation2]
  %v8235 = vld [vmem:[%s8234] ss:$2 sm:$0xff]
  %s8236 = scalar_lea.vmem %s8138, 51 [#allocation2]
  %v8237 = vld [vmem:[%s8236] ss:$2 sm:$0xff]
  %s8238 = scalar_lea.vmem %s8138, 99 [#allocation2]
  %v8239 = vld [vmem:[%s8238] ss:$2 sm:$0xff]
  %s8240 = scalar_lea.vmem %s8138, 147 [#allocation2]
  %v8241 = vld [vmem:[%s8240] ss:$2 sm:$0xff]
  %s8242 = scalar_lea.vmem %s8138, 195 [#allocation2]
  %v8243 = vld [vmem:[%s8242] ss:$2 sm:$0xff]
  %s8244 = scalar_lea.vmem %s8138, 243 [#allocation2]
  %v8245 = vld [vmem:[%s8244] ss:$2 sm:$0xff]
  %s8246 = scalar_lea.vmem %s8138, 291 [#allocation2]
  %v8247 = vld [vmem:[%s8246] ss:$2 sm:$0xff]
  %s8248 = scalar_lea.vmem %s8138, 339 [#allocation2]
  %v8249 = vld [vmem:[%s8248] ss:$2 sm:$0xff]
  %s8250 = scalar_lea.vmem %s8138, 435 [#allocation2]
  %v8251 = vld [vmem:[%s8250] ss:$2 sm:$0xff]
  %s8252 = scalar_lea.vmem %s8138, 483 [#allocation2]
  %v8253 = vld [vmem:[%s8252] ss:$2 sm:$0xff]
  %s8254 = scalar_lea.vmem %s8138, 531 [#allocation2]
  %v8255 = vld [vmem:[%s8254] ss:$2 sm:$0xff]
  %s8256 = scalar_lea.vmem %s8138, 579 [#allocation2]
  %v8257 = vld [vmem:[%s8256] ss:$2 sm:$0xff]
  %s8258 = scalar_lea.vmem %s8138, 627 [#allocation2]
  %v8259 = vld [vmem:[%s8258] ss:$2 sm:$0xff]
  %s8260 = scalar_lea.vmem %s8138, 675 [#allocation2]
  %v8261 = vld [vmem:[%s8260] ss:$2 sm:$0xff]
  %s8262 = scalar_lea.vmem %s8138, 723 [#allocation2]
  %v8263 = vld [vmem:[%s8262] ss:$2 sm:$0xff]
  %s8264 = scalar_lea.vmem %s8138, 771 [#allocation2]
  %v8265 = vld [vmem:[%s8264] ss:$2 sm:$0xff]
  %8282 = vrot.lane.b32.xlu0 %v7788, 16
  %v8283 = vpop.permute.xlu0 %8282
  %8284 = vrot.lane.b32.xlu0 %v7790, 16
  %v8285 = vpop.permute.xlu0 %8284
  %8286 = vrot.lane.b32.xlu0 %v7792, 16
  %v8287 = vpop.permute.xlu0 %8286
  %8288 = vrot.lane.b32.xlu0 %v7794, 16
  %v8289 = vpop.permute.xlu0 %8288
  %8290 = vrot.lane.b32.xlu0 %v7796, 16
  %v8291 = vpop.permute.xlu0 %8290
  %8292 = vrot.lane.b32.xlu0 %v7798, 16
  %v8293 = vpop.permute.xlu0 %8292
  %8294 = vrot.lane.b32.xlu0 %v7800, 16
  %v8295 = vpop.permute.xlu0 %8294
  %8296 = vrot.lane.b32.xlu0 %v7802, 16
  %v8297 = vpop.permute.xlu0 %8296
  %8298 = vrot.lane.b32.xlu0 %v7804, 16
  %v8299 = vpop.permute.xlu0 %8298
  %8300 = vrot.lane.b32.xlu0 %v7806, 16
  %v8301 = vpop.permute.xlu0 %8300
  %8302 = vrot.lane.b32.xlu0 %v7808, 16
  %v8303 = vpop.permute.xlu0 %8302
  %8304 = vrot.lane.b32.xlu0 %v7810, 16
  %v8305 = vpop.permute.xlu0 %8304
  %8306 = vrot.lane.b32.xlu0 %v7812, 16
  %v8307 = vpop.permute.xlu0 %8306
  %8308 = vrot.lane.b32.xlu0 %v7814, 16
  %v8309 = vpop.permute.xlu0 %8308
  %8310 = vrot.lane.b32.xlu0 %v7816, 16
  %v8311 = vpop.permute.xlu0 %8310
  %8312 = vrot.lane.b32.xlu0 %v7818, 16
  %v8313 = vpop.permute.xlu0 %8312
  %8346 = vrot.lane.b32.xlu0 %v7820, 32
  %v8347 = vpop.permute.xlu0 %8346
  %8348 = vrot.lane.b32.xlu0 %v7822, 32
  %v8349 = vpop.permute.xlu0 %8348
  %8350 = vrot.lane.b32.xlu0 %v7824, 32
  %v8351 = vpop.permute.xlu0 %8350
  %8352 = vrot.lane.b32.xlu0 %v7826, 32
  %v8353 = vpop.permute.xlu0 %8352
  %8354 = vrot.lane.b32.xlu0 %v7828, 32
  %v8355 = vpop.permute.xlu0 %8354
  %8356 = vrot.lane.b32.xlu0 %v7830, 32
  %v8357 = vpop.permute.xlu0 %8356
  %8358 = vrot.lane.b32.xlu0 %v7832, 32
  %v8359 = vpop.permute.xlu0 %8358
  %8360 = vrot.lane.b32.xlu0 %v7834, 32
  %v8361 = vpop.permute.xlu0 %8360
  %8362 = vrot.lane.b32.xlu0 %v7836, 32
  %v8363 = vpop.permute.xlu0 %8362
  %8364 = vrot.lane.b32.xlu0 %v7838, 32
  %v8365 = vpop.permute.xlu0 %8364
  %8366 = vrot.lane.b32.xlu0 %v7840, 32
  %v8367 = vpop.permute.xlu0 %8366
  %8368 = vrot.lane.b32.xlu0 %v7842, 32
  %v8369 = vpop.permute.xlu0 %8368
  %8370 = vrot.lane.b32.xlu0 %v7844, 32
  %v8371 = vpop.permute.xlu0 %8370
  %8372 = vrot.lane.b32.xlu0 %v7846, 32
  %v8373 = vpop.permute.xlu0 %8372
  %8374 = vrot.lane.b32.xlu0 %v7848, 32
  %v8375 = vpop.permute.xlu0 %8374
  %8376 = vrot.lane.b32.xlu0 %v7850, 32
  %v8377 = vpop.permute.xlu0 %8376
  %8410 = vrot.lane.b32.xlu0 %v7852, 48
  %v8411 = vpop.permute.xlu0 %8410
  %8412 = vrot.lane.b32.xlu0 %v7854, 48
  %v8413 = vpop.permute.xlu0 %8412
  %8414 = vrot.lane.b32.xlu0 %v7856, 48
  %v8415 = vpop.permute.xlu0 %8414
  %8416 = vrot.lane.b32.xlu0 %v7858, 48
  %v8417 = vpop.permute.xlu0 %8416
  %8418 = vrot.lane.b32.xlu0 %v7860, 48
  %v8419 = vpop.permute.xlu0 %8418
  %8420 = vrot.lane.b32.xlu0 %v7862, 48
  %v8421 = vpop.permute.xlu0 %8420
  %8422 = vrot.lane.b32.xlu0 %v7864, 48
  %v8423 = vpop.permute.xlu0 %8422
  %8424 = vrot.lane.b32.xlu0 %v7866, 48
  %v8425 = vpop.permute.xlu0 %8424
  %8426 = vrot.lane.b32.xlu0 %v7868, 48
  %v8427 = vpop.permute.xlu0 %8426
  %8428 = vrot.lane.b32.xlu0 %v7870, 48
  %v8429 = vpop.permute.xlu0 %8428
  %8430 = vrot.lane.b32.xlu0 %v7872, 48
  %v8431 = vpop.permute.xlu0 %8430
  %8432 = vrot.lane.b32.xlu0 %v7874, 48
  %v8433 = vpop.permute.xlu0 %8432
  %8434 = vrot.lane.b32.xlu0 %v7876, 48
  %v8435 = vpop.permute.xlu0 %8434
  %8436 = vrot.lane.b32.xlu0 %v7878, 48
  %v8437 = vpop.permute.xlu0 %8436
  %8438 = vrot.lane.b32.xlu0 %v7880, 48
  %v8439 = vpop.permute.xlu0 %8438
  %8440 = vrot.lane.b32.xlu0 %v7882, 48
  %v8441 = vpop.permute.xlu0 %8440
  %8474 = vrot.lane.b32.xlu0 %v7883, 64
  %v8475 = vpop.permute.xlu0 %8474
  %8476 = vrot.lane.b32.xlu0 %v7885, 64
  %v8477 = vpop.permute.xlu0 %8476
  %8478 = vrot.lane.b32.xlu0 %v7887, 64
  %v8479 = vpop.permute.xlu0 %8478
  %8480 = vrot.lane.b32.xlu0 %v7889, 64
  %v8481 = vpop.permute.xlu0 %8480
  %8482 = vrot.lane.b32.xlu0 %v7891, 64
  %v8483 = vpop.permute.xlu0 %8482
  %8484 = vrot.lane.b32.xlu0 %v7893, 64
  %v8485 = vpop.permute.xlu0 %8484
  %8486 = vrot.lane.b32.xlu0 %v7895, 64
  %v8487 = vpop.permute.xlu0 %8486
  %8488 = vrot.lane.b32.xlu0 %v7897, 64
  %v8489 = vpop.permute.xlu0 %8488
  %8490 = vrot.lane.b32.xlu0 %v7899, 64
  %v8491 = vpop.permute.xlu0 %8490
  %8492 = vrot.lane.b32.xlu0 %v7901, 64
  %v8493 = vpop.permute.xlu0 %8492
  %8494 = vrot.lane.b32.xlu0 %v7903, 64
  %v8495 = vpop.permute.xlu0 %8494
  %8496 = vrot.lane.b32.xlu0 %v7905, 64
  %v8497 = vpop.permute.xlu0 %8496
  %8498 = vrot.lane.b32.xlu0 %v7907, 64
  %v8499 = vpop.permute.xlu0 %8498
  %8500 = vrot.lane.b32.xlu0 %v7909, 64
  %v8501 = vpop.permute.xlu0 %8500
  %8502 = vrot.lane.b32.xlu0 %v7911, 64
  %v8503 = vpop.permute.xlu0 %8502
  %8504 = vrot.lane.b32.xlu0 %v7913, 64
  %v8505 = vpop.permute.xlu0 %8504
  %8538 = vrot.lane.b32.xlu0 %v7915, 80
  %v8539 = vpop.permute.xlu0 %8538
  %8540 = vrot.lane.b32.xlu0 %v7917, 80
  %v8541 = vpop.permute.xlu0 %8540
  %8542 = vrot.lane.b32.xlu0 %v7919, 80
  %v8543 = vpop.permute.xlu0 %8542
  %8544 = vrot.lane.b32.xlu0 %v7921, 80
  %v8545 = vpop.permute.xlu0 %8544
  %8546 = vrot.lane.b32.xlu0 %v7923, 80
  %v8547 = vpop.permute.xlu0 %8546
  %8548 = vrot.lane.b32.xlu0 %v7925, 80
  %v8549 = vpop.permute.xlu0 %8548
  %8550 = vrot.lane.b32.xlu0 %v7927, 80
  %v8551 = vpop.permute.xlu0 %8550
  %8552 = vrot.lane.b32.xlu0 %v7929, 80
  %v8553 = vpop.permute.xlu0 %8552
  %8554 = vrot.lane.b32.xlu0 %v7931, 80
  %v8555 = vpop.permute.xlu0 %8554
  %8556 = vrot.lane.b32.xlu0 %v7933, 80
  %v8557 = vpop.permute.xlu0 %8556
  %8558 = vrot.lane.b32.xlu0 %v7935, 80
  %v8559 = vpop.permute.xlu0 %8558
  %8560 = vrot.lane.b32.xlu0 %v7937, 80
  %v8561 = vpop.permute.xlu0 %8560
  %8562 = vrot.lane.b32.xlu0 %v7939, 80
  %v8563 = vpop.permute.xlu0 %8562
  %8564 = vrot.lane.b32.xlu0 %v7941, 80
  %v8565 = vpop.permute.xlu0 %8564
  %8566 = vrot.lane.b32.xlu0 %v7943, 80
  %v8567 = vpop.permute.xlu0 %8566
  %8568 = vrot.lane.b32.xlu0 %v7945, 80
  %v8569 = vpop.permute.xlu0 %8568
  %8602 = vrot.lane.b32.xlu0 %v7947, 96
  %v8603 = vpop.permute.xlu0 %8602
  %8604 = vrot.lane.b32.xlu0 %v7949, 96
  %v8605 = vpop.permute.xlu0 %8604
  %8606 = vrot.lane.b32.xlu0 %v7951, 96
  %v8607 = vpop.permute.xlu0 %8606
  %8608 = vrot.lane.b32.xlu0 %v7953, 96
  %v8609 = vpop.permute.xlu0 %8608
  %8610 = vrot.lane.b32.xlu0 %v7955, 96
  %v8611 = vpop.permute.xlu0 %8610
  %8612 = vrot.lane.b32.xlu0 %v7957, 96
  %v8613 = vpop.permute.xlu0 %8612
  %8614 = vrot.lane.b32.xlu0 %v7959, 96
  %v8615 = vpop.permute.xlu0 %8614
  %8616 = vrot.lane.b32.xlu0 %v7961, 96
  %v8617 = vpop.permute.xlu0 %8616
  %8618 = vrot.lane.b32.xlu0 %v7963, 96
  %v8619 = vpop.permute.xlu0 %8618
  %8620 = vrot.lane.b32.xlu0 %v7965, 96
  %v8621 = vpop.permute.xlu0 %8620
  %8622 = vrot.lane.b32.xlu0 %v7967, 96
  %v8623 = vpop.permute.xlu0 %8622
  %8624 = vrot.lane.b32.xlu0 %v7969, 96
  %v8625 = vpop.permute.xlu0 %8624
  %8626 = vrot.lane.b32.xlu0 %v7971, 96
  %v8627 = vpop.permute.xlu0 %8626
  %8628 = vrot.lane.b32.xlu0 %v7973, 96
  %v8629 = vpop.permute.xlu0 %8628
  %8630 = vrot.lane.b32.xlu0 %v7975, 96
  %v8631 = vpop.permute.xlu0 %8630
  %8632 = vrot.lane.b32.xlu0 %v7977, 96
  %v8633 = vpop.permute.xlu0 %8632
  %8666 = vrot.lane.b32.xlu0 %v7979, 112
  %v8667 = vpop.permute.xlu0 %8666
  %8668 = vrot.lane.b32.xlu0 %v7981, 112
  %v8669 = vpop.permute.xlu0 %8668
  %8670 = vrot.lane.b32.xlu0 %v7983, 112
  %v8671 = vpop.permute.xlu0 %8670
  %8672 = vrot.lane.b32.xlu0 %v7985, 112
  %v8673 = vpop.permute.xlu0 %8672
  %8674 = vrot.lane.b32.xlu0 %v7987, 112
  %v8675 = vpop.permute.xlu0 %8674
  %8676 = vrot.lane.b32.xlu0 %v7989, 112
  %v8677 = vpop.permute.xlu0 %8676
  %8678 = vrot.lane.b32.xlu0 %v7991, 112
  %v8679 = vpop.permute.xlu0 %8678
  %8680 = vrot.lane.b32.xlu0 %v7993, 112
  %v8681 = vpop.permute.xlu0 %8680
  %8682 = vrot.lane.b32.xlu0 %v7995, 112
  %v8683 = vpop.permute.xlu0 %8682
  %8684 = vrot.lane.b32.xlu0 %v7997, 112
  %v8685 = vpop.permute.xlu0 %8684
  %8686 = vrot.lane.b32.xlu0 %v7999, 112
  %v8687 = vpop.permute.xlu0 %8686
  %8688 = vrot.lane.b32.xlu0 %v8001, 112
  %v8689 = vpop.permute.xlu0 %8688
  %8690 = vrot.lane.b32.xlu0 %v8003, 112
  %v8691 = vpop.permute.xlu0 %8690
  %8692 = vrot.lane.b32.xlu0 %v8005, 112
  %v8693 = vpop.permute.xlu0 %8692
  %8694 = vrot.lane.b32.xlu0 %v8007, 112
  %v8695 = vpop.permute.xlu0 %8694
  %8696 = vrot.lane.b32.xlu0 %v8009, 112
  %v8697 = vpop.permute.xlu0 %8696
  %8730 = vrot.lane.b32.xlu0 %v8043, 16
  %v8731 = vpop.permute.xlu0 %8730
  %8732 = vrot.lane.b32.xlu0 %v8045, 16
  %v8733 = vpop.permute.xlu0 %8732
  %8734 = vrot.lane.b32.xlu0 %v8047, 16
  %v8735 = vpop.permute.xlu0 %8734
  %8736 = vrot.lane.b32.xlu0 %v8049, 16
  %v8737 = vpop.permute.xlu0 %8736
  %8738 = vrot.lane.b32.xlu0 %v8051, 16
  %v8739 = vpop.permute.xlu0 %8738
  %8740 = vrot.lane.b32.xlu0 %v8053, 16
  %v8741 = vpop.permute.xlu0 %8740
  %8742 = vrot.lane.b32.xlu0 %v8055, 16
  %v8743 = vpop.permute.xlu0 %8742
  %8744 = vrot.lane.b32.xlu0 %v8057, 16
  %v8745 = vpop.permute.xlu0 %8744
  %8746 = vrot.lane.b32.xlu0 %v8059, 16
  %v8747 = vpop.permute.xlu0 %8746
  %8748 = vrot.lane.b32.xlu0 %v8061, 16
  %v8749 = vpop.permute.xlu0 %8748
  %8750 = vrot.lane.b32.xlu0 %v8063, 16
  %v8751 = vpop.permute.xlu0 %8750
  %8752 = vrot.lane.b32.xlu0 %v8065, 16
  %v8753 = vpop.permute.xlu0 %8752
  %8754 = vrot.lane.b32.xlu0 %v8067, 16
  %v8755 = vpop.permute.xlu0 %8754
  %8756 = vrot.lane.b32.xlu0 %v8069, 16
  %v8757 = vpop.permute.xlu0 %8756
  %8758 = vrot.lane.b32.xlu0 %v8071, 16
  %v8759 = vpop.permute.xlu0 %8758
  %8760 = vrot.lane.b32.xlu0 %v8073, 16
  %v8761 = vpop.permute.xlu0 %8760
  %8794 = vrot.lane.b32.xlu0 %v8075, 32
  %v8795 = vpop.permute.xlu0 %8794
  %8796 = vrot.lane.b32.xlu0 %v8077, 32
  %v8797 = vpop.permute.xlu0 %8796
  %8798 = vrot.lane.b32.xlu0 %v8079, 32
  %v8799 = vpop.permute.xlu0 %8798
  %8800 = vrot.lane.b32.xlu0 %v8081, 32
  %v8801 = vpop.permute.xlu0 %8800
  %8802 = vrot.lane.b32.xlu0 %v8083, 32
  %v8803 = vpop.permute.xlu0 %8802
  %8804 = vrot.lane.b32.xlu0 %v8085, 32
  %v8805 = vpop.permute.xlu0 %8804
  %8806 = vrot.lane.b32.xlu0 %v8087, 32
  %v8807 = vpop.permute.xlu0 %8806
  %8808 = vrot.lane.b32.xlu0 %v8089, 32
  %v8809 = vpop.permute.xlu0 %8808
  %8810 = vrot.lane.b32.xlu0 %v8091, 32
  %v8811 = vpop.permute.xlu0 %8810
  %8812 = vrot.lane.b32.xlu0 %v8093, 32
  %v8813 = vpop.permute.xlu0 %8812
  %8814 = vrot.lane.b32.xlu0 %v8095, 32
  %v8815 = vpop.permute.xlu0 %8814
  %8816 = vrot.lane.b32.xlu0 %v8097, 32
  %v8817 = vpop.permute.xlu0 %8816
  %8818 = vrot.lane.b32.xlu0 %v8099, 32
  %v8819 = vpop.permute.xlu0 %8818
  %8820 = vrot.lane.b32.xlu0 %v8101, 32
  %v8821 = vpop.permute.xlu0 %8820
  %8822 = vrot.lane.b32.xlu0 %v8103, 32
  %v8823 = vpop.permute.xlu0 %8822
  %8824 = vrot.lane.b32.xlu0 %v8105, 32
  %v8825 = vpop.permute.xlu0 %8824
  %8858 = vrot.lane.b32.xlu0 %v8107, 48
  %v8859 = vpop.permute.xlu0 %8858
  %8860 = vrot.lane.b32.xlu0 %v8109, 48
  %v8861 = vpop.permute.xlu0 %8860
  %8862 = vrot.lane.b32.xlu0 %v8111, 48
  %v8863 = vpop.permute.xlu0 %8862
  %8864 = vrot.lane.b32.xlu0 %v8113, 48
  %v8865 = vpop.permute.xlu0 %8864
  %8866 = vrot.lane.b32.xlu0 %v8115, 48
  %v8867 = vpop.permute.xlu0 %8866
  %8868 = vrot.lane.b32.xlu0 %v8117, 48
  %v8869 = vpop.permute.xlu0 %8868
  %8870 = vrot.lane.b32.xlu0 %v8119, 48
  %v8871 = vpop.permute.xlu0 %8870
  %8872 = vrot.lane.b32.xlu0 %v8121, 48
  %v8873 = vpop.permute.xlu0 %8872
  %8874 = vrot.lane.b32.xlu0 %v8123, 48
  %v8875 = vpop.permute.xlu0 %8874
  %8876 = vrot.lane.b32.xlu0 %v8125, 48
  %v8877 = vpop.permute.xlu0 %8876
  %8878 = vrot.lane.b32.xlu0 %v8127, 48
  %v8879 = vpop.permute.xlu0 %8878
  %8880 = vrot.lane.b32.xlu0 %v8129, 48
  %v8881 = vpop.permute.xlu0 %8880
  %8882 = vrot.lane.b32.xlu0 %v8131, 48
  %v8883 = vpop.permute.xlu0 %8882
  %8884 = vrot.lane.b32.xlu0 %v8133, 48
  %v8885 = vpop.permute.xlu0 %8884
  %8886 = vrot.lane.b32.xlu0 %v8135, 48
  %v8887 = vpop.permute.xlu0 %8886
  %8888 = vrot.lane.b32.xlu0 %v8137, 48
  %v8889 = vpop.permute.xlu0 %8888
  %8922 = vrot.lane.b32.xlu0 %v8139, 64
  %v8923 = vpop.permute.xlu0 %8922
  %8924 = vrot.lane.b32.xlu0 %v8141, 64
  %v8925 = vpop.permute.xlu0 %8924
  %8926 = vrot.lane.b32.xlu0 %v8143, 64
  %v8927 = vpop.permute.xlu0 %8926
  %8928 = vrot.lane.b32.xlu0 %v8145, 64
  %v8929 = vpop.permute.xlu0 %8928
  %8930 = vrot.lane.b32.xlu0 %v8147, 64
  %v8931 = vpop.permute.xlu0 %8930
  %8932 = vrot.lane.b32.xlu0 %v8149, 64
  %v8933 = vpop.permute.xlu0 %8932
  %8934 = vrot.lane.b32.xlu0 %v8151, 64
  %v8935 = vpop.permute.xlu0 %8934
  %8936 = vrot.lane.b32.xlu0 %v8153, 64
  %v8937 = vpop.permute.xlu0 %8936
  %8938 = vrot.lane.b32.xlu0 %v8155, 64
  %v8939 = vpop.permute.xlu0 %8938
  %8940 = vrot.lane.b32.xlu0 %v8157, 64
  %v8941 = vpop.permute.xlu0 %8940
  %8942 = vrot.lane.b32.xlu0 %v8159, 64
  %v8943 = vpop.permute.xlu0 %8942
  %8944 = vrot.lane.b32.xlu0 %v8161, 64
  %v8945 = vpop.permute.xlu0 %8944
  %8946 = vrot.lane.b32.xlu0 %v8163, 64
  %v8947 = vpop.permute.xlu0 %8946
  %8948 = vrot.lane.b32.xlu0 %v8165, 64
  %v8949 = vpop.permute.xlu0 %8948
  %8950 = vrot.lane.b32.xlu0 %v8167, 64
  %v8951 = vpop.permute.xlu0 %8950
  %8952 = vrot.lane.b32.xlu0 %v8169, 64
  %v8953 = vpop.permute.xlu0 %8952
  %8986 = vrot.lane.b32.xlu0 %v8171, 80
  %v8987 = vpop.permute.xlu0 %8986
  %8988 = vrot.lane.b32.xlu0 %v8173, 80
  %v8989 = vpop.permute.xlu0 %8988
  %8990 = vrot.lane.b32.xlu0 %v8175, 80
  %v8991 = vpop.permute.xlu0 %8990
  %8992 = vrot.lane.b32.xlu0 %v8177, 80
  %v8993 = vpop.permute.xlu0 %8992
  %8994 = vrot.lane.b32.xlu0 %v8179, 80
  %v8995 = vpop.permute.xlu0 %8994
  %8996 = vrot.lane.b32.xlu0 %v8181, 80
  %v8997 = vpop.permute.xlu0 %8996
  %8998 = vrot.lane.b32.xlu0 %v8183, 80
  %v8999 = vpop.permute.xlu0 %8998
  %9000 = vrot.lane.b32.xlu0 %v8185, 80
  %v9001 = vpop.permute.xlu0 %9000
  %9002 = vrot.lane.b32.xlu0 %v8187, 80
  %v9003 = vpop.permute.xlu0 %9002
  %9004 = vrot.lane.b32.xlu0 %v8189, 80
  %v9005 = vpop.permute.xlu0 %9004
  %9006 = vrot.lane.b32.xlu0 %v8191, 80
  %v9007 = vpop.permute.xlu0 %9006
  %9008 = vrot.lane.b32.xlu0 %v8193, 80
  %v9009 = vpop.permute.xlu0 %9008
  %9010 = vrot.lane.b32.xlu0 %v8195, 80
  %v9011 = vpop.permute.xlu0 %9010
  %9012 = vrot.lane.b32.xlu0 %v8197, 80
  %v9013 = vpop.permute.xlu0 %9012
  %9014 = vrot.lane.b32.xlu0 %v8199, 80
  %v9015 = vpop.permute.xlu0 %9014
  %9016 = vrot.lane.b32.xlu0 %v8201, 80
  %v9017 = vpop.permute.xlu0 %9016
  %9050 = vrot.lane.b32.xlu0 %v8203, 96
  %v9051 = vpop.permute.xlu0 %9050
  %9052 = vrot.lane.b32.xlu0 %v8205, 96
  %v9053 = vpop.permute.xlu0 %9052
  %9054 = vrot.lane.b32.xlu0 %v8207, 96
  %v9055 = vpop.permute.xlu0 %9054
  %9056 = vrot.lane.b32.xlu0 %v8209, 96
  %v9057 = vpop.permute.xlu0 %9056
  %9058 = vrot.lane.b32.xlu0 %v8211, 96
  %v9059 = vpop.permute.xlu0 %9058
  %9060 = vrot.lane.b32.xlu0 %v8213, 96
  %v9061 = vpop.permute.xlu0 %9060
  %9062 = vrot.lane.b32.xlu0 %v8215, 96
  %v9063 = vpop.permute.xlu0 %9062
  %9064 = vrot.lane.b32.xlu0 %v8217, 96
  %v9065 = vpop.permute.xlu0 %9064
  %9066 = vrot.lane.b32.xlu0 %v8219, 96
  %v9067 = vpop.permute.xlu0 %9066
  %9068 = vrot.lane.b32.xlu0 %v8221, 96
  %v9069 = vpop.permute.xlu0 %9068
  %9070 = vrot.lane.b32.xlu0 %v8223, 96
  %v9071 = vpop.permute.xlu0 %9070
  %9072 = vrot.lane.b32.xlu0 %v8225, 96
  %v9073 = vpop.permute.xlu0 %9072
  %9074 = vrot.lane.b32.xlu0 %v8227, 96
  %v9075 = vpop.permute.xlu0 %9074
  %9076 = vrot.lane.b32.xlu0 %v8229, 96
  %v9077 = vpop.permute.xlu0 %9076
  %9078 = vrot.lane.b32.xlu0 %v8231, 96
  %v9079 = vpop.permute.xlu0 %9078
  %9080 = vrot.lane.b32.xlu0 %v8233, 96
  %v9081 = vpop.permute.xlu0 %9080
  %9114 = vrot.lane.b32.xlu0 %v8235, 112
  %v9115 = vpop.permute.xlu0 %9114
  %9116 = vrot.lane.b32.xlu0 %v8237, 112
  %v9117 = vpop.permute.xlu0 %9116
  %9118 = vrot.lane.b32.xlu0 %v8239, 112
  %v9119 = vpop.permute.xlu0 %9118
  %9120 = vrot.lane.b32.xlu0 %v8241, 112
  %v9121 = vpop.permute.xlu0 %9120
  %9122 = vrot.lane.b32.xlu0 %v8243, 112
  %v9123 = vpop.permute.xlu0 %9122
  %9124 = vrot.lane.b32.xlu0 %v8245, 112
  %v9125 = vpop.permute.xlu0 %9124
  %9126 = vrot.lane.b32.xlu0 %v8247, 112
  %v9127 = vpop.permute.xlu0 %9126
  %9128 = vrot.lane.b32.xlu0 %v8249, 112
  %v9129 = vpop.permute.xlu0 %9128
  %9130 = vrot.lane.b32.xlu0 %v8251, 112
  %v9131 = vpop.permute.xlu0 %9130
  %9132 = vrot.lane.b32.xlu0 %v8253, 112
  %v9133 = vpop.permute.xlu0 %9132
  %9134 = vrot.lane.b32.xlu0 %v8255, 112
  %v9135 = vpop.permute.xlu0 %9134
  %9136 = vrot.lane.b32.xlu0 %v8257, 112
  %v9137 = vpop.permute.xlu0 %9136
  %9138 = vrot.lane.b32.xlu0 %v8259, 112
  %v9139 = vpop.permute.xlu0 %9138
  %9140 = vrot.lane.b32.xlu0 %v8261, 112
  %v9141 = vpop.permute.xlu0 %9140
  %9142 = vrot.lane.b32.xlu0 %v8263, 112
  %v9143 = vpop.permute.xlu0 %9142
  %9144 = vrot.lane.b32.xlu0 %v8265, 112
  %v9145 = vpop.permute.xlu0 %9144
  %v9162 = vsel %vm42, %v7756, %v8283
  %v9163 = vsel %vm42, %v7758, %v8285
  %v9164 = vsel %vm42, %v7760, %v8287
  %v9165 = vsel %vm42, %v7762, %v8289
  %v9166 = vsel %vm42, %v7764, %v8291
  %v9167 = vsel %vm42, %v7766, %v8293
  %v9168 = vsel %vm42, %v7768, %v8295
  %v9169 = vsel %vm42, %v7770, %v8297
  %v9170 = vsel %vm42, %v7772, %v8299
  %v9171 = vsel %vm42, %v7774, %v8301
  %v9172 = vsel %vm42, %v7776, %v8303
  %v9173 = vsel %vm42, %v7778, %v8305
  %v9174 = vsel %vm42, %v7780, %v8307
  %v9175 = vsel %vm42, %v7782, %v8309
  %v9176 = vsel %vm42, %v7784, %v8311
  %v9177 = vsel %vm42, %v7786, %v8313
  %v9178 = vsel %vm130, %v9162, %v8347
  %v9179 = vsel %vm130, %v9163, %v8349
  %v9180 = vsel %vm130, %v9164, %v8351
  %v9181 = vsel %vm130, %v9165, %v8353
  %v9182 = vsel %vm130, %v9166, %v8355
  %v9183 = vsel %vm130, %v9167, %v8357
  %v9184 = vsel %vm130, %v9168, %v8359
  %v9185 = vsel %vm130, %v9169, %v8361
  %v9186 = vsel %vm130, %v9170, %v8363
  %v9187 = vsel %vm130, %v9171, %v8365
  %v9188 = vsel %vm130, %v9172, %v8367
  %v9189 = vsel %vm130, %v9173, %v8369
  %v9190 = vsel %vm130, %v9174, %v8371
  %v9191 = vsel %vm130, %v9175, %v8373
  %v9192 = vsel %vm130, %v9176, %v8375
  %v9193 = vsel %vm130, %v9177, %v8377
  %v9194 = vsel %vm7177, %v9178, %v8411
  %v9195 = vsel %vm7177, %v9179, %v8413
  %v9196 = vsel %vm7177, %v9180, %v8415
  %v9197 = vsel %vm7177, %v9181, %v8417
  %v9198 = vsel %vm7177, %v9182, %v8419
  %v9199 = vsel %vm7177, %v9183, %v8421
  %v9200 = vsel %vm7177, %v9184, %v8423
  %v9201 = vsel %vm7177, %v9185, %v8425
  %v9202 = vsel %vm7177, %v9186, %v8427
  %v9203 = vsel %vm7177, %v9187, %v8429
  %v9204 = vsel %vm7177, %v9188, %v8431
  %v9205 = vsel %vm7177, %v9189, %v8433
  %v9206 = vsel %vm7177, %v9190, %v8435
  %v9207 = vsel %vm7177, %v9191, %v8437
  %v9208 = vsel %vm7177, %v9192, %v8439
  %v9209 = vsel %vm7177, %v9193, %v8441
  %v9210 = vsel %vm206, %v9194, %v8475
  %v9211 = vsel %vm206, %v9195, %v8477
  %v9212 = vsel %vm206, %v9196, %v8479
  %v9213 = vsel %vm206, %v9197, %v8481
  %v9214 = vsel %vm206, %v9198, %v8483
  %v9215 = vsel %vm206, %v9199, %v8485
  %v9216 = vsel %vm206, %v9200, %v8487
  %v9217 = vsel %vm206, %v9201, %v8489
  %v9218 = vsel %vm206, %v9202, %v8491
  %v9219 = vsel %vm206, %v9203, %v8493
  %v9220 = vsel %vm206, %v9204, %v8495
  %v9221 = vsel %vm206, %v9205, %v8497
  %v9222 = vsel %vm206, %v9206, %v8499
  %v9223 = vsel %vm206, %v9207, %v8501
  %v9224 = vsel %vm206, %v9208, %v8503
  %v9225 = vsel %vm206, %v9209, %v8505
  %vm9226 = vcmask 654336
  %v9227 = vsel %vm9226, %v9210, %v8539
  %v9228 = vsel %vm9226, %v9211, %v8541
  %v9229 = vsel %vm9226, %v9212, %v8543
  %v9230 = vsel %vm9226, %v9213, %v8545
  %v9231 = vsel %vm9226, %v9214, %v8547
  %v9232 = vsel %vm9226, %v9215, %v8549
  %v9233 = vsel %vm9226, %v9216, %v8551
  %v9234 = vsel %vm9226, %v9217, %v8553
  %v9235 = vsel %vm9226, %v9218, %v8555
  %v9236 = vsel %vm9226, %v9219, %v8557
  %v9237 = vsel %vm9226, %v9220, %v8559
  %v9238 = vsel %vm9226, %v9221, %v8561
  %v9239 = vsel %vm9226, %v9222, %v8563
  %v9240 = vsel %vm9226, %v9223, %v8565
  %v9241 = vsel %vm9226, %v9224, %v8567
  %v9242 = vsel %vm9226, %v9225, %v8569
  %vm9243 = vcmask 785408
  %v9244 = vsel %vm9243, %v9227, %v8603
  %v9245 = vsel %vm9243, %v9228, %v8605
  %v9246 = vsel %vm9243, %v9229, %v8607
  %v9247 = vsel %vm9243, %v9230, %v8609
  %v9248 = vsel %vm9243, %v9231, %v8611
  %v9249 = vsel %vm9243, %v9232, %v8613
  %v9250 = vsel %vm9243, %v9233, %v8615
  %v9251 = vsel %vm9243, %v9234, %v8617
  %v9252 = vsel %vm9243, %v9235, %v8619
  %v9253 = vsel %vm9243, %v9236, %v8621
  %v9254 = vsel %vm9243, %v9237, %v8623
  %v9255 = vsel %vm9243, %v9238, %v8625
  %v9256 = vsel %vm9243, %v9239, %v8627
  %v9257 = vsel %vm9243, %v9240, %v8629
  %v9258 = vsel %vm9243, %v9241, %v8631
  %v9259 = vsel %vm9243, %v9242, %v8633
  %vm9260 = vcmask 916480
  %v9261 = vsel %vm9260, %v9244, %v8667
  %v9262 = vsel %vm9260, %v9245, %v8669
  %v9263 = vsel %vm9260, %v9246, %v8671
  %v9264 = vsel %vm9260, %v9247, %v8673
  %v9265 = vsel %vm9260, %v9248, %v8675
  %v9266 = vsel %vm9260, %v9249, %v8677
  %v9267 = vsel %vm9260, %v9250, %v8679
  %v9268 = vsel %vm9260, %v9251, %v8681
  %v9269 = vsel %vm9260, %v9252, %v8683
  %v9270 = vsel %vm9260, %v9253, %v8685
  %v9271 = vsel %vm9260, %v9254, %v8687
  %v9272 = vsel %vm9260, %v9255, %v8689
  %v9273 = vsel %vm9260, %v9256, %v8691
  %v9274 = vsel %vm9260, %v9257, %v8693
  %v9275 = vsel %vm9260, %v9258, %v8695
  %v9276 = vsel %vm9260, %v9259, %v8697
  %v9277 = vsel %vm42, %v8011, %v8731
  %v9278 = vsel %vm42, %v8013, %v8733
  %v9279 = vsel %vm42, %v8015, %v8735
  %v9280 = vsel %vm42, %v8017, %v8737
  %v9281 = vsel %vm42, %v8019, %v8739
  %v9282 = vsel %vm42, %v8021, %v8741
  %v9283 = vsel %vm42, %v8023, %v8743
  %v9284 = vsel %vm42, %v8025, %v8745
  %v9285 = vsel %vm42, %v8027, %v8747
  %v9286 = vsel %vm42, %v8029, %v8749
  %v9287 = vsel %vm42, %v8031, %v8751
  %v9288 = vsel %vm42, %v8033, %v8753
  %v9289 = vsel %vm42, %v8035, %v8755
  %v9290 = vsel %vm42, %v8037, %v8757
  %v9291 = vsel %vm42, %v8039, %v8759
  %v9292 = vsel %vm42, %v8041, %v8761
  %v9293 = vsel %vm130, %v9277, %v8795
  %v9294 = vsel %vm130, %v9278, %v8797
  %v9295 = vsel %vm130, %v9279, %v8799
  %v9296 = vsel %vm130, %v9280, %v8801
  %v9297 = vsel %vm130, %v9281, %v8803
  %v9298 = vsel %vm130, %v9282, %v8805
  %v9299 = vsel %vm130, %v9283, %v8807
  %v9300 = vsel %vm130, %v9284, %v8809
  %v9301 = vsel %vm130, %v9285, %v8811
  %v9302 = vsel %vm130, %v9286, %v8813
  %v9303 = vsel %vm130, %v9287, %v8815
  %v9304 = vsel %vm130, %v9288, %v8817
  %v9305 = vsel %vm130, %v9289, %v8819
  %v9306 = vsel %vm130, %v9290, %v8821
  %v9307 = vsel %vm130, %v9291, %v8823
  %v9308 = vsel %vm130, %v9292, %v8825
  %v9309 = vsel %vm7177, %v9293, %v8859
  %v9310 = vsel %vm7177, %v9294, %v8861
  %v9311 = vsel %vm7177, %v9295, %v8863
  %v9312 = vsel %vm7177, %v9296, %v8865
  %v9313 = vsel %vm7177, %v9297, %v8867
  %v9314 = vsel %vm7177, %v9298, %v8869
  %v9315 = vsel %vm7177, %v9299, %v8871
  %v9316 = vsel %vm7177, %v9300, %v8873
  %v9317 = vsel %vm7177, %v9301, %v8875
  %v9318 = vsel %vm7177, %v9302, %v8877
  %v9319 = vsel %vm7177, %v9303, %v8879
  %v9320 = vsel %vm7177, %v9304, %v8881
  %v9321 = vsel %vm7177, %v9305, %v8883
  %v9322 = vsel %vm7177, %v9306, %v8885
  %v9323 = vsel %vm7177, %v9307, %v8887
  %v9324 = vsel %vm7177, %v9308, %v8889
  %v9325 = vsel %vm206, %v9309, %v8923
  %v9326 = vsel %vm206, %v9310, %v8925
  %v9327 = vsel %vm206, %v9311, %v8927
  %v9328 = vsel %vm206, %v9312, %v8929
  %v9329 = vsel %vm206, %v9313, %v8931
  %v9330 = vsel %vm206, %v9314, %v8933
  %v9331 = vsel %vm206, %v9315, %v8935
  %v9332 = vsel %vm206, %v9316, %v8937
  %v9333 = vsel %vm206, %v9317, %v8939
  %v9334 = vsel %vm206, %v9318, %v8941
  %v9335 = vsel %vm206, %v9319, %v8943
  %v9336 = vsel %vm206, %v9320, %v8945
  %v9337 = vsel %vm206, %v9321, %v8947
  %v9338 = vsel %vm206, %v9322, %v8949
  %v9339 = vsel %vm206, %v9323, %v8951
  %v9340 = vsel %vm206, %v9324, %v8953
  %v9341 = vsel %vm9226, %v9325, %v8987
  %v9342 = vsel %vm9226, %v9326, %v8989
  %v9343 = vsel %vm9226, %v9327, %v8991
  %v9344 = vsel %vm9226, %v9328, %v8993
  %v9345 = vsel %vm9226, %v9329, %v8995
  %v9346 = vsel %vm9226, %v9330, %v8997
  %v9347 = vsel %vm9226, %v9331, %v8999
  %v9348 = vsel %vm9226, %v9332, %v9001
  %v9349 = vsel %vm9226, %v9333, %v9003
  %v9350 = vsel %vm9226, %v9334, %v9005
  %v9351 = vsel %vm9226, %v9335, %v9007
  %v9352 = vsel %vm9226, %v9336, %v9009
  %v9353 = vsel %vm9226, %v9337, %v9011
  %v9354 = vsel %vm9226, %v9338, %v9013
  %v9355 = vsel %vm9226, %v9339, %v9015
  %v9356 = vsel %vm9226, %v9340, %v9017
  %v9357 = vsel %vm9243, %v9341, %v9051
  %v9358 = vsel %vm9243, %v9342, %v9053
  %v9359 = vsel %vm9243, %v9343, %v9055
  %v9360 = vsel %vm9243, %v9344, %v9057
  %v9361 = vsel %vm9243, %v9345, %v9059
  %v9362 = vsel %vm9243, %v9346, %v9061
  %v9363 = vsel %vm9243, %v9347, %v9063
  %v9364 = vsel %vm9243, %v9348, %v9065
  %v9365 = vsel %vm9243, %v9349, %v9067
  %v9366 = vsel %vm9243, %v9350, %v9069
  %v9367 = vsel %vm9243, %v9351, %v9071
  %v9368 = vsel %vm9243, %v9352, %v9073
  %v9369 = vsel %vm9243, %v9353, %v9075
  %v9370 = vsel %vm9243, %v9354, %v9077
  %v9371 = vsel %vm9243, %v9355, %v9079
  %v9372 = vsel %vm9243, %v9356, %v9081
  %v9373 = vsel %vm9260, %v9357, %v9115
  %v9374 = vsel %vm9260, %v9358, %v9117
  %v9375 = vsel %vm9260, %v9359, %v9119
  %v9376 = vsel %vm9260, %v9360, %v9121
  %v9377 = vsel %vm9260, %v9361, %v9123
  %v9378 = vsel %vm9260, %v9362, %v9125
  %v9379 = vsel %vm9260, %v9363, %v9127
  %v9380 = vsel %vm9260, %v9364, %v9129
  %v9381 = vsel %vm9260, %v9365, %v9131
  %v9382 = vsel %vm9260, %v9366, %v9133
  %v9383 = vsel %vm9260, %v9367, %v9135
  %v9384 = vsel %vm9260, %v9368, %v9137
  %v9385 = vsel %vm9260, %v9369, %v9139
  %v9386 = vsel %vm9260, %v9370, %v9141
  %v9387 = vsel %vm9260, %v9371, %v9143
  %v9388 = vsel %vm9260, %v9372, %v9145
  %v9389 = vpack.c.bf16 %v9262, %v9261
  %v9390 = vpack.c.bf16 %v9374, %v9373
  %v9391 = vpack.c.bf16 %v9264, %v9263
  %v9392 = vpack.c.bf16 %v9376, %v9375
  %v9393 = vpack.c.bf16 %v9266, %v9265
  %v9394 = vpack.c.bf16 %v9378, %v9377
  %v9395 = vpack.c.bf16 %v9268, %v9267
  %v9396 = vpack.c.bf16 %v9380, %v9379
  %v9397 = vpack.c.bf16 %v9270, %v9269
  %v9398 = vpack.c.bf16 %v9382, %v9381
  %v9399 = vpack.c.bf16 %v9272, %v9271
  %v9400 = vpack.c.bf16 %v9384, %v9383
  %v9401 = vpack.c.bf16 %v9274, %v9273
  %v9402 = vpack.c.bf16 %v9386, %v9385
  %v9403 = vpack.c.bf16 %v9276, %v9275
  %v9404 = vpack.c.bf16 %v9388, %v9387
  %v9405 = vld [vmem:[%s2] sm:$0xf]
  %v9406 = vld [vmem:[%s2 + $0x4] sm:$0xf]
  %v9407 = vld [vmem:[%s2 + $0x8] sm:$0xf]
  %v9408 = vld [vmem:[%s2 + $0xc] sm:$0xf]
  %v9409 = vld [vmem:[%s2 + $0x10] sm:$0xf]
  %v9410 = vld [vmem:[%s2 + $0x14] sm:$0xf]
  %v9411 = vld [vmem:[%s2 + $0x18] sm:$0xf]
  %v9412 = vld [vmem:[%s2 + $0x1c] sm:$0xf]
  %v9413 = vld [vmem:[%s2 + $0x20] sm:$0xf]
  %v9414 = vld [vmem:[%s2 + $0x24] sm:$0xf]
  %v9415 = vld [vmem:[%s2 + $0x28] sm:$0xf]
  %v9416 = vld [vmem:[%s2 + $0x2c] sm:$0xf]
  %v9417 = vld [vmem:[%s2 + $0x30] sm:$0xf]
  %v9418 = vld [vmem:[%s2 + $0x34] sm:$0xf]
  %v9419 = vld [vmem:[%s2 + $0x38] sm:$0xf]
  %v9420 = vld [vmem:[%s2 + $0x3c] sm:$0xf]
  %v9421 = vld [vmem:[%s2 + $0x40] sm:$0xf]
  %v9422 = vld [vmem:[%s2 + $0x44] sm:$0xf]
  %v9423 = vld [vmem:[%s2 + $0x48] sm:$0xf]
  %v9424 = vld [vmem:[%s2 + $0x4c] sm:$0xf]
  %v9425 = vld [vmem:[%s2 + $0x50] sm:$0xf]
  %v9426 = vld [vmem:[%s2 + $0x54] sm:$0xf]
  %v9427 = vld [vmem:[%s2 + $0x58] sm:$0xf]
  %v9428 = vld [vmem:[%s2 + $0x5c] sm:$0xf]
  %v9429 = vld [vmem:[%s2 + $0x60] sm:$0xf]
  %v9430 = vld [vmem:[%s2 + $0x64] sm:$0xf]
  %v9431 = vld [vmem:[%s2 + $0x68] sm:$0xf]
  %v9432 = vld [vmem:[%s2 + $0x6c] sm:$0xf]
  %v9433 = vld [vmem:[%s2 + $0x70] sm:$0xf]
  %v9434 = vld [vmem:[%s2 + $0x74] sm:$0xf]
  %v9435 = vld [vmem:[%s2 + $0x78] sm:$0xf]
  %v9436 = vld [vmem:[%s2 + $0x7c] sm:$0xf]
  %v9469 = vunpack.c.l.b16 %v9405
  %v9470 = vunpack.c.l.b16 %v9406
  %v9471 = vunpack.c.l.b16 %v9407
  %v9472 = vunpack.c.l.b16 %v9408
  %v9473 = vunpack.c.l.b16 %v9409
  %v9474 = vunpack.c.l.b16 %v9410
  %v9475 = vunpack.c.l.b16 %v9411
  %v9476 = vunpack.c.l.b16 %v9412
  %v9477 = vunpack.c.l.b16 %v9413
  %v9478 = vunpack.c.l.b16 %v9414
  %v9479 = vunpack.c.l.b16 %v9415
  %v9480 = vunpack.c.l.b16 %v9416
  %v9481 = vunpack.c.l.b16 %v9417
  %v9482 = vunpack.c.l.b16 %v9418
  %v9483 = vunpack.c.l.b16 %v9419
  %v9484 = vunpack.c.l.b16 %v9420
  %v9485 = vunpack.c.l.b16 %v9421
  %v9486 = vunpack.c.l.b16 %v9422
  %v9487 = vunpack.c.l.b16 %v9423
  %v9488 = vunpack.c.l.b16 %v9424
  %v9489 = vunpack.c.l.b16 %v9425
  %v9490 = vunpack.c.l.b16 %v9426
  %v9491 = vunpack.c.l.b16 %v9427
  %v9492 = vunpack.c.l.b16 %v9428
  %v9493 = vunpack.c.l.b16 %v9429
  %v9494 = vunpack.c.l.b16 %v9430
  %v9495 = vunpack.c.l.b16 %v9431
  %v9496 = vunpack.c.l.b16 %v9432
  %v9497 = vunpack.c.l.b16 %v9433
  %v9498 = vunpack.c.l.b16 %v9434
  %v9499 = vunpack.c.l.b16 %v9435
  %v9500 = vunpack.c.l.b16 %v9436
  %v9501 = vpack.c.b16 %v9470, %v9469
  %v9502 = vpack.c.b16 %v9472, %v9471
  %v9503 = vpack.c.b16 %v9474, %v9473
  %v9504 = vpack.c.b16 %v9476, %v9475
  %v9505 = vpack.c.b16 %v9478, %v9477
  %v9506 = vpack.c.b16 %v9480, %v9479
  %v9507 = vpack.c.b16 %v9482, %v9481
  %v9508 = vpack.c.b16 %v9484, %v9483
  %v9509 = vpack.c.b16 %v9486, %v9485
  %v9510 = vpack.c.b16 %v9488, %v9487
  %v9511 = vpack.c.b16 %v9490, %v9489
  %v9512 = vpack.c.b16 %v9492, %v9491
  %v9513 = vpack.c.b16 %v9494, %v9493
  %v9514 = vpack.c.b16 %v9496, %v9495
  %v9515 = vpack.c.b16 %v9498, %v9497
  %v9516 = vpack.c.b16 %v9500, %v9499
  %9533 = vmatprep.subr.bf16.mxu0 0
  %9534 = vmatpush1.bf16.msra.mxu0 %v9501
  %9535 = vmatprep.subr.bf16.mxu0 0
  %9536 = vmatpush1.bf16.msra.mxu0 %v9502
  %9537 = vmatprep.subr.bf16.mxu0 0
  %9538 = vmatpush1.bf16.msra.mxu0 %v9503
  %9539 = vmatprep.subr.bf16.mxu0 0
  %9540 = vmatpush1.bf16.msra.mxu0 %v9504
  %9541 = vmatprep.subr.bf16.mxu0 0
  %9542 = vmatpush1.bf16.msra.mxu0 %v9505
  %9543 = vmatprep.subr.bf16.mxu0 0
  %9544 = vmatpush1.bf16.msra.mxu0 %v9506
  %9545 = vmatprep.subr.bf16.mxu0 0
  %9546 = vmatpush1.bf16.msra.mxu0 %v9507
  %9547 = vmatprep.subr.bf16.mxu0 0
  %9548 = vmatpush1.bf16.msra.mxu0 %v9508
  %9549 = vmatprep.subr.bf16.mxu0 0
  %9550 = vmatpush1.bf16.msra.mxu0 %v9509
  %9551 = vmatprep.subr.bf16.mxu0 0
  %9552 = vmatpush1.bf16.msra.mxu0 %v9510
  %9553 = vmatprep.subr.bf16.mxu0 0
  %9554 = vmatpush1.bf16.msra.mxu0 %v9511
  %9555 = vmatprep.subr.bf16.mxu0 0
  %9556 = vmatpush1.bf16.msra.mxu0 %v9512
  %9557 = vmatprep.subr.bf16.mxu0 0
  %9558 = vmatpush1.bf16.msra.mxu0 %v9513
  %9559 = vmatprep.subr.bf16.mxu0 0
  %9560 = vmatpush1.bf16.msra.mxu0 %v9514
  %9561 = vmatprep.subr.bf16.mxu0 0
  %9562 = vmatpush1.bf16.msra.mxu0 %v9515
  %9563 = vmatprep.subr.bf16.mxu0 0
  %9564 = vmatpush1.bf16.msra.mxu0 %v9516
  %9565 = vmatprep.mubr.bf16.mxu0 %v9390
  %9566 = vmatmul.mubr.bf16.gmra.mrb[0].mxu0 %v9389
  %v9567 = vpop.f32.mrb[0].mxu0
  %v9568 = vadd.f32 0.0, %v9567
  %v9569 = vpop.f32.mrb[0].mxu0
  %v9570 = vpop.f32.mrb[0].mxu0
  %v9571 = vadd.f32 0.0, %v9570
  %v9572 = vpop.f32.mrb[0].mxu0
  %9573 = vmatprep.mubr.bf16.mxu0 %v9392
  %9574 = vmatmul.mubr.bf16.gmra.mrb[0].mxu0 %v9391
  %v9575 = vpop.f32.mrb[0].mxu0
  %v9576 = vadd.f32 0.0, %v9575
  %v9577 = vpop.f32.mrb[0].mxu0
  %v9578 = vpop.f32.mrb[0].mxu0
  %v9579 = vadd.f32 0.0, %v9578
  %v9580 = vpop.f32.mrb[0].mxu0
  %9581 = vmatprep.mubr.bf16.mxu0 %v9394
  %9582 = vmatmul.mubr.bf16.gmra.mrb[0].mxu0 %v9393
  %v9583 = vpop.f32.mrb[0].mxu0
  %v9584 = vadd.f32 0.0, %v9583
  %v9585 = vpop.f32.mrb[0].mxu0
  %v9586 = vpop.f32.mrb[0].mxu0
  %v9587 = vadd.f32 0.0, %v9586
  %v9588 = vpop.f32.mrb[0].mxu0
  %9589 = vmatprep.mubr.bf16.mxu0 %v9396
  %9590 = vmatmul.mubr.bf16.gmra.mrb[0].mxu0 %v9395
  %v9591 = vpop.f32.mrb[0].mxu0
  %v9592 = vadd.f32 0.0, %v9591
  %v9593 = vpop.f32.mrb[0].mxu0
  %v9594 = vpop.f32.mrb[0].mxu0
  %v9595 = vadd.f32 0.0, %v9594
  %v9596 = vpop.f32.mrb[0].mxu0
  %9597 = vmatprep.mubr.bf16.mxu0 %v9398
  %9598 = vmatmul.mubr.bf16.gmra.mrb[0].mxu0 %v9397
  %v9599 = vpop.f32.mrb[0].mxu0
  %v9600 = vadd.f32 0.0, %v9599
  %v9601 = vpop.f32.mrb[0].mxu0
  %v9602 = vpop.f32.mrb[0].mxu0
  %v9603 = vadd.f32 0.0, %v9602
  %v9604 = vpop.f32.mrb[0].mxu0
  %9605 = vmatprep.mubr.bf16.mxu0 %v9400
  %9606 = vmatmul.mubr.bf16.gmra.mrb[0].mxu0 %v9399
  %v9607 = vpop.f32.mrb[0].mxu0
  %v9608 = vadd.f32 0.0, %v9607
  %v9609 = vpop.f32.mrb[0].mxu0
  %v9610 = vpop.f32.mrb[0].mxu0
  %v9611 = vadd.f32 0.0, %v9610
  %v9612 = vpop.f32.mrb[0].mxu0
  %9613 = vmatprep.mubr.bf16.mxu0 %v9402
  %9614 = vmatmul.mubr.bf16.gmra.mrb[0].mxu0 %v9401
  %v9615 = vpop.f32.mrb[0].mxu0
  %v9616 = vadd.f32 0.0, %v9615
  %v9617 = vpop.f32.mrb[0].mxu0
  %v9618 = vpop.f32.mrb[0].mxu0
  %v9619 = vadd.f32 0.0, %v9618
  %v9620 = vpop.f32.mrb[0].mxu0
  %9621 = vmatprep.mubr.bf16.mxu0 %v9404
  %9622 = vmatmul.mubr.bf16.gmra.mrb[0].mxu0 %v9403
  %v9623 = vpop.f32.mrb[0].mxu0
  %v9624 = vadd.f32 0.0, %v9623
  %v9625 = vpop.f32.mrb[0].mxu0
  %v9626 = vpop.f32.mrb[0].mxu0
  %v9627 = vadd.f32 0.0, %v9626
  %v9628 = vpop.f32.mrb[0].mxu0
  %9629 = vdwg.mxu0
  %v9630 = vsel %vm130, %v9568, 0.0
  %v9631 = vsel %vm130, %v9571, 0.0
  %v9632 = vadd.f32 %v9630, %v9631
  %v9633 = vsel %vm130, %v9576, 0.0
  %v9634 = vadd.f32 %v9632, %v9633
  %v9635 = vsel %vm130, %v9579, 0.0
  %v9636 = vadd.f32 %v9634, %v9635
  %v9637 = vsel %vm130, %v9584, 0.0
  %v9638 = vadd.f32 %v9636, %v9637
  %v9639 = vsel %vm130, %v9587, 0.0
  %v9640 = vadd.f32 %v9638, %v9639
  %v9641 = vsel %vm130, %v9592, 0.0
  %v9642 = vadd.f32 %v9640, %v9641
  %v9643 = vsel %vm130, %v9595, 0.0
  %v9644 = vadd.f32 %v9642, %v9643
  %v9645 = vsel %vm130, %v9600, 0.0
  %v9646 = vadd.f32 %v9644, %v9645
  %v9647 = vsel %vm130, %v9603, 0.0
  %v9648 = vadd.f32 %v9646, %v9647
  %v9649 = vsel %vm130, %v9608, 0.0
  %v9650 = vadd.f32 %v9648, %v9649
  %v9651 = vsel %vm130, %v9611, 0.0
  %v9652 = vadd.f32 %v9650, %v9651
  %v9653 = vsel %vm130, %v9616, 0.0
  %v9654 = vadd.f32 %v9652, %v9653
  %v9655 = vsel %vm130, %v9619, 0.0
  %v9656 = vadd.f32 %v9654, %v9655
  %v9657 = vsel %vm130, %v9624, 0.0
  %v9658 = vadd.f32 %v9656, %v9657
  %v9659 = vsel %vm130, %v9627, 0.0
  %v9660 = vadd.f32 %v9658, %v9659
  %v9661 = vrot.slane %v9660, 4
  %v9662 = vadd.f32 %v9660, %v9661
  %v9663 = vrot.slane %v9662, 2
  %v9664 = vadd.f32 %v9662, %v9663
  %v9665 = vrot.slane %v9664, 1
  %v9666 = vadd.f32 %v9664, %v9665
  %v9667 = vmul.f32 %v9568, %v9568
  %v9668 = vmul.f32 %v9571, %v9571
  %v9669 = vmul.f32 %v9576, %v9576
  %v9670 = vmul.f32 %v9579, %v9579
  %v9671 = vmul.f32 %v9584, %v9584
  %v9672 = vmul.f32 %v9587, %v9587
  %v9673 = vmul.f32 %v9592, %v9592
  %v9674 = vmul.f32 %v9595, %v9595
  %v9675 = vmul.f32 %v9600, %v9600
  %v9676 = vmul.f32 %v9603, %v9603
  %v9677 = vmul.f32 %v9608, %v9608
  %v9678 = vmul.f32 %v9611, %v9611
  %v9679 = vmul.f32 %v9616, %v9616
  %v9680 = vmul.f32 %v9619, %v9619
  %v9681 = vmul.f32 %v9624, %v9624
  %v9682 = vmul.f32 %v9627, %v9627
  %v9683 = vsel %vm130, %v9667, 0.0
  %v9684 = vsel %vm130, %v9668, 0.0
  %v9685 = vadd.f32 %v9683, %v9684
  %v9686 = vsel %vm130, %v9669, 0.0
  %v9687 = vadd.f32 %v9685, %v9686
  %v9688 = vsel %vm130, %v9670, 0.0
  %v9689 = vadd.f32 %v9687, %v9688
  %v9690 = vsel %vm130, %v9671, 0.0
  %v9691 = vadd.f32 %v9689, %v9690
  %v9692 = vsel %vm130, %v9672, 0.0
  %v9693 = vadd.f32 %v9691, %v9692
  %v9694 = vsel %vm130, %v9673, 0.0
  %v9695 = vadd.f32 %v9693, %v9694
  %v9696 = vsel %vm130, %v9674, 0.0
  %v9697 = vadd.f32 %v9695, %v9696
  %v9698 = vsel %vm130, %v9675, 0.0
  %v9699 = vadd.f32 %v9697, %v9698
  %v9700 = vsel %vm130, %v9676, 0.0
  %v9701 = vadd.f32 %v9699, %v9700
  %v9702 = vsel %vm130, %v9677, 0.0
  %v9703 = vadd.f32 %v9701, %v9702
  %v9704 = vsel %vm130, %v9678, 0.0
  %v9705 = vadd.f32 %v9703, %v9704
  %v9706 = vsel %vm130, %v9679, 0.0
  %v9707 = vadd.f32 %v9705, %v9706
  %v9708 = vsel %vm130, %v9680, 0.0
  %v9709 = vadd.f32 %v9707, %v9708
  %v9710 = vsel %vm130, %v9681, 0.0
  %v9711 = vadd.f32 %v9709, %v9710
  %v9712 = vsel %vm130, %v9682, 0.0
  %v9713 = vadd.f32 %v9711, %v9712
  %v9714 = vrot.slane %v9713, 4
  %v9715 = vadd.f32 %v9713, %v9714
  %v9716 = vrot.slane %v9715, 2
  %v9717 = vadd.f32 %v9715, %v9716
  %v9718 = vrot.slane %v9717, 1
  %v9719 = vadd.f32 %v9717, %v9718
  %v9720 = vmul.f32 %v9666, 0.0078125
  %v9721 = vmul.f32 %v9719, 0.0078125
  %v9722 = vmul.f32 %v9720, %v9720
  %v9723 = vsub.f32 %v9721, %v9722
  %v9724 = vmax.f32 %v9723, 0.0
  %v9725 = vld [vmem:[%s6] sm:$0x1]
  %v9726 = vadd.f32 %v9724, 1e-05
  %v9727 = vrsqrt.pop %v9726
  %v9728 = vmul.f32 %v9725, %v9727
  %v9729 = vld [vmem:[%s7] sm:$0x1]
  %v9730 = vmul.f32 %v9720, %v9728
  %v9731 = vsub.f32 %v9729, %v9730
  %v9733 = vlaneseq
  %v9734 = vshrl.u32 %v9733, 7
  %v9735 = vsub.s32 0, %v9734
  %v9736 = vrot.slane %v9728, %v9735
  %v9738 = vmul.f32 %v9568, %v9736
  %v9739 = vmul.f32 %v9571, %v9736
  %v9740 = vmul.f32 %v9576, %v9736
  %v9741 = vmul.f32 %v9579, %v9736
  %v9742 = vmul.f32 %v9584, %v9736
  %v9743 = vmul.f32 %v9587, %v9736
  %v9744 = vmul.f32 %v9592, %v9736
  %v9745 = vmul.f32 %v9595, %v9736
  %v9746 = vmul.f32 %v9600, %v9736
  %v9747 = vmul.f32 %v9603, %v9736
  %v9748 = vmul.f32 %v9608, %v9736
  %v9749 = vmul.f32 %v9611, %v9736
  %v9750 = vmul.f32 %v9616, %v9736
  %v9751 = vmul.f32 %v9619, %v9736
  %v9752 = vmul.f32 %v9624, %v9736
  %v9753 = vmul.f32 %v9627, %v9736
  %v9755 = vlaneseq
  %v9756 = vshrl.u32 %v9755, 7
  %v9757 = vsub.s32 0, %v9756
  %v9758 = vrot.slane %v9731, %v9757
  %v9760 = vadd.f32 %v9738, %v9758
  %v9761 = vadd.f32 %v9739, %v9758
  %v9762 = vadd.f32 %v9740, %v9758
  %v9763 = vadd.f32 %v9741, %v9758
  %v9764 = vadd.f32 %v9742, %v9758
  %v9765 = vadd.f32 %v9743, %v9758
  %v9766 = vadd.f32 %v9744, %v9758
  %v9767 = vadd.f32 %v9745, %v9758
  %v9768 = vadd.f32 %v9746, %v9758
  %v9769 = vadd.f32 %v9747, %v9758
  %v9770 = vadd.f32 %v9748, %v9758
  %v9771 = vadd.f32 %v9749, %v9758
  %v9772 = vadd.f32 %v9750, %v9758
  %v9773 = vadd.f32 %v9751, %v9758
  %v9774 = vadd.f32 %v9752, %v9758
  %v9775 = vadd.f32 %v9753, %v9758
  %v9776 = vmul.f32 %v9760, 0.2
  %v9777 = vmul.f32 %v9761, 0.2
  %v9778 = vmul.f32 %v9762, 0.2
  %v9779 = vmul.f32 %v9763, 0.2
  %v9780 = vmul.f32 %v9764, 0.2
  %v9781 = vmul.f32 %v9765, 0.2
  %v9782 = vmul.f32 %v9766, 0.2
  %v9783 = vmul.f32 %v9767, 0.2
  %v9784 = vmul.f32 %v9768, 0.2
  %v9785 = vmul.f32 %v9769, 0.2
  %v9786 = vmul.f32 %v9770, 0.2
  %v9787 = vmul.f32 %v9771, 0.2
  %v9788 = vmul.f32 %v9772, 0.2
  %v9789 = vmul.f32 %v9773, 0.2
  %v9790 = vmul.f32 %v9774, 0.2
  %v9791 = vmul.f32 %v9775, 0.2
  %v9792 = vmax.f32 %v9760, %v9776
  %v9793 = vmax.f32 %v9761, %v9777
  %v9794 = vmax.f32 %v9762, %v9778
  %v9795 = vmax.f32 %v9763, %v9779
  %v9796 = vmax.f32 %v9764, %v9780
  %v9797 = vmax.f32 %v9765, %v9781
  %v9798 = vmax.f32 %v9766, %v9782
  %v9799 = vmax.f32 %v9767, %v9783
  %v9800 = vmax.f32 %v9768, %v9784
  %v9801 = vmax.f32 %v9769, %v9785
  %v9802 = vmax.f32 %v9770, %v9786
  %v9803 = vmax.f32 %v9771, %v9787
  %v9804 = vmax.f32 %v9772, %v9788
  %v9805 = vmax.f32 %v9773, %v9789
  %v9806 = vmax.f32 %v9774, %v9790
  %v9807 = vmax.f32 %v9775, %v9791
  %s9808 = scalar_lea.vmem [#allocation3], 24
  %9809 = vst.msk [vmem:[%s9808 + $0x1] sm:$0xff] %vm130, %v9792
  %9810 = vst.msk [vmem:[%s9808 + $0x19] sm:$0xff] %vm130, %v9793
  %9811 = vst.msk [vmem:[%s9808 + $0x31] sm:$0xff] %vm130, %v9794
  %9812 = vst.msk [vmem:[%s9808 + $0x49] sm:$0xff] %vm130, %v9795
  %9813 = vst.msk [vmem:[%s9808 + $0x61] sm:$0xff] %vm130, %v9796
  %9814 = vst.msk [vmem:[%s9808 + $0x79] sm:$0xff] %vm130, %v9797
  %9815 = vst.msk [vmem:[%s9808 + $0x91] sm:$0xff] %vm130, %v9798
  %9816 = vst.msk [vmem:[%s9808 + $0xa9] sm:$0xff] %vm130, %v9799
  %9817 = vst.msk [vmem:[%s9808 + $0xf1] sm:$0xff] %vm130, %v9800
  %9818 = vst.msk [vmem:[%s9808 + $0x109] sm:$0xff] %vm130, %v9801
  %9819 = vst.msk [vmem:[%s9808 + $0x121] sm:$0xff] %vm130, %v9802
  %9820 = vst.msk [vmem:[%s9808 + $0x139] sm:$0xff] %vm130, %v9803
  %9821 = vst.msk [vmem:[%s9808 + $0x151] sm:$0xff] %vm130, %v9804
  %9822 = vst.msk [vmem:[%s9808 + $0x169] sm:$0xff] %vm130, %v9805
  %9823 = vst.msk [vmem:[%s9808 + $0x181] sm:$0xff] %vm130, %v9806
  %9824 = vst.msk [vmem:[%s9808 + $0x199] sm:$0xff] %vm130, %v9807
  %v9825 = vld [vmem:[#allocation3] ss:$2 sm:$0xff]
  %s9826 = scalar_lea.vmem [#allocation3], 48
  %v9827 = vld [vmem:[%s9826] ss:$2 sm:$0xff]
  %s9828 = scalar_lea.vmem [#allocation3], 96
  %v9829 = vld [vmem:[%s9828] ss:$2 sm:$0xff]
  %s9830 = scalar_lea.vmem [#allocation3], 144
  %v9831 = vld [vmem:[%s9830] ss:$2 sm:$0xff]
  %s9832 = scalar_lea.vmem [#allocation3], 240
  %v9833 = vld [vmem:[%s9832] ss:$2 sm:$0xff]
  %s9834 = scalar_lea.vmem [#allocation3], 288
  %v9835 = vld [vmem:[%s9834] ss:$2 sm:$0xff]
  %s9836 = scalar_lea.vmem [#allocation3], 336
  %v9837 = vld [vmem:[%s9836] ss:$2 sm:$0xff]
  %s9838 = scalar_lea.vmem [#allocation3], 384
  %v9839 = vld [vmem:[%s9838] ss:$2 sm:$0xff]
  %s9840 = scalar_lea.vmem [#allocation3], 1
  %v9841 = vld [vmem:[%s9840] ss:$2 sm:$0xff]
  %s9842 = scalar_lea.vmem [#allocation3], 49
  %v9843 = vld [vmem:[%s9842] ss:$2 sm:$0xff]
  %s9844 = scalar_lea.vmem [#allocation3], 97
  %v9845 = vld [vmem:[%s9844] ss:$2 sm:$0xff]
  %s9846 = scalar_lea.vmem [#allocation3], 145
  %v9847 = vld [vmem:[%s9846] ss:$2 sm:$0xff]
  %s9848 = scalar_lea.vmem [#allocation3], 241
  %v9849 = vld [vmem:[%s9848] ss:$2 sm:$0xff]
  %s9850 = scalar_lea.vmem [#allocation3], 289
  %v9851 = vld [vmem:[%s9850] ss:$2 sm:$0xff]
  %s9852 = scalar_lea.vmem [#allocation3], 337
  %v9853 = vld [vmem:[%s9852] ss:$2 sm:$0xff]
  %s9854 = scalar_lea.vmem [#allocation3], 385
  %v9855 = vld [vmem:[%s9854] ss:$2 sm:$0xff]
  %s9856 = scalar_lea.vmem [#allocation3], 2
  %v9857 = vld [vmem:[%s9856] ss:$2 sm:$0xff]
  %s9858 = scalar_lea.vmem [#allocation3], 50
  %v9859 = vld [vmem:[%s9858] ss:$2 sm:$0xff]
  %s9860 = scalar_lea.vmem [#allocation3], 98
  %v9861 = vld [vmem:[%s9860] ss:$2 sm:$0xff]
  %s9862 = scalar_lea.vmem [#allocation3], 146
  %v9863 = vld [vmem:[%s9862] ss:$2 sm:$0xff]
  %s9864 = scalar_lea.vmem [#allocation3], 242
  %v9865 = vld [vmem:[%s9864] ss:$2 sm:$0xff]
  %s9866 = scalar_lea.vmem [#allocation3], 290
  %v9867 = vld [vmem:[%s9866] ss:$2 sm:$0xff]
  %s9868 = scalar_lea.vmem [#allocation3], 338
  %v9869 = vld [vmem:[%s9868] ss:$2 sm:$0xff]
  %s9870 = scalar_lea.vmem [#allocation3], 386
  %v9871 = vld [vmem:[%s9870] ss:$2 sm:$0xff]
  %s9872 = scalar_lea.vmem [#allocation3], 3
  %v9873 = vld [vmem:[%s9872] ss:$2 sm:$0xff]
  %s9874 = scalar_lea.vmem [#allocation3], 51
  %v9875 = vld [vmem:[%s9874] ss:$2 sm:$0xff]
  %s9876 = scalar_lea.vmem [#allocation3], 99
  %v9877 = vld [vmem:[%s9876] ss:$2 sm:$0xff]
  %s9878 = scalar_lea.vmem [#allocation3], 147
  %v9879 = vld [vmem:[%s9878] ss:$2 sm:$0xff]
  %s9880 = scalar_lea.vmem [#allocation3], 243
  %v9881 = vld [vmem:[%s9880] ss:$2 sm:$0xff]
  %s9882 = scalar_lea.vmem [#allocation3], 291
  %v9883 = vld [vmem:[%s9882] ss:$2 sm:$0xff]
  %s9884 = scalar_lea.vmem [#allocation3], 339
  %v9885 = vld [vmem:[%s9884] ss:$2 sm:$0xff]
  %s9886 = scalar_lea.vmem [#allocation3], 387
  %v9887 = vld [vmem:[%s9886] ss:$2 sm:$0xff]
  %v9888 = vld [vmem:[%s9808] ss:$2 sm:$0xff]
  %s9889 = scalar_lea.vmem %s9808, 48 [#allocation3]
  %v9890 = vld [vmem:[%s9889] ss:$2 sm:$0xff]
  %s9891 = scalar_lea.vmem %s9808, 96 [#allocation3]
  %v9892 = vld [vmem:[%s9891] ss:$2 sm:$0xff]
  %s9893 = scalar_lea.vmem %s9808, 144 [#allocation3]
  %v9894 = vld [vmem:[%s9893] ss:$2 sm:$0xff]
  %s9895 = scalar_lea.vmem %s9808, 240 [#allocation3]
  %v9896 = vld [vmem:[%s9895] ss:$2 sm:$0xff]
  %s9897 = scalar_lea.vmem %s9808, 288 [#allocation3]
  %v9898 = vld [vmem:[%s9897] ss:$2 sm:$0xff]
  %s9899 = scalar_lea.vmem %s9808, 336 [#allocation3]
  %v9900 = vld [vmem:[%s9899] ss:$2 sm:$0xff]
  %s9901 = scalar_lea.vmem %s9808, 384 [#allocation3]
  %v9902 = vld [vmem:[%s9901] ss:$2 sm:$0xff]
  %s9903 = scalar_lea.vmem %s9808, 1 [#allocation3]
  %v9904 = vld [vmem:[%s9903] ss:$2 sm:$0xff]
  %s9905 = scalar_lea.vmem %s9808, 49 [#allocation3]
  %v9906 = vld [vmem:[%s9905] ss:$2 sm:$0xff]
  %s9907 = scalar_lea.vmem %s9808, 97 [#allocation3]
  %v9908 = vld [vmem:[%s9907] ss:$2 sm:$0xff]
  %s9909 = scalar_lea.vmem %s9808, 145 [#allocation3]
  %v9910 = vld [vmem:[%s9909] ss:$2 sm:$0xff]
  %s9911 = scalar_lea.vmem %s9808, 241 [#allocation3]
  %v9912 = vld [vmem:[%s9911] ss:$2 sm:$0xff]
  %s9913 = scalar_lea.vmem %s9808, 289 [#allocation3]
  %v9914 = vld [vmem:[%s9913] ss:$2 sm:$0xff]
  %s9915 = scalar_lea.vmem %s9808, 337 [#allocation3]
  %v9916 = vld [vmem:[%s9915] ss:$2 sm:$0xff]
  %s9917 = scalar_lea.vmem %s9808, 385 [#allocation3]
  %v9918 = vld [vmem:[%s9917] ss:$2 sm:$0xff]
  %s9919 = scalar_lea.vmem %s9808, 2 [#allocation3]
  %v9920 = vld [vmem:[%s9919] ss:$2 sm:$0xff]
  %s9921 = scalar_lea.vmem %s9808, 50 [#allocation3]
  %v9922 = vld [vmem:[%s9921] ss:$2 sm:$0xff]
  %s9923 = scalar_lea.vmem %s9808, 98 [#allocation3]
  %v9924 = vld [vmem:[%s9923] ss:$2 sm:$0xff]
  %s9925 = scalar_lea.vmem %s9808, 146 [#allocation3]
  %v9926 = vld [vmem:[%s9925] ss:$2 sm:$0xff]
  %s9927 = scalar_lea.vmem %s9808, 242 [#allocation3]
  %v9928 = vld [vmem:[%s9927] ss:$2 sm:$0xff]
  %s9929 = scalar_lea.vmem %s9808, 290 [#allocation3]
  %v9930 = vld [vmem:[%s9929] ss:$2 sm:$0xff]
  %s9931 = scalar_lea.vmem %s9808, 338 [#allocation3]
  %v9932 = vld [vmem:[%s9931] ss:$2 sm:$0xff]
  %s9933 = scalar_lea.vmem %s9808, 386 [#allocation3]
  %v9934 = vld [vmem:[%s9933] ss:$2 sm:$0xff]
  %s9935 = scalar_lea.vmem %s9808, 3 [#allocation3]
  %v9936 = vld [vmem:[%s9935] ss:$2 sm:$0xff]
  %s9937 = scalar_lea.vmem %s9808, 51 [#allocation3]
  %v9938 = vld [vmem:[%s9937] ss:$2 sm:$0xff]
  %s9939 = scalar_lea.vmem %s9808, 99 [#allocation3]
  %v9940 = vld [vmem:[%s9939] ss:$2 sm:$0xff]
  %s9941 = scalar_lea.vmem %s9808, 147 [#allocation3]
  %v9942 = vld [vmem:[%s9941] ss:$2 sm:$0xff]
  %s9943 = scalar_lea.vmem %s9808, 243 [#allocation3]
  %v9944 = vld [vmem:[%s9943] ss:$2 sm:$0xff]
  %s9945 = scalar_lea.vmem %s9808, 291 [#allocation3]
  %v9946 = vld [vmem:[%s9945] ss:$2 sm:$0xff]
  %s9947 = scalar_lea.vmem %s9808, 339 [#allocation3]
  %v9948 = vld [vmem:[%s9947] ss:$2 sm:$0xff]
  %s9949 = scalar_lea.vmem %s9808, 387 [#allocation3]
  %v9950 = vld [vmem:[%s9949] ss:$2 sm:$0xff]
  %s9951 = scalar_lea.vmem [#allocation3], 48
  %v9952 = vld [vmem:[%s9951] ss:$2 sm:$0xff]
  %s9953 = scalar_lea.vmem %s9951, 48 [#allocation3]
  %v9954 = vld [vmem:[%s9953] ss:$2 sm:$0xff]
  %s9955 = scalar_lea.vmem %s9951, 96 [#allocation3]
  %v9956 = vld [vmem:[%s9955] ss:$2 sm:$0xff]
  %s9957 = scalar_lea.vmem %s9951, 144 [#allocation3]
  %v9958 = vld [vmem:[%s9957] ss:$2 sm:$0xff]
  %s9959 = scalar_lea.vmem %s9951, 240 [#allocation3]
  %v9960 = vld [vmem:[%s9959] ss:$2 sm:$0xff]
  %s9961 = scalar_lea.vmem %s9951, 288 [#allocation3]
  %v9962 = vld [vmem:[%s9961] ss:$2 sm:$0xff]
  %s9963 = scalar_lea.vmem %s9951, 336 [#allocation3]
  %v9964 = vld [vmem:[%s9963] ss:$2 sm:$0xff]
  %s9965 = scalar_lea.vmem %s9951, 384 [#allocation3]
  %v9966 = vld [vmem:[%s9965] ss:$2 sm:$0xff]
  %s9967 = scalar_lea.vmem %s9951, 1 [#allocation3]
  %v9968 = vld [vmem:[%s9967] ss:$2 sm:$0xff]
  %s9969 = scalar_lea.vmem %s9951, 49 [#allocation3]
  %v9970 = vld [vmem:[%s9969] ss:$2 sm:$0xff]
  %s9971 = scalar_lea.vmem %s9951, 97 [#allocation3]
  %v9972 = vld [vmem:[%s9971] ss:$2 sm:$0xff]
  %s9973 = scalar_lea.vmem %s9951, 145 [#allocation3]
  %v9974 = vld [vmem:[%s9973] ss:$2 sm:$0xff]
  %s9975 = scalar_lea.vmem %s9951, 241 [#allocation3]
  %v9976 = vld [vmem:[%s9975] ss:$2 sm:$0xff]
  %s9977 = scalar_lea.vmem %s9951, 289 [#allocation3]
  %v9978 = vld [vmem:[%s9977] ss:$2 sm:$0xff]
  %s9979 = scalar_lea.vmem %s9951, 337 [#allocation3]
  %v9980 = vld [vmem:[%s9979] ss:$2 sm:$0xff]
  %s9981 = scalar_lea.vmem %s9951, 385 [#allocation3]
  %v9982 = vld [vmem:[%s9981] ss:$2 sm:$0xff]
  %s9983 = scalar_lea.vmem %s9951, 2 [#allocation3]
  %v9984 = vld [vmem:[%s9983] ss:$2 sm:$0xff]
  %s9985 = scalar_lea.vmem %s9951, 50 [#allocation3]
  %v9986 = vld [vmem:[%s9985] ss:$2 sm:$0xff]
  %s9987 = scalar_lea.vmem %s9951, 98 [#allocation3]
  %v9988 = vld [vmem:[%s9987] ss:$2 sm:$0xff]
  %s9989 = scalar_lea.vmem %s9951, 146 [#allocation3]
  %v9990 = vld [vmem:[%s9989] ss:$2 sm:$0xff]
  %s9991 = scalar_lea.vmem %s9951, 242 [#allocation3]
  %v9992 = vld [vmem:[%s9991] ss:$2 sm:$0xff]
  %s9993 = scalar_lea.vmem %s9951, 290 [#allocation3]
  %v9994 = vld [vmem:[%s9993] ss:$2 sm:$0xff]
  %s9995 = scalar_lea.vmem %s9951, 338 [#allocation3]
  %v9996 = vld [vmem:[%s9995] ss:$2 sm:$0xff]
  %s9997 = scalar_lea.vmem %s9951, 386 [#allocation3]
  %v9998 = vld [vmem:[%s9997] ss:$2 sm:$0xff]
  %s9999 = scalar_lea.vmem %s9951, 3 [#allocation3]
  %v10000 = vld [vmem:[%s9999] ss:$2 sm:$0xff]
  %s10001 = scalar_lea.vmem %s9951, 51 [#allocation3]
  %v10002 = vld [vmem:[%s10001] ss:$2 sm:$0xff]
  %s10003 = scalar_lea.vmem %s9951, 99 [#allocation3]
  %v10004 = vld [vmem:[%s10003] ss:$2 sm:$0xff]
  %s10005 = scalar_lea.vmem %s9951, 147 [#allocation3]
  %v10006 = vld [vmem:[%s10005] ss:$2 sm:$0xff]
  %s10007 = scalar_lea.vmem %s9951, 243 [#allocation3]
  %v10008 = vld [vmem:[%s10007] ss:$2 sm:$0xff]
  %s10009 = scalar_lea.vmem %s9951, 291 [#allocation3]
  %v10010 = vld [vmem:[%s10009] ss:$2 sm:$0xff]
  %s10011 = scalar_lea.vmem %s9951, 339 [#allocation3]
  %v10012 = vld [vmem:[%s10011] ss:$2 sm:$0xff]
  %s10013 = scalar_lea.vmem %s9951, 387 [#allocation3]
  %v10014 = vld [vmem:[%s10013] ss:$2 sm:$0xff]
  %s10015 = scalar_lea.vmem [#allocation3], 72
  %v10016 = vld [vmem:[%s10015] ss:$2 sm:$0xff]
  %s10017 = scalar_lea.vmem %s10015, 48 [#allocation3]
  %v10018 = vld [vmem:[%s10017] ss:$2 sm:$0xff]
  %s10019 = scalar_lea.vmem %s10015, 96 [#allocation3]
  %v10020 = vld [vmem:[%s10019] ss:$2 sm:$0xff]
  %s10021 = scalar_lea.vmem %s10015, 144 [#allocation3]
  %v10022 = vld [vmem:[%s10021] ss:$2 sm:$0xff]
  %s10023 = scalar_lea.vmem %s10015, 240 [#allocation3]
  %v10024 = vld [vmem:[%s10023] ss:$2 sm:$0xff]
  %s10025 = scalar_lea.vmem %s10015, 288 [#allocation3]
  %v10026 = vld [vmem:[%s10025] ss:$2 sm:$0xff]
  %s10027 = scalar_lea.vmem %s10015, 336 [#allocation3]
  %v10028 = vld [vmem:[%s10027] ss:$2 sm:$0xff]
  %s10029 = scalar_lea.vmem %s10015, 384 [#allocation3]
  %v10030 = vld [vmem:[%s10029] ss:$2 sm:$0xff]
  %s10031 = scalar_lea.vmem %s10015, 1 [#allocation3]
  %v10032 = vld [vmem:[%s10031] ss:$2 sm:$0xff]
  %s10033 = scalar_lea.vmem %s10015, 49 [#allocation3]
  %v10034 = vld [vmem:[%s10033] ss:$2 sm:$0xff]
  %s10035 = scalar_lea.vmem %s10015, 97 [#allocation3]
  %v10036 = vld [vmem:[%s10035] ss:$2 sm:$0xff]
  %s10037 = scalar_lea.vmem %s10015, 145 [#allocation3]
  %v10038 = vld [vmem:[%s10037] ss:$2 sm:$0xff]
  %s10039 = scalar_lea.vmem %s10015, 241 [#allocation3]
  %v10040 = vld [vmem:[%s10039] ss:$2 sm:$0xff]
  %s10041 = scalar_lea.vmem %s10015, 289 [#allocation3]
  %v10042 = vld [vmem:[%s10041] ss:$2 sm:$0xff]
  %s10043 = scalar_lea.vmem %s10015, 337 [#allocation3]
  %v10044 = vld [vmem:[%s10043] ss:$2 sm:$0xff]
  %s10045 = scalar_lea.vmem %s10015, 385 [#allocation3]
  %v10046 = vld [vmem:[%s10045] ss:$2 sm:$0xff]
  %s10047 = scalar_lea.vmem %s10015, 2 [#allocation3]
  %v10048 = vld [vmem:[%s10047] ss:$2 sm:$0xff]
  %s10049 = scalar_lea.vmem %s10015, 50 [#allocation3]
  %v10050 = vld [vmem:[%s10049] ss:$2 sm:$0xff]
  %s10051 = scalar_lea.vmem %s10015, 98 [#allocation3]
  %v10052 = vld [vmem:[%s10051] ss:$2 sm:$0xff]
  %s10053 = scalar_lea.vmem %s10015, 146 [#allocation3]
  %v10054 = vld [vmem:[%s10053] ss:$2 sm:$0xff]
  %s10055 = scalar_lea.vmem %s10015, 242 [#allocation3]
  %v10056 = vld [vmem:[%s10055] ss:$2 sm:$0xff]
  %s10057 = scalar_lea.vmem %s10015, 290 [#allocation3]
  %v10058 = vld [vmem:[%s10057] ss:$2 sm:$0xff]
  %s10059 = scalar_lea.vmem %s10015, 338 [#allocation3]
  %v10060 = vld [vmem:[%s10059] ss:$2 sm:$0xff]
  %s10061 = scalar_lea.vmem %s10015, 386 [#allocation3]
  %v10062 = vld [vmem:[%s10061] ss:$2 sm:$0xff]
  %s10063 = scalar_lea.vmem %s10015, 3 [#allocation3]
  %v10064 = vld [vmem:[%s10063] ss:$2 sm:$0xff]
  %s10065 = scalar_lea.vmem %s10015, 51 [#allocation3]
  %v10066 = vld [vmem:[%s10065] ss:$2 sm:$0xff]
  %s10067 = scalar_lea.vmem %s10015, 99 [#allocation3]
  %v10068 = vld [vmem:[%s10067] ss:$2 sm:$0xff]
  %s10069 = scalar_lea.vmem %s10015, 147 [#allocation3]
  %v10070 = vld [vmem:[%s10069] ss:$2 sm:$0xff]
  %s10071 = scalar_lea.vmem %s10015, 243 [#allocation3]
  %v10072 = vld [vmem:[%s10071] ss:$2 sm:$0xff]
  %s10073 = scalar_lea.vmem %s10015, 291 [#allocation3]
  %v10074 = vld [vmem:[%s10073] ss:$2 sm:$0xff]
  %s10075 = scalar_lea.vmem %s10015, 339 [#allocation3]
  %v10076 = vld [vmem:[%s10075] ss:$2 sm:$0xff]
  %s10077 = scalar_lea.vmem %s10015, 387 [#allocation3]
  %v10078 = vld [vmem:[%s10077] ss:$2 sm:$0xff]
  %10087 = vrot.lane.b32.xlu0 %v9841, 32
  %v10088 = vpop.permute.xlu0 %10087
  %10089 = vrot.lane.b32.xlu0 %v9843, 32
  %v10090 = vpop.permute.xlu0 %10089
  %10091 = vrot.lane.b32.xlu0 %v9845, 32
  %v10092 = vpop.permute.xlu0 %10091
  %10093 = vrot.lane.b32.xlu0 %v9847, 32
  %v10094 = vpop.permute.xlu0 %10093
  %10095 = vrot.lane.b32.xlu0 %v9849, 32
  %v10096 = vpop.permute.xlu0 %10095
  %10097 = vrot.lane.b32.xlu0 %v9851, 32
  %v10098 = vpop.permute.xlu0 %10097
  %10099 = vrot.lane.b32.xlu0 %v9853, 32
  %v10100 = vpop.permute.xlu0 %10099
  %10101 = vrot.lane.b32.xlu0 %v9855, 32
  %v10102 = vpop.permute.xlu0 %10101
  %10119 = vrot.lane.b32.xlu0 %v9857, 64
  %v10120 = vpop.permute.xlu0 %10119
  %10121 = vrot.lane.b32.xlu0 %v9859, 64
  %v10122 = vpop.permute.xlu0 %10121
  %10123 = vrot.lane.b32.xlu0 %v9861, 64
  %v10124 = vpop.permute.xlu0 %10123
  %10125 = vrot.lane.b32.xlu0 %v9863, 64
  %v10126 = vpop.permute.xlu0 %10125
  %10127 = vrot.lane.b32.xlu0 %v9865, 64
  %v10128 = vpop.permute.xlu0 %10127
  %10129 = vrot.lane.b32.xlu0 %v9867, 64
  %v10130 = vpop.permute.xlu0 %10129
  %10131 = vrot.lane.b32.xlu0 %v9869, 64
  %v10132 = vpop.permute.xlu0 %10131
  %10133 = vrot.lane.b32.xlu0 %v9871, 64
  %v10134 = vpop.permute.xlu0 %10133
  %10151 = vrot.lane.b32.xlu0 %v9873, 96
  %v10152 = vpop.permute.xlu0 %10151
  %10153 = vrot.lane.b32.xlu0 %v9875, 96
  %v10154 = vpop.permute.xlu0 %10153
  %10155 = vrot.lane.b32.xlu0 %v9877, 96
  %v10156 = vpop.permute.xlu0 %10155
  %10157 = vrot.lane.b32.xlu0 %v9879, 96
  %v10158 = vpop.permute.xlu0 %10157
  %10159 = vrot.lane.b32.xlu0 %v9881, 96
  %v10160 = vpop.permute.xlu0 %10159
  %10161 = vrot.lane.b32.xlu0 %v9883, 96
  %v10162 = vpop.permute.xlu0 %10161
  %10163 = vrot.lane.b32.xlu0 %v9885, 96
  %v10164 = vpop.permute.xlu0 %10163
  %10165 = vrot.lane.b32.xlu0 %v9887, 96
  %v10166 = vpop.permute.xlu0 %10165
  %10183 = vrot.lane.b32.xlu0 %v9904, 32
  %v10184 = vpop.permute.xlu0 %10183
  %10185 = vrot.lane.b32.xlu0 %v9906, 32
  %v10186 = vpop.permute.xlu0 %10185
  %10187 = vrot.lane.b32.xlu0 %v9908, 32
  %v10188 = vpop.permute.xlu0 %10187
  %10189 = vrot.lane.b32.xlu0 %v9910, 32
  %v10190 = vpop.permute.xlu0 %10189
  %10191 = vrot.lane.b32.xlu0 %v9912, 32
  %v10192 = vpop.permute.xlu0 %10191
  %10193 = vrot.lane.b32.xlu0 %v9914, 32
  %v10194 = vpop.permute.xlu0 %10193
  %10195 = vrot.lane.b32.xlu0 %v9916, 32
  %v10196 = vpop.permute.xlu0 %10195
  %10197 = vrot.lane.b32.xlu0 %v9918, 32
  %v10198 = vpop.permute.xlu0 %10197
  %10215 = vrot.lane.b32.xlu0 %v9920, 64
  %v10216 = vpop.permute.xlu0 %10215
  %10217 = vrot.lane.b32.xlu0 %v9922, 64
  %v10218 = vpop.permute.xlu0 %10217
  %10219 = vrot.lane.b32.xlu0 %v9924, 64
  %v10220 = vpop.permute.xlu0 %10219
  %10221 = vrot.lane.b32.xlu0 %v9926, 64
  %v10222 = vpop.permute.xlu0 %10221
  %10223 = vrot.lane.b32.xlu0 %v9928, 64
  %v10224 = vpop.permute.xlu0 %10223
  %10225 = vrot.lane.b32.xlu0 %v9930, 64
  %v10226 = vpop.permute.xlu0 %10225
  %10227 = vrot.lane.b32.xlu0 %v9932, 64
  %v10228 = vpop.permute.xlu0 %10227
  %10229 = vrot.lane.b32.xlu0 %v9934, 64
  %v10230 = vpop.permute.xlu0 %10229
  %10247 = vrot.lane.b32.xlu0 %v9936, 96
  %v10248 = vpop.permute.xlu0 %10247
  %10249 = vrot.lane.b32.xlu0 %v9938, 96
  %v10250 = vpop.permute.xlu0 %10249
  %10251 = vrot.lane.b32.xlu0 %v9940, 96
  %v10252 = vpop.permute.xlu0 %10251
  %10253 = vrot.lane.b32.xlu0 %v9942, 96
  %v10254 = vpop.permute.xlu0 %10253
  %10255 = vrot.lane.b32.xlu0 %v9944, 96
  %v10256 = vpop.permute.xlu0 %10255
  %10257 = vrot.lane.b32.xlu0 %v9946, 96
  %v10258 = vpop.permute.xlu0 %10257
  %10259 = vrot.lane.b32.xlu0 %v9948, 96
  %v10260 = vpop.permute.xlu0 %10259
  %10261 = vrot.lane.b32.xlu0 %v9950, 96
  %v10262 = vpop.permute.xlu0 %10261
  %10279 = vrot.lane.b32.xlu0 %v9968, 32
  %v10280 = vpop.permute.xlu0 %10279
  %10281 = vrot.lane.b32.xlu0 %v9970, 32
  %v10282 = vpop.permute.xlu0 %10281
  %10283 = vrot.lane.b32.xlu0 %v9972, 32
  %v10284 = vpop.permute.xlu0 %10283
  %10285 = vrot.lane.b32.xlu0 %v9974, 32
  %v10286 = vpop.permute.xlu0 %10285
  %10287 = vrot.lane.b32.xlu0 %v9976, 32
  %v10288 = vpop.permute.xlu0 %10287
  %10289 = vrot.lane.b32.xlu0 %v9978, 32
  %v10290 = vpop.permute.xlu0 %10289
  %10291 = vrot.lane.b32.xlu0 %v9980, 32
  %v10292 = vpop.permute.xlu0 %10291
  %10293 = vrot.lane.b32.xlu0 %v9982, 32
  %v10294 = vpop.permute.xlu0 %10293
  %10311 = vrot.lane.b32.xlu0 %v9984, 64
  %v10312 = vpop.permute.xlu0 %10311
  %10313 = vrot.lane.b32.xlu0 %v9986, 64
  %v10314 = vpop.permute.xlu0 %10313
  %10315 = vrot.lane.b32.xlu0 %v9988, 64
  %v10316 = vpop.permute.xlu0 %10315
  %10317 = vrot.lane.b32.xlu0 %v9990, 64
  %v10318 = vpop.permute.xlu0 %10317
  %10319 = vrot.lane.b32.xlu0 %v9992, 64
  %v10320 = vpop.permute.xlu0 %10319
  %10321 = vrot.lane.b32.xlu0 %v9994, 64
  %v10322 = vpop.permute.xlu0 %10321
  %10323 = vrot.lane.b32.xlu0 %v9996, 64
  %v10324 = vpop.permute.xlu0 %10323
  %10325 = vrot.lane.b32.xlu0 %v9998, 64
  %v10326 = vpop.permute.xlu0 %10325
  %10343 = vrot.lane.b32.xlu0 %v10000, 96
  %v10344 = vpop.permute.xlu0 %10343
  %10345 = vrot.lane.b32.xlu0 %v10002, 96
  %v10346 = vpop.permute.xlu0 %10345
  %10347 = vrot.lane.b32.xlu0 %v10004, 96
  %v10348 = vpop.permute.xlu0 %10347
  %10349 = vrot.lane.b32.xlu0 %v10006, 96
  %v10350 = vpop.permute.xlu0 %10349
  %10351 = vrot.lane.b32.xlu0 %v10008, 96
  %v10352 = vpop.permute.xlu0 %10351
  %10353 = vrot.lane.b32.xlu0 %v10010, 96
  %v10354 = vpop.permute.xlu0 %10353
  %10355 = vrot.lane.b32.xlu0 %v10012, 96
  %v10356 = vpop.permute.xlu0 %10355
  %10357 = vrot.lane.b32.xlu0 %v10014, 96
  %v10358 = vpop.permute.xlu0 %10357
  %10375 = vrot.lane.b32.xlu0 %v10032, 32
  %v10376 = vpop.permute.xlu0 %10375
  %10377 = vrot.lane.b32.xlu0 %v10034, 32
  %v10378 = vpop.permute.xlu0 %10377
  %10379 = vrot.lane.b32.xlu0 %v10036, 32
  %v10380 = vpop.permute.xlu0 %10379
  %10381 = vrot.lane.b32.xlu0 %v10038, 32
  %v10382 = vpop.permute.xlu0 %10381
  %10383 = vrot.lane.b32.xlu0 %v10040, 32
  %v10384 = vpop.permute.xlu0 %10383
  %10385 = vrot.lane.b32.xlu0 %v10042, 32
  %v10386 = vpop.permute.xlu0 %10385
  %10387 = vrot.lane.b32.xlu0 %v10044, 32
  %v10388 = vpop.permute.xlu0 %10387
  %10389 = vrot.lane.b32.xlu0 %v10046, 32
  %v10390 = vpop.permute.xlu0 %10389
  %10407 = vrot.lane.b32.xlu0 %v10048, 64
  %v10408 = vpop.permute.xlu0 %10407
  %10409 = vrot.lane.b32.xlu0 %v10050, 64
  %v10410 = vpop.permute.xlu0 %10409
  %10411 = vrot.lane.b32.xlu0 %v10052, 64
  %v10412 = vpop.permute.xlu0 %10411
  %10413 = vrot.lane.b32.xlu0 %v10054, 64
  %v10414 = vpop.permute.xlu0 %10413
  %10415 = vrot.lane.b32.xlu0 %v10056, 64
  %v10416 = vpop.permute.xlu0 %10415
  %10417 = vrot.lane.b32.xlu0 %v10058, 64
  %v10418 = vpop.permute.xlu0 %10417
  %10419 = vrot.lane.b32.xlu0 %v10060, 64
  %v10420 = vpop.permute.xlu0 %10419
  %10421 = vrot.lane.b32.xlu0 %v10062, 64
  %v10422 = vpop.permute.xlu0 %10421
  %10439 = vrot.lane.b32.xlu0 %v10064, 96
  %v10440 = vpop.permute.xlu0 %10439
  %10441 = vrot.lane.b32.xlu0 %v10066, 96
  %v10442 = vpop.permute.xlu0 %10441
  %10443 = vrot.lane.b32.xlu0 %v10068, 96
  %v10444 = vpop.permute.xlu0 %10443
  %10445 = vrot.lane.b32.xlu0 %v10070, 96
  %v10446 = vpop.permute.xlu0 %10445
  %10447 = vrot.lane.b32.xlu0 %v10072, 96
  %v10448 = vpop.permute.xlu0 %10447
  %10449 = vrot.lane.b32.xlu0 %v10074, 96
  %v10450 = vpop.permute.xlu0 %10449
  %10451 = vrot.lane.b32.xlu0 %v10076, 96
  %v10452 = vpop.permute.xlu0 %10451
  %10453 = vrot.lane.b32.xlu0 %v10078, 96
  %v10454 = vpop.permute.xlu0 %10453
  %v10463 = vsel %vm130, %v9825, %v10088
  %v10464 = vsel %vm130, %v9827, %v10090
  %v10465 = vsel %vm130, %v9829, %v10092
  %v10466 = vsel %vm130, %v9831, %v10094
  %v10467 = vsel %vm130, %v9833, %v10096
  %v10468 = vsel %vm130, %v9835, %v10098
  %v10469 = vsel %vm130, %v9837, %v10100
  %v10470 = vsel %vm130, %v9839, %v10102
  %v10471 = vsel %vm206, %v10463, %v10120
  %v10472 = vsel %vm206, %v10464, %v10122
  %v10473 = vsel %vm206, %v10465, %v10124
  %v10474 = vsel %vm206, %v10466, %v10126
  %v10475 = vsel %vm206, %v10467, %v10128
  %v10476 = vsel %vm206, %v10468, %v10130
  %v10477 = vsel %vm206, %v10469, %v10132
  %v10478 = vsel %vm206, %v10470, %v10134
  %v10479 = vsel %vm9243, %v10471, %v10152
  %v10480 = vsel %vm9243, %v10472, %v10154
  %v10481 = vsel %vm9243, %v10473, %v10156
  %v10482 = vsel %vm9243, %v10474, %v10158
  %v10483 = vsel %vm9243, %v10475, %v10160
  %v10484 = vsel %vm9243, %v10476, %v10162
  %v10485 = vsel %vm9243, %v10477, %v10164
  %v10486 = vsel %vm9243, %v10478, %v10166
  %v10487 = vsel %vm130, %v9888, %v10184
  %v10488 = vsel %vm130, %v9890, %v10186
  %v10489 = vsel %vm130, %v9892, %v10188
  %v10490 = vsel %vm130, %v9894, %v10190
  %v10491 = vsel %vm130, %v9896, %v10192
  %v10492 = vsel %vm130, %v9898, %v10194
  %v10493 = vsel %vm130, %v9900, %v10196
  %v10494 = vsel %vm130, %v9902, %v10198
  %v10495 = vsel %vm206, %v10487, %v10216
  %v10496 = vsel %vm206, %v10488, %v10218
  %v10497 = vsel %vm206, %v10489, %v10220
  %v10498 = vsel %vm206, %v10490, %v10222
  %v10499 = vsel %vm206, %v10491, %v10224
  %v10500 = vsel %vm206, %v10492, %v10226
  %v10501 = vsel %vm206, %v10493, %v10228
  %v10502 = vsel %vm206, %v10494, %v10230
  %v10503 = vsel %vm9243, %v10495, %v10248
  %v10504 = vsel %vm9243, %v10496, %v10250
  %v10505 = vsel %vm9243, %v10497, %v10252
  %v10506 = vsel %vm9243, %v10498, %v10254
  %v10507 = vsel %vm9243, %v10499, %v10256
  %v10508 = vsel %vm9243, %v10500, %v10258
  %v10509 = vsel %vm9243, %v10501, %v10260
  %v10510 = vsel %vm9243, %v10502, %v10262
  %v10511 = vsel %vm130, %v9952, %v10280
  %v10512 = vsel %vm130, %v9954, %v10282
  %v10513 = vsel %vm130, %v9956, %v10284
  %v10514 = vsel %vm130, %v9958, %v10286
  %v10515 = vsel %vm130, %v9960, %v10288
  %v10516 = vsel %vm130, %v9962, %v10290
  %v10517 = vsel %vm130, %v9964, %v10292
  %v10518 = vsel %vm130, %v9966, %v10294
  %v10519 = vsel %vm206, %v10511, %v10312
  %v10520 = vsel %vm206, %v10512, %v10314
  %v10521 = vsel %vm206, %v10513, %v10316
  %v10522 = vsel %vm206, %v10514, %v10318
  %v10523 = vsel %vm206, %v10515, %v10320
  %v10524 = vsel %vm206, %v10516, %v10322
  %v10525 = vsel %vm206, %v10517, %v10324
  %v10526 = vsel %vm206, %v10518, %v10326
  %v10527 = vsel %vm9243, %v10519, %v10344
  %v10528 = vsel %vm9243, %v10520, %v10346
  %v10529 = vsel %vm9243, %v10521, %v10348
  %v10530 = vsel %vm9243, %v10522, %v10350
  %v10531 = vsel %vm9243, %v10523, %v10352
  %v10532 = vsel %vm9243, %v10524, %v10354
  %v10533 = vsel %vm9243, %v10525, %v10356
  %v10534 = vsel %vm9243, %v10526, %v10358
  %v10535 = vsel %vm130, %v10016, %v10376
  %v10536 = vsel %vm130, %v10018, %v10378
  %v10537 = vsel %vm130, %v10020, %v10380
  %v10538 = vsel %vm130, %v10022, %v10382
  %v10539 = vsel %vm130, %v10024, %v10384
  %v10540 = vsel %vm130, %v10026, %v10386
  %v10541 = vsel %vm130, %v10028, %v10388
  %v10542 = vsel %vm130, %v10030, %v10390
  %v10543 = vsel %vm206, %v10535, %v10408
  %v10544 = vsel %vm206, %v10536, %v10410
  %v10545 = vsel %vm206, %v10537, %v10412
  %v10546 = vsel %vm206, %v10538, %v10414
  %v10547 = vsel %vm206, %v10539, %v10416
  %v10548 = vsel %vm206, %v10540, %v10418
  %v10549 = vsel %vm206, %v10541, %v10420
  %v10550 = vsel %vm206, %v10542, %v10422
  %v10551 = vsel %vm9243, %v10543, %v10440
  %v10552 = vsel %vm9243, %v10544, %v10442
  %v10553 = vsel %vm9243, %v10545, %v10444
  %v10554 = vsel %vm9243, %v10546, %v10446
  %v10555 = vsel %vm9243, %v10547, %v10448
  %v10556 = vsel %vm9243, %v10548, %v10450
  %v10557 = vsel %vm9243, %v10549, %v10452
  %v10558 = vsel %vm9243, %v10550, %v10454
  %v10559 = vpack.c.bf16 %v10480, %v10479
  %v10560 = vpack.c.bf16 %v10504, %v10503
  %v10561 = vpack.c.bf16 %v10528, %v10527
  %v10562 = vpack.c.bf16 %v10552, %v10551
  %v10563 = vpack.c.bf16 %v10482, %v10481
  %v10564 = vpack.c.bf16 %v10506, %v10505
  %v10565 = vpack.c.bf16 %v10530, %v10529
  %v10566 = vpack.c.bf16 %v10554, %v10553
  %v10567 = vpack.c.bf16 %v10484, %v10483
  %v10568 = vpack.c.bf16 %v10508, %v10507
  %v10569 = vpack.c.bf16 %v10532, %v10531
  %v10570 = vpack.c.bf16 %v10556, %v10555
  %v10571 = vpack.c.bf16 %v10486, %v10485
  %v10572 = vpack.c.bf16 %v10510, %v10509
  %v10573 = vpack.c.bf16 %v10534, %v10533
  %v10574 = vpack.c.bf16 %v10558, %v10557
  %v10575 = vld [vmem:[%s3] sm:$0xf]
  %v10576 = vld [vmem:[%s3 + $0x4] sm:$0xf]
  %v10577 = vld [vmem:[%s3 + $0x8] sm:$0xf]
  %v10578 = vld [vmem:[%s3 + $0xc] sm:$0xf]
  %v10579 = vld [vmem:[%s3 + $0x10] sm:$0xf]
  %v10580 = vld [vmem:[%s3 + $0x14] sm:$0xf]
  %v10581 = vld [vmem:[%s3 + $0x18] sm:$0xf]
  %v10582 = vld [vmem:[%s3 + $0x1c] sm:$0xf]
  %v10583 = vld [vmem:[%s3 + $0x20] sm:$0xf]
  %v10584 = vld [vmem:[%s3 + $0x24] sm:$0xf]
  %v10585 = vld [vmem:[%s3 + $0x28] sm:$0xf]
  %v10586 = vld [vmem:[%s3 + $0x2c] sm:$0xf]
  %v10587 = vld [vmem:[%s3 + $0x30] sm:$0xf]
  %v10588 = vld [vmem:[%s3 + $0x34] sm:$0xf]
  %v10589 = vld [vmem:[%s3 + $0x38] sm:$0xf]
  %v10590 = vld [vmem:[%s3 + $0x3c] sm:$0xf]
  %v10591 = vld [vmem:[%s3 + $0x40] sm:$0xf]
  %v10592 = vld [vmem:[%s3 + $0x44] sm:$0xf]
  %v10593 = vld [vmem:[%s3 + $0x48] sm:$0xf]
  %v10594 = vld [vmem:[%s3 + $0x4c] sm:$0xf]
  %v10595 = vld [vmem:[%s3 + $0x50] sm:$0xf]
  %v10596 = vld [vmem:[%s3 + $0x54] sm:$0xf]
  %v10597 = vld [vmem:[%s3 + $0x58] sm:$0xf]
  %v10598 = vld [vmem:[%s3 + $0x5c] sm:$0xf]
  %v10599 = vld [vmem:[%s3 + $0x60] sm:$0xf]
  %v10600 = vld [vmem:[%s3 + $0x64] sm:$0xf]
  %v10601 = vld [vmem:[%s3 + $0x68] sm:$0xf]
  %v10602 = vld [vmem:[%s3 + $0x6c] sm:$0xf]
  %v10603 = vld [vmem:[%s3 + $0x70] sm:$0xf]
  %v10604 = vld [vmem:[%s3 + $0x74] sm:$0xf]
  %v10605 = vld [vmem:[%s3 + $0x78] sm:$0xf]
  %v10606 = vld [vmem:[%s3 + $0x7c] sm:$0xf]
  %v10607 = vld [vmem:[%s3 + $0x80] sm:$0xf]
  %v10608 = vld [vmem:[%s3 + $0x84] sm:$0xf]
  %v10609 = vld [vmem:[%s3 + $0x88] sm:$0xf]
  %v10610 = vld [vmem:[%s3 + $0x8c] sm:$0xf]
  %v10611 = vld [vmem:[%s3 + $0x90] sm:$0xf]
  %v10612 = vld [vmem:[%s3 + $0x94] sm:$0xf]
  %v10613 = vld [vmem:[%s3 + $0x98] sm:$0xf]
  %v10614 = vld [vmem:[%s3 + $0x9c] sm:$0xf]
  %v10615 = vld [vmem:[%s3 + $0xa0] sm:$0xf]
  %v10616 = vld [vmem:[%s3 + $0xa4] sm:$0xf]
  %v10617 = vld [vmem:[%s3 + $0xa8] sm:$0xf]
  %v10618 = vld [vmem:[%s3 + $0xac] sm:$0xf]
  %v10619 = vld [vmem:[%s3 + $0xb0] sm:$0xf]
  %v10620 = vld [vmem:[%s3 + $0xb4] sm:$0xf]
  %v10621 = vld [vmem:[%s3 + $0xb8] sm:$0xf]
  %v10622 = vld [vmem:[%s3 + $0xbc] sm:$0xf]
  %v10623 = vld [vmem:[%s3 + $0xc0] sm:$0xf]
  %v10624 = vld [vmem:[%s3 + $0xc4] sm:$0xf]
  %v10625 = vld [vmem:[%s3 + $0xc8] sm:$0xf]
  %v10626 = vld [vmem:[%s3 + $0xcc] sm:$0xf]
  %v10627 = vld [vmem:[%s3 + $0xd0] sm:$0xf]
  %v10628 = vld [vmem:[%s3 + $0xd4] sm:$0xf]
  %v10629 = vld [vmem:[%s3 + $0xd8] sm:$0xf]
  %v10630 = vld [vmem:[%s3 + $0xdc] sm:$0xf]
  %v10631 = vld [vmem:[%s3 + $0xe0] sm:$0xf]
  %v10632 = vld [vmem:[%s3 + $0xe4] sm:$0xf]
  %v10633 = vld [vmem:[%s3 + $0xe8] sm:$0xf]
  %v10634 = vld [vmem:[%s3 + $0xec] sm:$0xf]
  %v10635 = vld [vmem:[%s3 + $0xf0] sm:$0xf]
  %v10636 = vld [vmem:[%s3 + $0xf4] sm:$0xf]
  %v10637 = vld [vmem:[%s3 + $0xf8] sm:$0xf]
  %v10638 = vld [vmem:[%s3 + $0xfc] sm:$0xf]
  %v10703 = vunpack.c.l.b16 %v10575
  %v10704 = vunpack.c.l.b16 %v10576
  %v10705 = vunpack.c.l.b16 %v10577
  %v10706 = vunpack.c.l.b16 %v10578
  %v10707 = vunpack.c.l.b16 %v10579
  %v10708 = vunpack.c.l.b16 %v10580
  %v10709 = vunpack.c.l.b16 %v10581
  %v10710 = vunpack.c.l.b16 %v10582
  %v10711 = vunpack.c.l.b16 %v10583
  %v10712 = vunpack.c.l.b16 %v10584
  %v10713 = vunpack.c.l.b16 %v10585
  %v10714 = vunpack.c.l.b16 %v10586
  %v10715 = vunpack.c.l.b16 %v10587
  %v10716 = vunpack.c.l.b16 %v10588
  %v10717 = vunpack.c.l.b16 %v10589
  %v10718 = vunpack.c.l.b16 %v10590
  %v10719 = vunpack.c.l.b16 %v10591
  %v10720 = vunpack.c.l.b16 %v10592
  %v10721 = vunpack.c.l.b16 %v10593
  %v10722 = vunpack.c.l.b16 %v10594
  %v10723 = vunpack.c.l.b16 %v10595
  %v10724 = vunpack.c.l.b16 %v10596
  %v10725 = vunpack.c.l.b16 %v10597
  %v10726 = vunpack.c.l.b16 %v10598
  %v10727 = vunpack.c.l.b16 %v10599
  %v10728 = vunpack.c.l.b16 %v10600
  %v10729 = vunpack.c.l.b16 %v10601
  %v10730 = vunpack.c.l.b16 %v10602
  %v10731 = vunpack.c.l.b16 %v10603
  %v10732 = vunpack.c.l.b16 %v10604
  %v10733 = vunpack.c.l.b16 %v10605
  %v10734 = vunpack.c.l.b16 %v10606
  %v10735 = vunpack.c.l.b16 %v10607
  %v10736 = vunpack.c.l.b16 %v10608
  %v10737 = vunpack.c.l.b16 %v10609
  %v10738 = vunpack.c.l.b16 %v10610
  %v10739 = vunpack.c.l.b16 %v10611
  %v10740 = vunpack.c.l.b16 %v10612
  %v10741 = vunpack.c.l.b16 %v10613
  %v10742 = vunpack.c.l.b16 %v10614
  %v10743 = vunpack.c.l.b16 %v10615
  %v10744 = vunpack.c.l.b16 %v10616
  %v10745 = vunpack.c.l.b16 %v10617
  %v10746 = vunpack.c.l.b16 %v10618
  %v10747 = vunpack.c.l.b16 %v10619
  %v10748 = vunpack.c.l.b16 %v10620
  %v10749 = vunpack.c.l.b16 %v10621
  %v10750 = vunpack.c.l.b16 %v10622
  %v10751 = vunpack.c.l.b16 %v10623
  %v10752 = vunpack.c.l.b16 %v10624
  %v10753 = vunpack.c.l.b16 %v10625
  %v10754 = vunpack.c.l.b16 %v10626
  %v10755 = vunpack.c.l.b16 %v10627
  %v10756 = vunpack.c.l.b16 %v10628
  %v10757 = vunpack.c.l.b16 %v10629
  %v10758 = vunpack.c.l.b16 %v10630
  %v10759 = vunpack.c.l.b16 %v10631
  %v10760 = vunpack.c.l.b16 %v10632
  %v10761 = vunpack.c.l.b16 %v10633
  %v10762 = vunpack.c.l.b16 %v10634
  %v10763 = vunpack.c.l.b16 %v10635
  %v10764 = vunpack.c.l.b16 %v10636
  %v10765 = vunpack.c.l.b16 %v10637
  %v10766 = vunpack.c.l.b16 %v10638
  %v10767 = vpack.c.b16 %v10704, %v10703
  %v10768 = vpack.c.b16 %v10706, %v10705
  %v10769 = vpack.c.b16 %v10708, %v10707
  %v10770 = vpack.c.b16 %v10710, %v10709
  %v10771 = vpack.c.b16 %v10712, %v10711
  %v10772 = vpack.c.b16 %v10714, %v10713
  %v10773 = vpack.c.b16 %v10716, %v10715
  %v10774 = vpack.c.b16 %v10718, %v10717
  %v10775 = vpack.c.b16 %v10720, %v10719
  %v10776 = vpack.c.b16 %v10722, %v10721
  %v10777 = vpack.c.b16 %v10724, %v10723
  %v10778 = vpack.c.b16 %v10726, %v10725
  %v10779 = vpack.c.b16 %v10728, %v10727
  %v10780 = vpack.c.b16 %v10730, %v10729
  %v10781 = vpack.c.b16 %v10732, %v10731
  %v10782 = vpack.c.b16 %v10734, %v10733
  %v10783 = vpack.c.b16 %v10736, %v10735
  %v10784 = vpack.c.b16 %v10738, %v10737
  %v10785 = vpack.c.b16 %v10740, %v10739
  %v10786 = vpack.c.b16 %v10742, %v10741
  %v10787 = vpack.c.b16 %v10744, %v10743
  %v10788 = vpack.c.b16 %v10746, %v10745
  %v10789 = vpack.c.b16 %v10748, %v10747
  %v10790 = vpack.c.b16 %v10750, %v10749
  %v10791 = vpack.c.b16 %v10752, %v10751
  %v10792 = vpack.c.b16 %v10754, %v10753
  %v10793 = vpack.c.b16 %v10756, %v10755
  %v10794 = vpack.c.b16 %v10758, %v10757
  %v10795 = vpack.c.b16 %v10760, %v10759
  %v10796 = vpack.c.b16 %v10762, %v10761
  %v10797 = vpack.c.b16 %v10764, %v10763
  %v10798 = vpack.c.b16 %v10766, %v10765
  %10831 = vmatprep.subr.bf16.mxu0 0
  %10832 = vmatpush1.bf16.msra.mxu0 %v10767
  %10833 = vmatprep.subr.bf16.mxu0 0
  %10834 = vmatpush1.bf16.msra.mxu0 %v10768
  %10835 = vmatprep.subr.bf16.mxu0 0
  %10836 = vmatpush1.bf16.msra.mxu0 %v10769
  %10837 = vmatprep.subr.bf16.mxu0 0
  %10838 = vmatpush1.bf16.msra.mxu0 %v10770
  %10839 = vmatprep.subr.bf16.mxu0 0
  %10840 = vmatpush1.bf16.msra.mxu0 %v10771
  %10841 = vmatprep.subr.bf16.mxu0 0
  %10842 = vmatpush1.bf16.msra.mxu0 %v10772
  %10843 = vmatprep.subr.bf16.mxu0 0
  %10844 = vmatpush1.bf16.msra.mxu0 %v10773
  %10845 = vmatprep.subr.bf16.mxu0 0
  %10846 = vmatpush1.bf16.msra.mxu0 %v10774
  %10847 = vmatprep.subr.bf16.mxu0 0
  %10848 = vmatpush1.bf16.msra.mxu0 %v10775
  %10849 = vmatprep.subr.bf16.mxu0 0
  %10850 = vmatpush1.bf16.msra.mxu0 %v10776
  %10851 = vmatprep.subr.bf16.mxu0 0
  %10852 = vmatpush1.bf16.msra.mxu0 %v10777
  %10853 = vmatprep.subr.bf16.mxu0 0
  %10854 = vmatpush1.bf16.msra.mxu0 %v10778
  %10855 = vmatprep.subr.bf16.mxu0 0
  %10856 = vmatpush1.bf16.msra.mxu0 %v10779
  %10857 = vmatprep.subr.bf16.mxu0 0
  %10858 = vmatpush1.bf16.msra.mxu0 %v10780
  %10859 = vmatprep.subr.bf16.mxu0 0
  %10860 = vmatpush1.bf16.msra.mxu0 %v10781
  %10861 = vmatprep.subr.bf16.mxu0 0
  %10862 = vmatpush1.bf16.msra.mxu0 %v10782
  %10863 = vmatprep.mubr.bf16.mxu0 %v10560
  %10864 = vmatmul.mubr.bf16.gmra.mrb[0].mxu0 %v10559
  %v10865 = vpop.f32.mrb[0].mxu0
  %v10866 = vadd.f32 0.0, %v10865
  %v10867 = vpop.f32.mrb[0].mxu0
  %v10868 = vpop.f32.mrb[0].mxu0
  %v10869 = vadd.f32 0.0, %v10868
  %v10870 = vpop.f32.mrb[0].mxu0
  %10871 = vmatprep.mubr.bf16.mxu0 %v10564
  %10872 = vmatmul.mubr.bf16.gmra.mrb[0].mxu0 %v10563
  %v10873 = vpop.f32.mrb[0].mxu0
  %v10874 = vadd.f32 0.0, %v10873
  %v10875 = vpop.f32.mrb[0].mxu0
  %v10876 = vpop.f32.mrb[0].mxu0
  %v10877 = vadd.f32 0.0, %v10876
  %v10878 = vpop.f32.mrb[0].mxu0
  %10879 = vmatprep.mubr.bf16.mxu0 %v10568
  %10880 = vmatmul.mubr.bf16.gmra.mrb[0].mxu0 %v10567
  %v10881 = vpop.f32.mrb[0].mxu0
  %v10882 = vadd.f32 0.0, %v10881
  %v10883 = vpop.f32.mrb[0].mxu0
  %v10884 = vpop.f32.mrb[0].mxu0
  %v10885 = vadd.f32 0.0, %v10884
  %v10886 = vpop.f32.mrb[0].mxu0
  %10887 = vmatprep.mubr.bf16.mxu0 %v10572
  %10888 = vmatmul.mubr.bf16.gmra.mrb[0].mxu0 %v10571
  %v10889 = vpop.f32.mrb[0].mxu0
  %v10890 = vadd.f32 0.0, %v10889
  %v10891 = vpop.f32.mrb[0].mxu0
  %v10892 = vpop.f32.mrb[0].mxu0
  %v10893 = vadd.f32 0.0, %v10892
  %v10894 = vpop.f32.mrb[0].mxu0
  %10895 = vdwg.mxu0
  %10896 = vmatprep.subr.bf16.mxu0 0
  %10897 = vmatpush1.bf16.msra.mxu0 %v10783
  %10898 = vmatprep.subr.bf16.mxu0 0
  %10899 = vmatpush1.bf16.msra.mxu0 %v10784
  %10900 = vmatprep.subr.bf16.mxu0 0
  %10901 = vmatpush1.bf16.msra.mxu0 %v10785
  %10902 = vmatprep.subr.bf16.mxu0 0
  %10903 = vmatpush1.bf16.msra.mxu0 %v10786
  %10904 = vmatprep.subr.bf16.mxu0 0
  %10905 = vmatpush1.bf16.msra.mxu0 %v10787
  %10906 = vmatprep.subr.bf16.mxu0 0
  %10907 = vmatpush1.bf16.msra.mxu0 %v10788
  %10908 = vmatprep.subr.bf16.mxu0 0
  %10909 = vmatpush1.bf16.msra.mxu0 %v10789
  %10910 = vmatprep.subr.bf16.mxu0 0
  %10911 = vmatpush1.bf16.msra.mxu0 %v10790
  %10912 = vmatprep.subr.bf16.mxu0 0
  %10913 = vmatpush1.bf16.msra.mxu0 %v10791
  %10914 = vmatprep.subr.bf16.mxu0 0
  %10915 = vmatpush1.bf16.msra.mxu0 %v10792
  %10916 = vmatprep.subr.bf16.mxu0 0
  %10917 = vmatpush1.bf16.msra.mxu0 %v10793
  %10918 = vmatprep.subr.bf16.mxu0 0
  %10919 = vmatpush1.bf16.msra.mxu0 %v10794
  %10920 = vmatprep.subr.bf16.mxu0 0
  %10921 = vmatpush1.bf16.msra.mxu0 %v10795
  %10922 = vmatprep.subr.bf16.mxu0 0
  %10923 = vmatpush1.bf16.msra.mxu0 %v10796
  %10924 = vmatprep.subr.bf16.mxu0 0
  %10925 = vmatpush1.bf16.msra.mxu0 %v10797
  %10926 = vmatprep.subr.bf16.mxu0 0
  %10927 = vmatpush1.bf16.msra.mxu0 %v10798
  %10928 = vmatprep.mubr.bf16.mxu0 %v10562
  %10929 = vmatmul.mubr.bf16.gmra.mrb[0].mxu0 %v10561
  %v10930 = vpop.f32.mrb[0].mxu0
  %v10931 = vadd.f32 %v10866, %v10930
  %v10932 = vpop.f32.mrb[0].mxu0
  %v10933 = vpop.f32.mrb[0].mxu0
  %v10934 = vadd.f32 %v10869, %v10933
  %v10935 = vpop.f32.mrb[0].mxu0
  %10936 = vmatprep.mubr.bf16.mxu0 %v10566
  %10937 = vmatmul.mubr.bf16.gmra.mrb[0].mxu0 %v10565
  %v10938 = vpop.f32.mrb[0].mxu0
  %v10939 = vadd.f32 %v10874, %v10938
  %v10940 = vpop.f32.mrb[0].mxu0
  %v10941 = vpop.f32.mrb[0].mxu0
  %v10942 = vadd.f32 %v10877, %v10941
  %v10943 = vpop.f32.mrb[0].mxu0
  %10944 = vmatprep.mubr.bf16.mxu0 %v10570
  %10945 = vmatmul.mubr.bf16.gmra.mrb[0].mxu0 %v10569
  %v10946 = vpop.f32.mrb[0].mxu0
  %v10947 = vadd.f32 %v10882, %v10946
  %v10948 = vpop.f32.mrb[0].mxu0
  %v10949 = vpop.f32.mrb[0].mxu0
  %v10950 = vadd.f32 %v10885, %v10949
  %v10951 = vpop.f32.mrb[0].mxu0
  %10952 = vmatprep.mubr.bf16.mxu0 %v10574
  %10953 = vmatmul.mubr.bf16.gmra.mrb[0].mxu0 %v10573
  %v10954 = vpop.f32.mrb[0].mxu0
  %v10955 = vadd.f32 %v10890, %v10954
  %v10956 = vpop.f32.mrb[0].mxu0
  %v10957 = vpop.f32.mrb[0].mxu0
  %v10958 = vadd.f32 %v10893, %v10957
  %v10959 = vpop.f32.mrb[0].mxu0
  %10960 = vdwg.mxu0
  %v10961 = vlaneseq
  %v10962 = vshrl.u32 %v10961, 7
  %v10963 = vadd.s32 %v10962, 8
  %v10964 = vadd.s32 %v10962, 16
  %v10965 = vadd.s32 %v10962, 24
  %v10966 = vadd.s32 %v10962, 32
  %v10967 = vadd.s32 %v10962, 40
  %v10968 = vadd.s32 %v10962, 48
  %v10969 = vadd.s32 %v10962, 56
  %vm10970 = vcmp.lt.s32.totalorder %v10962, 0
  %v10971 = vsub.s32 0, %v10962
  %v10972 = vsel %vm10970, %v10971, %v10962
  %v10973 = vshrl.u32 %v10972, 3
  %v10974 = vand.u32 %v10972, 7
  %v10975 = vsub.s32 0, %v10974
  %v10976 = vsel %vm10970, %v10975, %v10974
  %vm10977 = vcmp.lt.s32.totalorder %v10963, 0
  %v10978 = vsub.s32 0, %v10963
  %v10979 = vsel %vm10977, %v10978, %v10963
  %v10980 = vshrl.u32 %v10979, 3
  %v10981 = vand.u32 %v10979, 7
  %v10982 = vsub.s32 0, %v10981
  %v10983 = vsel %vm10977, %v10982, %v10981
  %vm10984 = vcmp.lt.s32.totalorder %v10964, 0
  %v10985 = vsub.s32 0, %v10964
  %v10986 = vsel %vm10984, %v10985, %v10964
  %v10987 = vshrl.u32 %v10986, 3
  %v10988 = vand.u32 %v10986, 7
  %v10989 = vsub.s32 0, %v10988
  %v10990 = vsel %vm10984, %v10989, %v10988
  %vm10991 = vcmp.lt.s32.totalorder %v10965, 0
  %v10992 = vsub.s32 0, %v10965
  %v10993 = vsel %vm10991, %v10992, %v10965
  %v10994 = vshrl.u32 %v10993, 3
  %v10995 = vand.u32 %v10993, 7
  %v10996 = vsub.s32 0, %v10995
  %v10997 = vsel %vm10991, %v10996, %v10995
  %vm10998 = vcmp.lt.s32.totalorder %v10966, 0
  %v10999 = vsub.s32 0, %v10966
  %v11000 = vsel %vm10998, %v10999, %v10966
  %v11001 = vshrl.u32 %v11000, 3
  %v11002 = vand.u32 %v11000, 7
  %v11003 = vsub.s32 0, %v11002
  %v11004 = vsel %vm10998, %v11003, %v11002
  %vm11005 = vcmp.lt.s32.totalorder %v10967, 0
  %v11006 = vsub.s32 0, %v10967
  %v11007 = vsel %vm11005, %v11006, %v10967
  %v11008 = vshrl.u32 %v11007, 3
  %v11009 = vand.u32 %v11007, 7
  %v11010 = vsub.s32 0, %v11009
  %v11011 = vsel %vm11005, %v11010, %v11009
  %vm11012 = vcmp.lt.s32.totalorder %v10968, 0
  %v11013 = vsub.s32 0, %v10968
  %v11014 = vsel %vm11012, %v11013, %v10968
  %v11015 = vshrl.u32 %v11014, 3
  %v11016 = vand.u32 %v11014, 7
  %v11017 = vsub.s32 0, %v11016
  %v11018 = vsel %vm11012, %v11017, %v11016
  %vm11019 = vcmp.lt.s32.totalorder %v10969, 0
  %v11020 = vsub.s32 0, %v10969
  %v11021 = vsel %vm11019, %v11020, %v10969
  %v11022 = vshrl.u32 %v11021, 3
  %v11023 = vand.u32 %v11021, 7
  %v11024 = vsub.s32 0, %v11023
  %v11025 = vsel %vm11019, %v11024, %v11023
  %vm11026 = vcmp.ne.s32.totalorder %v10976, 0
  %vm11027 = vcmp.ne.s32.totalorder %v10983, 0
  %vm11028 = vcmp.ne.s32.totalorder %v10990, 0
  %vm11029 = vcmp.ne.s32.totalorder %v10997, 0
  %vm11030 = vcmp.ne.s32.totalorder %v11004, 0
  %vm11031 = vcmp.ne.s32.totalorder %v11011, 0
  %vm11032 = vcmp.ne.s32.totalorder %v11018, 0
  %vm11033 = vcmp.ne.s32.totalorder %v11025, 0
  %vm11034 = vcmp.lt.s32.totalorder %v10976, 0
  %vm11035 = vcmp.lt.s32.totalorder %v10983, 0
  %vm11036 = vcmp.lt.s32.totalorder %v10990, 0
  %vm11037 = vcmp.lt.s32.totalorder %v10997, 0
  %vm11038 = vcmp.lt.s32.totalorder %v11004, 0
  %vm11039 = vcmp.lt.s32.totalorder %v11011, 0
  %vm11040 = vcmp.lt.s32.totalorder %v11018, 0
  %vm11041 = vcmp.lt.s32.totalorder %v11025, 0
  %vm11042 = vmand %vm11034, %vm11026
  %vm11043 = vmand %vm11035, %vm11027
  %vm11044 = vmand %vm11036, %vm11028
  %vm11045 = vmand %vm11037, %vm11029
  %vm11046 = vmand %vm11038, %vm11030
  %vm11047 = vmand %vm11039, %vm11031
  %vm11048 = vmand %vm11040, %vm11032
  %vm11049 = vmand %vm11041, %vm11033
  %v11050 = vadd.s32 %v10976, 8
  %v11051 = vadd.s32 %v10983, 8
  %v11052 = vadd.s32 %v10990, 8
  %v11053 = vadd.s32 %v10997, 8
  %v11054 = vadd.s32 %v11004, 8
  %v11055 = vadd.s32 %v11011, 8
  %v11056 = vadd.s32 %v11018, 8
  %v11057 = vadd.s32 %v11025, 8
  %v11058 = vsel %vm11042, %v11050, %v10976
  %v11059 = vsel %vm11043, %v11051, %v10983
  %v11060 = vsel %vm11044, %v11052, %v10990
  %v11061 = vsel %vm11045, %v11053, %v10997
  %v11062 = vsel %vm11046, %v11054, %v11004
  %v11063 = vsel %vm11047, %v11055, %v11011
  %v11064 = vsel %vm11048, %v11056, %v11018
  %v11065 = vsel %vm11049, %v11057, %v11025
  %vm11066 = vcmp.lt.s32.totalorder %v11058, 4
  %vm11067 = vcmp.lt.s32.totalorder %v11059, 4
  %vm11068 = vcmp.lt.s32.totalorder %v11060, 4
  %vm11069 = vcmp.lt.s32.totalorder %v11061, 4
  %vm11070 = vcmp.lt.s32.totalorder %v11062, 4
  %vm11071 = vcmp.lt.s32.totalorder %v11063, 4
  %vm11072 = vcmp.lt.s32.totalorder %v11064, 4
  %vm11073 = vcmp.lt.s32.totalorder %v11065, 4
  %v11074 = vsel %vm11066, 1, 0
  %v11075 = vsel %vm11067, 1, 0
  %v11076 = vsel %vm11068, 1, 0
  %v11077 = vsel %vm11069, 1, 0
  %v11078 = vsel %vm11070, 1, 0
  %v11079 = vsel %vm11071, 1, 0
  %v11080 = vsel %vm11072, 1, 0
  %v11081 = vsel %vm11073, 1, 0
  %v11082 = vcvt.s32.f32 %v11074
  %v11083 = vcvt.s32.f32 %v11075
  %v11084 = vcvt.s32.f32 %v11076
  %v11085 = vcvt.s32.f32 %v11077
  %v11086 = vcvt.s32.f32 %v11078
  %v11087 = vcvt.s32.f32 %v11079
  %v11088 = vcvt.s32.f32 %v11080
  %v11089 = vcvt.s32.f32 %v11081
  %v11090 = vmul.f32 %v10931, %v11082
  %v11091 = vmul.f32 %v10934, %v11083
  %v11092 = vmul.f32 %v10939, %v11084
  %v11093 = vmul.f32 %v10942, %v11085
  %v11094 = vmul.f32 %v10947, %v11086
  %v11095 = vmul.f32 %v10950, %v11087
  %v11096 = vmul.f32 %v10955, %v11088
  %v11097 = vmul.f32 %v10958, %v11089
  %v11098 = vsel %vm206, %v11090, 0.0
  %v11099 = vsel %vm206, %v11091, 0.0
  %v11100 = vadd.f32 %v11098, %v11099
  %v11101 = vsel %vm206, %v11092, 0.0
  %v11102 = vadd.f32 %v11100, %v11101
  %v11103 = vsel %vm206, %v11093, 0.0
  %v11104 = vadd.f32 %v11102, %v11103
  %v11105 = vsel %vm206, %v11094, 0.0
  %v11106 = vadd.f32 %v11104, %v11105
  %v11107 = vsel %vm206, %v11095, 0.0
  %v11108 = vadd.f32 %v11106, %v11107
  %v11109 = vsel %vm206, %v11096, 0.0
  %v11110 = vadd.f32 %v11108, %v11109
  %v11111 = vsel %vm206, %v11097, 0.0
  %v11112 = vadd.f32 %v11110, %v11111
  %v11113 = vrot.slane %v11112, 4
  %v11114 = vadd.f32 %v11112, %v11113
  %v11115 = vrot.slane %v11114, 2
  %v11116 = vadd.f32 %v11114, %v11115
  %v11117 = vrot.slane %v11116, 1
  %v11118 = vadd.f32 %v11116, %v11117
  %v11119 = vmul.f32 %v11090, %v10931
  %v11120 = vmul.f32 %v11091, %v10934
  %v11121 = vmul.f32 %v11092, %v10939
  %v11122 = vmul.f32 %v11093, %v10942
  %v11123 = vmul.f32 %v11094, %v10947
  %v11124 = vmul.f32 %v11095, %v10950
  %v11125 = vmul.f32 %v11096, %v10955
  %v11126 = vmul.f32 %v11097, %v10958
  %v11127 = vsel %vm206, %v11119, 0.0
  %v11128 = vsel %vm206, %v11120, 0.0
  %v11129 = vadd.f32 %v11127, %v11128
  %v11130 = vsel %vm206, %v11121, 0.0
  %v11131 = vadd.f32 %v11129, %v11130
  %v11132 = vsel %vm206, %v11122, 0.0
  %v11133 = vadd.f32 %v11131, %v11132
  %v11134 = vsel %vm206, %v11123, 0.0
  %v11135 = vadd.f32 %v11133, %v11134
  %v11136 = vsel %vm206, %v11124, 0.0
  %v11137 = vadd.f32 %v11135, %v11136
  %v11138 = vsel %vm206, %v11125, 0.0
  %v11139 = vadd.f32 %v11137, %v11138
  %v11140 = vsel %vm206, %v11126, 0.0
  %v11141 = vadd.f32 %v11139, %v11140
  %v11142 = vrot.slane %v11141, 4
  %v11143 = vadd.f32 %v11141, %v11142
  %v11144 = vrot.slane %v11143, 2
  %v11145 = vadd.f32 %v11143, %v11144
  %v11146 = vrot.slane %v11145, 1
  %v11147 = vadd.f32 %v11145, %v11146
  %v11148 = vmul.f32 %v11118, 0.03125
  %v11149 = vmul.f32 %v11147, 0.03125
  %v11150 = vmul.f32 %v11148, %v11148
  %v11151 = vsub.f32 %v11149, %v11150
  %v11152 = vmax.f32 %v11151, 0.0
  %v11153 = vld [vmem:[%s8] sm:$0x1]
  %v11154 = vadd.f32 %v11152, 1e-05
  %v11155 = vrsqrt.pop %v11154
  %v11156 = vmul.f32 %v11153, %v11155
  %v11157 = vld [vmem:[%s9] sm:$0x1]
  %v11158 = vmul.f32 %v11148, %v11156
  %v11159 = vsub.f32 %v11157, %v11158
  %v11161 = vlaneseq
  %v11162 = vshrl.u32 %v11161, 7
  %v11163 = vsub.s32 0, %v11162
  %v11164 = vrot.slane %v11156, %v11163
  %v11166 = vmul.f32 %v10931, %v11164
  %v11167 = vmul.f32 %v10934, %v11164
  %v11168 = vmul.f32 %v10939, %v11164
  %v11169 = vmul.f32 %v10942, %v11164
  %v11170 = vmul.f32 %v10947, %v11164
  %v11171 = vmul.f32 %v10950, %v11164
  %v11172 = vmul.f32 %v10955, %v11164
  %v11173 = vmul.f32 %v10958, %v11164
  %v11175 = vlaneseq
  %v11176 = vshrl.u32 %v11175, 7
  %v11177 = vsub.s32 0, %v11176
  %v11178 = vrot.slane %v11159, %v11177
  %v11180 = vadd.f32 %v11166, %v11178
  %v11181 = vadd.f32 %v11167, %v11178
  %v11182 = vadd.f32 %v11168, %v11178
  %v11183 = vadd.f32 %v11169, %v11178
  %v11184 = vadd.f32 %v11170, %v11178
  %v11185 = vadd.f32 %v11171, %v11178
  %v11186 = vadd.f32 %v11172, %v11178
  %v11187 = vadd.f32 %v11173, %v11178
  %v11188 = vmul.f32 %v11180, 0.2
  %v11189 = vmul.f32 %v11181, 0.2
  %v11190 = vmul.f32 %v11182, 0.2
  %v11191 = vmul.f32 %v11183, 0.2
  %v11192 = vmul.f32 %v11184, 0.2
  %v11193 = vmul.f32 %v11185, 0.2
  %v11194 = vmul.f32 %v11186, 0.2
  %v11195 = vmul.f32 %v11187, 0.2
  %v11196 = vmax.f32 %v11180, %v11188
  %v11197 = vmax.f32 %v11181, %v11189
  %v11198 = vmax.f32 %v11182, %v11190
  %v11199 = vmax.f32 %v11183, %v11191
  %v11200 = vmax.f32 %v11184, %v11192
  %v11201 = vmax.f32 %v11185, %v11193
  %v11202 = vmax.f32 %v11186, %v11194
  %v11203 = vmax.f32 %v11187, %v11195
  %s11204 = scalar_lea.vmem [#allocation4], 24
  %vm11205 = vcmask 519168
  %11206 = vst.msk [vmem:[%s11204 + $0x1] sm:$0xf] %vm11205, %v11196
  %11207 = vst.msk [vmem:[%s11204 + $0x19] sm:$0xf] %vm11205, %v11197
  %11208 = vst.msk [vmem:[%s11204 + $0x31] sm:$0xf] %vm11205, %v11198
  %11209 = vst.msk [vmem:[%s11204 + $0x49] sm:$0xf] %vm11205, %v11199
  %11210 = vst.msk [vmem:[%s11204 + $0x91] sm:$0xf] %vm11205, %v11200
  %11211 = vst.msk [vmem:[%s11204 + $0xa9] sm:$0xf] %vm11205, %v11201
  %11212 = vst.msk [vmem:[%s11204 + $0xc1] sm:$0xf] %vm11205, %v11202
  %11213 = vst.msk [vmem:[%s11204 + $0xd9] sm:$0xf] %vm11205, %v11203
  %v11214 = vld [vmem:[#allocation4] ss:$2 sm:$0xff]
  %s11215 = scalar_lea.vmem [#allocation4], 48
  %v11216 = vld [vmem:[%s11215] ss:$2 sm:$0xff]
  %s11217 = scalar_lea.vmem [#allocation4], 144
  %v11218 = vld [vmem:[%s11217] ss:$2 sm:$0xff]
  %s11219 = scalar_lea.vmem [#allocation4], 192
  %v11220 = vld [vmem:[%s11219] ss:$2 sm:$0xff]
  %s11221 = scalar_lea.vmem [#allocation4], 1
  %v11222 = vld [vmem:[%s11221] ss:$2 sm:$0xff]
  %s11223 = scalar_lea.vmem [#allocation4], 49
  %v11224 = vld [vmem:[%s11223] ss:$2 sm:$0xff]
  %s11225 = scalar_lea.vmem [#allocation4], 145
  %v11226 = vld [vmem:[%s11225] ss:$2 sm:$0xff]
  %s11227 = scalar_lea.vmem [#allocation4], 193
  %v11228 = vld [vmem:[%s11227] ss:$2 sm:$0xff]
  %s11229 = scalar_lea.vmem [#allocation4], 2
  %v11230 = vld [vmem:[%s11229] ss:$2 sm:$0xff]
  %s11231 = scalar_lea.vmem [#allocation4], 50
  %v11232 = vld [vmem:[%s11231] ss:$2 sm:$0xff]
  %s11233 = scalar_lea.vmem [#allocation4], 146
  %v11234 = vld [vmem:[%s11233] ss:$2 sm:$0xff]
  %s11235 = scalar_lea.vmem [#allocation4], 194
  %v11236 = vld [vmem:[%s11235] ss:$2 sm:$0xff]
  %s11237 = scalar_lea.vmem [#allocation4], 3
  %v11238 = vld [vmem:[%s11237] ss:$2 sm:$0xff]
  %s11239 = scalar_lea.vmem [#allocation4], 51
  %v11240 = vld [vmem:[%s11239] ss:$2 sm:$0xff]
  %s11241 = scalar_lea.vmem [#allocation4], 147
  %v11242 = vld [vmem:[%s11241] ss:$2 sm:$0xff]
  %s11243 = scalar_lea.vmem [#allocation4], 195
  %v11244 = vld [vmem:[%s11243] ss:$2 sm:$0xff]
  %v11245 = vld [vmem:[%s11204] ss:$2 sm:$0xff]
  %s11246 = scalar_lea.vmem %s11204, 48 [#allocation4]
  %v11247 = vld [vmem:[%s11246] ss:$2 sm:$0xff]
  %s11248 = scalar_lea.vmem %s11204, 144 [#allocation4]
  %v11249 = vld [vmem:[%s11248] ss:$2 sm:$0xff]
  %s11250 = scalar_lea.vmem %s11204, 192 [#allocation4]
  %v11251 = vld [vmem:[%s11250] ss:$2 sm:$0xff]
  %s11252 = scalar_lea.vmem %s11204, 1 [#allocation4]
  %v11253 = vld [vmem:[%s11252] ss:$2 sm:$0xff]
  %s11254 = scalar_lea.vmem %s11204, 49 [#allocation4]
  %v11255 = vld [vmem:[%s11254] ss:$2 sm:$0xff]
  %s11256 = scalar_lea.vmem %s11204, 145 [#allocation4]
  %v11257 = vld [vmem:[%s11256] ss:$2 sm:$0xff]
  %s11258 = scalar_lea.vmem %s11204, 193 [#allocation4]
  %v11259 = vld [vmem:[%s11258] ss:$2 sm:$0xff]
  %s11260 = scalar_lea.vmem %s11204, 2 [#allocation4]
  %v11261 = vld [vmem:[%s11260] ss:$2 sm:$0xff]
  %s11262 = scalar_lea.vmem %s11204, 50 [#allocation4]
  %v11263 = vld [vmem:[%s11262] ss:$2 sm:$0xff]
  %s11264 = scalar_lea.vmem %s11204, 146 [#allocation4]
  %v11265 = vld [vmem:[%s11264] ss:$2 sm:$0xff]
  %s11266 = scalar_lea.vmem %s11204, 194 [#allocation4]
  %v11267 = vld [vmem:[%s11266] ss:$2 sm:$0xff]
  %s11268 = scalar_lea.vmem %s11204, 3 [#allocation4]
  %v11269 = vld [vmem:[%s11268] ss:$2 sm:$0xff]
  %s11270 = scalar_lea.vmem %s11204, 51 [#allocation4]
  %v11271 = vld [vmem:[%s11270] ss:$2 sm:$0xff]
  %s11272 = scalar_lea.vmem %s11204, 147 [#allocation4]
  %v11273 = vld [vmem:[%s11272] ss:$2 sm:$0xff]
  %s11274 = scalar_lea.vmem %s11204, 195 [#allocation4]
  %v11275 = vld [vmem:[%s11274] ss:$2 sm:$0xff]
  %s11276 = scalar_lea.vmem [#allocation4], 48
  %v11277 = vld [vmem:[%s11276] ss:$2 sm:$0xff]
  %s11278 = scalar_lea.vmem %s11276, 48 [#allocation4]
  %v11279 = vld [vmem:[%s11278] ss:$2 sm:$0xff]
  %s11280 = scalar_lea.vmem %s11276, 144 [#allocation4]
  %v11281 = vld [vmem:[%s11280] ss:$2 sm:$0xff]
  %s11282 = scalar_lea.vmem %s11276, 192 [#allocation4]
  %v11283 = vld [vmem:[%s11282] ss:$2 sm:$0xff]
  %s11284 = scalar_lea.vmem %s11276, 1 [#allocation4]
  %v11285 = vld [vmem:[%s11284] ss:$2 sm:$0xff]
  %s11286 = scalar_lea.vmem %s11276, 49 [#allocation4]
  %v11287 = vld [vmem:[%s11286] ss:$2 sm:$0xff]
  %s11288 = scalar_lea.vmem %s11276, 145 [#allocation4]
  %v11289 = vld [vmem:[%s11288] ss:$2 sm:$0xff]
  %s11290 = scalar_lea.vmem %s11276, 193 [#allocation4]
  %v11291 = vld [vmem:[%s11290] ss:$2 sm:$0xff]
  %s11292 = scalar_lea.vmem %s11276, 2 [#allocation4]
  %v11293 = vld [vmem:[%s11292] ss:$2 sm:$0xff]
  %s11294 = scalar_lea.vmem %s11276, 50 [#allocation4]
  %v11295 = vld [vmem:[%s11294] ss:$2 sm:$0xff]
  %s11296 = scalar_lea.vmem %s11276, 146 [#allocation4]
  %v11297 = vld [vmem:[%s11296] ss:$2 sm:$0xff]
  %s11298 = scalar_lea.vmem %s11276, 194 [#allocation4]
  %v11299 = vld [vmem:[%s11298] ss:$2 sm:$0xff]
  %s11300 = scalar_lea.vmem %s11276, 3 [#allocation4]
  %v11301 = vld [vmem:[%s11300] ss:$2 sm:$0xff]
  %s11302 = scalar_lea.vmem %s11276, 51 [#allocation4]
  %v11303 = vld [vmem:[%s11302] ss:$2 sm:$0xff]
  %s11304 = scalar_lea.vmem %s11276, 147 [#allocation4]
  %v11305 = vld [vmem:[%s11304] ss:$2 sm:$0xff]
  %s11306 = scalar_lea.vmem %s11276, 195 [#allocation4]
  %v11307 = vld [vmem:[%s11306] ss:$2 sm:$0xff]
  %s11308 = scalar_lea.vmem [#allocation4], 72
  %v11309 = vld [vmem:[%s11308] ss:$2 sm:$0xff]
  %s11310 = scalar_lea.vmem %s11308, 48 [#allocation4]
  %v11311 = vld [vmem:[%s11310] ss:$2 sm:$0xff]
  %s11312 = scalar_lea.vmem %s11308, 144 [#allocation4]
  %v11313 = vld [vmem:[%s11312] ss:$2 sm:$0xff]
  %s11314 = scalar_lea.vmem %s11308, 192 [#allocation4]
  %v11315 = vld [vmem:[%s11314] ss:$2 sm:$0xff]
  %s11316 = scalar_lea.vmem %s11308, 1 [#allocation4]
  %v11317 = vld [vmem:[%s11316] ss:$2 sm:$0xff]
  %s11318 = scalar_lea.vmem %s11308, 49 [#allocation4]
  %v11319 = vld [vmem:[%s11318] ss:$2 sm:$0xff]
  %s11320 = scalar_lea.vmem %s11308, 145 [#allocation4]
  %v11321 = vld [vmem:[%s11320] ss:$2 sm:$0xff]
  %s11322 = scalar_lea.vmem %s11308, 193 [#allocation4]
  %v11323 = vld [vmem:[%s11322] ss:$2 sm:$0xff]
  %s11324 = scalar_lea.vmem %s11308, 2 [#allocation4]
  %v11325 = vld [vmem:[%s11324] ss:$2 sm:$0xff]
  %s11326 = scalar_lea.vmem %s11308, 50 [#allocation4]
  %v11327 = vld [vmem:[%s11326] ss:$2 sm:$0xff]
  %s11328 = scalar_lea.vmem %s11308, 146 [#allocation4]
  %v11329 = vld [vmem:[%s11328] ss:$2 sm:$0xff]
  %s11330 = scalar_lea.vmem %s11308, 194 [#allocation4]
  %v11331 = vld [vmem:[%s11330] ss:$2 sm:$0xff]
  %s11332 = scalar_lea.vmem %s11308, 3 [#allocation4]
  %v11333 = vld [vmem:[%s11332] ss:$2 sm:$0xff]
  %s11334 = scalar_lea.vmem %s11308, 51 [#allocation4]
  %v11335 = vld [vmem:[%s11334] ss:$2 sm:$0xff]
  %s11336 = scalar_lea.vmem %s11308, 147 [#allocation4]
  %v11337 = vld [vmem:[%s11336] ss:$2 sm:$0xff]
  %s11338 = scalar_lea.vmem %s11308, 195 [#allocation4]
  %v11339 = vld [vmem:[%s11338] ss:$2 sm:$0xff]
  %11344 = vrot.lane.b32.xlu0 %v11222, 64
  %v11345 = vpop.permute.xlu0 %11344
  %11346 = vrot.lane.b32.xlu0 %v11224, 64
  %v11347 = vpop.permute.xlu0 %11346
  %11348 = vrot.lane.b32.xlu0 %v11226, 64
  %v11349 = vpop.permute.xlu0 %11348
  %11350 = vrot.lane.b32.xlu0 %v11228, 64
  %v11351 = vpop.permute.xlu0 %11350
  %11360 = vrot.lane.b32.xlu0 %v11238, 64
  %v11361 = vpop.permute.xlu0 %11360
  %11362 = vrot.lane.b32.xlu0 %v11240, 64
  %v11363 = vpop.permute.xlu0 %11362
  %11364 = vrot.lane.b32.xlu0 %v11242, 64
  %v11365 = vpop.permute.xlu0 %11364
  %11366 = vrot.lane.b32.xlu0 %v11244, 64
  %v11367 = vpop.permute.xlu0 %11366
  %11376 = vrot.lane.b32.xlu0 %v11253, 64
  %v11377 = vpop.permute.xlu0 %11376
  %11378 = vrot.lane.b32.xlu0 %v11255, 64
  %v11379 = vpop.permute.xlu0 %11378
  %11380 = vrot.lane.b32.xlu0 %v11257, 64
  %v11381 = vpop.permute.xlu0 %11380
  %11382 = vrot.lane.b32.xlu0 %v11259, 64
  %v11383 = vpop.permute.xlu0 %11382
  %11392 = vrot.lane.b32.xlu0 %v11269, 64
  %v11393 = vpop.permute.xlu0 %11392
  %11394 = vrot.lane.b32.xlu0 %v11271, 64
  %v11395 = vpop.permute.xlu0 %11394
  %11396 = vrot.lane.b32.xlu0 %v11273, 64
  %v11397 = vpop.permute.xlu0 %11396
  %11398 = vrot.lane.b32.xlu0 %v11275, 64
  %v11399 = vpop.permute.xlu0 %11398
  %11408 = vrot.lane.b32.xlu0 %v11285, 64
  %v11409 = vpop.permute.xlu0 %11408
  %11410 = vrot.lane.b32.xlu0 %v11287, 64
  %v11411 = vpop.permute.xlu0 %11410
  %11412 = vrot.lane.b32.xlu0 %v11289, 64
  %v11413 = vpop.permute.xlu0 %11412
  %11414 = vrot.lane.b32.xlu0 %v11291, 64
  %v11415 = vpop.permute.xlu0 %11414
  %11424 = vrot.lane.b32.xlu0 %v11301, 64
  %v11425 = vpop.permute.xlu0 %11424
  %11426 = vrot.lane.b32.xlu0 %v11303, 64
  %v11427 = vpop.permute.xlu0 %11426
  %11428 = vrot.lane.b32.xlu0 %v11305, 64
  %v11429 = vpop.permute.xlu0 %11428
  %11430 = vrot.lane.b32.xlu0 %v11307, 64
  %v11431 = vpop.permute.xlu0 %11430
  %11440 = vrot.lane.b32.xlu0 %v11317, 64
  %v11441 = vpop.permute.xlu0 %11440
  %11442 = vrot.lane.b32.xlu0 %v11319, 64
  %v11443 = vpop.permute.xlu0 %11442
  %11444 = vrot.lane.b32.xlu0 %v11321, 64
  %v11445 = vpop.permute.xlu0 %11444
  %11446 = vrot.lane.b32.xlu0 %v11323, 64
  %v11447 = vpop.permute.xlu0 %11446
  %11456 = vrot.lane.b32.xlu0 %v11333, 64
  %v11457 = vpop.permute.xlu0 %11456
  %11458 = vrot.lane.b32.xlu0 %v11335, 64
  %v11459 = vpop.permute.xlu0 %11458
  %11460 = vrot.lane.b32.xlu0 %v11337, 64
  %v11461 = vpop.permute.xlu0 %11460
  %11462 = vrot.lane.b32.xlu0 %v11339, 64
  %v11463 = vpop.permute.xlu0 %11462
  %v11468 = vsel %vm206, %v11214, %v11345
  %v11469 = vsel %vm206, %v11216, %v11347
  %v11470 = vsel %vm206, %v11218, %v11349
  %v11471 = vsel %vm206, %v11220, %v11351
  %v11472 = vsel %vm206, %v11230, %v11361
  %v11473 = vsel %vm206, %v11232, %v11363
  %v11474 = vsel %vm206, %v11234, %v11365
  %v11475 = vsel %vm206, %v11236, %v11367
  %v11476 = vsel %vm206, %v11245, %v11377
  %v11477 = vsel %vm206, %v11247, %v11379
  %v11478 = vsel %vm206, %v11249, %v11381
  %v11479 = vsel %vm206, %v11251, %v11383
  %v11480 = vsel %vm206, %v11261, %v11393
  %v11481 = vsel %vm206, %v11263, %v11395
  %v11482 = vsel %vm206, %v11265, %v11397
  %v11483 = vsel %vm206, %v11267, %v11399
  %v11484 = vsel %vm206, %v11277, %v11409
  %v11485 = vsel %vm206, %v11279, %v11411
  %v11486 = vsel %vm206, %v11281, %v11413
  %v11487 = vsel %vm206, %v11283, %v11415
  %v11488 = vsel %vm206, %v11293, %v11425
  %v11489 = vsel %vm206, %v11295, %v11427
  %v11490 = vsel %vm206, %v11297, %v11429
  %v11491 = vsel %vm206, %v11299, %v11431
  %v11492 = vsel %vm206, %v11309, %v11441
  %v11493 = vsel %vm206, %v11311, %v11443
  %v11494 = vsel %vm206, %v11313, %v11445
  %v11495 = vsel %vm206, %v11315, %v11447
  %v11496 = vsel %vm206, %v11325, %v11457
  %v11497 = vsel %vm206, %v11327, %v11459
  %v11498 = vsel %vm206, %v11329, %v11461
  %v11499 = vsel %vm206, %v11331, %v11463
  %v11500 = vpack.c.bf16 %v11469, %v11468
  %v11501 = vpack.c.bf16 %v11473, %v11472
  %v11502 = vpack.c.bf16 %v11477, %v11476
  %v11503 = vpack.c.bf16 %v11481, %v11480
  %v11504 = vpack.c.bf16 %v11485, %v11484
  %v11505 = vpack.c.bf16 %v11489, %v11488
  %v11506 = vpack.c.bf16 %v11493, %v11492
  %v11507 = vpack.c.bf16 %v11497, %v11496
  %v11508 = vpack.c.bf16 %v11471, %v11470
  %v11509 = vpack.c.bf16 %v11475, %v11474
  %v11510 = vpack.c.bf16 %v11479, %v11478
  %v11511 = vpack.c.bf16 %v11483, %v11482
  %v11512 = vpack.c.bf16 %v11487, %v11486
  %v11513 = vpack.c.bf16 %v11491, %v11490
  %v11514 = vpack.c.bf16 %v11495, %v11494
  %v11515 = vpack.c.bf16 %v11499, %v11498
  %v11516 = vld [vmem:[%s4] sm:$0xf]
  %v11517 = vld [vmem:[%s4 + $0x4] sm:$0xf]
  %v11518 = vld [vmem:[%s4 + $0x8] sm:$0xf]
  %v11519 = vld [vmem:[%s4 + $0xc] sm:$0xf]
  %v11520 = vld [vmem:[%s4 + $0x10] sm:$0xf]
  %v11521 = vld [vmem:[%s4 + $0x14] sm:$0xf]
  %v11522 = vld [vmem:[%s4 + $0x18] sm:$0xf]
  %v11523 = vld [vmem:[%s4 + $0x1c] sm:$0xf]
  %v11524 = vld [vmem:[%s4 + $0x20] sm:$0xf]
  %v11525 = vld [vmem:[%s4 + $0x24] sm:$0xf]
  %v11526 = vld [vmem:[%s4 + $0x28] sm:$0xf]
  %v11527 = vld [vmem:[%s4 + $0x2c] sm:$0xf]
  %v11528 = vld [vmem:[%s4 + $0x30] sm:$0xf]
  %v11529 = vld [vmem:[%s4 + $0x34] sm:$0xf]
  %v11530 = vld [vmem:[%s4 + $0x38] sm:$0xf]
  %v11531 = vld [vmem:[%s4 + $0x3c] sm:$0xf]
  %v11532 = vld [vmem:[%s4 + $0x40] sm:$0xf]
  %v11533 = vld [vmem:[%s4 + $0x44] sm:$0xf]
  %v11534 = vld [vmem:[%s4 + $0x48] sm:$0xf]
  %v11535 = vld [vmem:[%s4 + $0x4c] sm:$0xf]
  %v11536 = vld [vmem:[%s4 + $0x50] sm:$0xf]
  %v11537 = vld [vmem:[%s4 + $0x54] sm:$0xf]
  %v11538 = vld [vmem:[%s4 + $0x58] sm:$0xf]
  %v11539 = vld [vmem:[%s4 + $0x5c] sm:$0xf]
  %v11540 = vld [vmem:[%s4 + $0x60] sm:$0xf]
  %v11541 = vld [vmem:[%s4 + $0x64] sm:$0xf]
  %v11542 = vld [vmem:[%s4 + $0x68] sm:$0xf]
  %v11543 = vld [vmem:[%s4 + $0x6c] sm:$0xf]
  %v11544 = vld [vmem:[%s4 + $0x70] sm:$0xf]
  %v11545 = vld [vmem:[%s4 + $0x74] sm:$0xf]
  %v11546 = vld [vmem:[%s4 + $0x78] sm:$0xf]
  %v11547 = vld [vmem:[%s4 + $0x7c] sm:$0xf]
  %v11548 = vld [vmem:[%s4 + $0x80] sm:$0xf]
  %v11549 = vld [vmem:[%s4 + $0x84] sm:$0xf]
  %v11550 = vld [vmem:[%s4 + $0x88] sm:$0xf]
  %v11551 = vld [vmem:[%s4 + $0x8c] sm:$0xf]
  %v11552 = vld [vmem:[%s4 + $0x90] sm:$0xf]
  %v11553 = vld [vmem:[%s4 + $0x94] sm:$0xf]
  %v11554 = vld [vmem:[%s4 + $0x98] sm:$0xf]
  %v11555 = vld [vmem:[%s4 + $0x9c] sm:$0xf]
  %v11556 = vld [vmem:[%s4 + $0xa0] sm:$0xf]
  %v11557 = vld [vmem:[%s4 + $0xa4] sm:$0xf]
  %v11558 = vld [vmem:[%s4 + $0xa8] sm:$0xf]
  %v11559 = vld [vmem:[%s4 + $0xac] sm:$0xf]
  %v11560 = vld [vmem:[%s4 + $0xb0] sm:$0xf]
  %v11561 = vld [vmem:[%s4 + $0xb4] sm:$0xf]
  %v11562 = vld [vmem:[%s4 + $0xb8] sm:$0xf]
  %v11563 = vld [vmem:[%s4 + $0xbc] sm:$0xf]
  %v11564 = vld [vmem:[%s4 + $0xc0] sm:$0xf]
  %v11565 = vld [vmem:[%s4 + $0xc4] sm:$0xf]
  %v11566 = vld [vmem:[%s4 + $0xc8] sm:$0xf]
  %v11567 = vld [vmem:[%s4 + $0xcc] sm:$0xf]
  %v11568 = vld [vmem:[%s4 + $0xd0] sm:$0xf]
  %v11569 = vld [vmem:[%s4 + $0xd4] sm:$0xf]
  %v11570 = vld [vmem:[%s4 + $0xd8] sm:$0xf]
  %v11571 = vld [vmem:[%s4 + $0xdc] sm:$0xf]
  %v11572 = vld [vmem:[%s4 + $0xe0] sm:$0xf]
  %v11573 = vld [vmem:[%s4 + $0xe4] sm:$0xf]
  %v11574 = vld [vmem:[%s4 + $0xe8] sm:$0xf]
  %v11575 = vld [vmem:[%s4 + $0xec] sm:$0xf]
  %v11576 = vld [vmem:[%s4 + $0xf0] sm:$0xf]
  %v11577 = vld [vmem:[%s4 + $0xf4] sm:$0xf]
  %v11578 = vld [vmem:[%s4 + $0xf8] sm:$0xf]
  %v11579 = vld [vmem:[%s4 + $0xfc] sm:$0xf]
  %v11580 = vld [vmem:[%s4 + $0x100] sm:$0xf]
  %v11581 = vld [vmem:[%s4 + $0x104] sm:$0xf]
  %v11582 = vld [vmem:[%s4 + $0x108] sm:$0xf]
  %v11583 = vld [vmem:[%s4 + $0x10c] sm:$0xf]
  %v11584 = vld [vmem:[%s4 + $0x110] sm:$0xf]
  %v11585 = vld [vmem:[%s4 + $0x114] sm:$0xf]
  %v11586 = vld [vmem:[%s4 + $0x118] sm:$0xf]
  %v11587 = vld [vmem:[%s4 + $0x11c] sm:$0xf]
  %v11588 = vld [vmem:[%s4 + $0x120] sm:$0xf]
  %v11589 = vld [vmem:[%s4 + $0x124] sm:$0xf]
  %v11590 = vld [vmem:[%s4 + $0x128] sm:$0xf]
  %v11591 = vld [vmem:[%s4 + $0x12c] sm:$0xf]
  %v11592 = vld [vmem:[%s4 + $0x130] sm:$0xf]
  %v11593 = vld [vmem:[%s4 + $0x134] sm:$0xf]
  %v11594 = vld [vmem:[%s4 + $0x138] sm:$0xf]
  %v11595 = vld [vmem:[%s4 + $0x13c] sm:$0xf]
  %v11596 = vld [vmem:[%s4 + $0x140] sm:$0xf]
  %v11597 = vld [vmem:[%s4 + $0x144] sm:$0xf]
  %v11598 = vld [vmem:[%s4 + $0x148] sm:$0xf]
  %v11599 = vld [vmem:[%s4 + $0x14c] sm:$0xf]
  %v11600 = vld [vmem:[%s4 + $0x150] sm:$0xf]
  %v11601 = vld [vmem:[%s4 + $0x154] sm:$0xf]
  %v11602 = vld [vmem:[%s4 + $0x158] sm:$0xf]
  %v11603 = vld [vmem:[%s4 + $0x15c] sm:$0xf]
  %v11604 = vld [vmem:[%s4 + $0x160] sm:$0xf]
  %v11605 = vld [vmem:[%s4 + $0x164] sm:$0xf]
  %v11606 = vld [vmem:[%s4 + $0x168] sm:$0xf]
  %v11607 = vld [vmem:[%s4 + $0x16c] sm:$0xf]
  %v11608 = vld [vmem:[%s4 + $0x170] sm:$0xf]
  %v11609 = vld [vmem:[%s4 + $0x174] sm:$0xf]
  %v11610 = vld [vmem:[%s4 + $0x178] sm:$0xf]
  %v11611 = vld [vmem:[%s4 + $0x17c] sm:$0xf]
  %v11612 = vld [vmem:[%s4 + $0x180] sm:$0xf]
  %v11613 = vld [vmem:[%s4 + $0x184] sm:$0xf]
  %v11614 = vld [vmem:[%s4 + $0x188] sm:$0xf]
  %v11615 = vld [vmem:[%s4 + $0x18c] sm:$0xf]
  %v11616 = vld [vmem:[%s4 + $0x190] sm:$0xf]
  %v11617 = vld [vmem:[%s4 + $0x194] sm:$0xf]
  %v11618 = vld [vmem:[%s4 + $0x198] sm:$0xf]
  %v11619 = vld [vmem:[%s4 + $0x19c] sm:$0xf]
  %v11620 = vld [vmem:[%s4 + $0x1a0] sm:$0xf]
  %v11621 = vld [vmem:[%s4 + $0x1a4] sm:$0xf]
  %v11622 = vld [vmem:[%s4 + $0x1a8] sm:$0xf]
  %v11623 = vld [vmem:[%s4 + $0x1ac] sm:$0xf]
  %v11624 = vld [vmem:[%s4 + $0x1b0] sm:$0xf]
  %v11625 = vld [vmem:[%s4 + $0x1b4] sm:$0xf]
  %v11626 = vld [vmem:[%s4 + $0x1b8] sm:$0xf]
  %v11627 = vld [vmem:[%s4 + $0x1bc] sm:$0xf]
  %v11628 = vld [vmem:[%s4 + $0x1c0] sm:$0xf]
  %v11629 = vld [vmem:[%s4 + $0x1c4] sm:$0xf]
  %v11630 = vld [vmem:[%s4 + $0x1c8] sm:$0xf]
  %v11631 = vld [vmem:[%s4 + $0x1cc] sm:$0xf]
  %v11632 = vld [vmem:[%s4 + $0x1d0] sm:$0xf]
  %v11633 = vld [vmem:[%s4 + $0x1d4] sm:$0xf]
  %v11634 = vld [vmem:[%s4 + $0x1d8] sm:$0xf]
  %v11635 = vld [vmem:[%s4 + $0x1dc] sm:$0xf]
  %v11636 = vld [vmem:[%s4 + $0x1e0] sm:$0xf]
  %v11637 = vld [vmem:[%s4 + $0x1e4] sm:$0xf]
  %v11638 = vld [vmem:[%s4 + $0x1e8] sm:$0xf]
  %v11639 = vld [vmem:[%s4 + $0x1ec] sm:$0xf]
  %v11640 = vld [vmem:[%s4 + $0x1f0] sm:$0xf]
  %v11641 = vld [vmem:[%s4 + $0x1f4] sm:$0xf]
  %v11642 = vld [vmem:[%s4 + $0x1f8] sm:$0xf]
  %v11643 = vld [vmem:[%s4 + $0x1fc] sm:$0xf]
  %v11772 = vunpack.c.l.b16 %v11516
  %v11773 = vunpack.c.l.b16 %v11517
  %v11774 = vunpack.c.l.b16 %v11518
  %v11775 = vunpack.c.l.b16 %v11519
  %v11776 = vunpack.c.l.b16 %v11520
  %v11777 = vunpack.c.l.b16 %v11521
  %v11778 = vunpack.c.l.b16 %v11522
  %v11779 = vunpack.c.l.b16 %v11523
  %v11780 = vunpack.c.l.b16 %v11524
  %v11781 = vunpack.c.l.b16 %v11525
  %v11782 = vunpack.c.l.b16 %v11526
  %v11783 = vunpack.c.l.b16 %v11527
  %v11784 = vunpack.c.l.b16 %v11528
  %v11785 = vunpack.c.l.b16 %v11529
  %v11786 = vunpack.c.l.b16 %v11530
  %v11787 = vunpack.c.l.b16 %v11531
  %v11788 = vunpack.c.l.b16 %v11532
  %v11789 = vunpack.c.l.b16 %v11533
  %v11790 = vunpack.c.l.b16 %v11534
  %v11791 = vunpack.c.l.b16 %v11535
  %v11792 = vunpack.c.l.b16 %v11536
  %v11793 = vunpack.c.l.b16 %v11537
  %v11794 = vunpack.c.l.b16 %v11538
  %v11795 = vunpack.c.l.b16 %v11539
  %v11796 = vunpack.c.l.b16 %v11540
  %v11797 = vunpack.c.l.b16 %v11541
  %v11798 = vunpack.c.l.b16 %v11542
  %v11799 = vunpack.c.l.b16 %v11543
  %v11800 = vunpack.c.l.b16 %v11544
  %v11801 = vunpack.c.l.b16 %v11545
  %v11802 = vunpack.c.l.b16 %v11546
  %v11803 = vunpack.c.l.b16 %v11547
  %v11804 = vunpack.c.l.b16 %v11548
  %v11805 = vunpack.c.l.b16 %v11549
  %v11806 = vunpack.c.l.b16 %v11550
  %v11807 = vunpack.c.l.b16 %v11551
  %v11808 = vunpack.c.l.b16 %v11552
  %v11809 = vunpack.c.l.b16 %v11553
  %v11810 = vunpack.c.l.b16 %v11554
  %v11811 = vunpack.c.l.b16 %v11555
  %v11812 = vunpack.c.l.b16 %v11556
  %v11813 = vunpack.c.l.b16 %v11557
  %v11814 = vunpack.c.l.b16 %v11558
  %v11815 = vunpack.c.l.b16 %v11559
  %v11816 = vunpack.c.l.b16 %v11560
  %v11817 = vunpack.c.l.b16 %v11561
  %v11818 = vunpack.c.l.b16 %v11562
  %v11819 = vunpack.c.l.b16 %v11563
  %v11820 = vunpack.c.l.b16 %v11564
  %v11821 = vunpack.c.l.b16 %v11565
  %v11822 = vunpack.c.l.b16 %v11566
  %v11823 = vunpack.c.l.b16 %v11567
  %v11824 = vunpack.c.l.b16 %v11568
  %v11825 = vunpack.c.l.b16 %v11569
  %v11826 = vunpack.c.l.b16 %v11570
  %v11827 = vunpack.c.l.b16 %v11571
  %v11828 = vunpack.c.l.b16 %v11572
  %v11829 = vunpack.c.l.b16 %v11573
  %v11830 = vunpack.c.l.b16 %v11574
  %v11831 = vunpack.c.l.b16 %v11575
  %v11832 = vunpack.c.l.b16 %v11576
  %v11833 = vunpack.c.l.b16 %v11577
  %v11834 = vunpack.c.l.b16 %v11578
  %v11835 = vunpack.c.l.b16 %v11579
  %v11836 = vunpack.c.l.b16 %v11580
  %v11837 = vunpack.c.l.b16 %v11581
  %v11838 = vunpack.c.l.b16 %v11582
  %v11839 = vunpack.c.l.b16 %v11583
  %v11840 = vunpack.c.l.b16 %v11584
  %v11841 = vunpack.c.l.b16 %v11585
  %v11842 = vunpack.c.l.b16 %v11586
  %v11843 = vunpack.c.l.b16 %v11587
  %v11844 = vunpack.c.l.b16 %v11588
  %v11845 = vunpack.c.l.b16 %v11589
  %v11846 = vunpack.c.l.b16 %v11590
  %v11847 = vunpack.c.l.b16 %v11591
  %v11848 = vunpack.c.l.b16 %v11592
  %v11849 = vunpack.c.l.b16 %v11593
  %v11850 = vunpack.c.l.b16 %v11594
  %v11851 = vunpack.c.l.b16 %v11595
  %v11852 = vunpack.c.l.b16 %v11596
  %v11853 = vunpack.c.l.b16 %v11597
  %v11854 = vunpack.c.l.b16 %v11598
  %v11855 = vunpack.c.l.b16 %v11599
  %v11856 = vunpack.c.l.b16 %v11600
  %v11857 = vunpack.c.l.b16 %v11601
  %v11858 = vunpack.c.l.b16 %v11602
  %v11859 = vunpack.c.l.b16 %v11603
  %v11860 = vunpack.c.l.b16 %v11604
  %v11861 = vunpack.c.l.b16 %v11605
  %v11862 = vunpack.c.l.b16 %v11606
  %v11863 = vunpack.c.l.b16 %v11607
  %v11864 = vunpack.c.l.b16 %v11608
  %v11865 = vunpack.c.l.b16 %v11609
  %v11866 = vunpack.c.l.b16 %v11610
  %v11867 = vunpack.c.l.b16 %v11611
  %v11868 = vunpack.c.l.b16 %v11612
  %v11869 = vunpack.c.l.b16 %v11613
  %v11870 = vunpack.c.l.b16 %v11614
  %v11871 = vunpack.c.l.b16 %v11615
  %v11872 = vunpack.c.l.b16 %v11616
  %v11873 = vunpack.c.l.b16 %v11617
  %v11874 = vunpack.c.l.b16 %v11618
  %v11875 = vunpack.c.l.b16 %v11619
  %v11876 = vunpack.c.l.b16 %v11620
  %v11877 = vunpack.c.l.b16 %v11621
  %v11878 = vunpack.c.l.b16 %v11622
  %v11879 = vunpack.c.l.b16 %v11623
  %v11880 = vunpack.c.l.b16 %v11624
  %v11881 = vunpack.c.l.b16 %v11625
  %v11882 = vunpack.c.l.b16 %v11626
  %v11883 = vunpack.c.l.b16 %v11627
  %v11884 = vunpack.c.l.b16 %v11628
  %v11885 = vunpack.c.l.b16 %v11629
  %v11886 = vunpack.c.l.b16 %v11630
  %v11887 = vunpack.c.l.b16 %v11631
  %v11888 = vunpack.c.l.b16 %v11632
  %v11889 = vunpack.c.l.b16 %v11633
  %v11890 = vunpack.c.l.b16 %v11634
  %v11891 = vunpack.c.l.b16 %v11635
  %v11892 = vunpack.c.l.b16 %v11636
  %v11893 = vunpack.c.l.b16 %v11637
  %v11894 = vunpack.c.l.b16 %v11638
  %v11895 = vunpack.c.l.b16 %v11639
  %v11896 = vunpack.c.l.b16 %v11640
  %v11897 = vunpack.c.l.b16 %v11641
  %v11898 = vunpack.c.l.b16 %v11642
  %v11899 = vunpack.c.l.b16 %v11643
  %v11900 = vpack.c.b16 %v11773, %v11772
  %v11901 = vpack.c.b16 %v11775, %v11774
  %v11902 = vpack.c.b16 %v11777, %v11776
  %v11903 = vpack.c.b16 %v11779, %v11778
  %v11904 = vpack.c.b16 %v11781, %v11780
  %v11905 = vpack.c.b16 %v11783, %v11782
  %v11906 = vpack.c.b16 %v11785, %v11784
  %v11907 = vpack.c.b16 %v11787, %v11786
  %v11908 = vpack.c.b16 %v11789, %v11788
  %v11909 = vpack.c.b16 %v11791, %v11790
  %v11910 = vpack.c.b16 %v11793, %v11792
  %v11911 = vpack.c.b16 %v11795, %v11794
  %v11912 = vpack.c.b16 %v11797, %v11796
  %v11913 = vpack.c.b16 %v11799, %v11798
  %v11914 = vpack.c.b16 %v11801, %v11800
  %v11915 = vpack.c.b16 %v11803, %v11802
  %v11916 = vpack.c.b16 %v11805, %v11804
  %v11917 = vpack.c.b16 %v11807, %v11806
  %v11918 = vpack.c.b16 %v11809, %v11808
  %v11919 = vpack.c.b16 %v11811, %v11810
  %v11920 = vpack.c.b16 %v11813, %v11812
  %v11921 = vpack.c.b16 %v11815, %v11814
  %v11922 = vpack.c.b16 %v11817, %v11816
  %v11923 = vpack.c.b16 %v11819, %v11818
  %v11924 = vpack.c.b16 %v11821, %v11820
  %v11925 = vpack.c.b16 %v11823, %v11822
  %v11926 = vpack.c.b16 %v11825, %v11824
  %v11927 = vpack.c.b16 %v11827, %v11826
  %v11928 = vpack.c.b16 %v11829, %v11828
  %v11929 = vpack.c.b16 %v11831, %v11830
  %v11930 = vpack.c.b16 %v11833, %v11832
  %v11931 = vpack.c.b16 %v11835, %v11834
  %v11932 = vpack.c.b16 %v11837, %v11836
  %v11933 = vpack.c.b16 %v11839, %v11838
  %v11934 = vpack.c.b16 %v11841, %v11840
  %v11935 = vpack.c.b16 %v11843, %v11842
  %v11936 = vpack.c.b16 %v11845, %v11844
  %v11937 = vpack.c.b16 %v11847, %v11846
  %v11938 = vpack.c.b16 %v11849, %v11848
  %v11939 = vpack.c.b16 %v11851, %v11850
  %v11940 = vpack.c.b16 %v11853, %v11852
  %v11941 = vpack.c.b16 %v11855, %v11854
  %v11942 = vpack.c.b16 %v11857, %v11856
  %v11943 = vpack.c.b16 %v11859, %v11858
  %v11944 = vpack.c.b16 %v11861, %v11860
  %v11945 = vpack.c.b16 %v11863, %v11862
  %v11946 = vpack.c.b16 %v11865, %v11864
  %v11947 = vpack.c.b16 %v11867, %v11866
  %v11948 = vpack.c.b16 %v11869, %v11868
  %v11949 = vpack.c.b16 %v11871, %v11870
  %v11950 = vpack.c.b16 %v11873, %v11872
  %v11951 = vpack.c.b16 %v11875, %v11874
  %v11952 = vpack.c.b16 %v11877, %v11876
  %v11953 = vpack.c.b16 %v11879, %v11878
  %v11954 = vpack.c.b16 %v11881, %v11880
  %v11955 = vpack.c.b16 %v11883, %v11882
  %v11956 = vpack.c.b16 %v11885, %v11884
  %v11957 = vpack.c.b16 %v11887, %v11886
  %v11958 = vpack.c.b16 %v11889, %v11888
  %v11959 = vpack.c.b16 %v11891, %v11890
  %v11960 = vpack.c.b16 %v11893, %v11892
  %v11961 = vpack.c.b16 %v11895, %v11894
  %v11962 = vpack.c.b16 %v11897, %v11896
  %v11963 = vpack.c.b16 %v11899, %v11898
  %12028 = vmatprep.subr.bf16.mxu0 0
  %12029 = vmatpush1.bf16.msra.mxu0 %v11900
  %12030 = vmatprep.subr.bf16.mxu0 0
  %12031 = vmatpush1.bf16.msra.mxu0 %v11901
  %12032 = vmatprep.subr.bf16.mxu0 0
  %12033 = vmatpush1.bf16.msra.mxu0 %v11902
  %12034 = vmatprep.subr.bf16.mxu0 0
  %12035 = vmatpush1.bf16.msra.mxu0 %v11903
  %12036 = vmatprep.subr.bf16.mxu0 0
  %12037 = vmatpush1.bf16.msra.mxu0 %v11904
  %12038 = vmatprep.subr.bf16.mxu0 0
  %12039 = vmatpush1.bf16.msra.mxu0 %v11905
  %12040 = vmatprep.subr.bf16.mxu0 0
  %12041 = vmatpush1.bf16.msra.mxu0 %v11906
  %12042 = vmatprep.subr.bf16.mxu0 0
  %12043 = vmatpush1.bf16.msra.mxu0 %v11907
  %12044 = vmatprep.subr.bf16.mxu0 0
  %12045 = vmatpush1.bf16.msra.mxu0 %v11908
  %12046 = vmatprep.subr.bf16.mxu0 0
  %12047 = vmatpush1.bf16.msra.mxu0 %v11909
  %12048 = vmatprep.subr.bf16.mxu0 0
  %12049 = vmatpush1.bf16.msra.mxu0 %v11910
  %12050 = vmatprep.subr.bf16.mxu0 0
  %12051 = vmatpush1.bf16.msra.mxu0 %v11911
  %12052 = vmatprep.subr.bf16.mxu0 0
  %12053 = vmatpush1.bf16.msra.mxu0 %v11912
  %12054 = vmatprep.subr.bf16.mxu0 0
  %12055 = vmatpush1.bf16.msra.mxu0 %v11913
  %12056 = vmatprep.subr.bf16.mxu0 0
  %12057 = vmatpush1.bf16.msra.mxu0 %v11914
  %12058 = vmatprep.subr.bf16.mxu0 0
  %12059 = vmatpush1.bf16.msra.mxu0 %v11915
  %12060 = vmatprep.mubr.bf16.mxu0 %v11501
  %12061 = vmatmul.mubr.bf16.gmra.mrb[0].mxu0 %v11500
  %v12062 = vpop.f32.mrb[0].mxu0
  %v12063 = vadd.f32 0.0, %v12062
  %v12064 = vpop.f32.mrb[0].mxu0
  %v12065 = vpop.f32.mrb[0].mxu0
  %v12066 = vadd.f32 0.0, %v12065
  %v12067 = vpop.f32.mrb[0].mxu0
  %12068 = vmatprep.mubr.bf16.mxu0 %v11509
  %12069 = vmatmul.mubr.bf16.gmra.mrb[0].mxu0 %v11508
  %v12070 = vpop.f32.mrb[0].mxu0
  %v12071 = vadd.f32 0.0, %v12070
  %v12072 = vpop.f32.mrb[0].mxu0
  %v12073 = vpop.f32.mrb[0].mxu0
  %v12074 = vadd.f32 0.0, %v12073
  %v12075 = vpop.f32.mrb[0].mxu0
  %12076 = vdwg.mxu0
  %12077 = vmatprep.subr.bf16.mxu0 0
  %12078 = vmatpush1.bf16.msra.mxu0 %v11916
  %12079 = vmatprep.subr.bf16.mxu0 0
  %12080 = vmatpush1.bf16.msra.mxu0 %v11917
  %12081 = vmatprep.subr.bf16.mxu0 0
  %12082 = vmatpush1.bf16.msra.mxu0 %v11918
  %12083 = vmatprep.subr.bf16.mxu0 0
  %12084 = vmatpush1.bf16.msra.mxu0 %v11919
  %12085 = vmatprep.subr.bf16.mxu0 0
  %12086 = vmatpush1.bf16.msra.mxu0 %v11920
  %12087 = vmatprep.subr.bf16.mxu0 0
  %12088 = vmatpush1.bf16.msra.mxu0 %v11921
  %12089 = vmatprep.subr.bf16.mxu0 0
  %12090 = vmatpush1.bf16.msra.mxu0 %v11922
  %12091 = vmatprep.subr.bf16.mxu0 0
  %12092 = vmatpush1.bf16.msra.mxu0 %v11923
  %12093 = vmatprep.subr.bf16.mxu0 0
  %12094 = vmatpush1.bf16.msra.mxu0 %v11924
  %12095 = vmatprep.subr.bf16.mxu0 0
  %12096 = vmatpush1.bf16.msra.mxu0 %v11925
  %12097 = vmatprep.subr.bf16.mxu0 0
  %12098 = vmatpush1.bf16.msra.mxu0 %v11926
  %12099 = vmatprep.subr.bf16.mxu0 0
  %12100 = vmatpush1.bf16.msra.mxu0 %v11927
  %12101 = vmatprep.subr.bf16.mxu0 0
  %12102 = vmatpush1.bf16.msra.mxu0 %v11928
  %12103 = vmatprep.subr.bf16.mxu0 0
  %12104 = vmatpush1.bf16.msra.mxu0 %v11929
  %12105 = vmatprep.subr.bf16.mxu0 0
  %12106 = vmatpush1.bf16.msra.mxu0 %v11930
  %12107 = vmatprep.subr.bf16.mxu0 0
  %12108 = vmatpush1.bf16.msra.mxu0 %v11931
  %12109 = vmatprep.mubr.bf16.mxu0 %v11503
  %12110 = vmatmul.mubr.bf16.gmra.mrb[0].mxu0 %v11502
  %v12111 = vpop.f32.mrb[0].mxu0
  %v12112 = vadd.f32 %v12063, %v12111
  %v12113 = vpop.f32.mrb[0].mxu0
  %v12114 = vpop.f32.mrb[0].mxu0
  %v12115 = vadd.f32 %v12066, %v12114
  %v12116 = vpop.f32.mrb[0].mxu0
  %12117 = vmatprep.mubr.bf16.mxu0 %v11511
  %12118 = vmatmul.mubr.bf16.gmra.mrb[0].mxu0 %v11510
  %v12119 = vpop.f32.mrb[0].mxu0
  %v12120 = vadd.f32 %v12071, %v12119
  %v12121 = vpop.f32.mrb[0].mxu0
  %v12122 = vpop.f32.mrb[0].mxu0
  %v12123 = vadd.f32 %v12074, %v12122
  %v12124 = vpop.f32.mrb[0].mxu0
  %12125 = vdwg.mxu0
  %12126 = vmatprep.subr.bf16.mxu0 0
  %12127 = vmatpush1.bf16.msra.mxu0 %v11932
  %12128 = vmatprep.subr.bf16.mxu0 0
  %12129 = vmatpush1.bf16.msra.mxu0 %v11933
  %12130 = vmatprep.subr.bf16.mxu0 0
  %12131 = vmatpush1.bf16.msra.mxu0 %v11934
  %12132 = vmatprep.subr.bf16.mxu0 0
  %12133 = vmatpush1.bf16.msra.mxu0 %v11935
  %12134 = vmatprep.subr.bf16.mxu0 0
  %12135 = vmatpush1.bf16.msra.mxu0 %v11936
  %12136 = vmatprep.subr.bf16.mxu0 0
  %12137 = vmatpush1.bf16.msra.mxu0 %v11937
  %12138 = vmatprep.subr.bf16.mxu0 0
  %12139 = vmatpush1.bf16.msra.mxu0 %v11938
  %12140 = vmatprep.subr.bf16.mxu0 0
  %12141 = vmatpush1.bf16.msra.mxu0 %v11939
  %12142 = vmatprep.subr.bf16.mxu0 0
  %12143 = vmatpush1.bf16.msra.mxu0 %v11940
  %12144 = vmatprep.subr.bf16.mxu0 0
  %12145 = vmatpush1.bf16.msra.mxu0 %v11941
  %12146 = vmatprep.subr.bf16.mxu0 0
  %12147 = vmatpush1.bf16.msra.mxu0 %v11942
  %12148 = vmatprep.subr.bf16.mxu0 0
  %12149 = vmatpush1.bf16.msra.mxu0 %v11943
  %12150 = vmatprep.subr.bf16.mxu0 0
  %12151 = vmatpush1.bf16.msra.mxu0 %v11944
  %12152 = vmatprep.subr.bf16.mxu0 0
  %12153 = vmatpush1.bf16.msra.mxu0 %v11945
  %12154 = vmatprep.subr.bf16.mxu0 0
  %12155 = vmatpush1.bf16.msra.mxu0 %v11946
  %12156 = vmatprep.subr.bf16.mxu0 0
  %12157 = vmatpush1.bf16.msra.mxu0 %v11947
  %12158 = vmatprep.mubr.bf16.mxu0 %v11505
  %12159 = vmatmul.mubr.bf16.gmra.mrb[0].mxu0 %v11504
  %v12160 = vpop.f32.mrb[0].mxu0
  %v12161 = vadd.f32 %v12112, %v12160
  %v12162 = vpop.f32.mrb[0].mxu0
  %v12163 = vpop.f32.mrb[0].mxu0
  %v12164 = vadd.f32 %v12115, %v12163
  %v12165 = vpop.f32.mrb[0].mxu0
  %12166 = vmatprep.mubr.bf16.mxu0 %v11513
  %12167 = vmatmul.mubr.bf16.gmra.mrb[0].mxu0 %v11512
  %v12168 = vpop.f32.mrb[0].mxu0
  %v12169 = vadd.f32 %v12120, %v12168
  %v12170 = vpop.f32.mrb[0].mxu0
  %v12171 = vpop.f32.mrb[0].mxu0
  %v12172 = vadd.f32 %v12123, %v12171
  %v12173 = vpop.f32.mrb[0].mxu0
  %12174 = vdwg.mxu0
  %12175 = vmatprep.subr.bf16.mxu0 0
  %12176 = vmatpush1.bf16.msra.mxu0 %v11948
  %12177 = vmatprep.subr.bf16.mxu0 0
  %12178 = vmatpush1.bf16.msra.mxu0 %v11949
  %12179 = vmatprep.subr.bf16.mxu0 0
  %12180 = vmatpush1.bf16.msra.mxu0 %v11950
  %12181 = vmatprep.subr.bf16.mxu0 0
  %12182 = vmatpush1.bf16.msra.mxu0 %v11951
  %12183 = vmatprep.subr.bf16.mxu0 0
  %12184 = vmatpush1.bf16.msra.mxu0 %v11952
  %12185 = vmatprep.subr.bf16.mxu0 0
  %12186 = vmatpush1.bf16.msra.mxu0 %v11953
  %12187 = vmatprep.subr.bf16.mxu0 0
  %12188 = vmatpush1.bf16.msra.mxu0 %v11954
  %12189 = vmatprep.subr.bf16.mxu0 0
  %12190 = vmatpush1.bf16.msra.mxu0 %v11955
  %12191 = vmatprep.subr.bf16.mxu0 0
  %12192 = vmatpush1.bf16.msra.mxu0 %v11956
  %12193 = vmatprep.subr.bf16.mxu0 0
  %12194 = vmatpush1.bf16.msra.mxu0 %v11957
  %12195 = vmatprep.subr.bf16.mxu0 0
  %12196 = vmatpush1.bf16.msra.mxu0 %v11958
  %12197 = vmatprep.subr.bf16.mxu0 0
  %12198 = vmatpush1.bf16.msra.mxu0 %v11959
  %12199 = vmatprep.subr.bf16.mxu0 0
  %12200 = vmatpush1.bf16.msra.mxu0 %v11960
  %12201 = vmatprep.subr.bf16.mxu0 0
  %12202 = vmatpush1.bf16.msra.mxu0 %v11961
  %12203 = vmatprep.subr.bf16.mxu0 0
  %12204 = vmatpush1.bf16.msra.mxu0 %v11962
  %12205 = vmatprep.subr.bf16.mxu0 0
  %12206 = vmatpush1.bf16.msra.mxu0 %v11963
  %12207 = vmatprep.mubr.bf16.mxu0 %v11507
  %12208 = vmatmul.mubr.bf16.gmra.mrb[0].mxu0 %v11506
  %v12209 = vpop.f32.mrb[0].mxu0
  %v12210 = vadd.f32 %v12161, %v12209
  %v12211 = vpop.f32.mrb[0].mxu0
  %v12212 = vpop.f32.mrb[0].mxu0
  %v12213 = vadd.f32 %v12164, %v12212
  %v12214 = vpop.f32.mrb[0].mxu0
  %12215 = vmatprep.mubr.bf16.mxu0 %v11515
  %12216 = vmatmul.mubr.bf16.gmra.mrb[0].mxu0 %v11514
  %v12217 = vpop.f32.mrb[0].mxu0
  %v12218 = vadd.f32 %v12169, %v12217
  %v12219 = vpop.f32.mrb[0].mxu0
  %v12220 = vpop.f32.mrb[0].mxu0
  %v12221 = vadd.f32 %v12172, %v12220
  %v12222 = vpop.f32.mrb[0].mxu0
  %12223 = vdwg.mxu0
  %vm12224 = vcmp.lt.s32.totalorder %v11058, 2
  %vm12225 = vcmp.lt.s32.totalorder %v11059, 2
  %vm12226 = vcmp.lt.s32.totalorder %v11060, 2
  %vm12227 = vcmp.lt.s32.totalorder %v11061, 2
  %v12228 = vsel %vm12224, 1, 0
  %v12229 = vsel %vm12225, 1, 0
  %v12230 = vsel %vm12226, 1, 0
  %v12231 = vsel %vm12227, 1, 0
  %v12232 = vcvt.s32.f32 %v12228
  %v12233 = vcvt.s32.f32 %v12229
  %v12234 = vcvt.s32.f32 %v12230
  %v12235 = vcvt.s32.f32 %v12231
  %v12236 = vmul.f32 %v12210, %v12232
  %v12237 = vmul.f32 %v12213, %v12233
  %v12238 = vmul.f32 %v12218, %v12234
  %v12239 = vmul.f32 %v12221, %v12235
  %v12240 = vadd.f32 %v12236, %v12237
  %v12241 = vadd.f32 %v12240, %v12238
  %v12242 = vadd.f32 %v12241, %v12239
  %v12243 = vrot.slane %v12242, 4
  %v12244 = vadd.f32 %v12242, %v12243
  %v12245 = vrot.slane %v12244, 2
  %v12246 = vadd.f32 %v12244, %v12245
  %v12247 = vrot.slane %v12246, 1
  %v12248 = vadd.f32 %v12246, %v12247
  %v12249 = vmul.f32 %v12236, %v12210
  %v12250 = vmul.f32 %v12237, %v12213
  %v12251 = vmul.f32 %v12238, %v12218
  %v12252 = vmul.f32 %v12239, %v12221
  %v12253 = vadd.f32 %v12249, %v12250
  %v12254 = vadd.f32 %v12253, %v12251
  %v12255 = vadd.f32 %v12254, %v12252
  %v12256 = vrot.slane %v12255, 4
  %v12257 = vadd.f32 %v12255, %v12256
  %v12258 = vrot.slane %v12257, 2
  %v12259 = vadd.f32 %v12257, %v12258
  %v12260 = vrot.slane %v12259, 1
  %v12261 = vadd.f32 %v12259, %v12260
  %v12262 = vmul.f32 %v12248, 0.125
  %v12263 = vmul.f32 %v12261, 0.125
  %v12264 = vmul.f32 %v12262, %v12262
  %v12265 = vsub.f32 %v12263, %v12264
  %v12266 = vmax.f32 %v12265, 0.0
  %v12267 = vld [vmem:[%s10] sm:$0x1]
  %v12268 = vadd.f32 %v12266, 1e-05
  %v12269 = vrsqrt.pop %v12268
  %v12270 = vmul.f32 %v12267, %v12269
  %v12271 = vld [vmem:[%s11] sm:$0x1]
  %v12272 = vmul.f32 %v12262, %v12270
  %v12273 = vsub.f32 %v12271, %v12272
  %v12275 = vlaneseq
  %v12276 = vshrl.u32 %v12275, 7
  %v12277 = vsub.s32 0, %v12276
  %v12278 = vrot.slane %v12270, %v12277
  %v12280 = vmul.f32 %v12210, %v12278
  %v12281 = vmul.f32 %v12213, %v12278
  %v12282 = vmul.f32 %v12218, %v12278
  %v12283 = vmul.f32 %v12221, %v12278
  %v12285 = vlaneseq
  %v12286 = vshrl.u32 %v12285, 7
  %v12287 = vsub.s32 0, %v12286
  %v12288 = vrot.slane %v12273, %v12287
  %v12290 = vadd.f32 %v12280, %v12288
  %v12291 = vadd.f32 %v12281, %v12288
  %v12292 = vadd.f32 %v12282, %v12288
  %v12293 = vadd.f32 %v12283, %v12288
  %v12294 = vmul.f32 %v12290, 0.2
  %v12295 = vmul.f32 %v12291, 0.2
  %v12296 = vmul.f32 %v12292, 0.2
  %v12297 = vmul.f32 %v12293, 0.2
  %v12298 = vmax.f32 %v12290, %v12294
  %v12299 = vmax.f32 %v12291, %v12295
  %v12300 = vmax.f32 %v12292, %v12296
  %v12301 = vmax.f32 %v12293, %v12297
  %v12302 = vld [vmem:[%s5] sm:$0xff]
  %v12303 = vld [vmem:[%s5 + $0x8] sm:$0xff]
  %v12304 = vld [vmem:[%s5 + $0x10] sm:$0xff]
  %v12305 = vld [vmem:[%s5 + $0x18] sm:$0xff]
  %v12306 = vmul.f32 %v12298, %v12302
  %v12307 = vmul.f32 %v12299, %v12303
  %v12308 = vmul.f32 %v12300, %v12304
  %v12309 = vmul.f32 %v12301, %v12305
  %12310 = vadd.xlane.f32.xlu0 %v12306
  %v12311 = vpop.xlane.xlu0 %12310
  %12312 = vadd.xlane.f32.xlu0 %v12307
  %v12313 = vpop.xlane.xlu0 %12312
  %12314 = vadd.xlane.f32.xlu0 %v12308
  %v12315 = vpop.xlane.xlu0 %12314
  %12316 = vadd.xlane.f32.xlu0 %v12309
  %v12317 = vpop.xlane.xlu0 %12316
  %v12318 = vadd.f32 %v12311, %v12313
  %v12319 = vrot.slane %v12318, 4
  %v12320 = vadd.f32 %v12318, %v12319
  %v12321 = vrot.slane %v12320, 2
  %v12322 = vadd.f32 %v12320, %v12321
  %v12323 = vrot.slane %v12322, 1
  %v12324 = vadd.f32 %v12322, %v12323
  %v12325 = vadd.f32 %v12315, %v12317
  %v12326 = vrot.slane %v12325, 4
  %v12327 = vadd.f32 %v12325, %v12326
  %v12328 = vrot.slane %v12327, 2
  %v12329 = vadd.f32 %v12327, %v12328
  %v12330 = vrot.slane %v12329, 1
  %v12331 = vadd.f32 %v12329, %v12330
  %v12332 = vxor.u32 %v12324, 2147483648
  %v12333 = vxor.u32 %v12331, 2147483648
  %v12334 = vmul.f32 %v12332, 1.442695
  %v12335 = vpow.pop %v12334
  %v12336 = vmul.f32 %v12333, 1.442695
  %v12337 = vpow.pop %v12336
  %v12338 = vadd.f32 %v12335, 1.0
  %v12339 = vadd.f32 %v12337, 1.0
  %v12340 = vrcp.pop %v12338
  %v12341 = vmul.f32 1.0, %v12340
  %v12342 = vrcp.pop %v12339
  %v12343 = vmul.f32 1.0, %v12342
  %vm12344 = vcmask 0
  %12345 = vst.msk [vmem:[%s12] sm:$0x1] %vm12344, %v12341
  %12346 = vst.msk [vmem:[%s12 + $0x1] sm:$0x1] %vm12344, %v12343
  // Predicated region
  $region50: #{discriminator_forward.1} parent=0 // pred_check
    _
  $region51: #{discriminator_forward.1} parent=0 // pred_check_branch
    %12348 = sbr.rel (0) target = $region53
  $region52: #{discriminator_forward.1} parent=0 // pred_region
    _
  $region53: #{discriminator_forward.1} parent=0 // pred_fallthru
    _
  // Predicated region
  $region54: #{discriminator_forward.1} parent=0 // pred_check
    _
  $region55: #{discriminator_forward.1} parent=0 // pred_check_branch
    %12350 = sbr.rel (0) target = $region57
  $region56: #{discriminator_forward.1} parent=0 // pred_region
    _
  $region57: #{discriminator_forward.1} parent=0 // pred_fallthru
    _

</llo_original>
